<compile_context>
chip_gen: v7x
topology: tpu7x:2x2x1
jax: 0.10.0
libtpu: 0.0.40
codegen_flags: <defaults>
</compile_context>

<pallas_src>
import functools

import numpy as np
import jax
import jax.numpy as jnp
from jax.experimental import pallas as pl
from jax.experimental.pallas import tpu as pltpu

MXU_DTYPE = jnp.bfloat16          # matmul operand dtype; accumulation is f32
VMEM_LIMIT = 32 * 1024 * 1024     # fits scoped VMEM on v5e/v6e/v7x
CIN_PAD = 16                      # 3 real input channels zero-padded to 16
POINTWISE_TM_CAP = 4096           # column tile cap for (W, M) kernels
QHEAD_TM_CAP = 512                # bounds the (4W, tm) f32 intermediate


# ----------------------------------------------------------------------------
# tiling helpers
# ----------------------------------------------------------------------------
def _round_up(n, m):
    return ((n + m - 1) // m) * m


def _tiles(m, cap):
    """Column tile (multiple of 128, <= cap) and padded length; >=2 steps."""
    n = max(-(-m // cap), 2 if m >= 256 else 1)
    tm = _round_up(-(-m // n), 128)
    return tm, n * tm


def _div_tile(m_pad, cap):
    """Largest multiple-of-128 tile <= cap dividing m_pad (prefer >=2 steps)."""
    cands = [t for t in range(min(cap, m_pad), 127, -128) if m_pad % t == 0]
    for t in cands:
        if m_pad // t >= 2:
            return t
    return cands[0]


# ----------------------------------------------------------------------------
# Pallas kernels (all outputs lane-dense: last dim multiple of 128)
# ----------------------------------------------------------------------------
def _p_kernel(x_ref, w_ref, b_ref, o_ref):
    """hT = p_w^T @ xT + b   -> (W, tm)."""
    y = jnp.dot(w_ref[...], x_ref[...].astype(MXU_DTYPE),
                preferred_element_type=jnp.float32)
    o_ref[...] = y + b_ref[...]


def pallas_p(xT, w_t, b, tm):
    Cin, M_pad = xT.shape
    W = w_t.shape[0]
    return pl.pallas_call(
        _p_kernel,
        out_shape=jax.ShapeDtypeStruct((W, M_pad), jnp.float32),
        grid_spec=pltpu.PrefetchScalarGridSpec(
            num_scalar_prefetch=0,
            grid=(M_pad // tm,),
            in_specs=[
                pl.BlockSpec((Cin, tm), lambda i: (0, i)),
                pl.BlockSpec((W, Cin), lambda i: (0, 0)),
                pl.BlockSpec((W, 1), lambda i: (0, 0)),
            ],
            out_specs=pl.BlockSpec((W, tm), lambda i: (0, i)),
        ),
        compiler_params=pltpu.CompilerParams(
            dimension_semantics=("parallel",), vmem_limit_bytes=VMEM_LIMIT),
    )(xT, w_t, b)


def _lc_add_relu_kernel(h_ref, x2_ref, w_ref, b_ref, o_ref):
    """Fused block tail: relu( lc_w^T @ hT + b + x2T ) -> (W, tm)."""
    y = jnp.dot(w_ref[...], h_ref[...].astype(MXU_DTYPE),
                preferred_element_type=jnp.float32)
    o_ref[...] = jnp.maximum(y + b_ref[...] + x2_ref[...], 0.0)


def pallas_lc_add_relu(hT, x2T, w_t, b, tm):
    W, M_pad = hT.shape
    return pl.pallas_call(
        _lc_add_relu_kernel,
        out_shape=jax.ShapeDtypeStruct((W, M_pad), jnp.float32),
        grid_spec=pltpu.PrefetchScalarGridSpec(
            num_scalar_prefetch=0,
            grid=(M_pad // tm,),
            in_specs=[
                pl.BlockSpec((W, tm), lambda i: (0, i)),
                pl.BlockSpec((W, tm), lambda i: (0, i)),
                pl.BlockSpec((W, W), lambda i: (0, 0)),
                pl.BlockSpec((W, 1), lambda i: (0, 0)),
            ],
            out_specs=pl.BlockSpec((W, tm), lambda i: (0, i)),
        ),
        compiler_params=pltpu.CompilerParams(
            dimension_semantics=("parallel",), vmem_limit_bytes=VMEM_LIMIT),
    )(hT, x2T, w_t, b)


def _tail_q_kernel(h_ref, x2_ref, lcw_ref, lcb_ref, w1_ref, b1_ref,
                   w2_ref, b2_ref, o_ref):
    """Last block tail fused with q head: lc+res+ReLU -> W->4W->ReLU->1."""
    h = jnp.dot(lcw_ref[...], h_ref[...].astype(MXU_DTYPE),
                preferred_element_type=jnp.float32)
    h = jnp.maximum(h + lcb_ref[...] + x2_ref[...], 0.0)            # (W, tm)
    z = jnp.dot(w1_ref[...], h.astype(MXU_DTYPE),
                preferred_element_type=jnp.float32) + b1_ref[...]    # (4W, tm)
    z = jnp.maximum(z, 0.0)
    y = jnp.dot(w2_ref[...], z.astype(MXU_DTYPE),
                preferred_element_type=jnp.float32) + b2_ref[...]    # (1, tm)
    o_ref[...] = y


def pallas_tail_q(hT, x2T, lc_w_t, lc_b, q_w1_t, q_b1, q_w2_t, q_b2, tm):
    W, M_pad = hT.shape
    H = q_w1_t.shape[0]
    return pl.pallas_call(
        _tail_q_kernel,
        out_shape=jax.ShapeDtypeStruct((1, M_pad), jnp.float32),
        grid_spec=pltpu.PrefetchScalarGridSpec(
            num_scalar_prefetch=0,
            grid=(M_pad // tm,),
            in_specs=[
                pl.BlockSpec((W, tm), lambda i: (0, i)),
                pl.BlockSpec((W, tm), lambda i: (0, i)),
                pl.BlockSpec((W, W), lambda i: (0, 0)),
                pl.BlockSpec((W, 1), lambda i: (0, 0)),
                pl.BlockSpec((H, W), lambda i: (0, 0)),
                pl.BlockSpec((H, 1), lambda i: (0, 0)),
                pl.BlockSpec((1, H), lambda i: (0, 0)),
                pl.BlockSpec((1, 1), lambda i: (0, 0)),
            ],
            out_specs=pl.BlockSpec((1, tm), lambda i: (0, i)),
        ),
        compiler_params=pltpu.CompilerParams(
            dimension_semantics=("parallel",), vmem_limit_bytes=VMEM_LIMIT),
    )(hT, x2T, lc_w_t, lc_b, q_w1_t, q_b1, q_w2_t, q_b2)


def _mode_mix_kernel(xr_ref, xi_ref, wr_ref, wi_ref, ws_ref, or_ref, oi_ref):
    """Complex per-mode channel mixing, Karatsuba 3-matmul form, bf16 MXU."""
    xr = xr_ref[...]
    xi = xi_ref[...]
    xs = (xr + xi).astype(MXU_DTYPE)
    xr = xr.astype(MXU_DTYPE)
    xi = xi.astype(MXU_DTYPE)
    t1 = jnp.einsum('kbi,kio->kbo', xr, wr_ref[...],
                    preferred_element_type=jnp.float32)
    t2 = jnp.einsum('kbi,kio->kbo', xi, wi_ref[...],
                    preferred_element_type=jnp.float32)
    t3 = jnp.einsum('kbi,kio->kbo', xs, ws_ref[...],
                    preferred_element_type=jnp.float32)
    or_ref[...] = t1 - t2
    oi_ref[...] = t3 - t1 - t2


def pallas_mode_mix(xr, xi, wr, wi, ws):
    K2, Bp, W = xr.shape
    full3 = lambda shape: pl.BlockSpec(shape, lambda k: (0, 0, 0))
    return pl.pallas_call(
        _mode_mix_kernel,
        out_shape=(jax.ShapeDtypeStruct((K2, Bp, W), jnp.float32),
                   jax.ShapeDtypeStruct((K2, Bp, W), jnp.float32)),
        grid_spec=pltpu.PrefetchScalarGridSpec(
            num_scalar_prefetch=0,
            grid=(1,),   # whole working set is tiny -> single step, no overhead
            in_specs=[full3((K2, Bp, W)), full3((K2, Bp, W)),
                      full3((K2, W, W)), full3((K2, W, W)), full3((K2, W, W))],
            out_specs=(full3((K2, Bp, W)), full3((K2, Bp, W))),
        ),
        compiler_params=pltpu.CompilerParams(
            dimension_semantics=("arbitrary",), vmem_limit_bytes=VMEM_LIMIT),
    )(xr, xi, wr, wi, ws)


# ----------------------------------------------------------------------------
# SpectralConv2d via truncated DFT (replaces rfft2 / irfft2 exactly)
# ----------------------------------------------------------------------------
def make_dft_mats(Sx, Sy, m1, m2):
    """Real matrices reproducing rfft2 band extraction and irfft2 exactly."""
    assert 2 * m1 <= Sx and m2 <= Sy // 2 + 1
    y = np.arange(Sy)
    ky = np.arange(m2)
    ang_y = 2.0 * np.pi * np.outer(y, ky) / Sy                 # (Sy, m2)
    Fy_r, Fy_i = np.cos(ang_y), -np.sin(ang_y)
    nyq = (ky == 0) | (2 * ky == Sy)
    cr = np.where(nyq, 1.0, 2.0)      # hermitian mirror weight (real part)
    ci = np.where(nyq, 0.0, 2.0)      # imag of DC / Nyquist bins is dropped
    ang_yT = ang_y.T                                           # (m2, Sy)
    Gy_r = cr[:, None] * np.cos(ang_yT) / Sy
    Gy_i = -ci[:, None] * np.sin(ang_yT) / Sy
    x = np.arange(Sx)
    kx = np.concatenate([np.arange(m1), np.arange(Sx - m1, Sx)])
    ang_x = 2.0 * np.pi * np.outer(x, kx) / Sx                 # (Sx, 2m1)
    Fx_r, Fx_i = np.cos(ang_x), -np.sin(ang_x)
    Gx_r, Gx_i = np.cos(ang_x).T / Sx, np.sin(ang_x).T / Sx    # (2m1, Sx)
    f32 = lambda a: jnp.asarray(a, jnp.float32)
    return dict(Fy_r=f32(Fy_r), Fy_i=f32(Fy_i), Gy_r=f32(Gy_r), Gy_i=f32(Gy_i),
                Fx_r=f32(Fx_r), Fx_i=f32(Fx_i), Gx_r=f32(Gx_r), Gx_i=f32(Gx_i))


def spectral_conv_dft(hT, wr, wi, ws, dft, B, Sx, Sy, m1, m2, M, M_pad, B_pad):
    """hT: (W, M_pad) real -> x2T: (W, M_pad) real (kernel-integral branch)."""
    W = hT.shape[0]
    HI = jax.lax.Precision.HIGHEST
    # TODO(synk): the small truncated-DFT contractions (middle-axis einsums)
    # run in XLA around the Pallas mode-mix kernel; only the per-mode complex
    # channel mixing is a Pallas kernel.
    h = hT[:, :M].reshape(W, B, Sx, Sy)
    # forward DFT: contract y (kept ky modes), then x (two kx bands)
    ar = jnp.einsum('wbxy,yk->wbxk', h, dft['Fy_r'], precision=HI)
    ai = jnp.einsum('wbxy,yk->wbxk', h, dft['Fy_i'], precision=HI)
    hr = (jnp.einsum('wbxk,xj->jkbw', ar, dft['Fx_r'], precision=HI)
          - jnp.einsum('wbxk,xj->jkbw', ai, dft['Fx_i'], precision=HI))
    hi = (jnp.einsum('wbxk,xj->jkbw', ar, dft['Fx_i'], precision=HI)
          + jnp.einsum('wbxk,xj->jkbw', ai, dft['Fx_r'], precision=HI))
    K2 = 2 * m1 * m2
    hr = hr.reshape(K2, B, W)
    hi = hi.reshape(K2, B, W)
    if B_pad > B:  # keep >=8 rows in the sublane dim of the mode-mix tiles
        hr = jnp.pad(hr, ((0, 0), (0, B_pad - B), (0, 0)))
        hi = jnp.pad(hi, ((0, 0), (0, B_pad - B), (0, 0)))
    outr, outi = pallas_mode_mix(hr, hi, wr, wi, ws)
    outr = outr[:, :B, :].reshape(2 * m1, m2, B, W)
    outi = outi[:, :B, :].reshape(2 * m1, m2, B, W)
    # inverse: ifft over x, then real irfft over y (imag of ky=0 bin dropped,
    # hermitian factor 2 on ky>0), matching jnp.fft.irfft2 of the zero-filled
    # spectrum exactly.
    pr = (jnp.einsum('jkbw,jx->wbxk', outr, dft['Gx_r'], precision=HI)
          - jnp.einsum('jkbw,jx->wbxk', outi, dft['Gx_i'], precision=HI))
    pi = (jnp.einsum('jkbw,jx->wbxk', outr, dft['Gx_i'], precision=HI)
          + jnp.einsum('jkbw,jx->wbxk', outi, dft['Gx_r'], precision=HI))
    x2 = (jnp.einsum('wbxk,ky->wbxy', pr, dft['Gy_r'], precision=HI)
          + jnp.einsum('wbxk,ky->wbxy', pi, dft['Gy_i'], precision=HI))
    x2T = x2.reshape(W, M)
    if M_pad > M:
        x2T = jnp.pad(x2T, ((0, 0), (0, M_pad - M)))
    return x2T


# ----------------------------------------------------------------------------
# Parameter init (PyTorch-style) and kernel-layout preparation
# ----------------------------------------------------------------------------
def _linear_init(key, fan_in, fan_out):
    k1, k2 = jax.random.split(key)
    bound = 1.0 / (fan_in ** 0.5)
    w = jax.random.uniform(k1, (fan_in, fan_out), jnp.float32, -bound, bound)
    b = jax.random.uniform(k2, (fan_out,), jnp.float32, -bound, bound)
    return w, b


def init_params(key, width, modes1, modes2, nblocks):
    keys = jax.random.split(key, 4 + nblocks)
    params = {}
    params['p_w'], params['p_b'] = _linear_init(keys[0], 3, width)
    params['q_w1'], params['q_b1'] = _linear_init(keys[1], width, 4 * width)
    params['q_w2'], params['q_b2'] = _linear_init(keys[2], 4 * width, 1)
    # SpectralConv2d: scale * U[0,1) complex; copy.deepcopy => identical start.
    scale = 1.0 / (width * width)
    kr, ki = jax.random.split(keys[3])
    K2 = 2 * modes1 * modes2
    kint_wr = scale * jax.random.uniform(kr, (K2, width, width), jnp.float32)
    kint_wi = scale * jax.random.uniform(ki, (K2, width, width), jnp.float32)
    blocks = []
    for i in range(nblocks):
        lw, lb = _linear_init(keys[4 + i], width, width)  # 1x1 conv (mlevel=0)
        blocks.append({'lc_w': lw, 'lc_b': lb,
                       'kint_wr': kint_wr, 'kint_wi': kint_wi})
    params['blocks'] = blocks
    return params


def prepare_params(params, width):
    """Pre-transpose / pre-cast weights once (bf16 MXU operands, f32 biases)."""
    W = width
    prep = {
        'p_w_t': jnp.pad(params['p_w'],
                         ((0, CIN_PAD - 3), (0, 0))).T.astype(MXU_DTYPE),
        'p_b': params['p_b'].reshape(W, 1),
        'q_w1_t': params['q_w1'].T.astype(MXU_DTYPE),
        'q_b1': params['q_b1'].reshape(4 * W, 1),
        'q_w2_t': params['q_w2'].T.astype(MXU_DTYPE),
        'q_b2': params['q_b2'].reshape(1, 1),
    }
    blocks = []
    for blk in params['blocks']:
        blocks.append({
            'lc_w_t': blk['lc_w'].T.astype(MXU_DTYPE),
            'lc_b': blk['lc_b'].reshape(W, 1),
            'wr': blk['kint_wr'].astype(MXU_DTYPE),
            'wi': blk['kint_wi'].astype(MXU_DTYPE),
            'ws': (blk['kint_wr'] + blk['kint_wi']).astype(MXU_DTYPE),
        })
    prep['blocks'] = blocks
    return prep


# ----------------------------------------------------------------------------
# FNO2d forward (defaults: clevel=0, mlevel=0, nblocks=4)
# ----------------------------------------------------------------------------
# TODO(synk): clevel != 0 (strided subsample + bilinear F.interpolate) and
# mlevel > 0 (multi-scale local correction) branches are not taken by the
# default constructor args and are not implemented.
def fno2d_forward(prep, dft, x_in, a_in, width, modes1, modes2, nblocks=4):
    B, Sx, Sy, _ = x_in.shape
    W = width
    M = B * Sx * Sy
    tm, M_pad = _tiles(M, POINTWISE_TM_CAP)
    tmq = _div_tile(M_pad, QHEAD_TM_CAP)
    B_pad = _round_up(max(B, 8), 8)

    # x = cat([a, x], -1) -> channels-first lane-dense slab (CIN_PAD, M_pad).
    # Padded lanes carry only bounded bias garbage; every kernel is
    # column-local and the final output is sliced back to [:M].
    xcat = jnp.concatenate([a_in, x_in], axis=-1).reshape(M, 3)
    xT = jnp.pad(xcat.T, ((0, CIN_PAD - 3), (0, M_pad - M)))

    # x = p(x)
    hT = pallas_p(xT, prep['p_w_t'], prep['p_b'], tm)                # (W, M_pad)

    y = None
    for i in range(nblocks):
        blk = prep['blocks'][i]
        # x2 = kernel integral (SpectralConv2d), clevel = 0 branch
        x2T = spectral_conv_dft(hT, blk['wr'], blk['wi'], blk['ws'], dft,
                                B, Sx, Sy, modes1, modes2, M, M_pad, B_pad)
        if i < nblocks - 1:
            # x = relu(lc(x) + x2) fused in one Pallas call
            hT = pallas_lc_add_relu(hT, x2T, blk['lc_w_t'], blk['lc_b'], tm)
        else:
            # last block tail fused with q head: relu(lc(x)+x2) -> W->4W->1
            y = pallas_tail_q(hT, x2T, blk['lc_w_t'], blk['lc_b'],
                              prep['q_w1_t'], prep['q_b1'],
                              prep['q_w2_t'], prep['q_b2'], tmq)     # (1, M_pad)

    return y[0, :M].reshape(B, Sx, Sy, 1)


if __name__ == "__main__":
    width, modes1, modes2, nblocks = 32, 4, 4, 4
    B, Sx, Sy = 2, 16, 16

    key = jax.random.PRNGKey(0)
    kx, ka, kp = jax.random.split(key, 3)
    x = jax.random.normal(kx, (B, Sx, Sy, 1), jnp.float32)   # scalar field
    a = jax.random.normal(ka, (B, Sx, Sy, 2), jnp.float32)   # grid coords
    params = init_params(kp, width, modes1, modes2, nblocks)
    prep = prepare_params(params, width)
    dft = make_dft_mats(Sx, Sy, modes1, modes2)

    fwd = jax.jit(functools.partial(fno2d_forward, width=width, modes1=modes1,
                                    modes2=modes2, nblocks=nblocks))
    out = jax.block_until_ready(fwd(prep, dft, x, a))
    assert out.shape == (B, Sx, Sy, 1)
    assert bool(jnp.all(jnp.isfinite(out)))
    print("KERNEL_OK")
</pallas_src>

<mosaic_0001>
module attributes {stable_mosaic.version = 11 : i64} {
  func.func @_p_kernel(%arg0: i32, %arg1: memref<16x256xf32, #tpu.memory_space<vmem>>, %arg2: memref<32x16xbf16, #tpu.memory_space<vmem>>, %arg3: memref<32x1xf32, #tpu.memory_space<vmem>>, %arg4: memref<32x256xf32, #tpu.memory_space<vmem>>) attributes {dimension_semantics = [#tpu.dimension_semantics<parallel>], iteration_bounds = array<i64: 2>, scalar_prefetch = 0 : i64, scratch_operands = 0 : i64, tpu.core_type = #tpu.core_type<tc>, window_params = [{transform_indices = @transform_0, window_bounds = array<i64: 16, 256>}, {pipeline_mode = #tpu.pipeline_mode<synchronous>, transform_indices = @transform_1, window_bounds = array<i64: 32, 16>}, {pipeline_mode = #tpu.pipeline_mode<synchronous>, transform_indices = @transform_2, window_bounds = array<i64: 32, 1>}, {transform_indices = @transform_3, window_bounds = array<i64: 32, 256>}]} {
    %c0 = arith.constant 0 : index
    %c0_0 = arith.constant 0 : index
    %0 = vector.load %arg2[%c0, %c0_0] : memref<32x16xbf16, #tpu.memory_space<vmem>>, vector<32x16xbf16>
    %c0_1 = arith.constant 0 : index
    %c0_2 = arith.constant 0 : index
    %1 = vector.load %arg1[%c0_1, %c0_2] : memref<16x256xf32, #tpu.memory_space<vmem>>, vector<16x256xf32>
    %2 = arith.truncf %1 : vector<16x256xf32> to vector<16x256xbf16>
    %cst = arith.constant dense<0.000000e+00> : vector<32x256xf32>
    %3 = tpu.matmul %0, %2, %cst {dimension_numbers = #tpu.dot_dimension_numbers<[1], [0], [0], [1], [0, 0, 1, 1], [], []>} : vector<32x16xbf16>, vector<16x256xbf16>, vector<32x256xf32> -> vector<32x256xf32>
    %c0_3 = arith.constant 0 : index
    %c0_4 = arith.constant 0 : index
    %4 = vector.load %arg3[%c0_3, %c0_4] : memref<32x1xf32, #tpu.memory_space<vmem>>, vector<32x1xf32>
    %5 = vector.broadcast %4 : vector<32x1xf32> to vector<32x256xf32>
    %6 = arith.addf %3, %5 : vector<32x256xf32>
    %c0_5 = arith.constant 0 : index
    %c0_6 = arith.constant 0 : index
    %7 = vector.load %arg4[%c0_5, %c0_6] : memref<32x256xf32, #tpu.memory_space<vmem>>, vector<32x256xf32>
    tpu.vector_store %arg4[%c0_5, %c0_6], %6 {strides = array<i32>} : memref<32x256xf32, #tpu.memory_space<vmem>>, vector<32x256xf32>,
    return
  }
  func.func @transform_0(%arg0: i32) -> (i32, i32) {
    %c0_i32 = arith.constant 0 : i32
    %c0_i32_0 = arith.constant 0 : i32
    return %c0_i32, %arg0 : i32, i32
  }
  func.func @transform_1(%arg0: i32) -> (i32, i32) {
    %c0_i32 = arith.constant 0 : i32
    %c0_i32_0 = arith.constant 0 : i32
    %c0_i32_1 = arith.constant 0 : i32
    return %c0_i32, %c0_i32_0 : i32, i32
  }
  func.func @transform_2(%arg0: i32) -> (i32, i32) {
    %c0_i32 = arith.constant 0 : i32
    %c0_i32_0 = arith.constant 0 : i32
    %c0_i32_1 = arith.constant 0 : i32
    return %c0_i32, %c0_i32_0 : i32, i32
  }
  func.func @transform_3(%arg0: i32) -> (i32, i32) {
    %c0_i32 = arith.constant 0 : i32
    %c0_i32_0 = arith.constant 0 : i32
    return %c0_i32, %arg0 : i32, i32
  }
}

module attributes {stable_mosaic.version = 11 : i64} {
  func.func @_mode_mix_kernel(%arg0: i32, %arg1: memref<32x8x32xf32, #tpu.memory_space<vmem>>, %arg2: memref<32x8x32xf32, #tpu.memory_space<vmem>>, %arg3: memref<32x32x32xbf16, #tpu.memory_space<vmem>>, %arg4: memref<32x32x32xbf16, #tpu.memory_space<vmem>>, %arg5: memref<32x32x32xbf16, #tpu.memory_space<vmem>>, %arg6: memref<32x8x32xf32, #tpu.memory_space<vmem>>, %arg7: memref<32x8x32xf32, #tpu.memory_space<vmem>>) attributes {dimension_semantics = [#tpu.dimension_semantics<arbitrary>], iteration_bounds = array<i64: 1>, scalar_prefetch = 0 : i64, scratch_operands = 0 : i64, tpu.core_type = #tpu.core_type<tc>, window_params = [{pipeline_mode = #tpu.pipeline_mode<synchronous>, transform_indices = @transform_0, window_bounds = array<i64: 32, 8, 32>}, {pipeline_mode = #tpu.pipeline_mode<synchronous>, transform_indices = @transform_1, window_bounds = array<i64: 32, 8, 32>}, {pipeline_mode = #tpu.pipeline_mode<synchronous>, transform_indices = @transform_2, window_bounds = array<i64: 32, 32, 32>}, {pipeline_mode = #tpu.pipeline_mode<synchronous>, transform_indices = @transform_3, window_bounds = array<i64: 32, 32, 32>}, {pipeline_mode = #tpu.pipeline_mode<synchronous>, transform_indices = @transform_4, window_bounds = array<i64: 32, 32, 32>}, {pipeline_mode = #tpu.pipeline_mode<synchronous>, transform_indices = @transform_5, window_bounds = array<i64: 32, 8, 32>}, {pipeline_mode = #tpu.pipeline_mode<synchronous>, transform_indices = @transform_6, window_bounds = array<i64: 32, 8, 32>}]} {
    %c0 = arith.constant 0 : index
    %c0_0 = arith.constant 0 : index
    %c0_1 = arith.constant 0 : index
    %0 = vector.load %arg1[%c0, %c0_0, %c0_1] : memref<32x8x32xf32, #tpu.memory_space<vmem>>, vector<32x8x32xf32>
    %c0_2 = arith.constant 0 : index
    %c0_3 = arith.constant 0 : index
    %c0_4 = arith.constant 0 : index
    %1 = vector.load %arg2[%c0_2, %c0_3, %c0_4] : memref<32x8x32xf32, #tpu.memory_space<vmem>>, vector<32x8x32xf32>
    %2 = arith.addf %0, %1 : vector<32x8x32xf32>
    %3 = arith.truncf %2 : vector<32x8x32xf32> to vector<32x8x32xbf16>
    %4 = arith.truncf %0 : vector<32x8x32xf32> to vector<32x8x32xbf16>
    %5 = arith.truncf %1 : vector<32x8x32xf32> to vector<32x8x32xbf16>
    %c0_5 = arith.constant 0 : index
    %c0_6 = arith.constant 0 : index
    %c0_7 = arith.constant 0 : index
    %6 = vector.load %arg3[%c0_5, %c0_6, %c0_7] : memref<32x32x32xbf16, #tpu.memory_space<vmem>>, vector<32x32x32xbf16>
    "tpu.trace_start"() <{level = 10 : i32, message = "kbi,kio->kbo"}> : () -> ()
    %cst = arith.constant dense<0.000000e+00> : vector<32x8x32xf32>
    %7 = tpu.matmul %4, %6, %cst {dimension_numbers = #tpu.dot_dimension_numbers<[2], [1], [1], [2], [0, 0, 0, 1, 1, 2], [0], [0]>} : vector<32x8x32xbf16>, vector<32x32x32xbf16>, vector<32x8x32xf32> -> vector<32x8x32xf32>
    "tpu.trace_stop"() : () -> ()
    %c0_8 = arith.constant 0 : index
    %c0_9 = arith.constant 0 : index
    %c0_10 = arith.constant 0 : index
    %8 = vector.load %arg4[%c0_8, %c0_9, %c0_10] : memref<32x32x32xbf16, #tpu.memory_space<vmem>>, vector<32x32x32xbf16>
    "tpu.trace_start"() <{level = 10 : i32, message = "kbi,kio->kbo"}> : () -> ()
    %cst_11 = arith.constant dense<0.000000e+00> : vector<32x8x32xf32>
    %9 = tpu.matmul %5, %8, %cst_11 {dimension_numbers = #tpu.dot_dimension_numbers<[2], [1], [1], [2], [0, 0, 0, 1, 1, 2], [0], [0]>} : vector<32x8x32xbf16>, vector<32x32x32xbf16>, vector<32x8x32xf32> -> vector<32x8x32xf32>
    "tpu.trace_stop"() : () -> ()
    %c0_12 = arith.constant 0 : index
    %c0_13 = arith.constant 0 : index
    %c0_14 = arith.constant 0 : index
    %10 = vector.load %arg5[%c0_12, %c0_13, %c0_14] : memref<32x32x32xbf16, #tpu.memory_space<vmem>>, vector<32x32x32xbf16>
    "tpu.trace_start"() <{level = 10 : i32, message = "kbi,kio->kbo"}> : () -> ()
    %cst_15 = arith.constant dense<0.000000e+00> : vector<32x8x32xf32>
    %11 = tpu.matmul %3, %10, %cst_15 {dimension_numbers = #tpu.dot_dimension_numbers<[2], [1], [1], [2], [0, 0, 0, 1, 1, 2], [0], [0]>} : vector<32x8x32xbf16>, vector<32x32x32xbf16>, vector<32x8x32xf32> -> vector<32x8x32xf32>
    "tpu.trace_stop"() : () -> ()
    %12 = arith.subf %7, %9 : vector<32x8x32xf32>
    %c0_16 = arith.constant 0 : index
    %c0_17 = arith.constant 0 : index
    %c0_18 = arith.constant 0 : index
    %13 = vector.load %arg6[%c0_16, %c0_17, %c0_18] : memref<32x8x32xf32, #tpu.memory_space<vmem>>, vector<32x8x32xf32>
    tpu.vector_store %arg6[%c0_16, %c0_17, %c0_18], %12 {strides = array<i32>} : memref<32x8x32xf32, #tpu.memory_space<vmem>>, vector<32x8x32xf32>,
    %14 = arith.subf %11, %7 : vector<32x8x32xf32>
    %15 = arith.subf %14, %9 : vector<32x8x32xf32>
    %c0_19 = arith.constant 0 : index
    %c0_20 = arith.constant 0 : index
    %c0_21 = arith.constant 0 : index
    %16 = vector.load %arg7[%c0_19, %c0_20, %c0_21] : memref<32x8x32xf32, #tpu.memory_space<vmem>>, vector<32x8x32xf32>
    tpu.vector_store %arg7[%c0_19, %c0_20, %c0_21], %15 {strides = array<i32>} : memref<32x8x32xf32, #tpu.memory_space<vmem>>, vector<32x8x32xf32>,
    return
  }
  func.func @transform_0(%arg0: i32) -> (i32, i32, i32) {
    %c0_i32 = arith.constant 0 : i32
    %c0_i32_0 = arith.constant 0 : i32
    %c0_i32_1 = arith.constant 0 : i32
    %c0_i32_2 = arith.constant 0 : i32
    return %c0_i32, %c0_i32_0, %c0_i32_1 : i32, i32, i32
  }
  func.func @transform_1(%arg0: i32) -> (i32, i32, i32) {
    %c0_i32 = arith.constant 0 : i32
    %c0_i32_0 = arith.constant 0 : i32
    %c0_i32_1 = arith.constant 0 : i32
    %c0_i32_2 = arith.constant 0 : i32
    return %c0_i32, %c0_i32_0, %c0_i32_1 : i32, i32, i32
  }
  func.func @transform_2(%arg0: i32) -> (i32, i32, i32) {
    %c0_i32 = arith.constant 0 : i32
    %c0_i32_0 = arith.constant 0 : i32
    %c0_i32_1 = arith.constant 0 : i32
    %c0_i32_2 = arith.constant 0 : i32
    return %c0_i32, %c0_i32_0, %c0_i32_1 : i32, i32, i32
  }
  func.func @transform_3(%arg0: i32) -> (i32, i32, i32) {
    %c0_i32 = arith.constant 0 : i32
    %c0_i32_0 = arith.constant 0 : i32
    %c0_i32_1 = arith.constant 0 : i32
    %c0_i32_2 = arith.constant 0 : i32
    return %c0_i32, %c0_i32_0, %c0_i32_1 : i32, i32, i32
  }
  func.func @transform_4(%arg0: i32) -> (i32, i32, i32) {
    %c0_i32 = arith.constant 0 : i32
    %c0_i32_0 = arith.constant 0 : i32
    %c0_i32_1 = arith.constant 0 : i32
    %c0_i32_2 = arith.constant 0 : i32
    return %c0_i32, %c0_i32_0, %c0_i32_1 : i32, i32, i32
  }
  func.func @transform_5(%arg0: i32) -> (i32, i32, i32) {
    %c0_i32 = arith.constant 0 : i32
    %c0_i32_0 = arith.constant 0 : i32
    %c0_i32_1 = arith.constant 0 : i32
    %c0_i32_2 = arith.constant 0 : i32
    return %c0_i32, %c0_i32_0, %c0_i32_1 : i32, i32, i32
  }
  func.func @transform_6(%arg0: i32) -> (i32, i32, i32) {
    %c0_i32 = arith.constant 0 : i32
    %c0_i32_0 = arith.constant 0 : i32
    %c0_i32_1 = arith.constant 0 : i32
    %c0_i32_2 = arith.constant 0 : i32
    return %c0_i32, %c0_i32_0, %c0_i32_1 : i32, i32, i32
  }
}

module attributes {stable_mosaic.version = 11 : i64} {
  func.func @_lc_add_relu_kernel(%arg0: i32, %arg1: memref<32x256xf32, #tpu.memory_space<vmem>>, %arg2: memref<32x256xf32, #tpu.memory_space<vmem>>, %arg3: memref<32x32xbf16, #tpu.memory_space<vmem>>, %arg4: memref<32x1xf32, #tpu.memory_space<vmem>>, %arg5: memref<32x256xf32, #tpu.memory_space<vmem>>) attributes {dimension_semantics = [#tpu.dimension_semantics<parallel>], iteration_bounds = array<i64: 2>, scalar_prefetch = 0 : i64, scratch_operands = 0 : i64, tpu.core_type = #tpu.core_type<tc>, window_params = [{transform_indices = @transform_0, window_bounds = array<i64: 32, 256>}, {transform_indices = @transform_1, window_bounds = array<i64: 32, 256>}, {pipeline_mode = #tpu.pipeline_mode<synchronous>, transform_indices = @transform_2, window_bounds = array<i64: 32, 32>}, {pipeline_mode = #tpu.pipeline_mode<synchronous>, transform_indices = @transform_3, window_bounds = array<i64: 32, 1>}, {transform_indices = @transform_4, window_bounds = array<i64: 32, 256>}]} {
    %c0 = arith.constant 0 : index
    %c0_0 = arith.constant 0 : index
    %0 = vector.load %arg3[%c0, %c0_0] : memref<32x32xbf16, #tpu.memory_space<vmem>>, vector<32x32xbf16>
    %c0_1 = arith.constant 0 : index
    %c0_2 = arith.constant 0 : index
    %1 = vector.load %arg1[%c0_1, %c0_2] : memref<32x256xf32, #tpu.memory_space<vmem>>, vector<32x256xf32>
    %2 = arith.truncf %1 : vector<32x256xf32> to vector<32x256xbf16>
    %cst = arith.constant dense<0.000000e+00> : vector<32x256xf32>
    %3 = tpu.matmul %0, %2, %cst {dimension_numbers = #tpu.dot_dimension_numbers<[1], [0], [0], [1], [0, 0, 1, 1], [], []>} : vector<32x32xbf16>, vector<32x256xbf16>, vector<32x256xf32> -> vector<32x256xf32>
    %c0_3 = arith.constant 0 : index
    %c0_4 = arith.constant 0 : index
    %4 = vector.load %arg4[%c0_3, %c0_4] : memref<32x1xf32, #tpu.memory_space<vmem>>, vector<32x1xf32>
    %5 = vector.broadcast %4 : vector<32x1xf32> to vector<32x256xf32>
    %6 = arith.addf %3, %5 : vector<32x256xf32>
    %c0_5 = arith.constant 0 : index
    %c0_6 = arith.constant 0 : index
    %7 = vector.load %arg2[%c0_5, %c0_6] : memref<32x256xf32, #tpu.memory_space<vmem>>, vector<32x256xf32>
    %8 = arith.addf %6, %7 : vector<32x256xf32>
    %cst_7 = arith.constant 0.000000e+00 : f32
    %9 = vector.broadcast %cst_7 : f32 to vector<32x256xf32>
    %10 = arith.maximumf %8, %9 : vector<32x256xf32>
    %c0_8 = arith.constant 0 : index
    %c0_9 = arith.constant 0 : index
    %11 = vector.load %arg5[%c0_8, %c0_9] : memref<32x256xf32, #tpu.memory_space<vmem>>, vector<32x256xf32>
    tpu.vector_store %arg5[%c0_8, %c0_9], %10 {strides = array<i32>} : memref<32x256xf32, #tpu.memory_space<vmem>>, vector<32x256xf32>,
    return
  }
  func.func @transform_0(%arg0: i32) -> (i32, i32) {
    %c0_i32 = arith.constant 0 : i32
    %c0_i32_0 = arith.constant 0 : i32
    return %c0_i32, %arg0 : i32, i32
  }
  func.func @transform_1(%arg0: i32) -> (i32, i32) {
    %c0_i32 = arith.constant 0 : i32
    %c0_i32_0 = arith.constant 0 : i32
    return %c0_i32, %arg0 : i32, i32
  }
  func.func @transform_2(%arg0: i32) -> (i32, i32) {
    %c0_i32 = arith.constant 0 : i32
    %c0_i32_0 = arith.constant 0 : i32
    %c0_i32_1 = arith.constant 0 : i32
    return %c0_i32, %c0_i32_0 : i32, i32
  }
  func.func @transform_3(%arg0: i32) -> (i32, i32) {
    %c0_i32 = arith.constant 0 : i32
    %c0_i32_0 = arith.constant 0 : i32
    %c0_i32_1 = arith.constant 0 : i32
    return %c0_i32, %c0_i32_0 : i32, i32
  }
  func.func @transform_4(%arg0: i32) -> (i32, i32) {
    %c0_i32 = arith.constant 0 : i32
    %c0_i32_0 = arith.constant 0 : i32
    return %c0_i32, %arg0 : i32, i32
  }
}

module attributes {stable_mosaic.version = 11 : i64} {
  func.func @_tail_q_kernel(%arg0: i32, %arg1: memref<32x256xf32, #tpu.memory_space<vmem>>, %arg2: memref<32x256xf32, #tpu.memory_space<vmem>>, %arg3: memref<32x32xbf16, #tpu.memory_space<vmem>>, %arg4: memref<32x1xf32, #tpu.memory_space<vmem>>, %arg5: memref<128x32xbf16, #tpu.memory_space<vmem>>, %arg6: memref<128x1xf32, #tpu.memory_space<vmem>>, %arg7: memref<1x128xbf16, #tpu.memory_space<vmem>>, %arg8: memref<1x1xf32, #tpu.memory_space<vmem>>, %arg9: memref<1x256xf32, #tpu.memory_space<vmem>>) attributes {dimension_semantics = [#tpu.dimension_semantics<parallel>], iteration_bounds = array<i64: 2>, scalar_prefetch = 0 : i64, scratch_operands = 0 : i64, tpu.core_type = #tpu.core_type<tc>, window_params = [{transform_indices = @transform_0, window_bounds = array<i64: 32, 256>}, {transform_indices = @transform_1, window_bounds = array<i64: 32, 256>}, {pipeline_mode = #tpu.pipeline_mode<synchronous>, transform_indices = @transform_2, window_bounds = array<i64: 32, 32>}, {pipeline_mode = #tpu.pipeline_mode<synchronous>, transform_indices = @transform_3, window_bounds = array<i64: 32, 1>}, {pipeline_mode = #tpu.pipeline_mode<synchronous>, transform_indices = @transform_4, window_bounds = array<i64: 128, 32>}, {pipeline_mode = #tpu.pipeline_mode<synchronous>, transform_indices = @transform_5, window_bounds = array<i64: 128, 1>}, {pipeline_mode = #tpu.pipeline_mode<synchronous>, transform_indices = @transform_6, window_bounds = array<i64: 1, 128>}, {pipeline_mode = #tpu.pipeline_mode<synchronous>, transform_indices = @transform_7, window_bounds = array<i64: 1, 1>}, {transform_indices = @transform_8, window_bounds = array<i64: 1, 256>}]} {
    %c0 = arith.constant 0 : index
    %c0_0 = arith.constant 0 : index
    %0 = vector.load %arg3[%c0, %c0_0] : memref<32x32xbf16, #tpu.memory_space<vmem>>, vector<32x32xbf16>
    %c0_1 = arith.constant 0 : index
    %c0_2 = arith.constant 0 : index
    %1 = vector.load %arg1[%c0_1, %c0_2] : memref<32x256xf32, #tpu.memory_space<vmem>>, vector<32x256xf32>
    %2 = arith.truncf %1 : vector<32x256xf32> to vector<32x256xbf16>
    %cst = arith.constant dense<0.000000e+00> : vector<32x256xf32>
    %3 = tpu.matmul %0, %2, %cst {dimension_numbers = #tpu.dot_dimension_numbers<[1], [0], [0], [1], [0, 0, 1, 1], [], []>} : vector<32x32xbf16>, vector<32x256xbf16>, vector<32x256xf32> -> vector<32x256xf32>
    %c0_3 = arith.constant 0 : index
    %c0_4 = arith.constant 0 : index
    %4 = vector.load %arg4[%c0_3, %c0_4] : memref<32x1xf32, #tpu.memory_space<vmem>>, vector<32x1xf32>
    %5 = vector.broadcast %4 : vector<32x1xf32> to vector<32x256xf32>
    %6 = arith.addf %3, %5 : vector<32x256xf32>
    %c0_5 = arith.constant 0 : index
    %c0_6 = arith.constant 0 : index
    %7 = vector.load %arg2[%c0_5, %c0_6] : memref<32x256xf32, #tpu.memory_space<vmem>>, vector<32x256xf32>
    %8 = arith.addf %6, %7 : vector<32x256xf32>
    %cst_7 = arith.constant 0.000000e+00 : f32
    %9 = vector.broadcast %cst_7 : f32 to vector<32x256xf32>
    %10 = arith.maximumf %8, %9 : vector<32x256xf32>
    %c0_8 = arith.constant 0 : index
    %c0_9 = arith.constant 0 : index
    %11 = vector.load %arg5[%c0_8, %c0_9] : memref<128x32xbf16, #tpu.memory_space<vmem>>, vector<128x32xbf16>
    %12 = arith.truncf %10 : vector<32x256xf32> to vector<32x256xbf16>
    %cst_10 = arith.constant dense<0.000000e+00> : vector<128x256xf32>
    %13 = tpu.matmul %11, %12, %cst_10 {dimension_numbers = #tpu.dot_dimension_numbers<[1], [0], [0], [1], [0, 0, 1, 1], [], []>} : vector<128x32xbf16>, vector<32x256xbf16>, vector<128x256xf32> -> vector<128x256xf32>
    %c0_11 = arith.constant 0 : index
    %c0_12 = arith.constant 0 : index
    %14 = vector.load %arg6[%c0_11, %c0_12] : memref<128x1xf32, #tpu.memory_space<vmem>>, vector<128x1xf32>
    %15 = vector.broadcast %14 : vector<128x1xf32> to vector<128x256xf32>
    %16 = arith.addf %13, %15 : vector<128x256xf32>
    %cst_13 = arith.constant 0.000000e+00 : f32
    %17 = vector.broadcast %cst_13 : f32 to vector<128x256xf32>
    %18 = arith.maximumf %16, %17 : vector<128x256xf32>
    %c0_14 = arith.constant 0 : index
    %c0_15 = arith.constant 0 : index
    %19 = vector.load %arg7[%c0_14, %c0_15] : memref<1x128xbf16, #tpu.memory_space<vmem>>, vector<1x128xbf16>
    %20 = arith.truncf %18 : vector<128x256xf32> to vector<128x256xbf16>
    %cst_16 = arith.constant dense<0.000000e+00> : vector<1x256xf32>
    %21 = tpu.matmul %19, %20, %cst_16 {dimension_numbers = #tpu.dot_dimension_numbers<[1], [0], [0], [1], [0, 0, 1, 1], [], []>} : vector<1x128xbf16>, vector<128x256xbf16>, vector<1x256xf32> -> vector<1x256xf32>
    %c0_17 = arith.constant 0 : index
    %c0_18 = arith.constant 0 : index
    %22 = vector.load %arg8[%c0_17, %c0_18] : memref<1x1xf32, #tpu.memory_space<vmem>>, vector<1x1xf32>
    %23 = vector.broadcast %22 : vector<1x1xf32> to vector<1x256xf32>
    %24 = arith.addf %21, %23 : vector<1x256xf32>
    %c0_19 = arith.constant 0 : index
    %c0_20 = arith.constant 0 : index
    %25 = vector.load %arg9[%c0_19, %c0_20] : memref<1x256xf32, #tpu.memory_space<vmem>>, vector<1x256xf32>
    tpu.vector_store %arg9[%c0_19, %c0_20], %24 {strides = array<i32>} : memref<1x256xf32, #tpu.memory_space<vmem>>, vector<1x256xf32>,
    return
  }
  func.func @transform_0(%arg0: i32) -> (i32, i32) {
    %c0_i32 = arith.constant 0 : i32
    %c0_i32_0 = arith.constant 0 : i32
    return %c0_i32, %arg0 : i32, i32
  }
  func.func @transform_1(%arg0: i32) -> (i32, i32) {
    %c0_i32 = arith.constant 0 : i32
    %c0_i32_0 = arith.constant 0 : i32
    return %c0_i32, %arg0 : i32, i32
  }
  func.func @transform_2(%arg0: i32) -> (i32, i32) {
    %c0_i32 = arith.constant 0 : i32
    %c0_i32_0 = arith.constant 0 : i32
    %c0_i32_1 = arith.constant 0 : i32
    return %c0_i32, %c0_i32_0 : i32, i32
  }
  func.func @transform_3(%arg0: i32) -> (i32, i32) {
    %c0_i32 = arith.constant 0 : i32
    %c0_i32_0 = arith.constant 0 : i32
    %c0_i32_1 = arith.constant 0 : i32
    return %c0_i32, %c0_i32_0 : i32, i32
  }
  func.func @transform_4(%arg0: i32) -> (i32, i32) {
    %c0_i32 = arith.constant 0 : i32
    %c0_i32_0 = arith.constant 0 : i32
    %c0_i32_1 = arith.constant 0 : i32
    return %c0_i32, %c0_i32_0 : i32, i32
  }
  func.func @transform_5(%arg0: i32) -> (i32, i32) {
    %c0_i32 = arith.constant 0 : i32
    %c0_i32_0 = arith.constant 0 : i32
    %c0_i32_1 = arith.constant 0 : i32
    return %c0_i32, %c0_i32_0 : i32, i32
  }
  func.func @transform_6(%arg0: i32) -> (i32, i32) {
    %c0_i32 = arith.constant 0 : i32
    %c0_i32_0 = arith.constant 0 : i32
    %c0_i32_1 = arith.constant 0 : i32
    return %c0_i32, %c0_i32_0 : i32, i32
  }
  func.func @transform_7(%arg0: i32) -> (i32, i32) {
    %c0_i32 = arith.constant 0 : i32
    %c0_i32_0 = arith.constant 0 : i32
    %c0_i32_1 = arith.constant 0 : i32
    return %c0_i32, %c0_i32_0 : i32, i32
  }
  func.func @transform_8(%arg0: i32) -> (i32, i32) {
    %c0_i32 = arith.constant 0 : i32
    %c0_i32_0 = arith.constant 0 : i32
    return %c0_i32, %arg0 : i32, i32
  }
}

</mosaic_0001>

<llo_original>
// kernel: fno2d_forward.9
$region0: #{fno2d_forward.9}
  #allocation0 [shape = 'u32[]', space=smem, size = 0x4, offset = 0x4, fixed_abs, tag = 'smem constant byte address 0x4 - core index']
  #allocation1 [shape = 'u32[144,128]{1,0:T(1,128)}', space=vmem, size = 0x12000, scoped, tag = 'internal scratch']
  %s0 = inlined_call_operand.vmem [shape: f32[16,512], index: 0, kind: input, shape index: {}]
  %s1 = inlined_call_operand.vmem [shape: bf16[32,16], index: 1, kind: input, shape index: {}]
  %s2 = inlined_call_operand.vmem [shape: f32[32,1], index: 2, kind: input, shape index: {}]
  %s3 = inlined_call_operand.vmem [shape: f32[32,512], index: 3, kind: output, shape index: {}]
  %s4 = sld [smem:[#allocation0]]
  $region87: #{fno2d_forward.9} parent=0
    _
  %s6 = ssub.s32 1, %s4
  %s7 = scalar_select 0, %s6, %s4
  $region1: #{fno2d_forward.9} parent=0
    #allocation2 [shape = 'u8[32768]{0}', space=vmem, size = 0x8000, scoped, tag = 'input window, operand 0']
    #allocation3 [shape = 'u8[65536]{0}', space=vmem, size = 0x10000, scoped, tag = 'output window, operand 0']
    loop: start=0, step=1, limit=4
    $region2: #{fno2d_forward.9} parent=1 // loop_pre_header
      _
    $region3: #{fno2d_forward.9} parent=1 // loop_header
      %s9 = sphi 0, %s13
      %p10 = scmp.ge.s32.totalorder %s9, 4
      %s19 = sphi 0, %s21
      %s22 = sphi 0, %s19
      %s23 = sphi 0, %s22
      %s39 = sphi 0, %s23
      %s43 = sphi 0, %s43
      %s45 = sphi 0, %s43
      %s46 = sphi 0, %s45
      %s60 = sphi 0, %s46
      %s64 = sphi 0, %s64
      %s66 = sphi 0, %s64
      %s67 = sphi 0, %s66
      %s81 = sphi 0, %s67
      %s87 = sphi 0, %s89
      %s90 = sphi 0, %s87
      %s91 = sphi 0, %s90
      %s107 = sphi 0, %s91
    $region4: #{fno2d_forward.9} parent=1 // loop_header_branch
      %12 = sbr.rel (%p10) target = $region8
    $region5: #{fno2d_forward.9} parent=1 // loop_body
      %s14 = ssub.s32 %s9, 1
      %s15 = ssub.s32 %s9, 2
      %s16 = sadd.s32 %s9, 1
      %s17 = ssub.s32 %s9, %s16
      %p18 = scmp.eq.s32.totalorder %s17, 0
      %s20 = sadd.s32 %s19, 1
      %s21 = scalar_select %p18, %s19, %s20
      %p24 = pneg %p18
      %p25 = scmp.eq.s32.totalorder %s9, 1
      %p26 = por %p24, %p25
      %p27 = scmp.ne.s32.totalorder %s19, %s22
      %p28 = scmp.eq.s32.totalorder %s9, 0
      %p29 = por %p27, %p28
      %p30 = scmp.ne.s32.totalorder %s19, %s22
      %p31 = scmp.eq.s32.totalorder %s14, 1
      %p32 = por %p30, %p31
      %p33 = scmp.ne.s32.totalorder %s22, %s23
      %p34 = scmp.eq.s32.totalorder %s14, 0
      %p35 = por %p33, %p34
      %p36 = scmp.ne.s32.totalorder %s22, %s23
      %p37 = scmp.eq.s32.totalorder %s15, 1
      %p38 = por %p36, %p37
      %p40 = scmp.ne.s32.totalorder %s23, %s39
      %p41 = scmp.eq.s32.totalorder %s15, 0
      %p42 = por %p40, %p41
      %s44 = sadd.s32 %s43, 1
      %p47 = scmp.eq.s32.totalorder %s9, 1
      %p48 = scmp.ne.s32.totalorder %s43, %s45
      %p49 = scmp.eq.s32.totalorder %s9, 0
      %p50 = por %p48, %p49
      %p51 = scmp.ne.s32.totalorder %s43, %s45
      %p52 = scmp.eq.s32.totalorder %s14, 1
      %p53 = por %p51, %p52
      %p54 = scmp.ne.s32.totalorder %s45, %s46
      %p55 = scmp.eq.s32.totalorder %s14, 0
      %p56 = por %p54, %p55
      %p57 = scmp.ne.s32.totalorder %s45, %s46
      %p58 = scmp.eq.s32.totalorder %s15, 1
      %p59 = por %p57, %p58
      %p61 = scmp.ne.s32.totalorder %s46, %s60
      %p62 = scmp.eq.s32.totalorder %s15, 0
      %p63 = por %p61, %p62
      %s65 = sadd.s32 %s64, 1
      %p68 = scmp.eq.s32.totalorder %s9, 1
      %p69 = scmp.ne.s32.totalorder %s64, %s66
      %p70 = scmp.eq.s32.totalorder %s9, 0
      %p71 = por %p69, %p70
      %p72 = scmp.ne.s32.totalorder %s64, %s66
      %p73 = scmp.eq.s32.totalorder %s14, 1
      %p74 = por %p72, %p73
      %p75 = scmp.ne.s32.totalorder %s66, %s67
      %p76 = scmp.eq.s32.totalorder %s14, 0
      %p77 = por %p75, %p76
      %p78 = scmp.ne.s32.totalorder %s66, %s67
      %p79 = scmp.eq.s32.totalorder %s15, 1
      %p80 = por %p78, %p79
      %p82 = scmp.ne.s32.totalorder %s67, %s81
      %p83 = scmp.eq.s32.totalorder %s15, 0
      %p84 = por %p82, %p83
      %s85 = ssub.s32 %s9, %s16
      %p86 = scmp.eq.s32.totalorder %s85, 0
      %s88 = sadd.s32 %s87, 1
      %s89 = scalar_select %p86, %s87, %s88
      %p92 = pneg %p86
      %p93 = scmp.eq.s32.totalorder %s9, 1
      %p94 = por %p92, %p93
      %p95 = scmp.ne.s32.totalorder %s87, %s90
      %p96 = scmp.eq.s32.totalorder %s9, 0
      %p97 = por %p95, %p96
      %p98 = scmp.ne.s32.totalorder %s87, %s90
      %p99 = scmp.eq.s32.totalorder %s14, 1
      %p100 = por %p98, %p99
      %p101 = scmp.ne.s32.totalorder %s90, %s91
      %p102 = scmp.eq.s32.totalorder %s14, 0
      %p103 = por %p101, %p102
      %p104 = scmp.ne.s32.totalorder %s90, %s91
      %p105 = scmp.eq.s32.totalorder %s15, 1
      %p106 = por %p104, %p105
      %p108 = scmp.ne.s32.totalorder %s91, %s107
      %p109 = scmp.eq.s32.totalorder %s15, 0
      %p110 = por %p108, %p109
      %p111 = scmp.le.s32.totalorder 1, %s9
      %p112 = scmp.lt.s32.totalorder %s9, 3
      %p113 = pnand %p111, %p112
      %p114 = pneg %p113
      // Predicated region
      $region9: #{fno2d_forward.9} parent=5 // pred_check
        _
      $region10: #{fno2d_forward.9} parent=5 // pred_check_branch
        %116 = sbr.rel (%p113) target = $region12
      $region11: #{fno2d_forward.9} parent=5 // pred_region
        %s117 = ssub.s32 %s9, 1
        // Predicated region
        $region13: #{fno2d_forward.9} parent=11 // pred_check
          %p118 = pneg %p56
        $region14: #{fno2d_forward.9} parent=11 // pred_check_branch
          %120 = sbr.rel (%p118) target = $region16
        $region15: #{fno2d_forward.9} parent=11 // pred_region
          _
        $region16: #{fno2d_forward.9} parent=11 // pred_fallthru
          _
        // Predicated region
        $region17: #{fno2d_forward.9} parent=11 // pred_check
          %p121 = pneg %p77
        $region18: #{fno2d_forward.9} parent=11 // pred_check_branch
          %123 = sbr.rel (%p121) target = $region20
        $region19: #{fno2d_forward.9} parent=11 // pred_region
          _
        $region20: #{fno2d_forward.9} parent=11 // pred_fallthru
          _
      $region12: #{fno2d_forward.9} parent=5 // pred_fallthru
        _
      %p124 = scmp.lt.s32.totalorder %s9, 2
      // Predicated region
      $region21: #{fno2d_forward.9} parent=5 // pred_check
        %p125 = pneg %p124
      $region22: #{fno2d_forward.9} parent=5 // pred_check_branch
        %127 = sbr.rel (%p125) target = $region24
      $region23: #{fno2d_forward.9} parent=5 // pred_region
        // Predicated region
        $region25: #{fno2d_forward.9} parent=23 // pred_check
          %p128 = pneg %p29
        $region26: #{fno2d_forward.9} parent=23 // pred_check_branch
          %130 = sbr.rel (%p128) target = $region28
        $region27: #{fno2d_forward.9} parent=23 // pred_region
          %s131 = sand.u32 %s19, 1
          %s132 = sand.u32 %s19, 1
          %s133 = smul.addr %s132, 32
          %s134 = scalar_lea.vmem [#allocation2], %s133
          %s135 = smul.u32 2, %s9
          %s136 = smul.addr %s135, 8
          %s137 = scalar_lea.vmem %s0, %s136
          // Predicated region
          $region29: #{fno2d_forward.9} parent=27 // pred_check
            _
          $region30: #{fno2d_forward.9} parent=27 // pred_check_branch
            %139 = sbr.rel (0) target = $region32
          $region31: #{fno2d_forward.9} parent=27 // pred_region
            // Predicated region
            $region33: #{fno2d_forward.9} parent=31 // pred_check
              _
            $region34: #{fno2d_forward.9} parent=31 // pred_check_branch
              %141 = sbr.rel (0) target = $region36
            $region35: #{fno2d_forward.9} parent=31 // pred_region
              loop: start=0, step=1, limit=1
              $region37: #{fno2d_forward.9} parent=35 // loop_pre_header
                _
              $region38: #{fno2d_forward.9} parent=35 // loop_header
                %s143 = sphi 0, %s147
                %p144 = scmp.ge.s32.totalorder %s143, 1
                %s148 = sphi %s137, %s137
                %s149 = sphi %s134, %s134
              $region39: #{fno2d_forward.9} parent=35 // loop_header_branch
                %146 = sbr.rel (%p144) target = $region43
              $region40: #{fno2d_forward.9} parent=35 // loop_body
                %v150 = vld [vmem:[%s148] sm:$0xff]
                %151 = vst [vmem:[%s149] sm:$0xff] %v150
                %v152 = vld [vmem:[%s148 + $0x8] sm:$0xff]
                %153 = vst [vmem:[%s149 + $0x8] sm:$0xff] %v152
                %v154 = vld [vmem:[%s148 + $0x20] sm:$0xff]
                %155 = vst [vmem:[%s149 + $0x10] sm:$0xff] %v154
                %v156 = vld [vmem:[%s148 + $0x28] sm:$0xff]
                %157 = vst [vmem:[%s149 + $0x18] sm:$0xff] %v156
              $region41: #{fno2d_forward.9} parent=35 // loop_footer
                %s147 = sadd.s32 1, %s143
              $region42: #{fno2d_forward.9} parent=35 // loop_footer_branch
                %142 = sbr.rel target = $region38
              $region43: #{fno2d_forward.9} parent=35 // loop_exit
                _
            $region36: #{fno2d_forward.9} parent=31 // pred_fallthru
              _
            // Predicated region
            $region44: #{fno2d_forward.9} parent=31 // pred_check
              _
            $region45: #{fno2d_forward.9} parent=31 // pred_check_branch
              %159 = sbr.rel target = $region47
            $region46: #{fno2d_forward.9} parent=31 // pred_region
              _
            $region47: #{fno2d_forward.9} parent=31 // pred_fallthru
              _
          $region32: #{fno2d_forward.9} parent=27 // pred_fallthru
            _
          %160 = vnop
        $region28: #{fno2d_forward.9} parent=23 // pred_fallthru
          _
      $region24: #{fno2d_forward.9} parent=5 // pred_fallthru
        _
      %p161 = scmp.le.s32.totalorder 1, %s9
      %p162 = scmp.lt.s32.totalorder %s9, 3
      %p163 = pnand %p161, %p162
      %p164 = pneg %p163
      // Predicated region
      $region48: #{fno2d_forward.9} parent=5 // pred_check
        _
      $region49: #{fno2d_forward.9} parent=5 // pred_check_branch
        %166 = sbr.rel (%p163) target = $region51
      $region50: #{fno2d_forward.9} parent=5 // pred_region
        %s167 = ssub.s32 %s9, 1
        %s168 = sand.u32 %s22, 1
        %s169 = sand.u32 %s22, 1
        %s170 = smul.addr %s169, 32
        %s171 = scalar_lea.vmem [#allocation2], %s170
        // Predicated region
        $region52: #{fno2d_forward.9} parent=50 // pred_check
          %p172 = pneg %p35
        $region53: #{fno2d_forward.9} parent=50 // pred_check_branch
          %174 = sbr.rel (%p172) target = $region55
        $region54: #{fno2d_forward.9} parent=50 // pred_region
          _
        $region55: #{fno2d_forward.9} parent=50 // pred_fallthru
          _
        %s175 = sand.u32 %s22, 1
        %s176 = sand.u32 %s22, 1
        %s177 = smul.addr %s176, 32
        %s178 = scalar_lea.vmem [#allocation2], %s177
        %p179 = pneg %p35
        %p180 = pneg %p32
        %p181 = pneg %p56
        %p182 = pneg %p53
        %p183 = pneg %p77
        %p184 = pneg %p74
        %p185 = pneg %p103
        %p186 = pneg %p100
        %s187 = sand.u32 %s90, 1
        %s188 = sand.u32 %s90, 1
        %s189 = smul.addr %s188, 64
        %s190 = scalar_lea.vmem [#allocation3], %s189
        %s191 = smul.u32 2, %s14
        %s192 = smul.u32 2, %s14
        %v194 = vld [vmem:[%s1] sm:$0xf]
        %v195 = vld [vmem:[%s1 + $0x4] sm:$0xf]
        %v196 = vld [vmem:[%s1 + $0x8] sm:$0xf]
        %v197 = vld [vmem:[%s1 + $0xc] sm:$0xf]
        %v198 = vld [vmem:[%s171] sm:$0xff]
        %v199 = vld [vmem:[%s171 + $0x8] sm:$0xff]
        %v200 = vld [vmem:[%s171 + $0x10] sm:$0xff]
        %v201 = vld [vmem:[%s171 + $0x18] sm:$0xff]
        %v202 = vpack.c.bf16 %v200, %v198
        %v203 = vpack.c.bf16 %v201, %v199
        %v204 = vld [vmem:[%s2] sm:$0xff]
        %v205 = vld [vmem:[%s2 + $0x8] sm:$0xff]
        %v206 = vld [vmem:[%s2 + $0x10] sm:$0xff]
        %v207 = vld [vmem:[%s2 + $0x18] sm:$0xff]
        %209 = vset.pattern.permute.xlu0 0
        %210 = vperm.xlu0 %209, %v204
        %v211 = vpop.permute.xlu0 %210
        %214 = vset.pattern.permute.xlu0 0
        %215 = vperm.xlu0 %214, %v205
        %v216 = vpop.permute.xlu0 %215
        %219 = vset.pattern.permute.xlu0 0
        %220 = vperm.xlu0 %219, %v206
        %v221 = vpop.permute.xlu0 %220
        %224 = vset.pattern.permute.xlu0 0
        %225 = vperm.xlu0 %224, %v207
        %v226 = vpop.permute.xlu0 %225
        %v232 = vunpack.c.l.b16 %v194
        %v233 = vunpack.c.l.b16 %v195
        %v234 = vunpack.c.l.b16 %v196
        %v235 = vunpack.c.l.b16 %v197
        %v236 = vpack.c.b16 %v233, %v232
        %v237 = vpack.c.b16 %v235, %v234
        %vm238 = vcmask 130048
        %v240 = vsel %vm238, %v236, 0
        %v243 = vsel %vm238, %v237, 0
        %245 = vmatprep.subr.bf16.mxu0 %v203
        %246 = vmatpush1.bf16.msra.mxu0 %v202
        %247 = vmatprep.subr.bf16.mxu0 0
        %248 = vmatpush1.bf16.msra.mxu0 0
        %249 = vmatprep.subr.bf16.mxu0 0
        %250 = vmatpush1.bf16.msra.mxu0 0
        %251 = vmatprep.subr.bf16.mxu0 0
        %252 = vmatpush1.bf16.msra.mxu0 0
        %253 = vmatprep.subr.bf16.mxu0 0
        %254 = vmatpush1.bf16.msra.mxu0 0
        %255 = vmatprep.subr.bf16.mxu0 0
        %256 = vmatpush1.bf16.msra.mxu0 0
        %257 = vmatprep.subr.bf16.mxu0 0
        %258 = vmatpush1.bf16.msra.mxu0 0
        %259 = vmatprep.subr.bf16.mxu0 0
        %260 = vmatpush1.bf16.msra.mxu0 0
        %261 = vmatprep.subr.bf16.mxu0 0
        %262 = vmatpush1.bf16.msra.mxu0 0
        %263 = vmatprep.subr.bf16.mxu0 0
        %264 = vmatpush1.bf16.msra.mxu0 0
        %265 = vmatprep.subr.bf16.mxu0 0
        %266 = vmatpush1.bf16.msra.mxu0 0
        %267 = vmatprep.subr.bf16.mxu0 0
        %268 = vmatpush1.bf16.msra.mxu0 0
        %269 = vmatprep.subr.bf16.mxu0 0
        %270 = vmatpush1.bf16.msra.mxu0 0
        %271 = vmatprep.subr.bf16.mxu0 0
        %272 = vmatpush1.bf16.msra.mxu0 0
        %273 = vmatprep.subr.bf16.mxu0 0
        %274 = vmatpush1.bf16.msra.mxu0 0
        %275 = vmatprep.subr.bf16.mxu0 0
        %276 = vmatpush1.bf16.msra.mxu0 0
        %277 = vmatprep.mubr.bf16.mxu0 0
        %278 = vmatmul.mubr.bf16.gmra.mrb[0].mxu0 %v240
        %v279 = vpop.f32.mrb[0].mxu0
        %v280 = vadd.f32 %v211, %v279
        %v281 = vpop.f32.mrb[0].mxu0
        %v282 = vadd.f32 %v211, %v281
        %v283 = vpop.f32.mrb[0].mxu0
        %v284 = vadd.f32 %v216, %v283
        %v285 = vpop.f32.mrb[0].mxu0
        %v286 = vadd.f32 %v216, %v285
        %287 = vmatprep.mubr.bf16.mxu0 0
        %288 = vmatmul.mubr.bf16.gmra.mrb[0].mxu0 %v243
        %v289 = vpop.f32.mrb[0].mxu0
        %v290 = vadd.f32 %v221, %v289
        %v291 = vpop.f32.mrb[0].mxu0
        %v292 = vadd.f32 %v221, %v291
        %v293 = vpop.f32.mrb[0].mxu0
        %v294 = vadd.f32 %v226, %v293
        %v295 = vpop.f32.mrb[0].mxu0
        %v296 = vadd.f32 %v226, %v295
        %297 = vdwg.mxu0
        %298 = vst [vmem:[%s190] sm:$0xff] %v280
        %299 = vst [vmem:[%s190 + $0x8] sm:$0xff] %v282
        %300 = vst [vmem:[%s190 + $0x10] sm:$0xff] %v284
        %301 = vst [vmem:[%s190 + $0x18] sm:$0xff] %v286
        %302 = vst [vmem:[%s190 + $0x20] sm:$0xff] %v290
        %303 = vst [vmem:[%s190 + $0x28] sm:$0xff] %v292
        %304 = vst [vmem:[%s190 + $0x30] sm:$0xff] %v294
        %305 = vst [vmem:[%s190 + $0x38] sm:$0xff] %v296
        %s306 = sand.u32 %s90, 1
        %s307 = sand.u32 %s90, 1
        %s308 = smul.addr %s307, 64
        %s309 = scalar_lea.vmem [#allocation3], %s308
        // Predicated region
        $region56: #{fno2d_forward.9} parent=50 // pred_check
          %p310 = pneg %p100
        $region57: #{fno2d_forward.9} parent=50 // pred_check_branch
          %312 = sbr.rel (%p310) target = $region59
        $region58: #{fno2d_forward.9} parent=50 // pred_region
          %s313 = smul.u32 2, %s14
          %s314 = smul.addr %s313, 8
          %s315 = scalar_lea.vmem %s3, %s314
          // Predicated region
          $region60: #{fno2d_forward.9} parent=58 // pred_check
            _
          $region61: #{fno2d_forward.9} parent=58 // pred_check_branch
            %317 = sbr.rel (0) target = $region63
          $region62: #{fno2d_forward.9} parent=58 // pred_region
            // Predicated region
            $region64: #{fno2d_forward.9} parent=62 // pred_check
              _
            $region65: #{fno2d_forward.9} parent=62 // pred_check_branch
              %319 = sbr.rel (0) target = $region67
            $region66: #{fno2d_forward.9} parent=62 // pred_region
              loop: start=0, step=1, limit=1
              $region68: #{fno2d_forward.9} parent=66 // loop_pre_header
                _
              $region69: #{fno2d_forward.9} parent=66 // loop_header
                %s321 = sphi 0, %s325
                %p322 = scmp.ge.s32.totalorder %s321, 1
                %s326 = sphi %s309, %s309
                %s327 = sphi %s315, %s315
              $region70: #{fno2d_forward.9} parent=66 // loop_header_branch
                %324 = sbr.rel (%p322) target = $region74
              $region71: #{fno2d_forward.9} parent=66 // loop_body
                %v328 = vld [vmem:[%s326] sm:$0xff]
                %329 = vst [vmem:[%s327] sm:$0xff] %v328
                %v330 = vld [vmem:[%s326 + $0x8] sm:$0xff]
                %331 = vst [vmem:[%s327 + $0x8] sm:$0xff] %v330
                %v332 = vld [vmem:[%s326 + $0x10] sm:$0xff]
                %333 = vst [vmem:[%s327 + $0x20] sm:$0xff] %v332
                %v334 = vld [vmem:[%s326 + $0x18] sm:$0xff]
                %335 = vst [vmem:[%s327 + $0x28] sm:$0xff] %v334
                %v336 = vld [vmem:[%s326 + $0x20] sm:$0xff]
                %337 = vst [vmem:[%s327 + $0x40] sm:$0xff] %v336
                %v338 = vld [vmem:[%s326 + $0x28] sm:$0xff]
                %339 = vst [vmem:[%s327 + $0x48] sm:$0xff] %v338
                %v340 = vld [vmem:[%s326 + $0x30] sm:$0xff]
                %341 = vst [vmem:[%s327 + $0x60] sm:$0xff] %v340
                %v342 = vld [vmem:[%s326 + $0x38] sm:$0xff]
                %343 = vst [vmem:[%s327 + $0x68] sm:$0xff] %v342
              $region72: #{fno2d_forward.9} parent=66 // loop_footer
                %s325 = sadd.s32 1, %s321
              $region73: #{fno2d_forward.9} parent=66 // loop_footer_branch
                %320 = sbr.rel target = $region69
              $region74: #{fno2d_forward.9} parent=66 // loop_exit
                _
            $region67: #{fno2d_forward.9} parent=62 // pred_fallthru
              _
            // Predicated region
            $region75: #{fno2d_forward.9} parent=62 // pred_check
              _
            $region76: #{fno2d_forward.9} parent=62 // pred_check_branch
              %345 = sbr.rel target = $region78
            $region77: #{fno2d_forward.9} parent=62 // pred_region
              _
            $region78: #{fno2d_forward.9} parent=62 // pred_fallthru
              _
          $region63: #{fno2d_forward.9} parent=58 // pred_fallthru
            _
          %346 = vnop
        $region59: #{fno2d_forward.9} parent=50 // pred_fallthru
          _
      $region51: #{fno2d_forward.9} parent=5 // pred_fallthru
        _
      %p347 = scmp.le.s32.totalorder 2, %s9
      // Predicated region
      $region79: #{fno2d_forward.9} parent=5 // pred_check
        %p348 = pneg %p347
      $region80: #{fno2d_forward.9} parent=5 // pred_check_branch
        %350 = sbr.rel (%p348) target = $region82
      $region81: #{fno2d_forward.9} parent=5 // pred_region
        %s351 = ssub.s32 %s9, 2
        // Predicated region
        $region83: #{fno2d_forward.9} parent=81 // pred_check
          %p352 = pneg %p106
        $region84: #{fno2d_forward.9} parent=81 // pred_check_branch
          %354 = sbr.rel (%p352) target = $region86
        $region85: #{fno2d_forward.9} parent=81 // pred_region
          %s355 = sand.u32 %s91, 1
          %s356 = sand.u32 %s91, 1
          %s357 = smul.addr %s356, 64
          %s358 = scalar_lea.vmem [#allocation3], %s357
        $region86: #{fno2d_forward.9} parent=81 // pred_fallthru
          _
      $region82: #{fno2d_forward.9} parent=5 // pred_fallthru
        _
    $region6: #{fno2d_forward.9} parent=1 // loop_footer
      %s13 = sadd.s32 1, %s9
    $region7: #{fno2d_forward.9} parent=1 // loop_footer_branch
      %8 = sbr.rel target = $region3
    $region8: #{fno2d_forward.9} parent=1 // loop_exit
      _

// kernel: fno2d_forward.11
$region0: #{fno2d_forward.11}
  #allocation0 [shape = 'u32[]', space=smem, size = 0x4, offset = 0x4, fixed_abs, tag = 'smem constant byte address 0x4 - core index']
  #allocation1 [shape = 'u32[144,128]{1,0:T(1,128)}', space=vmem, size = 0x12000, scoped, tag = 'internal scratch']
  %s0 = inlined_call_operand.vmem [shape: f32[32,512], index: 0, kind: input, shape index: {}]
  %s1 = inlined_call_operand.vmem [shape: f32[32,512], index: 1, kind: input, shape index: {}]
  %s2 = inlined_call_operand.vmem [shape: bf16[32,32], index: 2, kind: input, shape index: {}]
  %s3 = inlined_call_operand.vmem [shape: f32[32,1], index: 3, kind: input, shape index: {}]
  %s4 = inlined_call_operand.vmem [shape: f32[32,512], index: 4, kind: output, shape index: {}]
  %s5 = sld [smem:[#allocation0]]
  $region114: #{fno2d_forward.11} parent=0
    _
  %s7 = ssub.s32 1, %s5
  %s8 = scalar_select 0, %s7, %s5
  $region1: #{fno2d_forward.11} parent=0
    #allocation2 [shape = 'u8[65536]{0}', space=vmem, size = 0x10000, scoped, tag = 'input window, operand 0']
    #allocation3 [shape = 'u8[65536]{0}', space=vmem, size = 0x10000, scoped, tag = 'input window, operand 1']
    #allocation4 [shape = 'u8[65536]{0}', space=vmem, size = 0x10000, scoped, tag = 'output window, operand 0']
    loop: start=0, step=1, limit=4
    $region2: #{fno2d_forward.11} parent=1 // loop_pre_header
      _
    $region3: #{fno2d_forward.11} parent=1 // loop_header
      %s10 = sphi 0, %s14
      %p11 = scmp.ge.s32.totalorder %s10, 4
      %s20 = sphi 0, %s22
      %s23 = sphi 0, %s20
      %s24 = sphi 0, %s23
      %s40 = sphi 0, %s24
      %s46 = sphi 0, %s48
      %s49 = sphi 0, %s46
      %s50 = sphi 0, %s49
      %s66 = sphi 0, %s50
      %s70 = sphi 0, %s70
      %s72 = sphi 0, %s70
      %s73 = sphi 0, %s72
      %s87 = sphi 0, %s73
      %s91 = sphi 0, %s91
      %s93 = sphi 0, %s91
      %s94 = sphi 0, %s93
      %s108 = sphi 0, %s94
      %s114 = sphi 0, %s116
      %s117 = sphi 0, %s114
      %s118 = sphi 0, %s117
      %s134 = sphi 0, %s118
    $region4: #{fno2d_forward.11} parent=1 // loop_header_branch
      %13 = sbr.rel (%p11) target = $region8
    $region5: #{fno2d_forward.11} parent=1 // loop_body
      %s15 = ssub.s32 %s10, 1
      %s16 = ssub.s32 %s10, 2
      %s17 = sadd.s32 %s10, 1
      %s18 = ssub.s32 %s10, %s17
      %p19 = scmp.eq.s32.totalorder %s18, 0
      %s21 = sadd.s32 %s20, 1
      %s22 = scalar_select %p19, %s20, %s21
      %p25 = pneg %p19
      %p26 = scmp.eq.s32.totalorder %s10, 1
      %p27 = por %p25, %p26
      %p28 = scmp.ne.s32.totalorder %s20, %s23
      %p29 = scmp.eq.s32.totalorder %s10, 0
      %p30 = por %p28, %p29
      %p31 = scmp.ne.s32.totalorder %s20, %s23
      %p32 = scmp.eq.s32.totalorder %s15, 1
      %p33 = por %p31, %p32
      %p34 = scmp.ne.s32.totalorder %s23, %s24
      %p35 = scmp.eq.s32.totalorder %s15, 0
      %p36 = por %p34, %p35
      %p37 = scmp.ne.s32.totalorder %s23, %s24
      %p38 = scmp.eq.s32.totalorder %s16, 1
      %p39 = por %p37, %p38
      %p41 = scmp.ne.s32.totalorder %s24, %s40
      %p42 = scmp.eq.s32.totalorder %s16, 0
      %p43 = por %p41, %p42
      %s44 = ssub.s32 %s10, %s17
      %p45 = scmp.eq.s32.totalorder %s44, 0
      %s47 = sadd.s32 %s46, 1
      %s48 = scalar_select %p45, %s46, %s47
      %p51 = pneg %p45
      %p52 = scmp.eq.s32.totalorder %s10, 1
      %p53 = por %p51, %p52
      %p54 = scmp.ne.s32.totalorder %s46, %s49
      %p55 = scmp.eq.s32.totalorder %s10, 0
      %p56 = por %p54, %p55
      %p57 = scmp.ne.s32.totalorder %s46, %s49
      %p58 = scmp.eq.s32.totalorder %s15, 1
      %p59 = por %p57, %p58
      %p60 = scmp.ne.s32.totalorder %s49, %s50
      %p61 = scmp.eq.s32.totalorder %s15, 0
      %p62 = por %p60, %p61
      %p63 = scmp.ne.s32.totalorder %s49, %s50
      %p64 = scmp.eq.s32.totalorder %s16, 1
      %p65 = por %p63, %p64
      %p67 = scmp.ne.s32.totalorder %s50, %s66
      %p68 = scmp.eq.s32.totalorder %s16, 0
      %p69 = por %p67, %p68
      %s71 = sadd.s32 %s70, 1
      %p74 = scmp.eq.s32.totalorder %s10, 1
      %p75 = scmp.ne.s32.totalorder %s70, %s72
      %p76 = scmp.eq.s32.totalorder %s10, 0
      %p77 = por %p75, %p76
      %p78 = scmp.ne.s32.totalorder %s70, %s72
      %p79 = scmp.eq.s32.totalorder %s15, 1
      %p80 = por %p78, %p79
      %p81 = scmp.ne.s32.totalorder %s72, %s73
      %p82 = scmp.eq.s32.totalorder %s15, 0
      %p83 = por %p81, %p82
      %p84 = scmp.ne.s32.totalorder %s72, %s73
      %p85 = scmp.eq.s32.totalorder %s16, 1
      %p86 = por %p84, %p85
      %p88 = scmp.ne.s32.totalorder %s73, %s87
      %p89 = scmp.eq.s32.totalorder %s16, 0
      %p90 = por %p88, %p89
      %s92 = sadd.s32 %s91, 1
      %p95 = scmp.eq.s32.totalorder %s10, 1
      %p96 = scmp.ne.s32.totalorder %s91, %s93
      %p97 = scmp.eq.s32.totalorder %s10, 0
      %p98 = por %p96, %p97
      %p99 = scmp.ne.s32.totalorder %s91, %s93
      %p100 = scmp.eq.s32.totalorder %s15, 1
      %p101 = por %p99, %p100
      %p102 = scmp.ne.s32.totalorder %s93, %s94
      %p103 = scmp.eq.s32.totalorder %s15, 0
      %p104 = por %p102, %p103
      %p105 = scmp.ne.s32.totalorder %s93, %s94
      %p106 = scmp.eq.s32.totalorder %s16, 1
      %p107 = por %p105, %p106
      %p109 = scmp.ne.s32.totalorder %s94, %s108
      %p110 = scmp.eq.s32.totalorder %s16, 0
      %p111 = por %p109, %p110
      %s112 = ssub.s32 %s10, %s17
      %p113 = scmp.eq.s32.totalorder %s112, 0
      %s115 = sadd.s32 %s114, 1
      %s116 = scalar_select %p113, %s114, %s115
      %p119 = pneg %p113
      %p120 = scmp.eq.s32.totalorder %s10, 1
      %p121 = por %p119, %p120
      %p122 = scmp.ne.s32.totalorder %s114, %s117
      %p123 = scmp.eq.s32.totalorder %s10, 0
      %p124 = por %p122, %p123
      %p125 = scmp.ne.s32.totalorder %s114, %s117
      %p126 = scmp.eq.s32.totalorder %s15, 1
      %p127 = por %p125, %p126
      %p128 = scmp.ne.s32.totalorder %s117, %s118
      %p129 = scmp.eq.s32.totalorder %s15, 0
      %p130 = por %p128, %p129
      %p131 = scmp.ne.s32.totalorder %s117, %s118
      %p132 = scmp.eq.s32.totalorder %s16, 1
      %p133 = por %p131, %p132
      %p135 = scmp.ne.s32.totalorder %s118, %s134
      %p136 = scmp.eq.s32.totalorder %s16, 0
      %p137 = por %p135, %p136
      %p138 = scmp.le.s32.totalorder 1, %s10
      %p139 = scmp.lt.s32.totalorder %s10, 3
      %p140 = pnand %p138, %p139
      %p141 = pneg %p140
      // Predicated region
      $region9: #{fno2d_forward.11} parent=5 // pred_check
        _
      $region10: #{fno2d_forward.11} parent=5 // pred_check_branch
        %143 = sbr.rel (%p140) target = $region12
      $region11: #{fno2d_forward.11} parent=5 // pred_region
        %s144 = ssub.s32 %s10, 1
        // Predicated region
        $region13: #{fno2d_forward.11} parent=11 // pred_check
          %p145 = pneg %p83
        $region14: #{fno2d_forward.11} parent=11 // pred_check_branch
          %147 = sbr.rel (%p145) target = $region16
        $region15: #{fno2d_forward.11} parent=11 // pred_region
          _
        $region16: #{fno2d_forward.11} parent=11 // pred_fallthru
          _
        // Predicated region
        $region17: #{fno2d_forward.11} parent=11 // pred_check
          %p148 = pneg %p104
        $region18: #{fno2d_forward.11} parent=11 // pred_check_branch
          %150 = sbr.rel (%p148) target = $region20
        $region19: #{fno2d_forward.11} parent=11 // pred_region
          _
        $region20: #{fno2d_forward.11} parent=11 // pred_fallthru
          _
      $region12: #{fno2d_forward.11} parent=5 // pred_fallthru
        _
      %p151 = scmp.lt.s32.totalorder %s10, 2
      // Predicated region
      $region21: #{fno2d_forward.11} parent=5 // pred_check
        %p152 = pneg %p151
      $region22: #{fno2d_forward.11} parent=5 // pred_check_branch
        %154 = sbr.rel (%p152) target = $region24
      $region23: #{fno2d_forward.11} parent=5 // pred_region
        // Predicated region
        $region25: #{fno2d_forward.11} parent=23 // pred_check
          %p155 = pneg %p30
        $region26: #{fno2d_forward.11} parent=23 // pred_check_branch
          %157 = sbr.rel (%p155) target = $region28
        $region27: #{fno2d_forward.11} parent=23 // pred_region
          %s158 = sand.u32 %s20, 1
          %s159 = sand.u32 %s20, 1
          %s160 = smul.addr %s159, 64
          %s161 = scalar_lea.vmem [#allocation2], %s160
          %s162 = smul.u32 2, %s10
          %s163 = smul.addr %s162, 8
          %s164 = scalar_lea.vmem %s0, %s163
          // Predicated region
          $region29: #{fno2d_forward.11} parent=27 // pred_check
            _
          $region30: #{fno2d_forward.11} parent=27 // pred_check_branch
            %166 = sbr.rel (0) target = $region32
          $region31: #{fno2d_forward.11} parent=27 // pred_region
            // Predicated region
            $region33: #{fno2d_forward.11} parent=31 // pred_check
              _
            $region34: #{fno2d_forward.11} parent=31 // pred_check_branch
              %168 = sbr.rel (0) target = $region36
            $region35: #{fno2d_forward.11} parent=31 // pred_region
              loop: start=0, step=1, limit=1
              $region37: #{fno2d_forward.11} parent=35 // loop_pre_header
                _
              $region38: #{fno2d_forward.11} parent=35 // loop_header
                %s170 = sphi 0, %s174
                %p171 = scmp.ge.s32.totalorder %s170, 1
                %s175 = sphi %s164, %s164
                %s176 = sphi %s161, %s161
              $region39: #{fno2d_forward.11} parent=35 // loop_header_branch
                %173 = sbr.rel (%p171) target = $region43
              $region40: #{fno2d_forward.11} parent=35 // loop_body
                %v177 = vld [vmem:[%s175] sm:$0xff]
                %178 = vst [vmem:[%s176] sm:$0xff] %v177
                %v179 = vld [vmem:[%s175 + $0x8] sm:$0xff]
                %180 = vst [vmem:[%s176 + $0x8] sm:$0xff] %v179
                %v181 = vld [vmem:[%s175 + $0x20] sm:$0xff]
                %182 = vst [vmem:[%s176 + $0x10] sm:$0xff] %v181
                %v183 = vld [vmem:[%s175 + $0x28] sm:$0xff]
                %184 = vst [vmem:[%s176 + $0x18] sm:$0xff] %v183
                %v185 = vld [vmem:[%s175 + $0x40] sm:$0xff]
                %186 = vst [vmem:[%s176 + $0x20] sm:$0xff] %v185
                %v187 = vld [vmem:[%s175 + $0x48] sm:$0xff]
                %188 = vst [vmem:[%s176 + $0x28] sm:$0xff] %v187
                %v189 = vld [vmem:[%s175 + $0x60] sm:$0xff]
                %190 = vst [vmem:[%s176 + $0x30] sm:$0xff] %v189
                %v191 = vld [vmem:[%s175 + $0x68] sm:$0xff]
                %192 = vst [vmem:[%s176 + $0x38] sm:$0xff] %v191
              $region41: #{fno2d_forward.11} parent=35 // loop_footer
                %s174 = sadd.s32 1, %s170
              $region42: #{fno2d_forward.11} parent=35 // loop_footer_branch
                %169 = sbr.rel target = $region38
              $region43: #{fno2d_forward.11} parent=35 // loop_exit
                _
            $region36: #{fno2d_forward.11} parent=31 // pred_fallthru
              _
            // Predicated region
            $region44: #{fno2d_forward.11} parent=31 // pred_check
              _
            $region45: #{fno2d_forward.11} parent=31 // pred_check_branch
              %194 = sbr.rel target = $region47
            $region46: #{fno2d_forward.11} parent=31 // pred_region
              _
            $region47: #{fno2d_forward.11} parent=31 // pred_fallthru
              _
          $region32: #{fno2d_forward.11} parent=27 // pred_fallthru
            _
          %195 = vnop
        $region28: #{fno2d_forward.11} parent=23 // pred_fallthru
          _
        // Predicated region
        $region48: #{fno2d_forward.11} parent=23 // pred_check
          %p196 = pneg %p56
        $region49: #{fno2d_forward.11} parent=23 // pred_check_branch
          %198 = sbr.rel (%p196) target = $region51
        $region50: #{fno2d_forward.11} parent=23 // pred_region
          %s199 = sand.u32 %s46, 1
          %s200 = sand.u32 %s46, 1
          %s201 = smul.addr %s200, 64
          %s202 = scalar_lea.vmem [#allocation3], %s201
          %s203 = smul.u32 2, %s10
          %s204 = smul.addr %s203, 8
          %s205 = scalar_lea.vmem %s1, %s204
          // Predicated region
          $region52: #{fno2d_forward.11} parent=50 // pred_check
            _
          $region53: #{fno2d_forward.11} parent=50 // pred_check_branch
            %207 = sbr.rel (0) target = $region55
          $region54: #{fno2d_forward.11} parent=50 // pred_region
            // Predicated region
            $region56: #{fno2d_forward.11} parent=54 // pred_check
              _
            $region57: #{fno2d_forward.11} parent=54 // pred_check_branch
              %209 = sbr.rel (0) target = $region59
            $region58: #{fno2d_forward.11} parent=54 // pred_region
              loop: start=0, step=1, limit=1
              $region60: #{fno2d_forward.11} parent=58 // loop_pre_header
                _
              $region61: #{fno2d_forward.11} parent=58 // loop_header
                %s211 = sphi 0, %s215
                %p212 = scmp.ge.s32.totalorder %s211, 1
                %s216 = sphi %s205, %s205
                %s217 = sphi %s202, %s202
              $region62: #{fno2d_forward.11} parent=58 // loop_header_branch
                %214 = sbr.rel (%p212) target = $region66
              $region63: #{fno2d_forward.11} parent=58 // loop_body
                %v218 = vld [vmem:[%s216] sm:$0xff]
                %219 = vst [vmem:[%s217] sm:$0xff] %v218
                %v220 = vld [vmem:[%s216 + $0x8] sm:$0xff]
                %221 = vst [vmem:[%s217 + $0x8] sm:$0xff] %v220
                %v222 = vld [vmem:[%s216 + $0x20] sm:$0xff]
                %223 = vst [vmem:[%s217 + $0x10] sm:$0xff] %v222
                %v224 = vld [vmem:[%s216 + $0x28] sm:$0xff]
                %225 = vst [vmem:[%s217 + $0x18] sm:$0xff] %v224
                %v226 = vld [vmem:[%s216 + $0x40] sm:$0xff]
                %227 = vst [vmem:[%s217 + $0x20] sm:$0xff] %v226
                %v228 = vld [vmem:[%s216 + $0x48] sm:$0xff]
                %229 = vst [vmem:[%s217 + $0x28] sm:$0xff] %v228
                %v230 = vld [vmem:[%s216 + $0x60] sm:$0xff]
                %231 = vst [vmem:[%s217 + $0x30] sm:$0xff] %v230
                %v232 = vld [vmem:[%s216 + $0x68] sm:$0xff]
                %233 = vst [vmem:[%s217 + $0x38] sm:$0xff] %v232
              $region64: #{fno2d_forward.11} parent=58 // loop_footer
                %s215 = sadd.s32 1, %s211
              $region65: #{fno2d_forward.11} parent=58 // loop_footer_branch
                %210 = sbr.rel target = $region61
              $region66: #{fno2d_forward.11} parent=58 // loop_exit
                _
            $region59: #{fno2d_forward.11} parent=54 // pred_fallthru
              _
            // Predicated region
            $region67: #{fno2d_forward.11} parent=54 // pred_check
              _
            $region68: #{fno2d_forward.11} parent=54 // pred_check_branch
              %235 = sbr.rel target = $region70
            $region69: #{fno2d_forward.11} parent=54 // pred_region
              _
            $region70: #{fno2d_forward.11} parent=54 // pred_fallthru
              _
          $region55: #{fno2d_forward.11} parent=50 // pred_fallthru
            _
          %236 = vnop
        $region51: #{fno2d_forward.11} parent=23 // pred_fallthru
          _
      $region24: #{fno2d_forward.11} parent=5 // pred_fallthru
        _
      %p237 = scmp.le.s32.totalorder 1, %s10
      %p238 = scmp.lt.s32.totalorder %s10, 3
      %p239 = pnand %p237, %p238
      %p240 = pneg %p239
      // Predicated region
      $region71: #{fno2d_forward.11} parent=5 // pred_check
        _
      $region72: #{fno2d_forward.11} parent=5 // pred_check_branch
        %242 = sbr.rel (%p239) target = $region74
      $region73: #{fno2d_forward.11} parent=5 // pred_region
        %s243 = ssub.s32 %s10, 1
        %s244 = sand.u32 %s23, 1
        %s245 = sand.u32 %s23, 1
        %s246 = smul.addr %s245, 64
        %s247 = scalar_lea.vmem [#allocation2], %s246
        // Predicated region
        $region75: #{fno2d_forward.11} parent=73 // pred_check
          %p248 = pneg %p36
        $region76: #{fno2d_forward.11} parent=73 // pred_check_branch
          %250 = sbr.rel (%p248) target = $region78
        $region77: #{fno2d_forward.11} parent=73 // pred_region
          _
        $region78: #{fno2d_forward.11} parent=73 // pred_fallthru
          _
        %s251 = sand.u32 %s49, 1
        %s252 = sand.u32 %s49, 1
        %s253 = smul.addr %s252, 64
        %s254 = scalar_lea.vmem [#allocation3], %s253
        // Predicated region
        $region79: #{fno2d_forward.11} parent=73 // pred_check
          %p255 = pneg %p62
        $region80: #{fno2d_forward.11} parent=73 // pred_check_branch
          %257 = sbr.rel (%p255) target = $region82
        $region81: #{fno2d_forward.11} parent=73 // pred_region
          _
        $region82: #{fno2d_forward.11} parent=73 // pred_fallthru
          _
        %s258 = sand.u32 %s23, 1
        %s259 = sand.u32 %s23, 1
        %s260 = smul.addr %s259, 64
        %s261 = scalar_lea.vmem [#allocation2], %s260
        %p262 = pneg %p36
        %p263 = pneg %p33
        %s264 = sand.u32 %s49, 1
        %s265 = sand.u32 %s49, 1
        %s266 = smul.addr %s265, 64
        %s267 = scalar_lea.vmem [#allocation3], %s266
        %p268 = pneg %p62
        %p269 = pneg %p59
        %p270 = pneg %p83
        %p271 = pneg %p80
        %p272 = pneg %p104
        %p273 = pneg %p101
        %p274 = pneg %p130
        %p275 = pneg %p127
        %s276 = sand.u32 %s117, 1
        %s277 = sand.u32 %s117, 1
        %s278 = smul.addr %s277, 64
        %s279 = scalar_lea.vmem [#allocation4], %s278
        %s280 = smul.u32 2, %s15
        %s281 = smul.u32 2, %s15
        %s282 = smul.u32 2, %s15
        %v284 = vld [vmem:[%s2] sm:$0xf]
        %v285 = vld [vmem:[%s2 + $0x4] sm:$0xf]
        %v286 = vld [vmem:[%s2 + $0x8] sm:$0xf]
        %v287 = vld [vmem:[%s2 + $0xc] sm:$0xf]
        %v288 = vld [vmem:[%s247] sm:$0xff]
        %v289 = vld [vmem:[%s247 + $0x8] sm:$0xff]
        %v290 = vld [vmem:[%s247 + $0x10] sm:$0xff]
        %v291 = vld [vmem:[%s247 + $0x18] sm:$0xff]
        %v292 = vld [vmem:[%s247 + $0x20] sm:$0xff]
        %v293 = vld [vmem:[%s247 + $0x28] sm:$0xff]
        %v294 = vld [vmem:[%s247 + $0x30] sm:$0xff]
        %v295 = vld [vmem:[%s247 + $0x38] sm:$0xff]
        %v296 = vpack.c.bf16 %v290, %v288
        %v297 = vpack.c.bf16 %v291, %v289
        %v298 = vpack.c.bf16 %v294, %v292
        %v299 = vpack.c.bf16 %v295, %v293
        %v300 = vld [vmem:[%s3] sm:$0xff]
        %v301 = vld [vmem:[%s3 + $0x8] sm:$0xff]
        %v302 = vld [vmem:[%s3 + $0x10] sm:$0xff]
        %v303 = vld [vmem:[%s3 + $0x18] sm:$0xff]
        %305 = vset.pattern.permute.xlu0 0
        %306 = vperm.xlu0 %305, %v300
        %v307 = vpop.permute.xlu0 %306
        %310 = vset.pattern.permute.xlu0 0
        %311 = vperm.xlu0 %310, %v301
        %v312 = vpop.permute.xlu0 %311
        %315 = vset.pattern.permute.xlu0 0
        %316 = vperm.xlu0 %315, %v302
        %v317 = vpop.permute.xlu0 %316
        %320 = vset.pattern.permute.xlu0 0
        %321 = vperm.xlu0 %320, %v303
        %v322 = vpop.permute.xlu0 %321
        %v328 = vunpack.c.l.b16 %v284
        %v329 = vunpack.c.l.b16 %v285
        %v330 = vunpack.c.l.b16 %v286
        %v331 = vunpack.c.l.b16 %v287
        %v332 = vpack.c.b16 %v329, %v328
        %v333 = vpack.c.b16 %v331, %v330
        %vm334 = vcmask 261120
        %v336 = vsel %vm334, %v332, 0
        %v339 = vsel %vm334, %v333, 0
        %341 = vmatprep.subr.bf16.mxu0 %v297
        %342 = vmatpush1.bf16.msra.mxu0 %v296
        %343 = vmatprep.subr.bf16.mxu0 %v299
        %344 = vmatpush1.bf16.msra.mxu0 %v298
        %345 = vmatprep.subr.bf16.mxu0 0
        %346 = vmatpush1.bf16.msra.mxu0 0
        %347 = vmatprep.subr.bf16.mxu0 0
        %348 = vmatpush1.bf16.msra.mxu0 0
        %349 = vmatprep.subr.bf16.mxu0 0
        %350 = vmatpush1.bf16.msra.mxu0 0
        %351 = vmatprep.subr.bf16.mxu0 0
        %352 = vmatpush1.bf16.msra.mxu0 0
        %353 = vmatprep.subr.bf16.mxu0 0
        %354 = vmatpush1.bf16.msra.mxu0 0
        %355 = vmatprep.subr.bf16.mxu0 0
        %356 = vmatpush1.bf16.msra.mxu0 0
        %357 = vmatprep.subr.bf16.mxu0 0
        %358 = vmatpush1.bf16.msra.mxu0 0
        %359 = vmatprep.subr.bf16.mxu0 0
        %360 = vmatpush1.bf16.msra.mxu0 0
        %361 = vmatprep.subr.bf16.mxu0 0
        %362 = vmatpush1.bf16.msra.mxu0 0
        %363 = vmatprep.subr.bf16.mxu0 0
        %364 = vmatpush1.bf16.msra.mxu0 0
        %365 = vmatprep.subr.bf16.mxu0 0
        %366 = vmatpush1.bf16.msra.mxu0 0
        %367 = vmatprep.subr.bf16.mxu0 0
        %368 = vmatpush1.bf16.msra.mxu0 0
        %369 = vmatprep.subr.bf16.mxu0 0
        %370 = vmatpush1.bf16.msra.mxu0 0
        %371 = vmatprep.subr.bf16.mxu0 0
        %372 = vmatpush1.bf16.msra.mxu0 0
        %373 = vmatprep.mubr.bf16.mxu0 0
        %374 = vmatmul.mubr.bf16.gmra.mrb[0].mxu0 %v336
        %v375 = vpop.f32.mrb[0].mxu0
        %v376 = vadd.f32 %v307, %v375
        %v377 = vpop.f32.mrb[0].mxu0
        %v378 = vadd.f32 %v307, %v377
        %v379 = vpop.f32.mrb[0].mxu0
        %v380 = vadd.f32 %v312, %v379
        %v381 = vpop.f32.mrb[0].mxu0
        %v382 = vadd.f32 %v312, %v381
        %383 = vmatprep.mubr.bf16.mxu0 0
        %384 = vmatmul.mubr.bf16.gmra.mrb[0].mxu0 %v339
        %v385 = vpop.f32.mrb[0].mxu0
        %v386 = vadd.f32 %v317, %v385
        %v387 = vpop.f32.mrb[0].mxu0
        %v388 = vadd.f32 %v317, %v387
        %v389 = vpop.f32.mrb[0].mxu0
        %v390 = vadd.f32 %v322, %v389
        %v391 = vpop.f32.mrb[0].mxu0
        %v392 = vadd.f32 %v322, %v391
        %393 = vdwg.mxu0
        %v394 = vld [vmem:[%s254] sm:$0xff]
        %v395 = vld [vmem:[%s254 + $0x8] sm:$0xff]
        %v396 = vld [vmem:[%s254 + $0x10] sm:$0xff]
        %v397 = vld [vmem:[%s254 + $0x18] sm:$0xff]
        %v398 = vld [vmem:[%s254 + $0x20] sm:$0xff]
        %v399 = vld [vmem:[%s254 + $0x28] sm:$0xff]
        %v400 = vld [vmem:[%s254 + $0x30] sm:$0xff]
        %v401 = vld [vmem:[%s254 + $0x38] sm:$0xff]
        %v402 = vadd.f32 %v376, %v394
        %v403 = vadd.f32 %v378, %v395
        %v404 = vadd.f32 %v380, %v396
        %v405 = vadd.f32 %v382, %v397
        %v406 = vadd.f32 %v386, %v398
        %v407 = vadd.f32 %v388, %v399
        %v408 = vadd.f32 %v390, %v400
        %v409 = vadd.f32 %v392, %v401
        %v410 = vmax.f32 %v402, 0.0
        %v411 = vmax.f32 %v403, 0.0
        %v412 = vmax.f32 %v404, 0.0
        %v413 = vmax.f32 %v405, 0.0
        %v414 = vmax.f32 %v406, 0.0
        %v415 = vmax.f32 %v407, 0.0
        %v416 = vmax.f32 %v408, 0.0
        %v417 = vmax.f32 %v409, 0.0
        %418 = vst [vmem:[%s279] sm:$0xff] %v410
        %419 = vst [vmem:[%s279 + $0x8] sm:$0xff] %v411
        %420 = vst [vmem:[%s279 + $0x10] sm:$0xff] %v412
        %421 = vst [vmem:[%s279 + $0x18] sm:$0xff] %v413
        %422 = vst [vmem:[%s279 + $0x20] sm:$0xff] %v414
        %423 = vst [vmem:[%s279 + $0x28] sm:$0xff] %v415
        %424 = vst [vmem:[%s279 + $0x30] sm:$0xff] %v416
        %425 = vst [vmem:[%s279 + $0x38] sm:$0xff] %v417
        %s426 = sand.u32 %s117, 1
        %s427 = sand.u32 %s117, 1
        %s428 = smul.addr %s427, 64
        %s429 = scalar_lea.vmem [#allocation4], %s428
        // Predicated region
        $region83: #{fno2d_forward.11} parent=73 // pred_check
          %p430 = pneg %p127
        $region84: #{fno2d_forward.11} parent=73 // pred_check_branch
          %432 = sbr.rel (%p430) target = $region86
        $region85: #{fno2d_forward.11} parent=73 // pred_region
          %s433 = smul.u32 2, %s15
          %s434 = smul.addr %s433, 8
          %s435 = scalar_lea.vmem %s4, %s434
          // Predicated region
          $region87: #{fno2d_forward.11} parent=85 // pred_check
            _
          $region88: #{fno2d_forward.11} parent=85 // pred_check_branch
            %437 = sbr.rel (0) target = $region90
          $region89: #{fno2d_forward.11} parent=85 // pred_region
            // Predicated region
            $region91: #{fno2d_forward.11} parent=89 // pred_check
              _
            $region92: #{fno2d_forward.11} parent=89 // pred_check_branch
              %439 = sbr.rel (0) target = $region94
            $region93: #{fno2d_forward.11} parent=89 // pred_region
              loop: start=0, step=1, limit=1
              $region95: #{fno2d_forward.11} parent=93 // loop_pre_header
                _
              $region96: #{fno2d_forward.11} parent=93 // loop_header
                %s441 = sphi 0, %s445
                %p442 = scmp.ge.s32.totalorder %s441, 1
                %s446 = sphi %s429, %s429
                %s447 = sphi %s435, %s435
              $region97: #{fno2d_forward.11} parent=93 // loop_header_branch
                %444 = sbr.rel (%p442) target = $region101
              $region98: #{fno2d_forward.11} parent=93 // loop_body
                %v448 = vld [vmem:[%s446] sm:$0xff]
                %449 = vst [vmem:[%s447] sm:$0xff] %v448
                %v450 = vld [vmem:[%s446 + $0x8] sm:$0xff]
                %451 = vst [vmem:[%s447 + $0x8] sm:$0xff] %v450
                %v452 = vld [vmem:[%s446 + $0x10] sm:$0xff]
                %453 = vst [vmem:[%s447 + $0x20] sm:$0xff] %v452
                %v454 = vld [vmem:[%s446 + $0x18] sm:$0xff]
                %455 = vst [vmem:[%s447 + $0x28] sm:$0xff] %v454
                %v456 = vld [vmem:[%s446 + $0x20] sm:$0xff]
                %457 = vst [vmem:[%s447 + $0x40] sm:$0xff] %v456
                %v458 = vld [vmem:[%s446 + $0x28] sm:$0xff]
                %459 = vst [vmem:[%s447 + $0x48] sm:$0xff] %v458
                %v460 = vld [vmem:[%s446 + $0x30] sm:$0xff]
                %461 = vst [vmem:[%s447 + $0x60] sm:$0xff] %v460
                %v462 = vld [vmem:[%s446 + $0x38] sm:$0xff]
                %463 = vst [vmem:[%s447 + $0x68] sm:$0xff] %v462
              $region99: #{fno2d_forward.11} parent=93 // loop_footer
                %s445 = sadd.s32 1, %s441
              $region100: #{fno2d_forward.11} parent=93 // loop_footer_branch
                %440 = sbr.rel target = $region96
              $region101: #{fno2d_forward.11} parent=93 // loop_exit
                _
            $region94: #{fno2d_forward.11} parent=89 // pred_fallthru
              _
            // Predicated region
            $region102: #{fno2d_forward.11} parent=89 // pred_check
              _
            $region103: #{fno2d_forward.11} parent=89 // pred_check_branch
              %465 = sbr.rel target = $region105
            $region104: #{fno2d_forward.11} parent=89 // pred_region
              _
            $region105: #{fno2d_forward.11} parent=89 // pred_fallthru
              _
          $region90: #{fno2d_forward.11} parent=85 // pred_fallthru
            _
          %466 = vnop
        $region86: #{fno2d_forward.11} parent=73 // pred_fallthru
          _
      $region74: #{fno2d_forward.11} parent=5 // pred_fallthru
        _
      %p467 = scmp.le.s32.totalorder 2, %s10
      // Predicated region
      $region106: #{fno2d_forward.11} parent=5 // pred_check
        %p468 = pneg %p467
      $region107: #{fno2d_forward.11} parent=5 // pred_check_branch
        %470 = sbr.rel (%p468) target = $region109
      $region108: #{fno2d_forward.11} parent=5 // pred_region
        %s471 = ssub.s32 %s10, 2
        // Predicated region
        $region110: #{fno2d_forward.11} parent=108 // pred_check
          %p472 = pneg %p133
        $region111: #{fno2d_forward.11} parent=108 // pred_check_branch
          %474 = sbr.rel (%p472) target = $region113
        $region112: #{fno2d_forward.11} parent=108 // pred_region
          %s475 = sand.u32 %s118, 1
          %s476 = sand.u32 %s118, 1
          %s477 = smul.addr %s476, 64
          %s478 = scalar_lea.vmem [#allocation4], %s477
        $region113: #{fno2d_forward.11} parent=108 // pred_fallthru
          _
      $region109: #{fno2d_forward.11} parent=5 // pred_fallthru
        _
    $region6: #{fno2d_forward.11} parent=1 // loop_footer
      %s14 = sadd.s32 1, %s10
    $region7: #{fno2d_forward.11} parent=1 // loop_footer_branch
      %9 = sbr.rel target = $region3
    $region8: #{fno2d_forward.11} parent=1 // loop_exit
      _

// kernel: squeeze.1
$region0: #{squeeze.1}
  %s0 = inlined_call_operand.vmem [shape: f32[512], index: 0, kind: input, shape index: {}]
  %s1 = inlined_call_operand.hbm [shape: f32[2,16,16,1], index: 1, kind: output, shape index: {}]
  $region1: #{squeeze.1} parent=0
    #allocation0 [shape = 'u8[16384]{0}', space=vmem, size = 0x4000, scoped, tag = 'operand span for operand 1']
    #allocation1 [shape = 's32[1]{0}', space=sflag, size = 0x4, scoped, tag = 'scoped memory for squeeze.1']
    #allocation2 [shape = 'u8[4096]{0}', space=vmem, size = 0x1000, scoped, tag = 'scoped mem for input reshape']
    %2 = vsyncpa [#allocation1], 0
    %s4 = sshllo.u32 0, 4
    %v5 = vld [vmem:[%s0] sm:%s4]
    %6 = vst [vmem:[#allocation2] sm:%s4] %v5
    %v7 = vld [vmem:[#allocation2] sm:$0xf]
    %vm8 = vcmask 130048
    %9 = vst.msk [vmem:[#allocation0] ss:$8 sm:$0xf] %vm8, %v7
    %v10 = vld [vmem:[#allocation2] sm:$0xf]
    %11 = vrot.lane.b32.xlu0 %v10, 112
    %v12 = vpop.permute.xlu0 %11
    %vm13 = vcmask 130048
    %s14 = scalar_lea.vmem [#allocation0], 1
    %15 = vst.msk [vmem:[%s14] ss:$8 sm:$0xf] %vm13, %v12
    %v16 = vld [vmem:[#allocation2] sm:$0xf]
    %17 = vrot.lane.b32.xlu0 %v16, 96
    %v18 = vpop.permute.xlu0 %17
    %vm19 = vcmask 130048
    %s20 = scalar_lea.vmem [#allocation0], 2
    %21 = vst.msk [vmem:[%s20] ss:$8 sm:$0xf] %vm19, %v18
    %v22 = vld [vmem:[#allocation2] sm:$0xf]
    %23 = vrot.lane.b32.xlu0 %v22, 80
    %v24 = vpop.permute.xlu0 %23
    %vm25 = vcmask 130048
    %s26 = scalar_lea.vmem [#allocation0], 3
    %27 = vst.msk [vmem:[%s26] ss:$8 sm:$0xf] %vm25, %v24
    %v28 = vld [vmem:[#allocation2] sm:$0xf]
    %29 = vrot.lane.b32.xlu0 %v28, 64
    %v30 = vpop.permute.xlu0 %29
    %vm31 = vcmask 130048
    %s32 = scalar_lea.vmem [#allocation0], 4
    %33 = vst.msk [vmem:[%s32] ss:$8 sm:$0xf] %vm31, %v30
    %v34 = vld [vmem:[#allocation2] sm:$0xf]
    %35 = vrot.lane.b32.xlu0 %v34, 48
    %v36 = vpop.permute.xlu0 %35
    %vm37 = vcmask 130048
    %s38 = scalar_lea.vmem [#allocation0], 5
    %39 = vst.msk [vmem:[%s38] ss:$8 sm:$0xf] %vm37, %v36
    %v40 = vld [vmem:[#allocation2] sm:$0xf]
    %41 = vrot.lane.b32.xlu0 %v40, 32
    %v42 = vpop.permute.xlu0 %41
    %vm43 = vcmask 130048
    %s44 = scalar_lea.vmem [#allocation0], 6
    %45 = vst.msk [vmem:[%s44] ss:$8 sm:$0xf] %vm43, %v42
    %v46 = vld [vmem:[#allocation2] sm:$0xf]
    %47 = vrot.lane.b32.xlu0 %v46, 16
    %v48 = vpop.permute.xlu0 %47
    %vm49 = vcmask 130048
    %s50 = scalar_lea.vmem [#allocation0], 7
    %51 = vst.msk [vmem:[%s50] ss:$8 sm:$0xf] %vm49, %v48
    %s53 = ssub.s32 512, 512
    %54 = vsyncadd [#allocation1], %s53
    %s56 = sshll.u32 [#allocation0], 4
    %s57 = int_to_ptr.vmem [resolvable:$true] %s56
    %59 = dma.vmem_to_hbm [thread:$0]  %s57, 512, %s1, [#allocation1]
    %60 = dma.done [#allocation1], 512
    %61 = vsyncpa [#allocation1], 1

// kernel: fno2d_forward.17
$region0: #{fno2d_forward.17}
  #allocation0 [shape = 'u32[]', space=smem, size = 0x4, offset = 0x4, fixed_abs, tag = 'smem constant byte address 0x4 - core index']
  #allocation1 [shape = 'u32[144,128]{1,0:T(1,128)}', space=vmem, size = 0x12000, scoped, tag = 'internal scratch']
  #allocation2 [shape = 'f32[1,1]{1,0:T(1,128)S(1)}', space=vmem, size = 0x200, scoped, tag = 'scoped memory for fno2d_forward.17']
  %s0 = inlined_call_operand.vmem [shape: f32[32,512], index: 0, kind: input, shape index: {}]
  %s1 = inlined_call_operand.vmem [shape: f32[32,512], index: 1, kind: input, shape index: {}]
  %s2 = inlined_call_operand.vmem [shape: bf16[32,32], index: 2, kind: input, shape index: {}]
  %s3 = inlined_call_operand.vmem [shape: f32[32,1], index: 3, kind: input, shape index: {}]
  %s4 = inlined_call_operand.vmem [shape: bf16[128,32], index: 4, kind: input, shape index: {}]
  %s5 = inlined_call_operand.vmem [shape: f32[128,1], index: 5, kind: input, shape index: {}]
  %s6 = inlined_call_operand.vmem [shape: bf16[1,128], index: 6, kind: input, shape index: {}]
  %s7 = inlined_call_operand.<no memory space> [shape: f32[1,1], index: 7, kind: input, shape index: {}]
  %s8 = inlined_call_operand.vmem [shape: f32[1,512], index: 8, kind: output, shape index: {}]
  %s9 = sld [smem:[#allocation0]]
  $region111: #{fno2d_forward.17} parent=0
    _
  %s11 = ssub.s32 1, %s9
  %s12 = scalar_select 0, %s11, %s9
  %v13 = vstv %s7
  %14 = vst [vmem:[#allocation2] sm:$0x1] %v13
  $region1: #{fno2d_forward.17} parent=0
    #allocation3 [shape = 'u8[65536]{0}', space=vmem, size = 0x10000, scoped, tag = 'input window, operand 0']
    #allocation4 [shape = 'u8[65536]{0}', space=vmem, size = 0x10000, scoped, tag = 'input window, operand 1']
    loop: start=0, step=1, limit=4
    $region2: #{fno2d_forward.17} parent=1 // loop_pre_header
      _
    $region3: #{fno2d_forward.17} parent=1 // loop_header
      %s16 = sphi 0, %s20
      %p17 = scmp.ge.s32.totalorder %s16, 4
      %s26 = sphi 0, %s28
      %s29 = sphi 0, %s26
      %s30 = sphi 0, %s29
      %s46 = sphi 0, %s30
      %s52 = sphi 0, %s54
      %s55 = sphi 0, %s52
      %s56 = sphi 0, %s55
      %s72 = sphi 0, %s56
      %s76 = sphi 0, %s76
      %s78 = sphi 0, %s76
      %s79 = sphi 0, %s78
      %s93 = sphi 0, %s79
      %s97 = sphi 0, %s97
      %s99 = sphi 0, %s97
      %s100 = sphi 0, %s99
      %s114 = sphi 0, %s100
      %s118 = sphi 0, %s118
      %s120 = sphi 0, %s118
      %s121 = sphi 0, %s120
      %s135 = sphi 0, %s121
      %s139 = sphi 0, %s139
      %s141 = sphi 0, %s139
      %s142 = sphi 0, %s141
      %s156 = sphi 0, %s142
      %s160 = sphi 0, %s160
      %s162 = sphi 0, %s160
      %s163 = sphi 0, %s162
      %s177 = sphi 0, %s163
      %s181 = sphi 0, %s181
      %s183 = sphi 0, %s181
      %s184 = sphi 0, %s183
      %s198 = sphi 0, %s184
      %s204 = sphi 0, %s206
      %s207 = sphi 0, %s204
      %s208 = sphi 0, %s207
      %s224 = sphi 0, %s208
    $region4: #{fno2d_forward.17} parent=1 // loop_header_branch
      %19 = sbr.rel (%p17) target = $region8
    $region5: #{fno2d_forward.17} parent=1 // loop_body
      %s21 = ssub.s32 %s16, 1
      %s22 = ssub.s32 %s16, 2
      %s23 = sadd.s32 %s16, 1
      %s24 = ssub.s32 %s16, %s23
      %p25 = scmp.eq.s32.totalorder %s24, 0
      %s27 = sadd.s32 %s26, 1
      %s28 = scalar_select %p25, %s26, %s27
      %p31 = pneg %p25
      %p32 = scmp.eq.s32.totalorder %s16, 1
      %p33 = por %p31, %p32
      %p34 = scmp.ne.s32.totalorder %s26, %s29
      %p35 = scmp.eq.s32.totalorder %s16, 0
      %p36 = por %p34, %p35
      %p37 = scmp.ne.s32.totalorder %s26, %s29
      %p38 = scmp.eq.s32.totalorder %s21, 1
      %p39 = por %p37, %p38
      %p40 = scmp.ne.s32.totalorder %s29, %s30
      %p41 = scmp.eq.s32.totalorder %s21, 0
      %p42 = por %p40, %p41
      %p43 = scmp.ne.s32.totalorder %s29, %s30
      %p44 = scmp.eq.s32.totalorder %s22, 1
      %p45 = por %p43, %p44
      %p47 = scmp.ne.s32.totalorder %s30, %s46
      %p48 = scmp.eq.s32.totalorder %s22, 0
      %p49 = por %p47, %p48
      %s50 = ssub.s32 %s16, %s23
      %p51 = scmp.eq.s32.totalorder %s50, 0
      %s53 = sadd.s32 %s52, 1
      %s54 = scalar_select %p51, %s52, %s53
      %p57 = pneg %p51
      %p58 = scmp.eq.s32.totalorder %s16, 1
      %p59 = por %p57, %p58
      %p60 = scmp.ne.s32.totalorder %s52, %s55
      %p61 = scmp.eq.s32.totalorder %s16, 0
      %p62 = por %p60, %p61
      %p63 = scmp.ne.s32.totalorder %s52, %s55
      %p64 = scmp.eq.s32.totalorder %s21, 1
      %p65 = por %p63, %p64
      %p66 = scmp.ne.s32.totalorder %s55, %s56
      %p67 = scmp.eq.s32.totalorder %s21, 0
      %p68 = por %p66, %p67
      %p69 = scmp.ne.s32.totalorder %s55, %s56
      %p70 = scmp.eq.s32.totalorder %s22, 1
      %p71 = por %p69, %p70
      %p73 = scmp.ne.s32.totalorder %s56, %s72
      %p74 = scmp.eq.s32.totalorder %s22, 0
      %p75 = por %p73, %p74
      %s77 = sadd.s32 %s76, 1
      %p80 = scmp.eq.s32.totalorder %s16, 1
      %p81 = scmp.ne.s32.totalorder %s76, %s78
      %p82 = scmp.eq.s32.totalorder %s16, 0
      %p83 = por %p81, %p82
      %p84 = scmp.ne.s32.totalorder %s76, %s78
      %p85 = scmp.eq.s32.totalorder %s21, 1
      %p86 = por %p84, %p85
      %p87 = scmp.ne.s32.totalorder %s78, %s79
      %p88 = scmp.eq.s32.totalorder %s21, 0
      %p89 = por %p87, %p88
      %p90 = scmp.ne.s32.totalorder %s78, %s79
      %p91 = scmp.eq.s32.totalorder %s22, 1
      %p92 = por %p90, %p91
      %p94 = scmp.ne.s32.totalorder %s79, %s93
      %p95 = scmp.eq.s32.totalorder %s22, 0
      %p96 = por %p94, %p95
      %s98 = sadd.s32 %s97, 1
      %p101 = scmp.eq.s32.totalorder %s16, 1
      %p102 = scmp.ne.s32.totalorder %s97, %s99
      %p103 = scmp.eq.s32.totalorder %s16, 0
      %p104 = por %p102, %p103
      %p105 = scmp.ne.s32.totalorder %s97, %s99
      %p106 = scmp.eq.s32.totalorder %s21, 1
      %p107 = por %p105, %p106
      %p108 = scmp.ne.s32.totalorder %s99, %s100
      %p109 = scmp.eq.s32.totalorder %s21, 0
      %p110 = por %p108, %p109
      %p111 = scmp.ne.s32.totalorder %s99, %s100
      %p112 = scmp.eq.s32.totalorder %s22, 1
      %p113 = por %p111, %p112
      %p115 = scmp.ne.s32.totalorder %s100, %s114
      %p116 = scmp.eq.s32.totalorder %s22, 0
      %p117 = por %p115, %p116
      %s119 = sadd.s32 %s118, 1
      %p122 = scmp.eq.s32.totalorder %s16, 1
      %p123 = scmp.ne.s32.totalorder %s118, %s120
      %p124 = scmp.eq.s32.totalorder %s16, 0
      %p125 = por %p123, %p124
      %p126 = scmp.ne.s32.totalorder %s118, %s120
      %p127 = scmp.eq.s32.totalorder %s21, 1
      %p128 = por %p126, %p127
      %p129 = scmp.ne.s32.totalorder %s120, %s121
      %p130 = scmp.eq.s32.totalorder %s21, 0
      %p131 = por %p129, %p130
      %p132 = scmp.ne.s32.totalorder %s120, %s121
      %p133 = scmp.eq.s32.totalorder %s22, 1
      %p134 = por %p132, %p133
      %p136 = scmp.ne.s32.totalorder %s121, %s135
      %p137 = scmp.eq.s32.totalorder %s22, 0
      %p138 = por %p136, %p137
      %s140 = sadd.s32 %s139, 1
      %p143 = scmp.eq.s32.totalorder %s16, 1
      %p144 = scmp.ne.s32.totalorder %s139, %s141
      %p145 = scmp.eq.s32.totalorder %s16, 0
      %p146 = por %p144, %p145
      %p147 = scmp.ne.s32.totalorder %s139, %s141
      %p148 = scmp.eq.s32.totalorder %s21, 1
      %p149 = por %p147, %p148
      %p150 = scmp.ne.s32.totalorder %s141, %s142
      %p151 = scmp.eq.s32.totalorder %s21, 0
      %p152 = por %p150, %p151
      %p153 = scmp.ne.s32.totalorder %s141, %s142
      %p154 = scmp.eq.s32.totalorder %s22, 1
      %p155 = por %p153, %p154
      %p157 = scmp.ne.s32.totalorder %s142, %s156
      %p158 = scmp.eq.s32.totalorder %s22, 0
      %p159 = por %p157, %p158
      %s161 = sadd.s32 %s160, 1
      %p164 = scmp.eq.s32.totalorder %s16, 1
      %p165 = scmp.ne.s32.totalorder %s160, %s162
      %p166 = scmp.eq.s32.totalorder %s16, 0
      %p167 = por %p165, %p166
      %p168 = scmp.ne.s32.totalorder %s160, %s162
      %p169 = scmp.eq.s32.totalorder %s21, 1
      %p170 = por %p168, %p169
      %p171 = scmp.ne.s32.totalorder %s162, %s163
      %p172 = scmp.eq.s32.totalorder %s21, 0
      %p173 = por %p171, %p172
      %p174 = scmp.ne.s32.totalorder %s162, %s163
      %p175 = scmp.eq.s32.totalorder %s22, 1
      %p176 = por %p174, %p175
      %p178 = scmp.ne.s32.totalorder %s163, %s177
      %p179 = scmp.eq.s32.totalorder %s22, 0
      %p180 = por %p178, %p179
      %s182 = sadd.s32 %s181, 1
      %p185 = scmp.eq.s32.totalorder %s16, 1
      %p186 = scmp.ne.s32.totalorder %s181, %s183
      %p187 = scmp.eq.s32.totalorder %s16, 0
      %p188 = por %p186, %p187
      %p189 = scmp.ne.s32.totalorder %s181, %s183
      %p190 = scmp.eq.s32.totalorder %s21, 1
      %p191 = por %p189, %p190
      %p192 = scmp.ne.s32.totalorder %s183, %s184
      %p193 = scmp.eq.s32.totalorder %s21, 0
      %p194 = por %p192, %p193
      %p195 = scmp.ne.s32.totalorder %s183, %s184
      %p196 = scmp.eq.s32.totalorder %s22, 1
      %p197 = por %p195, %p196
      %p199 = scmp.ne.s32.totalorder %s184, %s198
      %p200 = scmp.eq.s32.totalorder %s22, 0
      %p201 = por %p199, %p200
      %s202 = ssub.s32 %s16, %s23
      %p203 = scmp.eq.s32.totalorder %s202, 0
      %s205 = sadd.s32 %s204, 1
      %s206 = scalar_select %p203, %s204, %s205
      %p209 = pneg %p203
      %p210 = scmp.eq.s32.totalorder %s16, 1
      %p211 = por %p209, %p210
      %p212 = scmp.ne.s32.totalorder %s204, %s207
      %p213 = scmp.eq.s32.totalorder %s16, 0
      %p214 = por %p212, %p213
      %p215 = scmp.ne.s32.totalorder %s204, %s207
      %p216 = scmp.eq.s32.totalorder %s21, 1
      %p217 = por %p215, %p216
      %p218 = scmp.ne.s32.totalorder %s207, %s208
      %p219 = scmp.eq.s32.totalorder %s21, 0
      %p220 = por %p218, %p219
      %p221 = scmp.ne.s32.totalorder %s207, %s208
      %p222 = scmp.eq.s32.totalorder %s22, 1
      %p223 = por %p221, %p222
      %p225 = scmp.ne.s32.totalorder %s208, %s224
      %p226 = scmp.eq.s32.totalorder %s22, 0
      %p227 = por %p225, %p226
      %p228 = scmp.le.s32.totalorder 1, %s16
      %p229 = scmp.lt.s32.totalorder %s16, 3
      %p230 = pnand %p228, %p229
      %p231 = pneg %p230
      // Predicated region
      $region9: #{fno2d_forward.17} parent=5 // pred_check
        _
      $region10: #{fno2d_forward.17} parent=5 // pred_check_branch
        %233 = sbr.rel (%p230) target = $region12
      $region11: #{fno2d_forward.17} parent=5 // pred_region
        %s234 = ssub.s32 %s16, 1
        // Predicated region
        $region13: #{fno2d_forward.17} parent=11 // pred_check
          %p235 = pneg %p89
        $region14: #{fno2d_forward.17} parent=11 // pred_check_branch
          %237 = sbr.rel (%p235) target = $region16
        $region15: #{fno2d_forward.17} parent=11 // pred_region
          _
        $region16: #{fno2d_forward.17} parent=11 // pred_fallthru
          _
        // Predicated region
        $region17: #{fno2d_forward.17} parent=11 // pred_check
          %p238 = pneg %p110
        $region18: #{fno2d_forward.17} parent=11 // pred_check_branch
          %240 = sbr.rel (%p238) target = $region20
        $region19: #{fno2d_forward.17} parent=11 // pred_region
          _
        $region20: #{fno2d_forward.17} parent=11 // pred_fallthru
          _
        // Predicated region
        $region21: #{fno2d_forward.17} parent=11 // pred_check
          %p241 = pneg %p131
        $region22: #{fno2d_forward.17} parent=11 // pred_check_branch
          %243 = sbr.rel (%p241) target = $region24
        $region23: #{fno2d_forward.17} parent=11 // pred_region
          _
        $region24: #{fno2d_forward.17} parent=11 // pred_fallthru
          _
        // Predicated region
        $region25: #{fno2d_forward.17} parent=11 // pred_check
          %p244 = pneg %p152
        $region26: #{fno2d_forward.17} parent=11 // pred_check_branch
          %246 = sbr.rel (%p244) target = $region28
        $region27: #{fno2d_forward.17} parent=11 // pred_region
          _
        $region28: #{fno2d_forward.17} parent=11 // pred_fallthru
          _
        // Predicated region
        $region29: #{fno2d_forward.17} parent=11 // pred_check
          %p247 = pneg %p173
        $region30: #{fno2d_forward.17} parent=11 // pred_check_branch
          %249 = sbr.rel (%p247) target = $region32
        $region31: #{fno2d_forward.17} parent=11 // pred_region
          _
        $region32: #{fno2d_forward.17} parent=11 // pred_fallthru
          _
        // Predicated region
        $region33: #{fno2d_forward.17} parent=11 // pred_check
          %p250 = pneg %p194
        $region34: #{fno2d_forward.17} parent=11 // pred_check_branch
          %252 = sbr.rel (%p250) target = $region36
        $region35: #{fno2d_forward.17} parent=11 // pred_region
          _
        $region36: #{fno2d_forward.17} parent=11 // pred_fallthru
          _
      $region12: #{fno2d_forward.17} parent=5 // pred_fallthru
        _
      %p253 = scmp.lt.s32.totalorder %s16, 2
      // Predicated region
      $region37: #{fno2d_forward.17} parent=5 // pred_check
        %p254 = pneg %p253
      $region38: #{fno2d_forward.17} parent=5 // pred_check_branch
        %256 = sbr.rel (%p254) target = $region40
      $region39: #{fno2d_forward.17} parent=5 // pred_region
        // Predicated region
        $region41: #{fno2d_forward.17} parent=39 // pred_check
          %p257 = pneg %p36
        $region42: #{fno2d_forward.17} parent=39 // pred_check_branch
          %259 = sbr.rel (%p257) target = $region44
        $region43: #{fno2d_forward.17} parent=39 // pred_region
          %s260 = sand.u32 %s26, 1
          %s261 = sand.u32 %s26, 1
          %s262 = smul.addr %s261, 64
          %s263 = scalar_lea.vmem [#allocation3], %s262
          %s264 = smul.u32 2, %s16
          %s265 = smul.addr %s264, 8
          %s266 = scalar_lea.vmem %s0, %s265
          // Predicated region
          $region45: #{fno2d_forward.17} parent=43 // pred_check
            _
          $region46: #{fno2d_forward.17} parent=43 // pred_check_branch
            %268 = sbr.rel (0) target = $region48
          $region47: #{fno2d_forward.17} parent=43 // pred_region
            // Predicated region
            $region49: #{fno2d_forward.17} parent=47 // pred_check
              _
            $region50: #{fno2d_forward.17} parent=47 // pred_check_branch
              %270 = sbr.rel (0) target = $region52
            $region51: #{fno2d_forward.17} parent=47 // pred_region
              loop: start=0, step=1, limit=1
              $region53: #{fno2d_forward.17} parent=51 // loop_pre_header
                _
              $region54: #{fno2d_forward.17} parent=51 // loop_header
                %s272 = sphi 0, %s276
                %p273 = scmp.ge.s32.totalorder %s272, 1
                %s277 = sphi %s266, %s266
                %s278 = sphi %s263, %s263
              $region55: #{fno2d_forward.17} parent=51 // loop_header_branch
                %275 = sbr.rel (%p273) target = $region59
              $region56: #{fno2d_forward.17} parent=51 // loop_body
                %v279 = vld [vmem:[%s277] sm:$0xff]
                %280 = vst [vmem:[%s278] sm:$0xff] %v279
                %v281 = vld [vmem:[%s277 + $0x8] sm:$0xff]
                %282 = vst [vmem:[%s278 + $0x8] sm:$0xff] %v281
                %v283 = vld [vmem:[%s277 + $0x20] sm:$0xff]
                %284 = vst [vmem:[%s278 + $0x10] sm:$0xff] %v283
                %v285 = vld [vmem:[%s277 + $0x28] sm:$0xff]
                %286 = vst [vmem:[%s278 + $0x18] sm:$0xff] %v285
                %v287 = vld [vmem:[%s277 + $0x40] sm:$0xff]
                %288 = vst [vmem:[%s278 + $0x20] sm:$0xff] %v287
                %v289 = vld [vmem:[%s277 + $0x48] sm:$0xff]
                %290 = vst [vmem:[%s278 + $0x28] sm:$0xff] %v289
                %v291 = vld [vmem:[%s277 + $0x60] sm:$0xff]
                %292 = vst [vmem:[%s278 + $0x30] sm:$0xff] %v291
                %v293 = vld [vmem:[%s277 + $0x68] sm:$0xff]
                %294 = vst [vmem:[%s278 + $0x38] sm:$0xff] %v293
              $region57: #{fno2d_forward.17} parent=51 // loop_footer
                %s276 = sadd.s32 1, %s272
              $region58: #{fno2d_forward.17} parent=51 // loop_footer_branch
                %271 = sbr.rel target = $region54
              $region59: #{fno2d_forward.17} parent=51 // loop_exit
                _
            $region52: #{fno2d_forward.17} parent=47 // pred_fallthru
              _
            // Predicated region
            $region60: #{fno2d_forward.17} parent=47 // pred_check
              _
            $region61: #{fno2d_forward.17} parent=47 // pred_check_branch
              %296 = sbr.rel target = $region63
            $region62: #{fno2d_forward.17} parent=47 // pred_region
              _
            $region63: #{fno2d_forward.17} parent=47 // pred_fallthru
              _
          $region48: #{fno2d_forward.17} parent=43 // pred_fallthru
            _
          %297 = vnop
        $region44: #{fno2d_forward.17} parent=39 // pred_fallthru
          _
        // Predicated region
        $region64: #{fno2d_forward.17} parent=39 // pred_check
          %p298 = pneg %p62
        $region65: #{fno2d_forward.17} parent=39 // pred_check_branch
          %300 = sbr.rel (%p298) target = $region67
        $region66: #{fno2d_forward.17} parent=39 // pred_region
          %s301 = sand.u32 %s52, 1
          %s302 = sand.u32 %s52, 1
          %s303 = smul.addr %s302, 64
          %s304 = scalar_lea.vmem [#allocation4], %s303
          %s305 = smul.u32 2, %s16
          %s306 = smul.addr %s305, 8
          %s307 = scalar_lea.vmem %s1, %s306
          // Predicated region
          $region68: #{fno2d_forward.17} parent=66 // pred_check
            _
          $region69: #{fno2d_forward.17} parent=66 // pred_check_branch
            %309 = sbr.rel (0) target = $region71
          $region70: #{fno2d_forward.17} parent=66 // pred_region
            // Predicated region
            $region72: #{fno2d_forward.17} parent=70 // pred_check
              _
            $region73: #{fno2d_forward.17} parent=70 // pred_check_branch
              %311 = sbr.rel (0) target = $region75
            $region74: #{fno2d_forward.17} parent=70 // pred_region
              loop: start=0, step=1, limit=1
              $region76: #{fno2d_forward.17} parent=74 // loop_pre_header
                _
              $region77: #{fno2d_forward.17} parent=74 // loop_header
                %s313 = sphi 0, %s317
                %p314 = scmp.ge.s32.totalorder %s313, 1
                %s318 = sphi %s307, %s307
                %s319 = sphi %s304, %s304
              $region78: #{fno2d_forward.17} parent=74 // loop_header_branch
                %316 = sbr.rel (%p314) target = $region82
              $region79: #{fno2d_forward.17} parent=74 // loop_body
                %v320 = vld [vmem:[%s318] sm:$0xff]
                %321 = vst [vmem:[%s319] sm:$0xff] %v320
                %v322 = vld [vmem:[%s318 + $0x8] sm:$0xff]
                %323 = vst [vmem:[%s319 + $0x8] sm:$0xff] %v322
                %v324 = vld [vmem:[%s318 + $0x20] sm:$0xff]
                %325 = vst [vmem:[%s319 + $0x10] sm:$0xff] %v324
                %v326 = vld [vmem:[%s318 + $0x28] sm:$0xff]
                %327 = vst [vmem:[%s319 + $0x18] sm:$0xff] %v326
                %v328 = vld [vmem:[%s318 + $0x40] sm:$0xff]
                %329 = vst [vmem:[%s319 + $0x20] sm:$0xff] %v328
                %v330 = vld [vmem:[%s318 + $0x48] sm:$0xff]
                %331 = vst [vmem:[%s319 + $0x28] sm:$0xff] %v330
                %v332 = vld [vmem:[%s318 + $0x60] sm:$0xff]
                %333 = vst [vmem:[%s319 + $0x30] sm:$0xff] %v332
                %v334 = vld [vmem:[%s318 + $0x68] sm:$0xff]
                %335 = vst [vmem:[%s319 + $0x38] sm:$0xff] %v334
              $region80: #{fno2d_forward.17} parent=74 // loop_footer
                %s317 = sadd.s32 1, %s313
              $region81: #{fno2d_forward.17} parent=74 // loop_footer_branch
                %312 = sbr.rel target = $region77
              $region82: #{fno2d_forward.17} parent=74 // loop_exit
                _
            $region75: #{fno2d_forward.17} parent=70 // pred_fallthru
              _
            // Predicated region
            $region83: #{fno2d_forward.17} parent=70 // pred_check
              _
            $region84: #{fno2d_forward.17} parent=70 // pred_check_branch
              %337 = sbr.rel target = $region86
            $region85: #{fno2d_forward.17} parent=70 // pred_region
              _
            $region86: #{fno2d_forward.17} parent=70 // pred_fallthru
              _
          $region71: #{fno2d_forward.17} parent=66 // pred_fallthru
            _
          %338 = vnop
        $region67: #{fno2d_forward.17} parent=39 // pred_fallthru
          _
      $region40: #{fno2d_forward.17} parent=5 // pred_fallthru
        _
      %p339 = scmp.le.s32.totalorder 1, %s16
      %p340 = scmp.lt.s32.totalorder %s16, 3
      %p341 = pnand %p339, %p340
      %p342 = pneg %p341
      // Predicated region
      $region87: #{fno2d_forward.17} parent=5 // pred_check
        _
      $region88: #{fno2d_forward.17} parent=5 // pred_check_branch
        %344 = sbr.rel (%p341) target = $region90
      $region89: #{fno2d_forward.17} parent=5 // pred_region
        %s345 = ssub.s32 %s16, 1
        %s346 = sand.u32 %s29, 1
        %s347 = sand.u32 %s29, 1
        %s348 = smul.addr %s347, 64
        %s349 = scalar_lea.vmem [#allocation3], %s348
        // Predicated region
        $region91: #{fno2d_forward.17} parent=89 // pred_check
          %p350 = pneg %p42
        $region92: #{fno2d_forward.17} parent=89 // pred_check_branch
          %352 = sbr.rel (%p350) target = $region94
        $region93: #{fno2d_forward.17} parent=89 // pred_region
          _
        $region94: #{fno2d_forward.17} parent=89 // pred_fallthru
          _
        %s353 = sand.u32 %s55, 1
        %s354 = sand.u32 %s55, 1
        %s355 = smul.addr %s354, 64
        %s356 = scalar_lea.vmem [#allocation4], %s355
        // Predicated region
        $region95: #{fno2d_forward.17} parent=89 // pred_check
          %p357 = pneg %p68
        $region96: #{fno2d_forward.17} parent=89 // pred_check_branch
          %359 = sbr.rel (%p357) target = $region98
        $region97: #{fno2d_forward.17} parent=89 // pred_region
          _
        $region98: #{fno2d_forward.17} parent=89 // pred_fallthru
          _
        %s360 = sand.u32 %s29, 1
        %s361 = sand.u32 %s29, 1
        %s362 = smul.addr %s361, 64
        %s363 = scalar_lea.vmem [#allocation3], %s362
        %p364 = pneg %p42
        %p365 = pneg %p39
        %s366 = sand.u32 %s55, 1
        %s367 = sand.u32 %s55, 1
        %s368 = smul.addr %s367, 64
        %s369 = scalar_lea.vmem [#allocation4], %s368
        %p370 = pneg %p68
        %p371 = pneg %p65
        %p372 = pneg %p89
        %p373 = pneg %p86
        %p374 = pneg %p110
        %p375 = pneg %p107
        %p376 = pneg %p131
        %p377 = pneg %p128
        %p378 = pneg %p152
        %p379 = pneg %p149
        %p380 = pneg %p173
        %p381 = pneg %p170
        %p382 = pneg %p194
        %p383 = pneg %p191
        %p384 = pneg %p220
        %p385 = pneg %p217
        %s386 = smul.u32 2, %s21
        %p387 = scmp.lt.s32.totalorder %s386, 3
        %s388 = scalar_select %p387, %s386, 3
        %s389 = scalar_lea.vmem %s8, %s388
        %s390 = smul.u32 2, %s21
        %s391 = smul.u32 2, %s21
        %s392 = smul.u32 2, %s21
        %p393 = scmp.lt.s32.totalorder %s392, 3
        %s394 = scalar_select %p393, %s392, 3
        %s395 = scalar_lea.vmem %s8, %s394
        %s396 = smul.u32 2, %s21
        %v398 = vld [vmem:[%s2] sm:$0xf]
        %v399 = vld [vmem:[%s2 + $0x4] sm:$0xf]
        %v400 = vld [vmem:[%s2 + $0x8] sm:$0xf]
        %v401 = vld [vmem:[%s2 + $0xc] sm:$0xf]
        %v402 = vld [vmem:[%s349] sm:$0xff]
        %v403 = vld [vmem:[%s349 + $0x8] sm:$0xff]
        %v404 = vld [vmem:[%s349 + $0x10] sm:$0xff]
        %v405 = vld [vmem:[%s349 + $0x18] sm:$0xff]
        %v406 = vld [vmem:[%s349 + $0x20] sm:$0xff]
        %v407 = vld [vmem:[%s349 + $0x28] sm:$0xff]
        %v408 = vld [vmem:[%s349 + $0x30] sm:$0xff]
        %v409 = vld [vmem:[%s349 + $0x38] sm:$0xff]
        %v410 = vpack.c.bf16 %v404, %v402
        %v411 = vpack.c.bf16 %v405, %v403
        %v412 = vpack.c.bf16 %v408, %v406
        %v413 = vpack.c.bf16 %v409, %v407
        %v414 = vld [vmem:[%s3] sm:$0xff]
        %v415 = vld [vmem:[%s3 + $0x8] sm:$0xff]
        %v416 = vld [vmem:[%s3 + $0x10] sm:$0xff]
        %v417 = vld [vmem:[%s3 + $0x18] sm:$0xff]
        %419 = vset.pattern.permute.xlu0 0
        %420 = vperm.xlu0 %419, %v414
        %v421 = vpop.permute.xlu0 %420
        %424 = vset.pattern.permute.xlu0 0
        %425 = vperm.xlu0 %424, %v415
        %v426 = vpop.permute.xlu0 %425
        %429 = vset.pattern.permute.xlu0 0
        %430 = vperm.xlu0 %429, %v416
        %v431 = vpop.permute.xlu0 %430
        %434 = vset.pattern.permute.xlu0 0
        %435 = vperm.xlu0 %434, %v417
        %v436 = vpop.permute.xlu0 %435
        %v442 = vunpack.c.l.b16 %v398
        %v443 = vunpack.c.l.b16 %v399
        %v444 = vunpack.c.l.b16 %v400
        %v445 = vunpack.c.l.b16 %v401
        %v446 = vpack.c.b16 %v443, %v442
        %v447 = vpack.c.b16 %v445, %v444
        %vm448 = vcmask 261120
        %v450 = vsel %vm448, %v446, 0
        %v453 = vsel %vm448, %v447, 0
        %455 = vmatprep.subr.bf16.mxu0 %v411
        %456 = vmatpush1.bf16.msra.mxu0 %v410
        %457 = vmatprep.subr.bf16.mxu0 %v413
        %458 = vmatpush1.bf16.msra.mxu0 %v412
        %459 = vmatprep.subr.bf16.mxu0 0
        %460 = vmatpush1.bf16.msra.mxu0 0
        %461 = vmatprep.subr.bf16.mxu0 0
        %462 = vmatpush1.bf16.msra.mxu0 0
        %463 = vmatprep.subr.bf16.mxu0 0
        %464 = vmatpush1.bf16.msra.mxu0 0
        %465 = vmatprep.subr.bf16.mxu0 0
        %466 = vmatpush1.bf16.msra.mxu0 0
        %467 = vmatprep.subr.bf16.mxu0 0
        %468 = vmatpush1.bf16.msra.mxu0 0
        %469 = vmatprep.subr.bf16.mxu0 0
        %470 = vmatpush1.bf16.msra.mxu0 0
        %471 = vmatprep.subr.bf16.mxu0 0
        %472 = vmatpush1.bf16.msra.mxu0 0
        %473 = vmatprep.subr.bf16.mxu0 0
        %474 = vmatpush1.bf16.msra.mxu0 0
        %475 = vmatprep.subr.bf16.mxu0 0
        %476 = vmatpush1.bf16.msra.mxu0 0
        %477 = vmatprep.subr.bf16.mxu0 0
        %478 = vmatpush1.bf16.msra.mxu0 0
        %479 = vmatprep.subr.bf16.mxu0 0
        %480 = vmatpush1.bf16.msra.mxu0 0
        %481 = vmatprep.subr.bf16.mxu0 0
        %482 = vmatpush1.bf16.msra.mxu0 0
        %483 = vmatprep.subr.bf16.mxu0 0
        %484 = vmatpush1.bf16.msra.mxu0 0
        %485 = vmatprep.subr.bf16.mxu0 0
        %486 = vmatpush1.bf16.msra.mxu0 0
        %487 = vmatprep.mubr.bf16.mxu0 0
        %488 = vmatmul.mubr.bf16.gmra.mrb[0].mxu0 %v450
        %v489 = vpop.f32.mrb[0].mxu0
        %v490 = vadd.f32 %v421, %v489
        %v491 = vpop.f32.mrb[0].mxu0
        %v492 = vadd.f32 %v421, %v491
        %v493 = vpop.f32.mrb[0].mxu0
        %v494 = vadd.f32 %v426, %v493
        %v495 = vpop.f32.mrb[0].mxu0
        %v496 = vadd.f32 %v426, %v495
        %497 = vmatprep.mubr.bf16.mxu0 0
        %498 = vmatmul.mubr.bf16.gmra.mrb[0].mxu0 %v453
        %v499 = vpop.f32.mrb[0].mxu0
        %v500 = vadd.f32 %v431, %v499
        %v501 = vpop.f32.mrb[0].mxu0
        %v502 = vadd.f32 %v431, %v501
        %v503 = vpop.f32.mrb[0].mxu0
        %v504 = vadd.f32 %v436, %v503
        %v505 = vpop.f32.mrb[0].mxu0
        %v506 = vadd.f32 %v436, %v505
        %507 = vdwg.mxu0
        %v508 = vld [vmem:[%s356] sm:$0xff]
        %v509 = vld [vmem:[%s356 + $0x8] sm:$0xff]
        %v510 = vld [vmem:[%s356 + $0x10] sm:$0xff]
        %v511 = vld [vmem:[%s356 + $0x18] sm:$0xff]
        %v512 = vld [vmem:[%s356 + $0x20] sm:$0xff]
        %v513 = vld [vmem:[%s356 + $0x28] sm:$0xff]
        %v514 = vld [vmem:[%s356 + $0x30] sm:$0xff]
        %v515 = vld [vmem:[%s356 + $0x38] sm:$0xff]
        %v516 = vadd.f32 %v490, %v508
        %v517 = vadd.f32 %v492, %v509
        %v518 = vadd.f32 %v494, %v510
        %v519 = vadd.f32 %v496, %v511
        %v520 = vadd.f32 %v500, %v512
        %v521 = vadd.f32 %v502, %v513
        %v522 = vadd.f32 %v504, %v514
        %v523 = vadd.f32 %v506, %v515
        %v524 = vmax.f32 %v516, 0.0
        %v525 = vmax.f32 %v517, 0.0
        %v526 = vmax.f32 %v518, 0.0
        %v527 = vmax.f32 %v519, 0.0
        %v528 = vmax.f32 %v520, 0.0
        %v529 = vmax.f32 %v521, 0.0
        %v530 = vmax.f32 %v522, 0.0
        %v531 = vmax.f32 %v523, 0.0
        %v532 = vld [vmem:[%s4] sm:$0xf]
        %v533 = vld [vmem:[%s4 + $0x4] sm:$0xf]
        %v534 = vld [vmem:[%s4 + $0x8] sm:$0xf]
        %v535 = vld [vmem:[%s4 + $0xc] sm:$0xf]
        %v536 = vld [vmem:[%s4 + $0x10] sm:$0xf]
        %v537 = vld [vmem:[%s4 + $0x14] sm:$0xf]
        %v538 = vld [vmem:[%s4 + $0x18] sm:$0xf]
        %v539 = vld [vmem:[%s4 + $0x1c] sm:$0xf]
        %v540 = vld [vmem:[%s4 + $0x20] sm:$0xf]
        %v541 = vld [vmem:[%s4 + $0x24] sm:$0xf]
        %v542 = vld [vmem:[%s4 + $0x28] sm:$0xf]
        %v543 = vld [vmem:[%s4 + $0x2c] sm:$0xf]
        %v544 = vld [vmem:[%s4 + $0x30] sm:$0xf]
        %v545 = vld [vmem:[%s4 + $0x34] sm:$0xf]
        %v546 = vld [vmem:[%s4 + $0x38] sm:$0xf]
        %v547 = vld [vmem:[%s4 + $0x3c] sm:$0xf]
        %v548 = vpack.c.bf16 %v526, %v524
        %v549 = vpack.c.bf16 %v527, %v525
        %v550 = vpack.c.bf16 %v530, %v528
        %v551 = vpack.c.bf16 %v531, %v529
        %v552 = vld [vmem:[%s5] sm:$0xff]
        %v553 = vld [vmem:[%s5 + $0x8] sm:$0xff]
        %v554 = vld [vmem:[%s5 + $0x10] sm:$0xff]
        %v555 = vld [vmem:[%s5 + $0x18] sm:$0xff]
        %v556 = vld [vmem:[%s5 + $0x20] sm:$0xff]
        %v557 = vld [vmem:[%s5 + $0x28] sm:$0xff]
        %v558 = vld [vmem:[%s5 + $0x30] sm:$0xff]
        %v559 = vld [vmem:[%s5 + $0x38] sm:$0xff]
        %v560 = vld [vmem:[%s5 + $0x40] sm:$0xff]
        %v561 = vld [vmem:[%s5 + $0x48] sm:$0xff]
        %v562 = vld [vmem:[%s5 + $0x50] sm:$0xff]
        %v563 = vld [vmem:[%s5 + $0x58] sm:$0xff]
        %v564 = vld [vmem:[%s5 + $0x60] sm:$0xff]
        %v565 = vld [vmem:[%s5 + $0x68] sm:$0xff]
        %v566 = vld [vmem:[%s5 + $0x70] sm:$0xff]
        %v567 = vld [vmem:[%s5 + $0x78] sm:$0xff]
        %569 = vset.pattern.permute.xlu0 0
        %570 = vperm.xlu0 %569, %v552
        %v571 = vpop.permute.xlu0 %570
        %574 = vset.pattern.permute.xlu0 0
        %575 = vperm.xlu0 %574, %v553
        %v576 = vpop.permute.xlu0 %575
        %579 = vset.pattern.permute.xlu0 0
        %580 = vperm.xlu0 %579, %v554
        %v581 = vpop.permute.xlu0 %580
        %584 = vset.pattern.permute.xlu0 0
        %585 = vperm.xlu0 %584, %v555
        %v586 = vpop.permute.xlu0 %585
        %589 = vset.pattern.permute.xlu0 0
        %590 = vperm.xlu0 %589, %v556
        %v591 = vpop.permute.xlu0 %590
        %594 = vset.pattern.permute.xlu0 0
        %595 = vperm.xlu0 %594, %v557
        %v596 = vpop.permute.xlu0 %595
        %599 = vset.pattern.permute.xlu0 0
        %600 = vperm.xlu0 %599, %v558
        %v601 = vpop.permute.xlu0 %600
        %604 = vset.pattern.permute.xlu0 0
        %605 = vperm.xlu0 %604, %v559
        %v606 = vpop.permute.xlu0 %605
        %609 = vset.pattern.permute.xlu0 0
        %610 = vperm.xlu0 %609, %v560
        %v611 = vpop.permute.xlu0 %610
        %614 = vset.pattern.permute.xlu0 0
        %615 = vperm.xlu0 %614, %v561
        %v616 = vpop.permute.xlu0 %615
        %619 = vset.pattern.permute.xlu0 0
        %620 = vperm.xlu0 %619, %v562
        %v621 = vpop.permute.xlu0 %620
        %624 = vset.pattern.permute.xlu0 0
        %625 = vperm.xlu0 %624, %v563
        %v626 = vpop.permute.xlu0 %625
        %629 = vset.pattern.permute.xlu0 0
        %630 = vperm.xlu0 %629, %v564
        %v631 = vpop.permute.xlu0 %630
        %634 = vset.pattern.permute.xlu0 0
        %635 = vperm.xlu0 %634, %v565
        %v636 = vpop.permute.xlu0 %635
        %639 = vset.pattern.permute.xlu0 0
        %640 = vperm.xlu0 %639, %v566
        %v641 = vpop.permute.xlu0 %640
        %644 = vset.pattern.permute.xlu0 0
        %645 = vperm.xlu0 %644, %v567
        %v646 = vpop.permute.xlu0 %645
        %v664 = vunpack.c.l.b16 %v532
        %v665 = vunpack.c.l.b16 %v533
        %v666 = vunpack.c.l.b16 %v534
        %v667 = vunpack.c.l.b16 %v535
        %v668 = vunpack.c.l.b16 %v536
        %v669 = vunpack.c.l.b16 %v537
        %v670 = vunpack.c.l.b16 %v538
        %v671 = vunpack.c.l.b16 %v539
        %v672 = vunpack.c.l.b16 %v540
        %v673 = vunpack.c.l.b16 %v541
        %v674 = vunpack.c.l.b16 %v542
        %v675 = vunpack.c.l.b16 %v543
        %v676 = vunpack.c.l.b16 %v544
        %v677 = vunpack.c.l.b16 %v545
        %v678 = vunpack.c.l.b16 %v546
        %v679 = vunpack.c.l.b16 %v547
        %v680 = vpack.c.b16 %v665, %v664
        %v681 = vpack.c.b16 %v667, %v666
        %v682 = vpack.c.b16 %v669, %v668
        %v683 = vpack.c.b16 %v671, %v670
        %v684 = vpack.c.b16 %v673, %v672
        %v685 = vpack.c.b16 %v675, %v674
        %v686 = vpack.c.b16 %v677, %v676
        %v687 = vpack.c.b16 %v679, %v678
        %v689 = vsel %vm448, %v680, 0
        %v692 = vsel %vm448, %v681, 0
        %v695 = vsel %vm448, %v682, 0
        %v698 = vsel %vm448, %v683, 0
        %v701 = vsel %vm448, %v684, 0
        %v704 = vsel %vm448, %v685, 0
        %v707 = vsel %vm448, %v686, 0
        %v710 = vsel %vm448, %v687, 0
        %712 = vmatprep.subr.bf16.mxu0 %v549
        %713 = vmatpush1.bf16.msra.mxu0 %v548
        %714 = vmatprep.subr.bf16.mxu0 %v551
        %715 = vmatpush1.bf16.msra.mxu0 %v550
        %716 = vmatprep.subr.bf16.mxu0 0
        %717 = vmatpush1.bf16.msra.mxu0 0
        %718 = vmatprep.subr.bf16.mxu0 0
        %719 = vmatpush1.bf16.msra.mxu0 0
        %720 = vmatprep.subr.bf16.mxu0 0
        %721 = vmatpush1.bf16.msra.mxu0 0
        %722 = vmatprep.subr.bf16.mxu0 0
        %723 = vmatpush1.bf16.msra.mxu0 0
        %724 = vmatprep.subr.bf16.mxu0 0
        %725 = vmatpush1.bf16.msra.mxu0 0
        %726 = vmatprep.subr.bf16.mxu0 0
        %727 = vmatpush1.bf16.msra.mxu0 0
        %728 = vmatprep.subr.bf16.mxu0 0
        %729 = vmatpush1.bf16.msra.mxu0 0
        %730 = vmatprep.subr.bf16.mxu0 0
        %731 = vmatpush1.bf16.msra.mxu0 0
        %732 = vmatprep.subr.bf16.mxu0 0
        %733 = vmatpush1.bf16.msra.mxu0 0
        %734 = vmatprep.subr.bf16.mxu0 0
        %735 = vmatpush1.bf16.msra.mxu0 0
        %736 = vmatprep.subr.bf16.mxu0 0
        %737 = vmatpush1.bf16.msra.mxu0 0
        %738 = vmatprep.subr.bf16.mxu0 0
        %739 = vmatpush1.bf16.msra.mxu0 0
        %740 = vmatprep.subr.bf16.mxu0 0
        %741 = vmatpush1.bf16.msra.mxu0 0
        %742 = vmatprep.subr.bf16.mxu0 0
        %743 = vmatpush1.bf16.msra.mxu0 0
        %744 = vmatprep.mubr.bf16.mxu0 0
        %745 = vmatmul.mubr.bf16.gmra.mrb[0].mxu0 %v689
        %v746 = vpop.f32.mrb[0].mxu0
        %v747 = vadd.f32 %v571, %v746
        %v748 = vpop.f32.mrb[0].mxu0
        %v749 = vadd.f32 %v571, %v748
        %v750 = vpop.f32.mrb[0].mxu0
        %v751 = vadd.f32 %v576, %v750
        %v752 = vpop.f32.mrb[0].mxu0
        %v753 = vadd.f32 %v576, %v752
        %754 = vmatprep.mubr.bf16.mxu0 0
        %755 = vmatmul.mubr.bf16.gmra.mrb[0].mxu0 %v692
        %v756 = vpop.f32.mrb[0].mxu0
        %v757 = vadd.f32 %v581, %v756
        %v758 = vpop.f32.mrb[0].mxu0
        %v759 = vadd.f32 %v581, %v758
        %v760 = vpop.f32.mrb[0].mxu0
        %v761 = vadd.f32 %v586, %v760
        %v762 = vpop.f32.mrb[0].mxu0
        %v763 = vadd.f32 %v586, %v762
        %764 = vmatprep.mubr.bf16.mxu0 0
        %765 = vmatmul.mubr.bf16.gmra.mrb[0].mxu0 %v695
        %v766 = vpop.f32.mrb[0].mxu0
        %v767 = vadd.f32 %v591, %v766
        %v768 = vpop.f32.mrb[0].mxu0
        %v769 = vadd.f32 %v591, %v768
        %v770 = vpop.f32.mrb[0].mxu0
        %v771 = vadd.f32 %v596, %v770
        %v772 = vpop.f32.mrb[0].mxu0
        %v773 = vadd.f32 %v596, %v772
        %774 = vmatprep.mubr.bf16.mxu0 0
        %775 = vmatmul.mubr.bf16.gmra.mrb[0].mxu0 %v698
        %v776 = vpop.f32.mrb[0].mxu0
        %v777 = vadd.f32 %v601, %v776
        %v778 = vpop.f32.mrb[0].mxu0
        %v779 = vadd.f32 %v601, %v778
        %v780 = vpop.f32.mrb[0].mxu0
        %v781 = vadd.f32 %v606, %v780
        %v782 = vpop.f32.mrb[0].mxu0
        %v783 = vadd.f32 %v606, %v782
        %784 = vmatprep.mubr.bf16.mxu0 0
        %785 = vmatmul.mubr.bf16.gmra.mrb[0].mxu0 %v701
        %v786 = vpop.f32.mrb[0].mxu0
        %v787 = vadd.f32 %v611, %v786
        %v788 = vpop.f32.mrb[0].mxu0
        %v789 = vadd.f32 %v611, %v788
        %v790 = vpop.f32.mrb[0].mxu0
        %v791 = vadd.f32 %v616, %v790
        %v792 = vpop.f32.mrb[0].mxu0
        %v793 = vadd.f32 %v616, %v792
        %794 = vmatprep.mubr.bf16.mxu0 0
        %795 = vmatmul.mubr.bf16.gmra.mrb[0].mxu0 %v704
        %v796 = vpop.f32.mrb[0].mxu0
        %v797 = vadd.f32 %v621, %v796
        %v798 = vpop.f32.mrb[0].mxu0
        %v799 = vadd.f32 %v621, %v798
        %v800 = vpop.f32.mrb[0].mxu0
        %v801 = vadd.f32 %v626, %v800
        %v802 = vpop.f32.mrb[0].mxu0
        %v803 = vadd.f32 %v626, %v802
        %804 = vmatprep.mubr.bf16.mxu0 0
        %805 = vmatmul.mubr.bf16.gmra.mrb[0].mxu0 %v707
        %v806 = vpop.f32.mrb[0].mxu0
        %v807 = vadd.f32 %v631, %v806
        %v808 = vpop.f32.mrb[0].mxu0
        %v809 = vadd.f32 %v631, %v808
        %v810 = vpop.f32.mrb[0].mxu0
        %v811 = vadd.f32 %v636, %v810
        %v812 = vpop.f32.mrb[0].mxu0
        %v813 = vadd.f32 %v636, %v812
        %814 = vmatprep.mubr.bf16.mxu0 0
        %815 = vmatmul.mubr.bf16.gmra.mrb[0].mxu0 %v710
        %v816 = vpop.f32.mrb[0].mxu0
        %v817 = vadd.f32 %v641, %v816
        %v818 = vpop.f32.mrb[0].mxu0
        %v819 = vadd.f32 %v641, %v818
        %v820 = vpop.f32.mrb[0].mxu0
        %v821 = vadd.f32 %v646, %v820
        %v822 = vpop.f32.mrb[0].mxu0
        %v823 = vadd.f32 %v646, %v822
        %824 = vdwg.mxu0
        %v825 = vmax.f32 %v747, 0.0
        %v826 = vmax.f32 %v749, 0.0
        %v827 = vmax.f32 %v751, 0.0
        %v828 = vmax.f32 %v753, 0.0
        %v829 = vmax.f32 %v757, 0.0
        %v830 = vmax.f32 %v759, 0.0
        %v831 = vmax.f32 %v761, 0.0
        %v832 = vmax.f32 %v763, 0.0
        %v833 = vmax.f32 %v767, 0.0
        %v834 = vmax.f32 %v769, 0.0
        %v835 = vmax.f32 %v771, 0.0
        %v836 = vmax.f32 %v773, 0.0
        %v837 = vmax.f32 %v777, 0.0
        %v838 = vmax.f32 %v779, 0.0
        %v839 = vmax.f32 %v781, 0.0
        %v840 = vmax.f32 %v783, 0.0
        %v841 = vmax.f32 %v787, 0.0
        %v842 = vmax.f32 %v789, 0.0
        %v843 = vmax.f32 %v791, 0.0
        %v844 = vmax.f32 %v793, 0.0
        %v845 = vmax.f32 %v797, 0.0
        %v846 = vmax.f32 %v799, 0.0
        %v847 = vmax.f32 %v801, 0.0
        %v848 = vmax.f32 %v803, 0.0
        %v849 = vmax.f32 %v807, 0.0
        %v850 = vmax.f32 %v809, 0.0
        %v851 = vmax.f32 %v811, 0.0
        %v852 = vmax.f32 %v813, 0.0
        %v853 = vmax.f32 %v817, 0.0
        %v854 = vmax.f32 %v819, 0.0
        %v855 = vmax.f32 %v821, 0.0
        %v856 = vmax.f32 %v823, 0.0
        %v857 = vld [vmem:[%s6] sm:$0x1]
        %v858 = vpack.c.bf16 %v827, %v825
        %v859 = vpack.c.bf16 %v828, %v826
        %v860 = vpack.c.bf16 %v831, %v829
        %v861 = vpack.c.bf16 %v832, %v830
        %v862 = vpack.c.bf16 %v835, %v833
        %v863 = vpack.c.bf16 %v836, %v834
        %v864 = vpack.c.bf16 %v839, %v837
        %v865 = vpack.c.bf16 %v840, %v838
        %v866 = vpack.c.bf16 %v843, %v841
        %v867 = vpack.c.bf16 %v844, %v842
        %v868 = vpack.c.bf16 %v847, %v845
        %v869 = vpack.c.bf16 %v848, %v846
        %v870 = vpack.c.bf16 %v851, %v849
        %v871 = vpack.c.bf16 %v852, %v850
        %v872 = vpack.c.bf16 %v855, %v853
        %v873 = vpack.c.bf16 %v856, %v854
        %v874 = vld [vmem:[#allocation2] sm:$0x1]
        %876 = vset.pattern.permute.xlu0 0
        %877 = vperm.xlu0 %876, %v874
        %v878 = vpop.permute.xlu0 %877
        %v880 = vlaneseq
        %v881 = vshrl.u32 %v880, 7
        %v882 = vsub.s32 0, %v881
        %v883 = vrot.slane %v878, %v882
        %884 = vmatprep.subr.bf16.mxu0 %v859
        %885 = vmatpush1.bf16.msra.mxu0 %v858
        %886 = vmatprep.subr.bf16.mxu0 %v861
        %887 = vmatpush1.bf16.msra.mxu0 %v860
        %888 = vmatprep.subr.bf16.mxu0 %v863
        %889 = vmatpush1.bf16.msra.mxu0 %v862
        %890 = vmatprep.subr.bf16.mxu0 %v865
        %891 = vmatpush1.bf16.msra.mxu0 %v864
        %892 = vmatprep.subr.bf16.mxu0 %v867
        %893 = vmatpush1.bf16.msra.mxu0 %v866
        %894 = vmatprep.subr.bf16.mxu0 %v869
        %895 = vmatpush1.bf16.msra.mxu0 %v868
        %896 = vmatprep.subr.bf16.mxu0 %v871
        %897 = vmatpush1.bf16.msra.mxu0 %v870
        %898 = vmatprep.subr.bf16.mxu0 %v873
        %899 = vmatpush1.bf16.msra.mxu0 %v872
        %900 = vmatprep.subr.bf16.mxu0 0
        %901 = vmatpush1.bf16.msra.mxu0 0
        %902 = vmatprep.subr.bf16.mxu0 0
        %903 = vmatpush1.bf16.msra.mxu0 0
        %904 = vmatprep.subr.bf16.mxu0 0
        %905 = vmatpush1.bf16.msra.mxu0 0
        %906 = vmatprep.subr.bf16.mxu0 0
        %907 = vmatpush1.bf16.msra.mxu0 0
        %908 = vmatprep.subr.bf16.mxu0 0
        %909 = vmatpush1.bf16.msra.mxu0 0
        %910 = vmatprep.subr.bf16.mxu0 0
        %911 = vmatpush1.bf16.msra.mxu0 0
        %912 = vmatprep.subr.bf16.mxu0 0
        %913 = vmatpush1.bf16.msra.mxu0 0
        %914 = vmatprep.subr.bf16.mxu0 0
        %915 = vmatpush1.bf16.msra.mxu0 0
        %916 = vmatprep.mubr.bf16.mxu0 0
        %917 = vmatmul.mubr.bf16.gmra.mrb[0].mxu0 %v857
        %v918 = vpop.f32.mrb[0].mxu0
        %v919 = vadd.f32 %v883, %v918
        %v920 = vpop.f32.mrb[0].mxu0
        %v921 = vadd.f32 %v883, %v920
        %v922 = vpop.f32.mrb[0].mxu0
        %v923 = vpop.f32.mrb[0].mxu0
        %924 = vdwg.mxu0
        %v927 = vcombine.low %v919, %v921
        %v929 = vunpack.c.l.s4 1966171168
        %v930 = vunpack.c.0.s8 %v929
        %v931 = vlaneseq
        %v932 = vshrl.u32 %v931, 7
        %v933 = vsub.s32 %v930, %v932
        %v934 = vrot.slane %v927, %v933
        %v936 = vunpack.c.l.s4 1966171168
        %v937 = vunpack.c.0.s8 %v936
        %v938 = vlaneseq
        %v939 = vshrl.u32 %v938, 7
        %v940 = vsub.s32 %v937, %v939
        %v941 = vrot.slane %v934, %v940
        %v943 = vlaneseq
        %vm944 = vcmp.ge.s32.totalorder %v943, 0
        %vm945 = vcmp.lt.s32.totalorder %v943, 256
        %vm946 = vmand %vm944, %vm945
        %947 = vst.msk [vmem:[%s395] sm:$0x3] %vm946, %v941
        %s948 = smul.u32 2, %s21
        %p949 = scmp.lt.s32.totalorder %s948, 3
        %s950 = scalar_select %p949, %s948, 3
        %s951 = scalar_lea.vmem %s8, %s950
        // Predicated region
        $region99: #{fno2d_forward.17} parent=89 // pred_check
          %p952 = pneg %p217
        $region100: #{fno2d_forward.17} parent=89 // pred_check_branch
          %954 = sbr.rel (%p952) target = $region102
        $region101: #{fno2d_forward.17} parent=89 // pred_region
          %s955 = smul.u32 2, %s21
        $region102: #{fno2d_forward.17} parent=89 // pred_fallthru
          _
      $region90: #{fno2d_forward.17} parent=5 // pred_fallthru
        _
      %p956 = scmp.le.s32.totalorder 2, %s16
      // Predicated region
      $region103: #{fno2d_forward.17} parent=5 // pred_check
        %p957 = pneg %p956
      $region104: #{fno2d_forward.17} parent=5 // pred_check_branch
        %959 = sbr.rel (%p957) target = $region106
      $region105: #{fno2d_forward.17} parent=5 // pred_region
        %s960 = ssub.s32 %s16, 2
        // Predicated region
        $region107: #{fno2d_forward.17} parent=105 // pred_check
          %p961 = pneg %p223
        $region108: #{fno2d_forward.17} parent=105 // pred_check_branch
          %963 = sbr.rel (%p961) target = $region110
        $region109: #{fno2d_forward.17} parent=105 // pred_region
          %s964 = smul.u32 2, %s22
          %p965 = scmp.lt.s32.totalorder %s964, 3
          %s966 = scalar_select %p965, %s964, 3
          %s967 = scalar_lea.vmem %s8, %s966
        $region110: #{fno2d_forward.17} parent=105 // pred_fallthru
          _
      $region106: #{fno2d_forward.17} parent=5 // pred_fallthru
        _
    $region6: #{fno2d_forward.17} parent=1 // loop_footer
      %s20 = sadd.s32 1, %s16
    $region7: #{fno2d_forward.17} parent=1 // loop_footer_branch
      %15 = sbr.rel target = $region3
    $region8: #{fno2d_forward.17} parent=1 // loop_exit
      _

// kernel: fno2d_forward.10
$region0: #{fno2d_forward.10}
  #allocation0 [shape = 'u32[]', space=smem, size = 0x4, offset = 0x4, fixed_abs, tag = 'smem constant byte address 0x4 - core index']
  #allocation1 [shape = 'u32[144,128]{1,0:T(1,128)}', space=vmem, size = 0x12000, scoped, tag = 'internal scratch']
  %s0 = inlined_call_operand.vmem [shape: f32[32,8,32], index: 0, kind: input, shape index: {}]
  %s1 = inlined_call_operand.vmem [shape: f32[32,8,32], index: 1, kind: input, shape index: {}]
  %s2 = inlined_call_operand.vmem [shape: bf16[32,32,32], index: 2, kind: input, shape index: {}]
  %s3 = inlined_call_operand.vmem [shape: bf16[32,32,32], index: 3, kind: input, shape index: {}]
  %s4 = inlined_call_operand.vmem [shape: bf16[32,32,32], index: 4, kind: input, shape index: {}]
  %s5 = inlined_call_operand.vmem [shape: f32[32,8,32], index: 5, kind: output, shape index: {0}]
  %s6 = inlined_call_operand.vmem [shape: f32[32,8,32], index: 6, kind: output, shape index: {1}]
  %7 = xla_tuple %s5, %s6
  %s8 = sld [smem:[#allocation0]]
  $region38: #{fno2d_forward.10} parent=0
    _
  %s10 = ssub.s32 1, %s8
  %s11 = scalar_select 0, %s10, %s8
  // Predicated region
  $region2: #{fno2d_forward.10} parent=0 // pred_check
    _
  $region3: #{fno2d_forward.10} parent=0 // pred_check_branch
    %13 = sbr.rel (0) target = $region5
  $region4: #{fno2d_forward.10} parent=0 // pred_region
    _
  $region5: #{fno2d_forward.10} parent=0 // pred_fallthru
    _
  // Predicated region
  $region6: #{fno2d_forward.10} parent=0 // pred_check
    _
  $region7: #{fno2d_forward.10} parent=0 // pred_check_branch
    %15 = sbr.rel (0) target = $region9
  $region8: #{fno2d_forward.10} parent=0 // pred_region
    _
  $region9: #{fno2d_forward.10} parent=0 // pred_fallthru
    _
  // Predicated region
  $region10: #{fno2d_forward.10} parent=0 // pred_check
    _
  $region11: #{fno2d_forward.10} parent=0 // pred_check_branch
    %17 = sbr.rel (0) target = $region13
  $region12: #{fno2d_forward.10} parent=0 // pred_region
    _
  $region13: #{fno2d_forward.10} parent=0 // pred_fallthru
    _
  // Predicated region
  $region14: #{fno2d_forward.10} parent=0 // pred_check
    _
  $region15: #{fno2d_forward.10} parent=0 // pred_check_branch
    %19 = sbr.rel (0) target = $region17
  $region16: #{fno2d_forward.10} parent=0 // pred_region
    _
  $region17: #{fno2d_forward.10} parent=0 // pred_fallthru
    _
  // Predicated region
  $region18: #{fno2d_forward.10} parent=0 // pred_check
    _
  $region19: #{fno2d_forward.10} parent=0 // pred_check_branch
    %21 = sbr.rel (0) target = $region21
  $region20: #{fno2d_forward.10} parent=0 // pred_region
    _
  $region21: #{fno2d_forward.10} parent=0 // pred_fallthru
    _
  %v23 = vld [vmem:[%s0] sm:$0xff]
  %v24 = vld [vmem:[%s0 + $0x8] sm:$0xff]
  %v25 = vld [vmem:[%s0 + $0x10] sm:$0xff]
  %v26 = vld [vmem:[%s0 + $0x18] sm:$0xff]
  %v27 = vld [vmem:[%s0 + $0x20] sm:$0xff]
  %v28 = vld [vmem:[%s0 + $0x28] sm:$0xff]
  %v29 = vld [vmem:[%s0 + $0x30] sm:$0xff]
  %v30 = vld [vmem:[%s0 + $0x38] sm:$0xff]
  %v31 = vld [vmem:[%s0 + $0x40] sm:$0xff]
  %v32 = vld [vmem:[%s0 + $0x48] sm:$0xff]
  %v33 = vld [vmem:[%s0 + $0x50] sm:$0xff]
  %v34 = vld [vmem:[%s0 + $0x58] sm:$0xff]
  %v35 = vld [vmem:[%s0 + $0x60] sm:$0xff]
  %v36 = vld [vmem:[%s0 + $0x68] sm:$0xff]
  %v37 = vld [vmem:[%s0 + $0x70] sm:$0xff]
  %v38 = vld [vmem:[%s0 + $0x78] sm:$0xff]
  %v39 = vld [vmem:[%s0 + $0x80] sm:$0xff]
  %v40 = vld [vmem:[%s0 + $0x88] sm:$0xff]
  %v41 = vld [vmem:[%s0 + $0x90] sm:$0xff]
  %v42 = vld [vmem:[%s0 + $0x98] sm:$0xff]
  %v43 = vld [vmem:[%s0 + $0xa0] sm:$0xff]
  %v44 = vld [vmem:[%s0 + $0xa8] sm:$0xff]
  %v45 = vld [vmem:[%s0 + $0xb0] sm:$0xff]
  %v46 = vld [vmem:[%s0 + $0xb8] sm:$0xff]
  %v47 = vld [vmem:[%s0 + $0xc0] sm:$0xff]
  %v48 = vld [vmem:[%s0 + $0xc8] sm:$0xff]
  %v49 = vld [vmem:[%s0 + $0xd0] sm:$0xff]
  %v50 = vld [vmem:[%s0 + $0xd8] sm:$0xff]
  %v51 = vld [vmem:[%s0 + $0xe0] sm:$0xff]
  %v52 = vld [vmem:[%s0 + $0xe8] sm:$0xff]
  %v53 = vld [vmem:[%s0 + $0xf0] sm:$0xff]
  %v54 = vld [vmem:[%s0 + $0xf8] sm:$0xff]
  %v55 = vld [vmem:[%s1] sm:$0xff]
  %v56 = vld [vmem:[%s1 + $0x8] sm:$0xff]
  %v57 = vld [vmem:[%s1 + $0x10] sm:$0xff]
  %v58 = vld [vmem:[%s1 + $0x18] sm:$0xff]
  %v59 = vld [vmem:[%s1 + $0x20] sm:$0xff]
  %v60 = vld [vmem:[%s1 + $0x28] sm:$0xff]
  %v61 = vld [vmem:[%s1 + $0x30] sm:$0xff]
  %v62 = vld [vmem:[%s1 + $0x38] sm:$0xff]
  %v63 = vld [vmem:[%s1 + $0x40] sm:$0xff]
  %v64 = vld [vmem:[%s1 + $0x48] sm:$0xff]
  %v65 = vld [vmem:[%s1 + $0x50] sm:$0xff]
  %v66 = vld [vmem:[%s1 + $0x58] sm:$0xff]
  %v67 = vld [vmem:[%s1 + $0x60] sm:$0xff]
  %v68 = vld [vmem:[%s1 + $0x68] sm:$0xff]
  %v69 = vld [vmem:[%s1 + $0x70] sm:$0xff]
  %v70 = vld [vmem:[%s1 + $0x78] sm:$0xff]
  %v71 = vld [vmem:[%s1 + $0x80] sm:$0xff]
  %v72 = vld [vmem:[%s1 + $0x88] sm:$0xff]
  %v73 = vld [vmem:[%s1 + $0x90] sm:$0xff]
  %v74 = vld [vmem:[%s1 + $0x98] sm:$0xff]
  %v75 = vld [vmem:[%s1 + $0xa0] sm:$0xff]
  %v76 = vld [vmem:[%s1 + $0xa8] sm:$0xff]
  %v77 = vld [vmem:[%s1 + $0xb0] sm:$0xff]
  %v78 = vld [vmem:[%s1 + $0xb8] sm:$0xff]
  %v79 = vld [vmem:[%s1 + $0xc0] sm:$0xff]
  %v80 = vld [vmem:[%s1 + $0xc8] sm:$0xff]
  %v81 = vld [vmem:[%s1 + $0xd0] sm:$0xff]
  %v82 = vld [vmem:[%s1 + $0xd8] sm:$0xff]
  %v83 = vld [vmem:[%s1 + $0xe0] sm:$0xff]
  %v84 = vld [vmem:[%s1 + $0xe8] sm:$0xff]
  %v85 = vld [vmem:[%s1 + $0xf0] sm:$0xff]
  %v86 = vld [vmem:[%s1 + $0xf8] sm:$0xff]
  %v87 = vadd.f32 %v23, %v55
  %v88 = vadd.f32 %v24, %v56
  %v89 = vadd.f32 %v25, %v57
  %v90 = vadd.f32 %v26, %v58
  %v91 = vadd.f32 %v27, %v59
  %v92 = vadd.f32 %v28, %v60
  %v93 = vadd.f32 %v29, %v61
  %v94 = vadd.f32 %v30, %v62
  %v95 = vadd.f32 %v31, %v63
  %v96 = vadd.f32 %v32, %v64
  %v97 = vadd.f32 %v33, %v65
  %v98 = vadd.f32 %v34, %v66
  %v99 = vadd.f32 %v35, %v67
  %v100 = vadd.f32 %v36, %v68
  %v101 = vadd.f32 %v37, %v69
  %v102 = vadd.f32 %v38, %v70
  %v103 = vadd.f32 %v39, %v71
  %v104 = vadd.f32 %v40, %v72
  %v105 = vadd.f32 %v41, %v73
  %v106 = vadd.f32 %v42, %v74
  %v107 = vadd.f32 %v43, %v75
  %v108 = vadd.f32 %v44, %v76
  %v109 = vadd.f32 %v45, %v77
  %v110 = vadd.f32 %v46, %v78
  %v111 = vadd.f32 %v47, %v79
  %v112 = vadd.f32 %v48, %v80
  %v113 = vadd.f32 %v49, %v81
  %v114 = vadd.f32 %v50, %v82
  %v115 = vadd.f32 %v51, %v83
  %v116 = vadd.f32 %v52, %v84
  %v117 = vadd.f32 %v53, %v85
  %v118 = vadd.f32 %v54, %v86
  %v119 = vpack.c.bf16 %v87, %v87
  %v120 = vpack.c.bf16 %v88, %v88
  %v121 = vpack.c.bf16 %v89, %v89
  %v122 = vpack.c.bf16 %v90, %v90
  %v123 = vpack.c.bf16 %v91, %v91
  %v124 = vpack.c.bf16 %v92, %v92
  %v125 = vpack.c.bf16 %v93, %v93
  %v126 = vpack.c.bf16 %v94, %v94
  %v127 = vpack.c.bf16 %v95, %v95
  %v128 = vpack.c.bf16 %v96, %v96
  %v129 = vpack.c.bf16 %v97, %v97
  %v130 = vpack.c.bf16 %v98, %v98
  %v131 = vpack.c.bf16 %v99, %v99
  %v132 = vpack.c.bf16 %v100, %v100
  %v133 = vpack.c.bf16 %v101, %v101
  %v134 = vpack.c.bf16 %v102, %v102
  %v135 = vpack.c.bf16 %v103, %v103
  %v136 = vpack.c.bf16 %v104, %v104
  %v137 = vpack.c.bf16 %v105, %v105
  %v138 = vpack.c.bf16 %v106, %v106
  %v139 = vpack.c.bf16 %v107, %v107
  %v140 = vpack.c.bf16 %v108, %v108
  %v141 = vpack.c.bf16 %v109, %v109
  %v142 = vpack.c.bf16 %v110, %v110
  %v143 = vpack.c.bf16 %v111, %v111
  %v144 = vpack.c.bf16 %v112, %v112
  %v145 = vpack.c.bf16 %v113, %v113
  %v146 = vpack.c.bf16 %v114, %v114
  %v147 = vpack.c.bf16 %v115, %v115
  %v148 = vpack.c.bf16 %v116, %v116
  %v149 = vpack.c.bf16 %v117, %v117
  %v150 = vpack.c.bf16 %v118, %v118
  %v151 = vpack.c.bf16 %v23, %v23
  %v152 = vpack.c.bf16 %v24, %v24
  %v153 = vpack.c.bf16 %v25, %v25
  %v154 = vpack.c.bf16 %v26, %v26
  %v155 = vpack.c.bf16 %v27, %v27
  %v156 = vpack.c.bf16 %v28, %v28
  %v157 = vpack.c.bf16 %v29, %v29
  %v158 = vpack.c.bf16 %v30, %v30
  %v159 = vpack.c.bf16 %v31, %v31
  %v160 = vpack.c.bf16 %v32, %v32
  %v161 = vpack.c.bf16 %v33, %v33
  %v162 = vpack.c.bf16 %v34, %v34
  %v163 = vpack.c.bf16 %v35, %v35
  %v164 = vpack.c.bf16 %v36, %v36
  %v165 = vpack.c.bf16 %v37, %v37
  %v166 = vpack.c.bf16 %v38, %v38
  %v167 = vpack.c.bf16 %v39, %v39
  %v168 = vpack.c.bf16 %v40, %v40
  %v169 = vpack.c.bf16 %v41, %v41
  %v170 = vpack.c.bf16 %v42, %v42
  %v171 = vpack.c.bf16 %v43, %v43
  %v172 = vpack.c.bf16 %v44, %v44
  %v173 = vpack.c.bf16 %v45, %v45
  %v174 = vpack.c.bf16 %v46, %v46
  %v175 = vpack.c.bf16 %v47, %v47
  %v176 = vpack.c.bf16 %v48, %v48
  %v177 = vpack.c.bf16 %v49, %v49
  %v178 = vpack.c.bf16 %v50, %v50
  %v179 = vpack.c.bf16 %v51, %v51
  %v180 = vpack.c.bf16 %v52, %v52
  %v181 = vpack.c.bf16 %v53, %v53
  %v182 = vpack.c.bf16 %v54, %v54
  %v183 = vpack.c.bf16 %v55, %v55
  %v184 = vpack.c.bf16 %v56, %v56
  %v185 = vpack.c.bf16 %v57, %v57
  %v186 = vpack.c.bf16 %v58, %v58
  %v187 = vpack.c.bf16 %v59, %v59
  %v188 = vpack.c.bf16 %v60, %v60
  %v189 = vpack.c.bf16 %v61, %v61
  %v190 = vpack.c.bf16 %v62, %v62
  %v191 = vpack.c.bf16 %v63, %v63
  %v192 = vpack.c.bf16 %v64, %v64
  %v193 = vpack.c.bf16 %v65, %v65
  %v194 = vpack.c.bf16 %v66, %v66
  %v195 = vpack.c.bf16 %v67, %v67
  %v196 = vpack.c.bf16 %v68, %v68
  %v197 = vpack.c.bf16 %v69, %v69
  %v198 = vpack.c.bf16 %v70, %v70
  %v199 = vpack.c.bf16 %v71, %v71
  %v200 = vpack.c.bf16 %v72, %v72
  %v201 = vpack.c.bf16 %v73, %v73
  %v202 = vpack.c.bf16 %v74, %v74
  %v203 = vpack.c.bf16 %v75, %v75
  %v204 = vpack.c.bf16 %v76, %v76
  %v205 = vpack.c.bf16 %v77, %v77
  %v206 = vpack.c.bf16 %v78, %v78
  %v207 = vpack.c.bf16 %v79, %v79
  %v208 = vpack.c.bf16 %v80, %v80
  %v209 = vpack.c.bf16 %v81, %v81
  %v210 = vpack.c.bf16 %v82, %v82
  %v211 = vpack.c.bf16 %v83, %v83
  %v212 = vpack.c.bf16 %v84, %v84
  %v213 = vpack.c.bf16 %v85, %v85
  %v214 = vpack.c.bf16 %v86, %v86
  %v215 = vld [vmem:[%s2] sm:$0xf]
  %v216 = vld [vmem:[%s2 + $0x4] sm:$0xf]
  %v217 = vld [vmem:[%s2 + $0x8] sm:$0xf]
  %v218 = vld [vmem:[%s2 + $0xc] sm:$0xf]
  %v219 = vld [vmem:[%s2 + $0x10] sm:$0xf]
  %v220 = vld [vmem:[%s2 + $0x14] sm:$0xf]
  %v221 = vld [vmem:[%s2 + $0x18] sm:$0xf]
  %v222 = vld [vmem:[%s2 + $0x1c] sm:$0xf]
  %v223 = vld [vmem:[%s2 + $0x20] sm:$0xf]
  %v224 = vld [vmem:[%s2 + $0x24] sm:$0xf]
  %v225 = vld [vmem:[%s2 + $0x28] sm:$0xf]
  %v226 = vld [vmem:[%s2 + $0x2c] sm:$0xf]
  %v227 = vld [vmem:[%s2 + $0x30] sm:$0xf]
  %v228 = vld [vmem:[%s2 + $0x34] sm:$0xf]
  %v229 = vld [vmem:[%s2 + $0x38] sm:$0xf]
  %v230 = vld [vmem:[%s2 + $0x3c] sm:$0xf]
  %v231 = vld [vmem:[%s2 + $0x40] sm:$0xf]
  %v232 = vld [vmem:[%s2 + $0x44] sm:$0xf]
  %v233 = vld [vmem:[%s2 + $0x48] sm:$0xf]
  %v234 = vld [vmem:[%s2 + $0x4c] sm:$0xf]
  %v235 = vld [vmem:[%s2 + $0x50] sm:$0xf]
  %v236 = vld [vmem:[%s2 + $0x54] sm:$0xf]
  %v237 = vld [vmem:[%s2 + $0x58] sm:$0xf]
  %v238 = vld [vmem:[%s2 + $0x5c] sm:$0xf]
  %v239 = vld [vmem:[%s2 + $0x60] sm:$0xf]
  %v240 = vld [vmem:[%s2 + $0x64] sm:$0xf]
  %v241 = vld [vmem:[%s2 + $0x68] sm:$0xf]
  %v242 = vld [vmem:[%s2 + $0x6c] sm:$0xf]
  %v243 = vld [vmem:[%s2 + $0x70] sm:$0xf]
  %v244 = vld [vmem:[%s2 + $0x74] sm:$0xf]
  %v245 = vld [vmem:[%s2 + $0x78] sm:$0xf]
  %v246 = vld [vmem:[%s2 + $0x7c] sm:$0xf]
  %v247 = vld [vmem:[%s2 + $0x80] sm:$0xf]
  %v248 = vld [vmem:[%s2 + $0x84] sm:$0xf]
  %v249 = vld [vmem:[%s2 + $0x88] sm:$0xf]
  %v250 = vld [vmem:[%s2 + $0x8c] sm:$0xf]
  %v251 = vld [vmem:[%s2 + $0x90] sm:$0xf]
  %v252 = vld [vmem:[%s2 + $0x94] sm:$0xf]
  %v253 = vld [vmem:[%s2 + $0x98] sm:$0xf]
  %v254 = vld [vmem:[%s2 + $0x9c] sm:$0xf]
  %v255 = vld [vmem:[%s2 + $0xa0] sm:$0xf]
  %v256 = vld [vmem:[%s2 + $0xa4] sm:$0xf]
  %v257 = vld [vmem:[%s2 + $0xa8] sm:$0xf]
  %v258 = vld [vmem:[%s2 + $0xac] sm:$0xf]
  %v259 = vld [vmem:[%s2 + $0xb0] sm:$0xf]
  %v260 = vld [vmem:[%s2 + $0xb4] sm:$0xf]
  %v261 = vld [vmem:[%s2 + $0xb8] sm:$0xf]
  %v262 = vld [vmem:[%s2 + $0xbc] sm:$0xf]
  %v263 = vld [vmem:[%s2 + $0xc0] sm:$0xf]
  %v264 = vld [vmem:[%s2 + $0xc4] sm:$0xf]
  %v265 = vld [vmem:[%s2 + $0xc8] sm:$0xf]
  %v266 = vld [vmem:[%s2 + $0xcc] sm:$0xf]
  %v267 = vld [vmem:[%s2 + $0xd0] sm:$0xf]
  %v268 = vld [vmem:[%s2 + $0xd4] sm:$0xf]
  %v269 = vld [vmem:[%s2 + $0xd8] sm:$0xf]
  %v270 = vld [vmem:[%s2 + $0xdc] sm:$0xf]
  %v271 = vld [vmem:[%s2 + $0xe0] sm:$0xf]
  %v272 = vld [vmem:[%s2 + $0xe4] sm:$0xf]
  %v273 = vld [vmem:[%s2 + $0xe8] sm:$0xf]
  %v274 = vld [vmem:[%s2 + $0xec] sm:$0xf]
  %v275 = vld [vmem:[%s2 + $0xf0] sm:$0xf]
  %v276 = vld [vmem:[%s2 + $0xf4] sm:$0xf]
  %v277 = vld [vmem:[%s2 + $0xf8] sm:$0xf]
  %v278 = vld [vmem:[%s2 + $0xfc] sm:$0xf]
  %v279 = vld [vmem:[%s2 + $0x100] sm:$0xf]
  %v280 = vld [vmem:[%s2 + $0x104] sm:$0xf]
  %v281 = vld [vmem:[%s2 + $0x108] sm:$0xf]
  %v282 = vld [vmem:[%s2 + $0x10c] sm:$0xf]
  %v283 = vld [vmem:[%s2 + $0x110] sm:$0xf]
  %v284 = vld [vmem:[%s2 + $0x114] sm:$0xf]
  %v285 = vld [vmem:[%s2 + $0x118] sm:$0xf]
  %v286 = vld [vmem:[%s2 + $0x11c] sm:$0xf]
  %v287 = vld [vmem:[%s2 + $0x120] sm:$0xf]
  %v288 = vld [vmem:[%s2 + $0x124] sm:$0xf]
  %v289 = vld [vmem:[%s2 + $0x128] sm:$0xf]
  %v290 = vld [vmem:[%s2 + $0x12c] sm:$0xf]
  %v291 = vld [vmem:[%s2 + $0x130] sm:$0xf]
  %v292 = vld [vmem:[%s2 + $0x134] sm:$0xf]
  %v293 = vld [vmem:[%s2 + $0x138] sm:$0xf]
  %v294 = vld [vmem:[%s2 + $0x13c] sm:$0xf]
  %v295 = vld [vmem:[%s2 + $0x140] sm:$0xf]
  %v296 = vld [vmem:[%s2 + $0x144] sm:$0xf]
  %v297 = vld [vmem:[%s2 + $0x148] sm:$0xf]
  %v298 = vld [vmem:[%s2 + $0x14c] sm:$0xf]
  %v299 = vld [vmem:[%s2 + $0x150] sm:$0xf]
  %v300 = vld [vmem:[%s2 + $0x154] sm:$0xf]
  %v301 = vld [vmem:[%s2 + $0x158] sm:$0xf]
  %v302 = vld [vmem:[%s2 + $0x15c] sm:$0xf]
  %v303 = vld [vmem:[%s2 + $0x160] sm:$0xf]
  %v304 = vld [vmem:[%s2 + $0x164] sm:$0xf]
  %v305 = vld [vmem:[%s2 + $0x168] sm:$0xf]
  %v306 = vld [vmem:[%s2 + $0x16c] sm:$0xf]
  %v307 = vld [vmem:[%s2 + $0x170] sm:$0xf]
  %v308 = vld [vmem:[%s2 + $0x174] sm:$0xf]
  %v309 = vld [vmem:[%s2 + $0x178] sm:$0xf]
  %v310 = vld [vmem:[%s2 + $0x17c] sm:$0xf]
  %v311 = vld [vmem:[%s2 + $0x180] sm:$0xf]
  %v312 = vld [vmem:[%s2 + $0x184] sm:$0xf]
  %v313 = vld [vmem:[%s2 + $0x188] sm:$0xf]
  %v314 = vld [vmem:[%s2 + $0x18c] sm:$0xf]
  %v315 = vld [vmem:[%s2 + $0x190] sm:$0xf]
  %v316 = vld [vmem:[%s2 + $0x194] sm:$0xf]
  %v317 = vld [vmem:[%s2 + $0x198] sm:$0xf]
  %v318 = vld [vmem:[%s2 + $0x19c] sm:$0xf]
  %v319 = vld [vmem:[%s2 + $0x1a0] sm:$0xf]
  %v320 = vld [vmem:[%s2 + $0x1a4] sm:$0xf]
  %v321 = vld [vmem:[%s2 + $0x1a8] sm:$0xf]
  %v322 = vld [vmem:[%s2 + $0x1ac] sm:$0xf]
  %v323 = vld [vmem:[%s2 + $0x1b0] sm:$0xf]
  %v324 = vld [vmem:[%s2 + $0x1b4] sm:$0xf]
  %v325 = vld [vmem:[%s2 + $0x1b8] sm:$0xf]
  %v326 = vld [vmem:[%s2 + $0x1bc] sm:$0xf]
  %v327 = vld [vmem:[%s2 + $0x1c0] sm:$0xf]
  %v328 = vld [vmem:[%s2 + $0x1c4] sm:$0xf]
  %v329 = vld [vmem:[%s2 + $0x1c8] sm:$0xf]
  %v330 = vld [vmem:[%s2 + $0x1cc] sm:$0xf]
  %v331 = vld [vmem:[%s2 + $0x1d0] sm:$0xf]
  %v332 = vld [vmem:[%s2 + $0x1d4] sm:$0xf]
  %v333 = vld [vmem:[%s2 + $0x1d8] sm:$0xf]
  %v334 = vld [vmem:[%s2 + $0x1dc] sm:$0xf]
  %v335 = vld [vmem:[%s2 + $0x1e0] sm:$0xf]
  %v336 = vld [vmem:[%s2 + $0x1e4] sm:$0xf]
  %v337 = vld [vmem:[%s2 + $0x1e8] sm:$0xf]
  %v338 = vld [vmem:[%s2 + $0x1ec] sm:$0xf]
  %v339 = vld [vmem:[%s2 + $0x1f0] sm:$0xf]
  %v340 = vld [vmem:[%s2 + $0x1f4] sm:$0xf]
  %v341 = vld [vmem:[%s2 + $0x1f8] sm:$0xf]
  %v342 = vld [vmem:[%s2 + $0x1fc] sm:$0xf]
  %v347 = vunpack.c.l.b16 %v215
  %v348 = vunpack.c.l.b16 %v216
  %v349 = vunpack.c.l.b16 %v217
  %v350 = vunpack.c.l.b16 %v218
  %v351 = vpack.c.b16 %v348, %v347
  %v352 = vpack.c.b16 %v350, %v349
  %vm355 = vcmask 261120
  %v357 = vsel %vm355, %v151, 0
  %359 = vmatprep.subr.bf16.mxu0 0
  %360 = vmatpush1.bf16.msra.mxu0 %v351
  %361 = vmatprep.subr.bf16.mxu0 0
  %362 = vmatpush1.bf16.msra.mxu0 %v352
  %363 = vmatprep.subr.bf16.mxu0 0
  %364 = vmatpush1.bf16.msra.mxu0 0
  %365 = vmatprep.subr.bf16.mxu0 0
  %366 = vmatpush1.bf16.msra.mxu0 0
  %367 = vmatprep.subr.bf16.mxu0 0
  %368 = vmatpush1.bf16.msra.mxu0 0
  %369 = vmatprep.subr.bf16.mxu0 0
  %370 = vmatpush1.bf16.msra.mxu0 0
  %371 = vmatprep.subr.bf16.mxu0 0
  %372 = vmatpush1.bf16.msra.mxu0 0
  %373 = vmatprep.subr.bf16.mxu0 0
  %374 = vmatpush1.bf16.msra.mxu0 0
  %375 = vmatprep.subr.bf16.mxu0 0
  %376 = vmatpush1.bf16.msra.mxu0 0
  %377 = vmatprep.subr.bf16.mxu0 0
  %378 = vmatpush1.bf16.msra.mxu0 0
  %379 = vmatprep.subr.bf16.mxu0 0
  %380 = vmatpush1.bf16.msra.mxu0 0
  %381 = vmatprep.subr.bf16.mxu0 0
  %382 = vmatpush1.bf16.msra.mxu0 0
  %383 = vmatprep.subr.bf16.mxu0 0
  %384 = vmatpush1.bf16.msra.mxu0 0
  %385 = vmatprep.subr.bf16.mxu0 0
  %386 = vmatpush1.bf16.msra.mxu0 0
  %387 = vmatprep.subr.bf16.mxu0 0
  %388 = vmatpush1.bf16.msra.mxu0 0
  %389 = vmatprep.subr.bf16.mxu0 0
  %390 = vmatpush1.bf16.msra.mxu0 0
  %391 = vmatprep.mubr.bf16.mxu0 0
  %392 = vmatmul.mubr.bf16.gmra.mrb[0].mxu0 %v357
  %v393 = vpop.f32.mrb[0].mxu0
  %v394 = vadd.f32 0.0, %v393
  %v395 = vpop.f32.mrb[0].mxu0
  %v396 = vpop.f32.mrb[0].mxu0
  %v397 = vpop.f32.mrb[0].mxu0
  %398 = vdwg.mxu0
  %v403 = vunpack.c.l.b16 %v219
  %v404 = vunpack.c.l.b16 %v220
  %v405 = vunpack.c.l.b16 %v221
  %v406 = vunpack.c.l.b16 %v222
  %v407 = vpack.c.b16 %v404, %v403
  %v408 = vpack.c.b16 %v406, %v405
  %v412 = vsel %vm355, %v152, 0
  %414 = vmatprep.subr.bf16.mxu0 0
  %415 = vmatpush1.bf16.msra.mxu0 %v407
  %416 = vmatprep.subr.bf16.mxu0 0
  %417 = vmatpush1.bf16.msra.mxu0 %v408
  %418 = vmatprep.subr.bf16.mxu0 0
  %419 = vmatpush1.bf16.msra.mxu0 0
  %420 = vmatprep.subr.bf16.mxu0 0
  %421 = vmatpush1.bf16.msra.mxu0 0
  %422 = vmatprep.subr.bf16.mxu0 0
  %423 = vmatpush1.bf16.msra.mxu0 0
  %424 = vmatprep.subr.bf16.mxu0 0
  %425 = vmatpush1.bf16.msra.mxu0 0
  %426 = vmatprep.subr.bf16.mxu0 0
  %427 = vmatpush1.bf16.msra.mxu0 0
  %428 = vmatprep.subr.bf16.mxu0 0
  %429 = vmatpush1.bf16.msra.mxu0 0
  %430 = vmatprep.subr.bf16.mxu0 0
  %431 = vmatpush1.bf16.msra.mxu0 0
  %432 = vmatprep.subr.bf16.mxu0 0
  %433 = vmatpush1.bf16.msra.mxu0 0
  %434 = vmatprep.subr.bf16.mxu0 0
  %435 = vmatpush1.bf16.msra.mxu0 0
  %436 = vmatprep.subr.bf16.mxu0 0
  %437 = vmatpush1.bf16.msra.mxu0 0
  %438 = vmatprep.subr.bf16.mxu0 0
  %439 = vmatpush1.bf16.msra.mxu0 0
  %440 = vmatprep.subr.bf16.mxu0 0
  %441 = vmatpush1.bf16.msra.mxu0 0
  %442 = vmatprep.subr.bf16.mxu0 0
  %443 = vmatpush1.bf16.msra.mxu0 0
  %444 = vmatprep.subr.bf16.mxu0 0
  %445 = vmatpush1.bf16.msra.mxu0 0
  %446 = vmatprep.mubr.bf16.mxu0 0
  %447 = vmatmul.mubr.bf16.gmra.mrb[0].mxu0 %v412
  %v448 = vpop.f32.mrb[0].mxu0
  %v449 = vadd.f32 0.0, %v448
  %v450 = vpop.f32.mrb[0].mxu0
  %v451 = vpop.f32.mrb[0].mxu0
  %v452 = vpop.f32.mrb[0].mxu0
  %453 = vdwg.mxu0
  %v458 = vunpack.c.l.b16 %v223
  %v459 = vunpack.c.l.b16 %v224
  %v460 = vunpack.c.l.b16 %v225
  %v461 = vunpack.c.l.b16 %v226
  %v462 = vpack.c.b16 %v459, %v458
  %v463 = vpack.c.b16 %v461, %v460
  %v467 = vsel %vm355, %v153, 0
  %469 = vmatprep.subr.bf16.mxu0 0
  %470 = vmatpush1.bf16.msra.mxu0 %v462
  %471 = vmatprep.subr.bf16.mxu0 0
  %472 = vmatpush1.bf16.msra.mxu0 %v463
  %473 = vmatprep.subr.bf16.mxu0 0
  %474 = vmatpush1.bf16.msra.mxu0 0
  %475 = vmatprep.subr.bf16.mxu0 0
  %476 = vmatpush1.bf16.msra.mxu0 0
  %477 = vmatprep.subr.bf16.mxu0 0
  %478 = vmatpush1.bf16.msra.mxu0 0
  %479 = vmatprep.subr.bf16.mxu0 0
  %480 = vmatpush1.bf16.msra.mxu0 0
  %481 = vmatprep.subr.bf16.mxu0 0
  %482 = vmatpush1.bf16.msra.mxu0 0
  %483 = vmatprep.subr.bf16.mxu0 0
  %484 = vmatpush1.bf16.msra.mxu0 0
  %485 = vmatprep.subr.bf16.mxu0 0
  %486 = vmatpush1.bf16.msra.mxu0 0
  %487 = vmatprep.subr.bf16.mxu0 0
  %488 = vmatpush1.bf16.msra.mxu0 0
  %489 = vmatprep.subr.bf16.mxu0 0
  %490 = vmatpush1.bf16.msra.mxu0 0
  %491 = vmatprep.subr.bf16.mxu0 0
  %492 = vmatpush1.bf16.msra.mxu0 0
  %493 = vmatprep.subr.bf16.mxu0 0
  %494 = vmatpush1.bf16.msra.mxu0 0
  %495 = vmatprep.subr.bf16.mxu0 0
  %496 = vmatpush1.bf16.msra.mxu0 0
  %497 = vmatprep.subr.bf16.mxu0 0
  %498 = vmatpush1.bf16.msra.mxu0 0
  %499 = vmatprep.subr.bf16.mxu0 0
  %500 = vmatpush1.bf16.msra.mxu0 0
  %501 = vmatprep.mubr.bf16.mxu0 0
  %502 = vmatmul.mubr.bf16.gmra.mrb[0].mxu0 %v467
  %v503 = vpop.f32.mrb[0].mxu0
  %v504 = vadd.f32 0.0, %v503
  %v505 = vpop.f32.mrb[0].mxu0
  %v506 = vpop.f32.mrb[0].mxu0
  %v507 = vpop.f32.mrb[0].mxu0
  %508 = vdwg.mxu0
  %v513 = vunpack.c.l.b16 %v227
  %v514 = vunpack.c.l.b16 %v228
  %v515 = vunpack.c.l.b16 %v229
  %v516 = vunpack.c.l.b16 %v230
  %v517 = vpack.c.b16 %v514, %v513
  %v518 = vpack.c.b16 %v516, %v515
  %v522 = vsel %vm355, %v154, 0
  %524 = vmatprep.subr.bf16.mxu0 0
  %525 = vmatpush1.bf16.msra.mxu0 %v517
  %526 = vmatprep.subr.bf16.mxu0 0
  %527 = vmatpush1.bf16.msra.mxu0 %v518
  %528 = vmatprep.subr.bf16.mxu0 0
  %529 = vmatpush1.bf16.msra.mxu0 0
  %530 = vmatprep.subr.bf16.mxu0 0
  %531 = vmatpush1.bf16.msra.mxu0 0
  %532 = vmatprep.subr.bf16.mxu0 0
  %533 = vmatpush1.bf16.msra.mxu0 0
  %534 = vmatprep.subr.bf16.mxu0 0
  %535 = vmatpush1.bf16.msra.mxu0 0
  %536 = vmatprep.subr.bf16.mxu0 0
  %537 = vmatpush1.bf16.msra.mxu0 0
  %538 = vmatprep.subr.bf16.mxu0 0
  %539 = vmatpush1.bf16.msra.mxu0 0
  %540 = vmatprep.subr.bf16.mxu0 0
  %541 = vmatpush1.bf16.msra.mxu0 0
  %542 = vmatprep.subr.bf16.mxu0 0
  %543 = vmatpush1.bf16.msra.mxu0 0
  %544 = vmatprep.subr.bf16.mxu0 0
  %545 = vmatpush1.bf16.msra.mxu0 0
  %546 = vmatprep.subr.bf16.mxu0 0
  %547 = vmatpush1.bf16.msra.mxu0 0
  %548 = vmatprep.subr.bf16.mxu0 0
  %549 = vmatpush1.bf16.msra.mxu0 0
  %550 = vmatprep.subr.bf16.mxu0 0
  %551 = vmatpush1.bf16.msra.mxu0 0
  %552 = vmatprep.subr.bf16.mxu0 0
  %553 = vmatpush1.bf16.msra.mxu0 0
  %554 = vmatprep.subr.bf16.mxu0 0
  %555 = vmatpush1.bf16.msra.mxu0 0
  %556 = vmatprep.mubr.bf16.mxu0 0
  %557 = vmatmul.mubr.bf16.gmra.mrb[0].mxu0 %v522
  %v558 = vpop.f32.mrb[0].mxu0
  %v559 = vadd.f32 0.0, %v558
  %v560 = vpop.f32.mrb[0].mxu0
  %v561 = vpop.f32.mrb[0].mxu0
  %v562 = vpop.f32.mrb[0].mxu0
  %563 = vdwg.mxu0
  %v568 = vunpack.c.l.b16 %v231
  %v569 = vunpack.c.l.b16 %v232
  %v570 = vunpack.c.l.b16 %v233
  %v571 = vunpack.c.l.b16 %v234
  %v572 = vpack.c.b16 %v569, %v568
  %v573 = vpack.c.b16 %v571, %v570
  %v577 = vsel %vm355, %v155, 0
  %579 = vmatprep.subr.bf16.mxu0 0
  %580 = vmatpush1.bf16.msra.mxu0 %v572
  %581 = vmatprep.subr.bf16.mxu0 0
  %582 = vmatpush1.bf16.msra.mxu0 %v573
  %583 = vmatprep.subr.bf16.mxu0 0
  %584 = vmatpush1.bf16.msra.mxu0 0
  %585 = vmatprep.subr.bf16.mxu0 0
  %586 = vmatpush1.bf16.msra.mxu0 0
  %587 = vmatprep.subr.bf16.mxu0 0
  %588 = vmatpush1.bf16.msra.mxu0 0
  %589 = vmatprep.subr.bf16.mxu0 0
  %590 = vmatpush1.bf16.msra.mxu0 0
  %591 = vmatprep.subr.bf16.mxu0 0
  %592 = vmatpush1.bf16.msra.mxu0 0
  %593 = vmatprep.subr.bf16.mxu0 0
  %594 = vmatpush1.bf16.msra.mxu0 0
  %595 = vmatprep.subr.bf16.mxu0 0
  %596 = vmatpush1.bf16.msra.mxu0 0
  %597 = vmatprep.subr.bf16.mxu0 0
  %598 = vmatpush1.bf16.msra.mxu0 0
  %599 = vmatprep.subr.bf16.mxu0 0
  %600 = vmatpush1.bf16.msra.mxu0 0
  %601 = vmatprep.subr.bf16.mxu0 0
  %602 = vmatpush1.bf16.msra.mxu0 0
  %603 = vmatprep.subr.bf16.mxu0 0
  %604 = vmatpush1.bf16.msra.mxu0 0
  %605 = vmatprep.subr.bf16.mxu0 0
  %606 = vmatpush1.bf16.msra.mxu0 0
  %607 = vmatprep.subr.bf16.mxu0 0
  %608 = vmatpush1.bf16.msra.mxu0 0
  %609 = vmatprep.subr.bf16.mxu0 0
  %610 = vmatpush1.bf16.msra.mxu0 0
  %611 = vmatprep.mubr.bf16.mxu0 0
  %612 = vmatmul.mubr.bf16.gmra.mrb[0].mxu0 %v577
  %v613 = vpop.f32.mrb[0].mxu0
  %v614 = vadd.f32 0.0, %v613
  %v615 = vpop.f32.mrb[0].mxu0
  %v616 = vpop.f32.mrb[0].mxu0
  %v617 = vpop.f32.mrb[0].mxu0
  %618 = vdwg.mxu0
  %v623 = vunpack.c.l.b16 %v235
  %v624 = vunpack.c.l.b16 %v236
  %v625 = vunpack.c.l.b16 %v237
  %v626 = vunpack.c.l.b16 %v238
  %v627 = vpack.c.b16 %v624, %v623
  %v628 = vpack.c.b16 %v626, %v625
  %v632 = vsel %vm355, %v156, 0
  %634 = vmatprep.subr.bf16.mxu0 0
  %635 = vmatpush1.bf16.msra.mxu0 %v627
  %636 = vmatprep.subr.bf16.mxu0 0
  %637 = vmatpush1.bf16.msra.mxu0 %v628
  %638 = vmatprep.subr.bf16.mxu0 0
  %639 = vmatpush1.bf16.msra.mxu0 0
  %640 = vmatprep.subr.bf16.mxu0 0
  %641 = vmatpush1.bf16.msra.mxu0 0
  %642 = vmatprep.subr.bf16.mxu0 0
  %643 = vmatpush1.bf16.msra.mxu0 0
  %644 = vmatprep.subr.bf16.mxu0 0
  %645 = vmatpush1.bf16.msra.mxu0 0
  %646 = vmatprep.subr.bf16.mxu0 0
  %647 = vmatpush1.bf16.msra.mxu0 0
  %648 = vmatprep.subr.bf16.mxu0 0
  %649 = vmatpush1.bf16.msra.mxu0 0
  %650 = vmatprep.subr.bf16.mxu0 0
  %651 = vmatpush1.bf16.msra.mxu0 0
  %652 = vmatprep.subr.bf16.mxu0 0
  %653 = vmatpush1.bf16.msra.mxu0 0
  %654 = vmatprep.subr.bf16.mxu0 0
  %655 = vmatpush1.bf16.msra.mxu0 0
  %656 = vmatprep.subr.bf16.mxu0 0
  %657 = vmatpush1.bf16.msra.mxu0 0
  %658 = vmatprep.subr.bf16.mxu0 0
  %659 = vmatpush1.bf16.msra.mxu0 0
  %660 = vmatprep.subr.bf16.mxu0 0
  %661 = vmatpush1.bf16.msra.mxu0 0
  %662 = vmatprep.subr.bf16.mxu0 0
  %663 = vmatpush1.bf16.msra.mxu0 0
  %664 = vmatprep.subr.bf16.mxu0 0
  %665 = vmatpush1.bf16.msra.mxu0 0
  %666 = vmatprep.mubr.bf16.mxu0 0
  %667 = vmatmul.mubr.bf16.gmra.mrb[0].mxu0 %v632
  %v668 = vpop.f32.mrb[0].mxu0
  %v669 = vadd.f32 0.0, %v668
  %v670 = vpop.f32.mrb[0].mxu0
  %v671 = vpop.f32.mrb[0].mxu0
  %v672 = vpop.f32.mrb[0].mxu0
  %673 = vdwg.mxu0
  %v678 = vunpack.c.l.b16 %v239
  %v679 = vunpack.c.l.b16 %v240
  %v680 = vunpack.c.l.b16 %v241
  %v681 = vunpack.c.l.b16 %v242
  %v682 = vpack.c.b16 %v679, %v678
  %v683 = vpack.c.b16 %v681, %v680
  %v687 = vsel %vm355, %v157, 0
  %689 = vmatprep.subr.bf16.mxu0 0
  %690 = vmatpush1.bf16.msra.mxu0 %v682
  %691 = vmatprep.subr.bf16.mxu0 0
  %692 = vmatpush1.bf16.msra.mxu0 %v683
  %693 = vmatprep.subr.bf16.mxu0 0
  %694 = vmatpush1.bf16.msra.mxu0 0
  %695 = vmatprep.subr.bf16.mxu0 0
  %696 = vmatpush1.bf16.msra.mxu0 0
  %697 = vmatprep.subr.bf16.mxu0 0
  %698 = vmatpush1.bf16.msra.mxu0 0
  %699 = vmatprep.subr.bf16.mxu0 0
  %700 = vmatpush1.bf16.msra.mxu0 0
  %701 = vmatprep.subr.bf16.mxu0 0
  %702 = vmatpush1.bf16.msra.mxu0 0
  %703 = vmatprep.subr.bf16.mxu0 0
  %704 = vmatpush1.bf16.msra.mxu0 0
  %705 = vmatprep.subr.bf16.mxu0 0
  %706 = vmatpush1.bf16.msra.mxu0 0
  %707 = vmatprep.subr.bf16.mxu0 0
  %708 = vmatpush1.bf16.msra.mxu0 0
  %709 = vmatprep.subr.bf16.mxu0 0
  %710 = vmatpush1.bf16.msra.mxu0 0
  %711 = vmatprep.subr.bf16.mxu0 0
  %712 = vmatpush1.bf16.msra.mxu0 0
  %713 = vmatprep.subr.bf16.mxu0 0
  %714 = vmatpush1.bf16.msra.mxu0 0
  %715 = vmatprep.subr.bf16.mxu0 0
  %716 = vmatpush1.bf16.msra.mxu0 0
  %717 = vmatprep.subr.bf16.mxu0 0
  %718 = vmatpush1.bf16.msra.mxu0 0
  %719 = vmatprep.subr.bf16.mxu0 0
  %720 = vmatpush1.bf16.msra.mxu0 0
  %721 = vmatprep.mubr.bf16.mxu0 0
  %722 = vmatmul.mubr.bf16.gmra.mrb[0].mxu0 %v687
  %v723 = vpop.f32.mrb[0].mxu0
  %v724 = vadd.f32 0.0, %v723
  %v725 = vpop.f32.mrb[0].mxu0
  %v726 = vpop.f32.mrb[0].mxu0
  %v727 = vpop.f32.mrb[0].mxu0
  %728 = vdwg.mxu0
  %v733 = vunpack.c.l.b16 %v243
  %v734 = vunpack.c.l.b16 %v244
  %v735 = vunpack.c.l.b16 %v245
  %v736 = vunpack.c.l.b16 %v246
  %v737 = vpack.c.b16 %v734, %v733
  %v738 = vpack.c.b16 %v736, %v735
  %v742 = vsel %vm355, %v158, 0
  %744 = vmatprep.subr.bf16.mxu0 0
  %745 = vmatpush1.bf16.msra.mxu0 %v737
  %746 = vmatprep.subr.bf16.mxu0 0
  %747 = vmatpush1.bf16.msra.mxu0 %v738
  %748 = vmatprep.subr.bf16.mxu0 0
  %749 = vmatpush1.bf16.msra.mxu0 0
  %750 = vmatprep.subr.bf16.mxu0 0
  %751 = vmatpush1.bf16.msra.mxu0 0
  %752 = vmatprep.subr.bf16.mxu0 0
  %753 = vmatpush1.bf16.msra.mxu0 0
  %754 = vmatprep.subr.bf16.mxu0 0
  %755 = vmatpush1.bf16.msra.mxu0 0
  %756 = vmatprep.subr.bf16.mxu0 0
  %757 = vmatpush1.bf16.msra.mxu0 0
  %758 = vmatprep.subr.bf16.mxu0 0
  %759 = vmatpush1.bf16.msra.mxu0 0
  %760 = vmatprep.subr.bf16.mxu0 0
  %761 = vmatpush1.bf16.msra.mxu0 0
  %762 = vmatprep.subr.bf16.mxu0 0
  %763 = vmatpush1.bf16.msra.mxu0 0
  %764 = vmatprep.subr.bf16.mxu0 0
  %765 = vmatpush1.bf16.msra.mxu0 0
  %766 = vmatprep.subr.bf16.mxu0 0
  %767 = vmatpush1.bf16.msra.mxu0 0
  %768 = vmatprep.subr.bf16.mxu0 0
  %769 = vmatpush1.bf16.msra.mxu0 0
  %770 = vmatprep.subr.bf16.mxu0 0
  %771 = vmatpush1.bf16.msra.mxu0 0
  %772 = vmatprep.subr.bf16.mxu0 0
  %773 = vmatpush1.bf16.msra.mxu0 0
  %774 = vmatprep.subr.bf16.mxu0 0
  %775 = vmatpush1.bf16.msra.mxu0 0
  %776 = vmatprep.mubr.bf16.mxu0 0
  %777 = vmatmul.mubr.bf16.gmra.mrb[0].mxu0 %v742
  %v778 = vpop.f32.mrb[0].mxu0
  %v779 = vadd.f32 0.0, %v778
  %v780 = vpop.f32.mrb[0].mxu0
  %v781 = vpop.f32.mrb[0].mxu0
  %v782 = vpop.f32.mrb[0].mxu0
  %783 = vdwg.mxu0
  %v788 = vunpack.c.l.b16 %v247
  %v789 = vunpack.c.l.b16 %v248
  %v790 = vunpack.c.l.b16 %v249
  %v791 = vunpack.c.l.b16 %v250
  %v792 = vpack.c.b16 %v789, %v788
  %v793 = vpack.c.b16 %v791, %v790
  %v797 = vsel %vm355, %v159, 0
  %799 = vmatprep.subr.bf16.mxu0 0
  %800 = vmatpush1.bf16.msra.mxu0 %v792
  %801 = vmatprep.subr.bf16.mxu0 0
  %802 = vmatpush1.bf16.msra.mxu0 %v793
  %803 = vmatprep.subr.bf16.mxu0 0
  %804 = vmatpush1.bf16.msra.mxu0 0
  %805 = vmatprep.subr.bf16.mxu0 0
  %806 = vmatpush1.bf16.msra.mxu0 0
  %807 = vmatprep.subr.bf16.mxu0 0
  %808 = vmatpush1.bf16.msra.mxu0 0
  %809 = vmatprep.subr.bf16.mxu0 0
  %810 = vmatpush1.bf16.msra.mxu0 0
  %811 = vmatprep.subr.bf16.mxu0 0
  %812 = vmatpush1.bf16.msra.mxu0 0
  %813 = vmatprep.subr.bf16.mxu0 0
  %814 = vmatpush1.bf16.msra.mxu0 0
  %815 = vmatprep.subr.bf16.mxu0 0
  %816 = vmatpush1.bf16.msra.mxu0 0
  %817 = vmatprep.subr.bf16.mxu0 0
  %818 = vmatpush1.bf16.msra.mxu0 0
  %819 = vmatprep.subr.bf16.mxu0 0
  %820 = vmatpush1.bf16.msra.mxu0 0
  %821 = vmatprep.subr.bf16.mxu0 0
  %822 = vmatpush1.bf16.msra.mxu0 0
  %823 = vmatprep.subr.bf16.mxu0 0
  %824 = vmatpush1.bf16.msra.mxu0 0
  %825 = vmatprep.subr.bf16.mxu0 0
  %826 = vmatpush1.bf16.msra.mxu0 0
  %827 = vmatprep.subr.bf16.mxu0 0
  %828 = vmatpush1.bf16.msra.mxu0 0
  %829 = vmatprep.subr.bf16.mxu0 0
  %830 = vmatpush1.bf16.msra.mxu0 0
  %831 = vmatprep.mubr.bf16.mxu0 0
  %832 = vmatmul.mubr.bf16.gmra.mrb[0].mxu0 %v797
  %v833 = vpop.f32.mrb[0].mxu0
  %v834 = vadd.f32 0.0, %v833
  %v835 = vpop.f32.mrb[0].mxu0
  %v836 = vpop.f32.mrb[0].mxu0
  %v837 = vpop.f32.mrb[0].mxu0
  %838 = vdwg.mxu0
  %v843 = vunpack.c.l.b16 %v251
  %v844 = vunpack.c.l.b16 %v252
  %v845 = vunpack.c.l.b16 %v253
  %v846 = vunpack.c.l.b16 %v254
  %v847 = vpack.c.b16 %v844, %v843
  %v848 = vpack.c.b16 %v846, %v845
  %v852 = vsel %vm355, %v160, 0
  %854 = vmatprep.subr.bf16.mxu0 0
  %855 = vmatpush1.bf16.msra.mxu0 %v847
  %856 = vmatprep.subr.bf16.mxu0 0
  %857 = vmatpush1.bf16.msra.mxu0 %v848
  %858 = vmatprep.subr.bf16.mxu0 0
  %859 = vmatpush1.bf16.msra.mxu0 0
  %860 = vmatprep.subr.bf16.mxu0 0
  %861 = vmatpush1.bf16.msra.mxu0 0
  %862 = vmatprep.subr.bf16.mxu0 0
  %863 = vmatpush1.bf16.msra.mxu0 0
  %864 = vmatprep.subr.bf16.mxu0 0
  %865 = vmatpush1.bf16.msra.mxu0 0
  %866 = vmatprep.subr.bf16.mxu0 0
  %867 = vmatpush1.bf16.msra.mxu0 0
  %868 = vmatprep.subr.bf16.mxu0 0
  %869 = vmatpush1.bf16.msra.mxu0 0
  %870 = vmatprep.subr.bf16.mxu0 0
  %871 = vmatpush1.bf16.msra.mxu0 0
  %872 = vmatprep.subr.bf16.mxu0 0
  %873 = vmatpush1.bf16.msra.mxu0 0
  %874 = vmatprep.subr.bf16.mxu0 0
  %875 = vmatpush1.bf16.msra.mxu0 0
  %876 = vmatprep.subr.bf16.mxu0 0
  %877 = vmatpush1.bf16.msra.mxu0 0
  %878 = vmatprep.subr.bf16.mxu0 0
  %879 = vmatpush1.bf16.msra.mxu0 0
  %880 = vmatprep.subr.bf16.mxu0 0
  %881 = vmatpush1.bf16.msra.mxu0 0
  %882 = vmatprep.subr.bf16.mxu0 0
  %883 = vmatpush1.bf16.msra.mxu0 0
  %884 = vmatprep.subr.bf16.mxu0 0
  %885 = vmatpush1.bf16.msra.mxu0 0
  %886 = vmatprep.mubr.bf16.mxu0 0
  %887 = vmatmul.mubr.bf16.gmra.mrb[0].mxu0 %v852
  %v888 = vpop.f32.mrb[0].mxu0
  %v889 = vadd.f32 0.0, %v888
  %v890 = vpop.f32.mrb[0].mxu0
  %v891 = vpop.f32.mrb[0].mxu0
  %v892 = vpop.f32.mrb[0].mxu0
  %893 = vdwg.mxu0
  %v898 = vunpack.c.l.b16 %v255
  %v899 = vunpack.c.l.b16 %v256
  %v900 = vunpack.c.l.b16 %v257
  %v901 = vunpack.c.l.b16 %v258
  %v902 = vpack.c.b16 %v899, %v898
  %v903 = vpack.c.b16 %v901, %v900
  %v907 = vsel %vm355, %v161, 0
  %909 = vmatprep.subr.bf16.mxu0 0
  %910 = vmatpush1.bf16.msra.mxu0 %v902
  %911 = vmatprep.subr.bf16.mxu0 0
  %912 = vmatpush1.bf16.msra.mxu0 %v903
  %913 = vmatprep.subr.bf16.mxu0 0
  %914 = vmatpush1.bf16.msra.mxu0 0
  %915 = vmatprep.subr.bf16.mxu0 0
  %916 = vmatpush1.bf16.msra.mxu0 0
  %917 = vmatprep.subr.bf16.mxu0 0
  %918 = vmatpush1.bf16.msra.mxu0 0
  %919 = vmatprep.subr.bf16.mxu0 0
  %920 = vmatpush1.bf16.msra.mxu0 0
  %921 = vmatprep.subr.bf16.mxu0 0
  %922 = vmatpush1.bf16.msra.mxu0 0
  %923 = vmatprep.subr.bf16.mxu0 0
  %924 = vmatpush1.bf16.msra.mxu0 0
  %925 = vmatprep.subr.bf16.mxu0 0
  %926 = vmatpush1.bf16.msra.mxu0 0
  %927 = vmatprep.subr.bf16.mxu0 0
  %928 = vmatpush1.bf16.msra.mxu0 0
  %929 = vmatprep.subr.bf16.mxu0 0
  %930 = vmatpush1.bf16.msra.mxu0 0
  %931 = vmatprep.subr.bf16.mxu0 0
  %932 = vmatpush1.bf16.msra.mxu0 0
  %933 = vmatprep.subr.bf16.mxu0 0
  %934 = vmatpush1.bf16.msra.mxu0 0
  %935 = vmatprep.subr.bf16.mxu0 0
  %936 = vmatpush1.bf16.msra.mxu0 0
  %937 = vmatprep.subr.bf16.mxu0 0
  %938 = vmatpush1.bf16.msra.mxu0 0
  %939 = vmatprep.subr.bf16.mxu0 0
  %940 = vmatpush1.bf16.msra.mxu0 0
  %941 = vmatprep.mubr.bf16.mxu0 0
  %942 = vmatmul.mubr.bf16.gmra.mrb[0].mxu0 %v907
  %v943 = vpop.f32.mrb[0].mxu0
  %v944 = vadd.f32 0.0, %v943
  %v945 = vpop.f32.mrb[0].mxu0
  %v946 = vpop.f32.mrb[0].mxu0
  %v947 = vpop.f32.mrb[0].mxu0
  %948 = vdwg.mxu0
  %v953 = vunpack.c.l.b16 %v259
  %v954 = vunpack.c.l.b16 %v260
  %v955 = vunpack.c.l.b16 %v261
  %v956 = vunpack.c.l.b16 %v262
  %v957 = vpack.c.b16 %v954, %v953
  %v958 = vpack.c.b16 %v956, %v955
  %v962 = vsel %vm355, %v162, 0
  %964 = vmatprep.subr.bf16.mxu0 0
  %965 = vmatpush1.bf16.msra.mxu0 %v957
  %966 = vmatprep.subr.bf16.mxu0 0
  %967 = vmatpush1.bf16.msra.mxu0 %v958
  %968 = vmatprep.subr.bf16.mxu0 0
  %969 = vmatpush1.bf16.msra.mxu0 0
  %970 = vmatprep.subr.bf16.mxu0 0
  %971 = vmatpush1.bf16.msra.mxu0 0
  %972 = vmatprep.subr.bf16.mxu0 0
  %973 = vmatpush1.bf16.msra.mxu0 0
  %974 = vmatprep.subr.bf16.mxu0 0
  %975 = vmatpush1.bf16.msra.mxu0 0
  %976 = vmatprep.subr.bf16.mxu0 0
  %977 = vmatpush1.bf16.msra.mxu0 0
  %978 = vmatprep.subr.bf16.mxu0 0
  %979 = vmatpush1.bf16.msra.mxu0 0
  %980 = vmatprep.subr.bf16.mxu0 0
  %981 = vmatpush1.bf16.msra.mxu0 0
  %982 = vmatprep.subr.bf16.mxu0 0
  %983 = vmatpush1.bf16.msra.mxu0 0
  %984 = vmatprep.subr.bf16.mxu0 0
  %985 = vmatpush1.bf16.msra.mxu0 0
  %986 = vmatprep.subr.bf16.mxu0 0
  %987 = vmatpush1.bf16.msra.mxu0 0
  %988 = vmatprep.subr.bf16.mxu0 0
  %989 = vmatpush1.bf16.msra.mxu0 0
  %990 = vmatprep.subr.bf16.mxu0 0
  %991 = vmatpush1.bf16.msra.mxu0 0
  %992 = vmatprep.subr.bf16.mxu0 0
  %993 = vmatpush1.bf16.msra.mxu0 0
  %994 = vmatprep.subr.bf16.mxu0 0
  %995 = vmatpush1.bf16.msra.mxu0 0
  %996 = vmatprep.mubr.bf16.mxu0 0
  %997 = vmatmul.mubr.bf16.gmra.mrb[0].mxu0 %v962
  %v998 = vpop.f32.mrb[0].mxu0
  %v999 = vadd.f32 0.0, %v998
  %v1000 = vpop.f32.mrb[0].mxu0
  %v1001 = vpop.f32.mrb[0].mxu0
  %v1002 = vpop.f32.mrb[0].mxu0
  %1003 = vdwg.mxu0
  %v1008 = vunpack.c.l.b16 %v263
  %v1009 = vunpack.c.l.b16 %v264
  %v1010 = vunpack.c.l.b16 %v265
  %v1011 = vunpack.c.l.b16 %v266
  %v1012 = vpack.c.b16 %v1009, %v1008
  %v1013 = vpack.c.b16 %v1011, %v1010
  %v1017 = vsel %vm355, %v163, 0
  %1019 = vmatprep.subr.bf16.mxu0 0
  %1020 = vmatpush1.bf16.msra.mxu0 %v1012
  %1021 = vmatprep.subr.bf16.mxu0 0
  %1022 = vmatpush1.bf16.msra.mxu0 %v1013
  %1023 = vmatprep.subr.bf16.mxu0 0
  %1024 = vmatpush1.bf16.msra.mxu0 0
  %1025 = vmatprep.subr.bf16.mxu0 0
  %1026 = vmatpush1.bf16.msra.mxu0 0
  %1027 = vmatprep.subr.bf16.mxu0 0
  %1028 = vmatpush1.bf16.msra.mxu0 0
  %1029 = vmatprep.subr.bf16.mxu0 0
  %1030 = vmatpush1.bf16.msra.mxu0 0
  %1031 = vmatprep.subr.bf16.mxu0 0
  %1032 = vmatpush1.bf16.msra.mxu0 0
  %1033 = vmatprep.subr.bf16.mxu0 0
  %1034 = vmatpush1.bf16.msra.mxu0 0
  %1035 = vmatprep.subr.bf16.mxu0 0
  %1036 = vmatpush1.bf16.msra.mxu0 0
  %1037 = vmatprep.subr.bf16.mxu0 0
  %1038 = vmatpush1.bf16.msra.mxu0 0
  %1039 = vmatprep.subr.bf16.mxu0 0
  %1040 = vmatpush1.bf16.msra.mxu0 0
  %1041 = vmatprep.subr.bf16.mxu0 0
  %1042 = vmatpush1.bf16.msra.mxu0 0
  %1043 = vmatprep.subr.bf16.mxu0 0
  %1044 = vmatpush1.bf16.msra.mxu0 0
  %1045 = vmatprep.subr.bf16.mxu0 0
  %1046 = vmatpush1.bf16.msra.mxu0 0
  %1047 = vmatprep.subr.bf16.mxu0 0
  %1048 = vmatpush1.bf16.msra.mxu0 0
  %1049 = vmatprep.subr.bf16.mxu0 0
  %1050 = vmatpush1.bf16.msra.mxu0 0
  %1051 = vmatprep.mubr.bf16.mxu0 0
  %1052 = vmatmul.mubr.bf16.gmra.mrb[0].mxu0 %v1017
  %v1053 = vpop.f32.mrb[0].mxu0
  %v1054 = vadd.f32 0.0, %v1053
  %v1055 = vpop.f32.mrb[0].mxu0
  %v1056 = vpop.f32.mrb[0].mxu0
  %v1057 = vpop.f32.mrb[0].mxu0
  %1058 = vdwg.mxu0
  %v1063 = vunpack.c.l.b16 %v267
  %v1064 = vunpack.c.l.b16 %v268
  %v1065 = vunpack.c.l.b16 %v269
  %v1066 = vunpack.c.l.b16 %v270
  %v1067 = vpack.c.b16 %v1064, %v1063
  %v1068 = vpack.c.b16 %v1066, %v1065
  %v1072 = vsel %vm355, %v164, 0
  %1074 = vmatprep.subr.bf16.mxu0 0
  %1075 = vmatpush1.bf16.msra.mxu0 %v1067
  %1076 = vmatprep.subr.bf16.mxu0 0
  %1077 = vmatpush1.bf16.msra.mxu0 %v1068
  %1078 = vmatprep.subr.bf16.mxu0 0
  %1079 = vmatpush1.bf16.msra.mxu0 0
  %1080 = vmatprep.subr.bf16.mxu0 0
  %1081 = vmatpush1.bf16.msra.mxu0 0
  %1082 = vmatprep.subr.bf16.mxu0 0
  %1083 = vmatpush1.bf16.msra.mxu0 0
  %1084 = vmatprep.subr.bf16.mxu0 0
  %1085 = vmatpush1.bf16.msra.mxu0 0
  %1086 = vmatprep.subr.bf16.mxu0 0
  %1087 = vmatpush1.bf16.msra.mxu0 0
  %1088 = vmatprep.subr.bf16.mxu0 0
  %1089 = vmatpush1.bf16.msra.mxu0 0
  %1090 = vmatprep.subr.bf16.mxu0 0
  %1091 = vmatpush1.bf16.msra.mxu0 0
  %1092 = vmatprep.subr.bf16.mxu0 0
  %1093 = vmatpush1.bf16.msra.mxu0 0
  %1094 = vmatprep.subr.bf16.mxu0 0
  %1095 = vmatpush1.bf16.msra.mxu0 0
  %1096 = vmatprep.subr.bf16.mxu0 0
  %1097 = vmatpush1.bf16.msra.mxu0 0
  %1098 = vmatprep.subr.bf16.mxu0 0
  %1099 = vmatpush1.bf16.msra.mxu0 0
  %1100 = vmatprep.subr.bf16.mxu0 0
  %1101 = vmatpush1.bf16.msra.mxu0 0
  %1102 = vmatprep.subr.bf16.mxu0 0
  %1103 = vmatpush1.bf16.msra.mxu0 0
  %1104 = vmatprep.subr.bf16.mxu0 0
  %1105 = vmatpush1.bf16.msra.mxu0 0
  %1106 = vmatprep.mubr.bf16.mxu0 0
  %1107 = vmatmul.mubr.bf16.gmra.mrb[0].mxu0 %v1072
  %v1108 = vpop.f32.mrb[0].mxu0
  %v1109 = vadd.f32 0.0, %v1108
  %v1110 = vpop.f32.mrb[0].mxu0
  %v1111 = vpop.f32.mrb[0].mxu0
  %v1112 = vpop.f32.mrb[0].mxu0
  %1113 = vdwg.mxu0
  %v1118 = vunpack.c.l.b16 %v271
  %v1119 = vunpack.c.l.b16 %v272
  %v1120 = vunpack.c.l.b16 %v273
  %v1121 = vunpack.c.l.b16 %v274
  %v1122 = vpack.c.b16 %v1119, %v1118
  %v1123 = vpack.c.b16 %v1121, %v1120
  %v1127 = vsel %vm355, %v165, 0
  %1129 = vmatprep.subr.bf16.mxu0 0
  %1130 = vmatpush1.bf16.msra.mxu0 %v1122
  %1131 = vmatprep.subr.bf16.mxu0 0
  %1132 = vmatpush1.bf16.msra.mxu0 %v1123
  %1133 = vmatprep.subr.bf16.mxu0 0
  %1134 = vmatpush1.bf16.msra.mxu0 0
  %1135 = vmatprep.subr.bf16.mxu0 0
  %1136 = vmatpush1.bf16.msra.mxu0 0
  %1137 = vmatprep.subr.bf16.mxu0 0
  %1138 = vmatpush1.bf16.msra.mxu0 0
  %1139 = vmatprep.subr.bf16.mxu0 0
  %1140 = vmatpush1.bf16.msra.mxu0 0
  %1141 = vmatprep.subr.bf16.mxu0 0
  %1142 = vmatpush1.bf16.msra.mxu0 0
  %1143 = vmatprep.subr.bf16.mxu0 0
  %1144 = vmatpush1.bf16.msra.mxu0 0
  %1145 = vmatprep.subr.bf16.mxu0 0
  %1146 = vmatpush1.bf16.msra.mxu0 0
  %1147 = vmatprep.subr.bf16.mxu0 0
  %1148 = vmatpush1.bf16.msra.mxu0 0
  %1149 = vmatprep.subr.bf16.mxu0 0
  %1150 = vmatpush1.bf16.msra.mxu0 0
  %1151 = vmatprep.subr.bf16.mxu0 0
  %1152 = vmatpush1.bf16.msra.mxu0 0
  %1153 = vmatprep.subr.bf16.mxu0 0
  %1154 = vmatpush1.bf16.msra.mxu0 0
  %1155 = vmatprep.subr.bf16.mxu0 0
  %1156 = vmatpush1.bf16.msra.mxu0 0
  %1157 = vmatprep.subr.bf16.mxu0 0
  %1158 = vmatpush1.bf16.msra.mxu0 0
  %1159 = vmatprep.subr.bf16.mxu0 0
  %1160 = vmatpush1.bf16.msra.mxu0 0
  %1161 = vmatprep.mubr.bf16.mxu0 0
  %1162 = vmatmul.mubr.bf16.gmra.mrb[0].mxu0 %v1127
  %v1163 = vpop.f32.mrb[0].mxu0
  %v1164 = vadd.f32 0.0, %v1163
  %v1165 = vpop.f32.mrb[0].mxu0
  %v1166 = vpop.f32.mrb[0].mxu0
  %v1167 = vpop.f32.mrb[0].mxu0
  %1168 = vdwg.mxu0
  %v1173 = vunpack.c.l.b16 %v275
  %v1174 = vunpack.c.l.b16 %v276
  %v1175 = vunpack.c.l.b16 %v277
  %v1176 = vunpack.c.l.b16 %v278
  %v1177 = vpack.c.b16 %v1174, %v1173
  %v1178 = vpack.c.b16 %v1176, %v1175
  %v1182 = vsel %vm355, %v166, 0
  %1184 = vmatprep.subr.bf16.mxu0 0
  %1185 = vmatpush1.bf16.msra.mxu0 %v1177
  %1186 = vmatprep.subr.bf16.mxu0 0
  %1187 = vmatpush1.bf16.msra.mxu0 %v1178
  %1188 = vmatprep.subr.bf16.mxu0 0
  %1189 = vmatpush1.bf16.msra.mxu0 0
  %1190 = vmatprep.subr.bf16.mxu0 0
  %1191 = vmatpush1.bf16.msra.mxu0 0
  %1192 = vmatprep.subr.bf16.mxu0 0
  %1193 = vmatpush1.bf16.msra.mxu0 0
  %1194 = vmatprep.subr.bf16.mxu0 0
  %1195 = vmatpush1.bf16.msra.mxu0 0
  %1196 = vmatprep.subr.bf16.mxu0 0
  %1197 = vmatpush1.bf16.msra.mxu0 0
  %1198 = vmatprep.subr.bf16.mxu0 0
  %1199 = vmatpush1.bf16.msra.mxu0 0
  %1200 = vmatprep.subr.bf16.mxu0 0
  %1201 = vmatpush1.bf16.msra.mxu0 0
  %1202 = vmatprep.subr.bf16.mxu0 0
  %1203 = vmatpush1.bf16.msra.mxu0 0
  %1204 = vmatprep.subr.bf16.mxu0 0
  %1205 = vmatpush1.bf16.msra.mxu0 0
  %1206 = vmatprep.subr.bf16.mxu0 0
  %1207 = vmatpush1.bf16.msra.mxu0 0
  %1208 = vmatprep.subr.bf16.mxu0 0
  %1209 = vmatpush1.bf16.msra.mxu0 0
  %1210 = vmatprep.subr.bf16.mxu0 0
  %1211 = vmatpush1.bf16.msra.mxu0 0
  %1212 = vmatprep.subr.bf16.mxu0 0
  %1213 = vmatpush1.bf16.msra.mxu0 0
  %1214 = vmatprep.subr.bf16.mxu0 0
  %1215 = vmatpush1.bf16.msra.mxu0 0
  %1216 = vmatprep.mubr.bf16.mxu0 0
  %1217 = vmatmul.mubr.bf16.gmra.mrb[0].mxu0 %v1182
  %v1218 = vpop.f32.mrb[0].mxu0
  %v1219 = vadd.f32 0.0, %v1218
  %v1220 = vpop.f32.mrb[0].mxu0
  %v1221 = vpop.f32.mrb[0].mxu0
  %v1222 = vpop.f32.mrb[0].mxu0
  %1223 = vdwg.mxu0
  %v1228 = vunpack.c.l.b16 %v279
  %v1229 = vunpack.c.l.b16 %v280
  %v1230 = vunpack.c.l.b16 %v281
  %v1231 = vunpack.c.l.b16 %v282
  %v1232 = vpack.c.b16 %v1229, %v1228
  %v1233 = vpack.c.b16 %v1231, %v1230
  %v1237 = vsel %vm355, %v167, 0
  %1239 = vmatprep.subr.bf16.mxu0 0
  %1240 = vmatpush1.bf16.msra.mxu0 %v1232
  %1241 = vmatprep.subr.bf16.mxu0 0
  %1242 = vmatpush1.bf16.msra.mxu0 %v1233
  %1243 = vmatprep.subr.bf16.mxu0 0
  %1244 = vmatpush1.bf16.msra.mxu0 0
  %1245 = vmatprep.subr.bf16.mxu0 0
  %1246 = vmatpush1.bf16.msra.mxu0 0
  %1247 = vmatprep.subr.bf16.mxu0 0
  %1248 = vmatpush1.bf16.msra.mxu0 0
  %1249 = vmatprep.subr.bf16.mxu0 0
  %1250 = vmatpush1.bf16.msra.mxu0 0
  %1251 = vmatprep.subr.bf16.mxu0 0
  %1252 = vmatpush1.bf16.msra.mxu0 0
  %1253 = vmatprep.subr.bf16.mxu0 0
  %1254 = vmatpush1.bf16.msra.mxu0 0
  %1255 = vmatprep.subr.bf16.mxu0 0
  %1256 = vmatpush1.bf16.msra.mxu0 0
  %1257 = vmatprep.subr.bf16.mxu0 0
  %1258 = vmatpush1.bf16.msra.mxu0 0
  %1259 = vmatprep.subr.bf16.mxu0 0
  %1260 = vmatpush1.bf16.msra.mxu0 0
  %1261 = vmatprep.subr.bf16.mxu0 0
  %1262 = vmatpush1.bf16.msra.mxu0 0
  %1263 = vmatprep.subr.bf16.mxu0 0
  %1264 = vmatpush1.bf16.msra.mxu0 0
  %1265 = vmatprep.subr.bf16.mxu0 0
  %1266 = vmatpush1.bf16.msra.mxu0 0
  %1267 = vmatprep.subr.bf16.mxu0 0
  %1268 = vmatpush1.bf16.msra.mxu0 0
  %1269 = vmatprep.subr.bf16.mxu0 0
  %1270 = vmatpush1.bf16.msra.mxu0 0
  %1271 = vmatprep.mubr.bf16.mxu0 0
  %1272 = vmatmul.mubr.bf16.gmra.mrb[0].mxu0 %v1237
  %v1273 = vpop.f32.mrb[0].mxu0
  %v1274 = vadd.f32 0.0, %v1273
  %v1275 = vpop.f32.mrb[0].mxu0
  %v1276 = vpop.f32.mrb[0].mxu0
  %v1277 = vpop.f32.mrb[0].mxu0
  %1278 = vdwg.mxu0
  %v1283 = vunpack.c.l.b16 %v283
  %v1284 = vunpack.c.l.b16 %v284
  %v1285 = vunpack.c.l.b16 %v285
  %v1286 = vunpack.c.l.b16 %v286
  %v1287 = vpack.c.b16 %v1284, %v1283
  %v1288 = vpack.c.b16 %v1286, %v1285
  %v1292 = vsel %vm355, %v168, 0
  %1294 = vmatprep.subr.bf16.mxu0 0
  %1295 = vmatpush1.bf16.msra.mxu0 %v1287
  %1296 = vmatprep.subr.bf16.mxu0 0
  %1297 = vmatpush1.bf16.msra.mxu0 %v1288
  %1298 = vmatprep.subr.bf16.mxu0 0
  %1299 = vmatpush1.bf16.msra.mxu0 0
  %1300 = vmatprep.subr.bf16.mxu0 0
  %1301 = vmatpush1.bf16.msra.mxu0 0
  %1302 = vmatprep.subr.bf16.mxu0 0
  %1303 = vmatpush1.bf16.msra.mxu0 0
  %1304 = vmatprep.subr.bf16.mxu0 0
  %1305 = vmatpush1.bf16.msra.mxu0 0
  %1306 = vmatprep.subr.bf16.mxu0 0
  %1307 = vmatpush1.bf16.msra.mxu0 0
  %1308 = vmatprep.subr.bf16.mxu0 0
  %1309 = vmatpush1.bf16.msra.mxu0 0
  %1310 = vmatprep.subr.bf16.mxu0 0
  %1311 = vmatpush1.bf16.msra.mxu0 0
  %1312 = vmatprep.subr.bf16.mxu0 0
  %1313 = vmatpush1.bf16.msra.mxu0 0
  %1314 = vmatprep.subr.bf16.mxu0 0
  %1315 = vmatpush1.bf16.msra.mxu0 0
  %1316 = vmatprep.subr.bf16.mxu0 0
  %1317 = vmatpush1.bf16.msra.mxu0 0
  %1318 = vmatprep.subr.bf16.mxu0 0
  %1319 = vmatpush1.bf16.msra.mxu0 0
  %1320 = vmatprep.subr.bf16.mxu0 0
  %1321 = vmatpush1.bf16.msra.mxu0 0
  %1322 = vmatprep.subr.bf16.mxu0 0
  %1323 = vmatpush1.bf16.msra.mxu0 0
  %1324 = vmatprep.subr.bf16.mxu0 0
  %1325 = vmatpush1.bf16.msra.mxu0 0
  %1326 = vmatprep.mubr.bf16.mxu0 0
  %1327 = vmatmul.mubr.bf16.gmra.mrb[0].mxu0 %v1292
  %v1328 = vpop.f32.mrb[0].mxu0
  %v1329 = vadd.f32 0.0, %v1328
  %v1330 = vpop.f32.mrb[0].mxu0
  %v1331 = vpop.f32.mrb[0].mxu0
  %v1332 = vpop.f32.mrb[0].mxu0
  %1333 = vdwg.mxu0
  %v1338 = vunpack.c.l.b16 %v287
  %v1339 = vunpack.c.l.b16 %v288
  %v1340 = vunpack.c.l.b16 %v289
  %v1341 = vunpack.c.l.b16 %v290
  %v1342 = vpack.c.b16 %v1339, %v1338
  %v1343 = vpack.c.b16 %v1341, %v1340
  %v1347 = vsel %vm355, %v169, 0
  %1349 = vmatprep.subr.bf16.mxu0 0
  %1350 = vmatpush1.bf16.msra.mxu0 %v1342
  %1351 = vmatprep.subr.bf16.mxu0 0
  %1352 = vmatpush1.bf16.msra.mxu0 %v1343
  %1353 = vmatprep.subr.bf16.mxu0 0
  %1354 = vmatpush1.bf16.msra.mxu0 0
  %1355 = vmatprep.subr.bf16.mxu0 0
  %1356 = vmatpush1.bf16.msra.mxu0 0
  %1357 = vmatprep.subr.bf16.mxu0 0
  %1358 = vmatpush1.bf16.msra.mxu0 0
  %1359 = vmatprep.subr.bf16.mxu0 0
  %1360 = vmatpush1.bf16.msra.mxu0 0
  %1361 = vmatprep.subr.bf16.mxu0 0
  %1362 = vmatpush1.bf16.msra.mxu0 0
  %1363 = vmatprep.subr.bf16.mxu0 0
  %1364 = vmatpush1.bf16.msra.mxu0 0
  %1365 = vmatprep.subr.bf16.mxu0 0
  %1366 = vmatpush1.bf16.msra.mxu0 0
  %1367 = vmatprep.subr.bf16.mxu0 0
  %1368 = vmatpush1.bf16.msra.mxu0 0
  %1369 = vmatprep.subr.bf16.mxu0 0
  %1370 = vmatpush1.bf16.msra.mxu0 0
  %1371 = vmatprep.subr.bf16.mxu0 0
  %1372 = vmatpush1.bf16.msra.mxu0 0
  %1373 = vmatprep.subr.bf16.mxu0 0
  %1374 = vmatpush1.bf16.msra.mxu0 0
  %1375 = vmatprep.subr.bf16.mxu0 0
  %1376 = vmatpush1.bf16.msra.mxu0 0
  %1377 = vmatprep.subr.bf16.mxu0 0
  %1378 = vmatpush1.bf16.msra.mxu0 0
  %1379 = vmatprep.subr.bf16.mxu0 0
  %1380 = vmatpush1.bf16.msra.mxu0 0
  %1381 = vmatprep.mubr.bf16.mxu0 0
  %1382 = vmatmul.mubr.bf16.gmra.mrb[0].mxu0 %v1347
  %v1383 = vpop.f32.mrb[0].mxu0
  %v1384 = vadd.f32 0.0, %v1383
  %v1385 = vpop.f32.mrb[0].mxu0
  %v1386 = vpop.f32.mrb[0].mxu0
  %v1387 = vpop.f32.mrb[0].mxu0
  %1388 = vdwg.mxu0
  %v1393 = vunpack.c.l.b16 %v291
  %v1394 = vunpack.c.l.b16 %v292
  %v1395 = vunpack.c.l.b16 %v293
  %v1396 = vunpack.c.l.b16 %v294
  %v1397 = vpack.c.b16 %v1394, %v1393
  %v1398 = vpack.c.b16 %v1396, %v1395
  %v1402 = vsel %vm355, %v170, 0
  %1404 = vmatprep.subr.bf16.mxu0 0
  %1405 = vmatpush1.bf16.msra.mxu0 %v1397
  %1406 = vmatprep.subr.bf16.mxu0 0
  %1407 = vmatpush1.bf16.msra.mxu0 %v1398
  %1408 = vmatprep.subr.bf16.mxu0 0
  %1409 = vmatpush1.bf16.msra.mxu0 0
  %1410 = vmatprep.subr.bf16.mxu0 0
  %1411 = vmatpush1.bf16.msra.mxu0 0
  %1412 = vmatprep.subr.bf16.mxu0 0
  %1413 = vmatpush1.bf16.msra.mxu0 0
  %1414 = vmatprep.subr.bf16.mxu0 0
  %1415 = vmatpush1.bf16.msra.mxu0 0
  %1416 = vmatprep.subr.bf16.mxu0 0
  %1417 = vmatpush1.bf16.msra.mxu0 0
  %1418 = vmatprep.subr.bf16.mxu0 0
  %1419 = vmatpush1.bf16.msra.mxu0 0
  %1420 = vmatprep.subr.bf16.mxu0 0
  %1421 = vmatpush1.bf16.msra.mxu0 0
  %1422 = vmatprep.subr.bf16.mxu0 0
  %1423 = vmatpush1.bf16.msra.mxu0 0
  %1424 = vmatprep.subr.bf16.mxu0 0
  %1425 = vmatpush1.bf16.msra.mxu0 0
  %1426 = vmatprep.subr.bf16.mxu0 0
  %1427 = vmatpush1.bf16.msra.mxu0 0
  %1428 = vmatprep.subr.bf16.mxu0 0
  %1429 = vmatpush1.bf16.msra.mxu0 0
  %1430 = vmatprep.subr.bf16.mxu0 0
  %1431 = vmatpush1.bf16.msra.mxu0 0
  %1432 = vmatprep.subr.bf16.mxu0 0
  %1433 = vmatpush1.bf16.msra.mxu0 0
  %1434 = vmatprep.subr.bf16.mxu0 0
  %1435 = vmatpush1.bf16.msra.mxu0 0
  %1436 = vmatprep.mubr.bf16.mxu0 0
  %1437 = vmatmul.mubr.bf16.gmra.mrb[0].mxu0 %v1402
  %v1438 = vpop.f32.mrb[0].mxu0
  %v1439 = vadd.f32 0.0, %v1438
  %v1440 = vpop.f32.mrb[0].mxu0
  %v1441 = vpop.f32.mrb[0].mxu0
  %v1442 = vpop.f32.mrb[0].mxu0
  %1443 = vdwg.mxu0
  %v1448 = vunpack.c.l.b16 %v295
  %v1449 = vunpack.c.l.b16 %v296
  %v1450 = vunpack.c.l.b16 %v297
  %v1451 = vunpack.c.l.b16 %v298
  %v1452 = vpack.c.b16 %v1449, %v1448
  %v1453 = vpack.c.b16 %v1451, %v1450
  %v1457 = vsel %vm355, %v171, 0
  %1459 = vmatprep.subr.bf16.mxu0 0
  %1460 = vmatpush1.bf16.msra.mxu0 %v1452
  %1461 = vmatprep.subr.bf16.mxu0 0
  %1462 = vmatpush1.bf16.msra.mxu0 %v1453
  %1463 = vmatprep.subr.bf16.mxu0 0
  %1464 = vmatpush1.bf16.msra.mxu0 0
  %1465 = vmatprep.subr.bf16.mxu0 0
  %1466 = vmatpush1.bf16.msra.mxu0 0
  %1467 = vmatprep.subr.bf16.mxu0 0
  %1468 = vmatpush1.bf16.msra.mxu0 0
  %1469 = vmatprep.subr.bf16.mxu0 0
  %1470 = vmatpush1.bf16.msra.mxu0 0
  %1471 = vmatprep.subr.bf16.mxu0 0
  %1472 = vmatpush1.bf16.msra.mxu0 0
  %1473 = vmatprep.subr.bf16.mxu0 0
  %1474 = vmatpush1.bf16.msra.mxu0 0
  %1475 = vmatprep.subr.bf16.mxu0 0
  %1476 = vmatpush1.bf16.msra.mxu0 0
  %1477 = vmatprep.subr.bf16.mxu0 0
  %1478 = vmatpush1.bf16.msra.mxu0 0
  %1479 = vmatprep.subr.bf16.mxu0 0
  %1480 = vmatpush1.bf16.msra.mxu0 0
  %1481 = vmatprep.subr.bf16.mxu0 0
  %1482 = vmatpush1.bf16.msra.mxu0 0
  %1483 = vmatprep.subr.bf16.mxu0 0
  %1484 = vmatpush1.bf16.msra.mxu0 0
  %1485 = vmatprep.subr.bf16.mxu0 0
  %1486 = vmatpush1.bf16.msra.mxu0 0
  %1487 = vmatprep.subr.bf16.mxu0 0
  %1488 = vmatpush1.bf16.msra.mxu0 0
  %1489 = vmatprep.subr.bf16.mxu0 0
  %1490 = vmatpush1.bf16.msra.mxu0 0
  %1491 = vmatprep.mubr.bf16.mxu0 0
  %1492 = vmatmul.mubr.bf16.gmra.mrb[0].mxu0 %v1457
  %v1493 = vpop.f32.mrb[0].mxu0
  %v1494 = vadd.f32 0.0, %v1493
  %v1495 = vpop.f32.mrb[0].mxu0
  %v1496 = vpop.f32.mrb[0].mxu0
  %v1497 = vpop.f32.mrb[0].mxu0
  %1498 = vdwg.mxu0
  %v1503 = vunpack.c.l.b16 %v299
  %v1504 = vunpack.c.l.b16 %v300
  %v1505 = vunpack.c.l.b16 %v301
  %v1506 = vunpack.c.l.b16 %v302
  %v1507 = vpack.c.b16 %v1504, %v1503
  %v1508 = vpack.c.b16 %v1506, %v1505
  %v1512 = vsel %vm355, %v172, 0
  %1514 = vmatprep.subr.bf16.mxu0 0
  %1515 = vmatpush1.bf16.msra.mxu0 %v1507
  %1516 = vmatprep.subr.bf16.mxu0 0
  %1517 = vmatpush1.bf16.msra.mxu0 %v1508
  %1518 = vmatprep.subr.bf16.mxu0 0
  %1519 = vmatpush1.bf16.msra.mxu0 0
  %1520 = vmatprep.subr.bf16.mxu0 0
  %1521 = vmatpush1.bf16.msra.mxu0 0
  %1522 = vmatprep.subr.bf16.mxu0 0
  %1523 = vmatpush1.bf16.msra.mxu0 0
  %1524 = vmatprep.subr.bf16.mxu0 0
  %1525 = vmatpush1.bf16.msra.mxu0 0
  %1526 = vmatprep.subr.bf16.mxu0 0
  %1527 = vmatpush1.bf16.msra.mxu0 0
  %1528 = vmatprep.subr.bf16.mxu0 0
  %1529 = vmatpush1.bf16.msra.mxu0 0
  %1530 = vmatprep.subr.bf16.mxu0 0
  %1531 = vmatpush1.bf16.msra.mxu0 0
  %1532 = vmatprep.subr.bf16.mxu0 0
  %1533 = vmatpush1.bf16.msra.mxu0 0
  %1534 = vmatprep.subr.bf16.mxu0 0
  %1535 = vmatpush1.bf16.msra.mxu0 0
  %1536 = vmatprep.subr.bf16.mxu0 0
  %1537 = vmatpush1.bf16.msra.mxu0 0
  %1538 = vmatprep.subr.bf16.mxu0 0
  %1539 = vmatpush1.bf16.msra.mxu0 0
  %1540 = vmatprep.subr.bf16.mxu0 0
  %1541 = vmatpush1.bf16.msra.mxu0 0
  %1542 = vmatprep.subr.bf16.mxu0 0
  %1543 = vmatpush1.bf16.msra.mxu0 0
  %1544 = vmatprep.subr.bf16.mxu0 0
  %1545 = vmatpush1.bf16.msra.mxu0 0
  %1546 = vmatprep.mubr.bf16.mxu0 0
  %1547 = vmatmul.mubr.bf16.gmra.mrb[0].mxu0 %v1512
  %v1548 = vpop.f32.mrb[0].mxu0
  %v1549 = vadd.f32 0.0, %v1548
  %v1550 = vpop.f32.mrb[0].mxu0
  %v1551 = vpop.f32.mrb[0].mxu0
  %v1552 = vpop.f32.mrb[0].mxu0
  %1553 = vdwg.mxu0
  %v1558 = vunpack.c.l.b16 %v303
  %v1559 = vunpack.c.l.b16 %v304
  %v1560 = vunpack.c.l.b16 %v305
  %v1561 = vunpack.c.l.b16 %v306
  %v1562 = vpack.c.b16 %v1559, %v1558
  %v1563 = vpack.c.b16 %v1561, %v1560
  %v1567 = vsel %vm355, %v173, 0
  %1569 = vmatprep.subr.bf16.mxu0 0
  %1570 = vmatpush1.bf16.msra.mxu0 %v1562
  %1571 = vmatprep.subr.bf16.mxu0 0
  %1572 = vmatpush1.bf16.msra.mxu0 %v1563
  %1573 = vmatprep.subr.bf16.mxu0 0
  %1574 = vmatpush1.bf16.msra.mxu0 0
  %1575 = vmatprep.subr.bf16.mxu0 0
  %1576 = vmatpush1.bf16.msra.mxu0 0
  %1577 = vmatprep.subr.bf16.mxu0 0
  %1578 = vmatpush1.bf16.msra.mxu0 0
  %1579 = vmatprep.subr.bf16.mxu0 0
  %1580 = vmatpush1.bf16.msra.mxu0 0
  %1581 = vmatprep.subr.bf16.mxu0 0
  %1582 = vmatpush1.bf16.msra.mxu0 0
  %1583 = vmatprep.subr.bf16.mxu0 0
  %1584 = vmatpush1.bf16.msra.mxu0 0
  %1585 = vmatprep.subr.bf16.mxu0 0
  %1586 = vmatpush1.bf16.msra.mxu0 0
  %1587 = vmatprep.subr.bf16.mxu0 0
  %1588 = vmatpush1.bf16.msra.mxu0 0
  %1589 = vmatprep.subr.bf16.mxu0 0
  %1590 = vmatpush1.bf16.msra.mxu0 0
  %1591 = vmatprep.subr.bf16.mxu0 0
  %1592 = vmatpush1.bf16.msra.mxu0 0
  %1593 = vmatprep.subr.bf16.mxu0 0
  %1594 = vmatpush1.bf16.msra.mxu0 0
  %1595 = vmatprep.subr.bf16.mxu0 0
  %1596 = vmatpush1.bf16.msra.mxu0 0
  %1597 = vmatprep.subr.bf16.mxu0 0
  %1598 = vmatpush1.bf16.msra.mxu0 0
  %1599 = vmatprep.subr.bf16.mxu0 0
  %1600 = vmatpush1.bf16.msra.mxu0 0
  %1601 = vmatprep.mubr.bf16.mxu0 0
  %1602 = vmatmul.mubr.bf16.gmra.mrb[0].mxu0 %v1567
  %v1603 = vpop.f32.mrb[0].mxu0
  %v1604 = vadd.f32 0.0, %v1603
  %v1605 = vpop.f32.mrb[0].mxu0
  %v1606 = vpop.f32.mrb[0].mxu0
  %v1607 = vpop.f32.mrb[0].mxu0
  %1608 = vdwg.mxu0
  %v1613 = vunpack.c.l.b16 %v307
  %v1614 = vunpack.c.l.b16 %v308
  %v1615 = vunpack.c.l.b16 %v309
  %v1616 = vunpack.c.l.b16 %v310
  %v1617 = vpack.c.b16 %v1614, %v1613
  %v1618 = vpack.c.b16 %v1616, %v1615
  %v1622 = vsel %vm355, %v174, 0
  %1624 = vmatprep.subr.bf16.mxu0 0
  %1625 = vmatpush1.bf16.msra.mxu0 %v1617
  %1626 = vmatprep.subr.bf16.mxu0 0
  %1627 = vmatpush1.bf16.msra.mxu0 %v1618
  %1628 = vmatprep.subr.bf16.mxu0 0
  %1629 = vmatpush1.bf16.msra.mxu0 0
  %1630 = vmatprep.subr.bf16.mxu0 0
  %1631 = vmatpush1.bf16.msra.mxu0 0
  %1632 = vmatprep.subr.bf16.mxu0 0
  %1633 = vmatpush1.bf16.msra.mxu0 0
  %1634 = vmatprep.subr.bf16.mxu0 0
  %1635 = vmatpush1.bf16.msra.mxu0 0
  %1636 = vmatprep.subr.bf16.mxu0 0
  %1637 = vmatpush1.bf16.msra.mxu0 0
  %1638 = vmatprep.subr.bf16.mxu0 0
  %1639 = vmatpush1.bf16.msra.mxu0 0
  %1640 = vmatprep.subr.bf16.mxu0 0
  %1641 = vmatpush1.bf16.msra.mxu0 0
  %1642 = vmatprep.subr.bf16.mxu0 0
  %1643 = vmatpush1.bf16.msra.mxu0 0
  %1644 = vmatprep.subr.bf16.mxu0 0
  %1645 = vmatpush1.bf16.msra.mxu0 0
  %1646 = vmatprep.subr.bf16.mxu0 0
  %1647 = vmatpush1.bf16.msra.mxu0 0
  %1648 = vmatprep.subr.bf16.mxu0 0
  %1649 = vmatpush1.bf16.msra.mxu0 0
  %1650 = vmatprep.subr.bf16.mxu0 0
  %1651 = vmatpush1.bf16.msra.mxu0 0
  %1652 = vmatprep.subr.bf16.mxu0 0
  %1653 = vmatpush1.bf16.msra.mxu0 0
  %1654 = vmatprep.subr.bf16.mxu0 0
  %1655 = vmatpush1.bf16.msra.mxu0 0
  %1656 = vmatprep.mubr.bf16.mxu0 0
  %1657 = vmatmul.mubr.bf16.gmra.mrb[0].mxu0 %v1622
  %v1658 = vpop.f32.mrb[0].mxu0
  %v1659 = vadd.f32 0.0, %v1658
  %v1660 = vpop.f32.mrb[0].mxu0
  %v1661 = vpop.f32.mrb[0].mxu0
  %v1662 = vpop.f32.mrb[0].mxu0
  %1663 = vdwg.mxu0
  %v1668 = vunpack.c.l.b16 %v311
  %v1669 = vunpack.c.l.b16 %v312
  %v1670 = vunpack.c.l.b16 %v313
  %v1671 = vunpack.c.l.b16 %v314
  %v1672 = vpack.c.b16 %v1669, %v1668
  %v1673 = vpack.c.b16 %v1671, %v1670
  %v1677 = vsel %vm355, %v175, 0
  %1679 = vmatprep.subr.bf16.mxu0 0
  %1680 = vmatpush1.bf16.msra.mxu0 %v1672
  %1681 = vmatprep.subr.bf16.mxu0 0
  %1682 = vmatpush1.bf16.msra.mxu0 %v1673
  %1683 = vmatprep.subr.bf16.mxu0 0
  %1684 = vmatpush1.bf16.msra.mxu0 0
  %1685 = vmatprep.subr.bf16.mxu0 0
  %1686 = vmatpush1.bf16.msra.mxu0 0
  %1687 = vmatprep.subr.bf16.mxu0 0
  %1688 = vmatpush1.bf16.msra.mxu0 0
  %1689 = vmatprep.subr.bf16.mxu0 0
  %1690 = vmatpush1.bf16.msra.mxu0 0
  %1691 = vmatprep.subr.bf16.mxu0 0
  %1692 = vmatpush1.bf16.msra.mxu0 0
  %1693 = vmatprep.subr.bf16.mxu0 0
  %1694 = vmatpush1.bf16.msra.mxu0 0
  %1695 = vmatprep.subr.bf16.mxu0 0
  %1696 = vmatpush1.bf16.msra.mxu0 0
  %1697 = vmatprep.subr.bf16.mxu0 0
  %1698 = vmatpush1.bf16.msra.mxu0 0
  %1699 = vmatprep.subr.bf16.mxu0 0
  %1700 = vmatpush1.bf16.msra.mxu0 0
  %1701 = vmatprep.subr.bf16.mxu0 0
  %1702 = vmatpush1.bf16.msra.mxu0 0
  %1703 = vmatprep.subr.bf16.mxu0 0
  %1704 = vmatpush1.bf16.msra.mxu0 0
  %1705 = vmatprep.subr.bf16.mxu0 0
  %1706 = vmatpush1.bf16.msra.mxu0 0
  %1707 = vmatprep.subr.bf16.mxu0 0
  %1708 = vmatpush1.bf16.msra.mxu0 0
  %1709 = vmatprep.subr.bf16.mxu0 0
  %1710 = vmatpush1.bf16.msra.mxu0 0
  %1711 = vmatprep.mubr.bf16.mxu0 0
  %1712 = vmatmul.mubr.bf16.gmra.mrb[0].mxu0 %v1677
  %v1713 = vpop.f32.mrb[0].mxu0
  %v1714 = vadd.f32 0.0, %v1713
  %v1715 = vpop.f32.mrb[0].mxu0
  %v1716 = vpop.f32.mrb[0].mxu0
  %v1717 = vpop.f32.mrb[0].mxu0
  %1718 = vdwg.mxu0
  %v1723 = vunpack.c.l.b16 %v315
  %v1724 = vunpack.c.l.b16 %v316
  %v1725 = vunpack.c.l.b16 %v317
  %v1726 = vunpack.c.l.b16 %v318
  %v1727 = vpack.c.b16 %v1724, %v1723
  %v1728 = vpack.c.b16 %v1726, %v1725
  %v1732 = vsel %vm355, %v176, 0
  %1734 = vmatprep.subr.bf16.mxu0 0
  %1735 = vmatpush1.bf16.msra.mxu0 %v1727
  %1736 = vmatprep.subr.bf16.mxu0 0
  %1737 = vmatpush1.bf16.msra.mxu0 %v1728
  %1738 = vmatprep.subr.bf16.mxu0 0
  %1739 = vmatpush1.bf16.msra.mxu0 0
  %1740 = vmatprep.subr.bf16.mxu0 0
  %1741 = vmatpush1.bf16.msra.mxu0 0
  %1742 = vmatprep.subr.bf16.mxu0 0
  %1743 = vmatpush1.bf16.msra.mxu0 0
  %1744 = vmatprep.subr.bf16.mxu0 0
  %1745 = vmatpush1.bf16.msra.mxu0 0
  %1746 = vmatprep.subr.bf16.mxu0 0
  %1747 = vmatpush1.bf16.msra.mxu0 0
  %1748 = vmatprep.subr.bf16.mxu0 0
  %1749 = vmatpush1.bf16.msra.mxu0 0
  %1750 = vmatprep.subr.bf16.mxu0 0
  %1751 = vmatpush1.bf16.msra.mxu0 0
  %1752 = vmatprep.subr.bf16.mxu0 0
  %1753 = vmatpush1.bf16.msra.mxu0 0
  %1754 = vmatprep.subr.bf16.mxu0 0
  %1755 = vmatpush1.bf16.msra.mxu0 0
  %1756 = vmatprep.subr.bf16.mxu0 0
  %1757 = vmatpush1.bf16.msra.mxu0 0
  %1758 = vmatprep.subr.bf16.mxu0 0
  %1759 = vmatpush1.bf16.msra.mxu0 0
  %1760 = vmatprep.subr.bf16.mxu0 0
  %1761 = vmatpush1.bf16.msra.mxu0 0
  %1762 = vmatprep.subr.bf16.mxu0 0
  %1763 = vmatpush1.bf16.msra.mxu0 0
  %1764 = vmatprep.subr.bf16.mxu0 0
  %1765 = vmatpush1.bf16.msra.mxu0 0
  %1766 = vmatprep.mubr.bf16.mxu0 0
  %1767 = vmatmul.mubr.bf16.gmra.mrb[0].mxu0 %v1732
  %v1768 = vpop.f32.mrb[0].mxu0
  %v1769 = vadd.f32 0.0, %v1768
  %v1770 = vpop.f32.mrb[0].mxu0
  %v1771 = vpop.f32.mrb[0].mxu0
  %v1772 = vpop.f32.mrb[0].mxu0
  %1773 = vdwg.mxu0
  %v1778 = vunpack.c.l.b16 %v319
  %v1779 = vunpack.c.l.b16 %v320
  %v1780 = vunpack.c.l.b16 %v321
  %v1781 = vunpack.c.l.b16 %v322
  %v1782 = vpack.c.b16 %v1779, %v1778
  %v1783 = vpack.c.b16 %v1781, %v1780
  %v1787 = vsel %vm355, %v177, 0
  %1789 = vmatprep.subr.bf16.mxu0 0
  %1790 = vmatpush1.bf16.msra.mxu0 %v1782
  %1791 = vmatprep.subr.bf16.mxu0 0
  %1792 = vmatpush1.bf16.msra.mxu0 %v1783
  %1793 = vmatprep.subr.bf16.mxu0 0
  %1794 = vmatpush1.bf16.msra.mxu0 0
  %1795 = vmatprep.subr.bf16.mxu0 0
  %1796 = vmatpush1.bf16.msra.mxu0 0
  %1797 = vmatprep.subr.bf16.mxu0 0
  %1798 = vmatpush1.bf16.msra.mxu0 0
  %1799 = vmatprep.subr.bf16.mxu0 0
  %1800 = vmatpush1.bf16.msra.mxu0 0
  %1801 = vmatprep.subr.bf16.mxu0 0
  %1802 = vmatpush1.bf16.msra.mxu0 0
  %1803 = vmatprep.subr.bf16.mxu0 0
  %1804 = vmatpush1.bf16.msra.mxu0 0
  %1805 = vmatprep.subr.bf16.mxu0 0
  %1806 = vmatpush1.bf16.msra.mxu0 0
  %1807 = vmatprep.subr.bf16.mxu0 0
  %1808 = vmatpush1.bf16.msra.mxu0 0
  %1809 = vmatprep.subr.bf16.mxu0 0
  %1810 = vmatpush1.bf16.msra.mxu0 0
  %1811 = vmatprep.subr.bf16.mxu0 0
  %1812 = vmatpush1.bf16.msra.mxu0 0
  %1813 = vmatprep.subr.bf16.mxu0 0
  %1814 = vmatpush1.bf16.msra.mxu0 0
  %1815 = vmatprep.subr.bf16.mxu0 0
  %1816 = vmatpush1.bf16.msra.mxu0 0
  %1817 = vmatprep.subr.bf16.mxu0 0
  %1818 = vmatpush1.bf16.msra.mxu0 0
  %1819 = vmatprep.subr.bf16.mxu0 0
  %1820 = vmatpush1.bf16.msra.mxu0 0
  %1821 = vmatprep.mubr.bf16.mxu0 0
  %1822 = vmatmul.mubr.bf16.gmra.mrb[0].mxu0 %v1787
  %v1823 = vpop.f32.mrb[0].mxu0
  %v1824 = vadd.f32 0.0, %v1823
  %v1825 = vpop.f32.mrb[0].mxu0
  %v1826 = vpop.f32.mrb[0].mxu0
  %v1827 = vpop.f32.mrb[0].mxu0
  %1828 = vdwg.mxu0
  %v1833 = vunpack.c.l.b16 %v323
  %v1834 = vunpack.c.l.b16 %v324
  %v1835 = vunpack.c.l.b16 %v325
  %v1836 = vunpack.c.l.b16 %v326
  %v1837 = vpack.c.b16 %v1834, %v1833
  %v1838 = vpack.c.b16 %v1836, %v1835
  %v1842 = vsel %vm355, %v178, 0
  %1844 = vmatprep.subr.bf16.mxu0 0
  %1845 = vmatpush1.bf16.msra.mxu0 %v1837
  %1846 = vmatprep.subr.bf16.mxu0 0
  %1847 = vmatpush1.bf16.msra.mxu0 %v1838
  %1848 = vmatprep.subr.bf16.mxu0 0
  %1849 = vmatpush1.bf16.msra.mxu0 0
  %1850 = vmatprep.subr.bf16.mxu0 0
  %1851 = vmatpush1.bf16.msra.mxu0 0
  %1852 = vmatprep.subr.bf16.mxu0 0
  %1853 = vmatpush1.bf16.msra.mxu0 0
  %1854 = vmatprep.subr.bf16.mxu0 0
  %1855 = vmatpush1.bf16.msra.mxu0 0
  %1856 = vmatprep.subr.bf16.mxu0 0
  %1857 = vmatpush1.bf16.msra.mxu0 0
  %1858 = vmatprep.subr.bf16.mxu0 0
  %1859 = vmatpush1.bf16.msra.mxu0 0
  %1860 = vmatprep.subr.bf16.mxu0 0
  %1861 = vmatpush1.bf16.msra.mxu0 0
  %1862 = vmatprep.subr.bf16.mxu0 0
  %1863 = vmatpush1.bf16.msra.mxu0 0
  %1864 = vmatprep.subr.bf16.mxu0 0
  %1865 = vmatpush1.bf16.msra.mxu0 0
  %1866 = vmatprep.subr.bf16.mxu0 0
  %1867 = vmatpush1.bf16.msra.mxu0 0
  %1868 = vmatprep.subr.bf16.mxu0 0
  %1869 = vmatpush1.bf16.msra.mxu0 0
  %1870 = vmatprep.subr.bf16.mxu0 0
  %1871 = vmatpush1.bf16.msra.mxu0 0
  %1872 = vmatprep.subr.bf16.mxu0 0
  %1873 = vmatpush1.bf16.msra.mxu0 0
  %1874 = vmatprep.subr.bf16.mxu0 0
  %1875 = vmatpush1.bf16.msra.mxu0 0
  %1876 = vmatprep.mubr.bf16.mxu0 0
  %1877 = vmatmul.mubr.bf16.gmra.mrb[0].mxu0 %v1842
  %v1878 = vpop.f32.mrb[0].mxu0
  %v1879 = vadd.f32 0.0, %v1878
  %v1880 = vpop.f32.mrb[0].mxu0
  %v1881 = vpop.f32.mrb[0].mxu0
  %v1882 = vpop.f32.mrb[0].mxu0
  %1883 = vdwg.mxu0
  %v1888 = vunpack.c.l.b16 %v327
  %v1889 = vunpack.c.l.b16 %v328
  %v1890 = vunpack.c.l.b16 %v329
  %v1891 = vunpack.c.l.b16 %v330
  %v1892 = vpack.c.b16 %v1889, %v1888
  %v1893 = vpack.c.b16 %v1891, %v1890
  %v1897 = vsel %vm355, %v179, 0
  %1899 = vmatprep.subr.bf16.mxu0 0
  %1900 = vmatpush1.bf16.msra.mxu0 %v1892
  %1901 = vmatprep.subr.bf16.mxu0 0
  %1902 = vmatpush1.bf16.msra.mxu0 %v1893
  %1903 = vmatprep.subr.bf16.mxu0 0
  %1904 = vmatpush1.bf16.msra.mxu0 0
  %1905 = vmatprep.subr.bf16.mxu0 0
  %1906 = vmatpush1.bf16.msra.mxu0 0
  %1907 = vmatprep.subr.bf16.mxu0 0
  %1908 = vmatpush1.bf16.msra.mxu0 0
  %1909 = vmatprep.subr.bf16.mxu0 0
  %1910 = vmatpush1.bf16.msra.mxu0 0
  %1911 = vmatprep.subr.bf16.mxu0 0
  %1912 = vmatpush1.bf16.msra.mxu0 0
  %1913 = vmatprep.subr.bf16.mxu0 0
  %1914 = vmatpush1.bf16.msra.mxu0 0
  %1915 = vmatprep.subr.bf16.mxu0 0
  %1916 = vmatpush1.bf16.msra.mxu0 0
  %1917 = vmatprep.subr.bf16.mxu0 0
  %1918 = vmatpush1.bf16.msra.mxu0 0
  %1919 = vmatprep.subr.bf16.mxu0 0
  %1920 = vmatpush1.bf16.msra.mxu0 0
  %1921 = vmatprep.subr.bf16.mxu0 0
  %1922 = vmatpush1.bf16.msra.mxu0 0
  %1923 = vmatprep.subr.bf16.mxu0 0
  %1924 = vmatpush1.bf16.msra.mxu0 0
  %1925 = vmatprep.subr.bf16.mxu0 0
  %1926 = vmatpush1.bf16.msra.mxu0 0
  %1927 = vmatprep.subr.bf16.mxu0 0
  %1928 = vmatpush1.bf16.msra.mxu0 0
  %1929 = vmatprep.subr.bf16.mxu0 0
  %1930 = vmatpush1.bf16.msra.mxu0 0
  %1931 = vmatprep.mubr.bf16.mxu0 0
  %1932 = vmatmul.mubr.bf16.gmra.mrb[0].mxu0 %v1897
  %v1933 = vpop.f32.mrb[0].mxu0
  %v1934 = vadd.f32 0.0, %v1933
  %v1935 = vpop.f32.mrb[0].mxu0
  %v1936 = vpop.f32.mrb[0].mxu0
  %v1937 = vpop.f32.mrb[0].mxu0
  %1938 = vdwg.mxu0
  %v1943 = vunpack.c.l.b16 %v331
  %v1944 = vunpack.c.l.b16 %v332
  %v1945 = vunpack.c.l.b16 %v333
  %v1946 = vunpack.c.l.b16 %v334
  %v1947 = vpack.c.b16 %v1944, %v1943
  %v1948 = vpack.c.b16 %v1946, %v1945
  %v1952 = vsel %vm355, %v180, 0
  %1954 = vmatprep.subr.bf16.mxu0 0
  %1955 = vmatpush1.bf16.msra.mxu0 %v1947
  %1956 = vmatprep.subr.bf16.mxu0 0
  %1957 = vmatpush1.bf16.msra.mxu0 %v1948
  %1958 = vmatprep.subr.bf16.mxu0 0
  %1959 = vmatpush1.bf16.msra.mxu0 0
  %1960 = vmatprep.subr.bf16.mxu0 0
  %1961 = vmatpush1.bf16.msra.mxu0 0
  %1962 = vmatprep.subr.bf16.mxu0 0
  %1963 = vmatpush1.bf16.msra.mxu0 0
  %1964 = vmatprep.subr.bf16.mxu0 0
  %1965 = vmatpush1.bf16.msra.mxu0 0
  %1966 = vmatprep.subr.bf16.mxu0 0
  %1967 = vmatpush1.bf16.msra.mxu0 0
  %1968 = vmatprep.subr.bf16.mxu0 0
  %1969 = vmatpush1.bf16.msra.mxu0 0
  %1970 = vmatprep.subr.bf16.mxu0 0
  %1971 = vmatpush1.bf16.msra.mxu0 0
  %1972 = vmatprep.subr.bf16.mxu0 0
  %1973 = vmatpush1.bf16.msra.mxu0 0
  %1974 = vmatprep.subr.bf16.mxu0 0
  %1975 = vmatpush1.bf16.msra.mxu0 0
  %1976 = vmatprep.subr.bf16.mxu0 0
  %1977 = vmatpush1.bf16.msra.mxu0 0
  %1978 = vmatprep.subr.bf16.mxu0 0
  %1979 = vmatpush1.bf16.msra.mxu0 0
  %1980 = vmatprep.subr.bf16.mxu0 0
  %1981 = vmatpush1.bf16.msra.mxu0 0
  %1982 = vmatprep.subr.bf16.mxu0 0
  %1983 = vmatpush1.bf16.msra.mxu0 0
  %1984 = vmatprep.subr.bf16.mxu0 0
  %1985 = vmatpush1.bf16.msra.mxu0 0
  %1986 = vmatprep.mubr.bf16.mxu0 0
  %1987 = vmatmul.mubr.bf16.gmra.mrb[0].mxu0 %v1952
  %v1988 = vpop.f32.mrb[0].mxu0
  %v1989 = vadd.f32 0.0, %v1988
  %v1990 = vpop.f32.mrb[0].mxu0
  %v1991 = vpop.f32.mrb[0].mxu0
  %v1992 = vpop.f32.mrb[0].mxu0
  %1993 = vdwg.mxu0
  %v1998 = vunpack.c.l.b16 %v335
  %v1999 = vunpack.c.l.b16 %v336
  %v2000 = vunpack.c.l.b16 %v337
  %v2001 = vunpack.c.l.b16 %v338
  %v2002 = vpack.c.b16 %v1999, %v1998
  %v2003 = vpack.c.b16 %v2001, %v2000
  %v2007 = vsel %vm355, %v181, 0
  %2009 = vmatprep.subr.bf16.mxu0 0
  %2010 = vmatpush1.bf16.msra.mxu0 %v2002
  %2011 = vmatprep.subr.bf16.mxu0 0
  %2012 = vmatpush1.bf16.msra.mxu0 %v2003
  %2013 = vmatprep.subr.bf16.mxu0 0
  %2014 = vmatpush1.bf16.msra.mxu0 0
  %2015 = vmatprep.subr.bf16.mxu0 0
  %2016 = vmatpush1.bf16.msra.mxu0 0
  %2017 = vmatprep.subr.bf16.mxu0 0
  %2018 = vmatpush1.bf16.msra.mxu0 0
  %2019 = vmatprep.subr.bf16.mxu0 0
  %2020 = vmatpush1.bf16.msra.mxu0 0
  %2021 = vmatprep.subr.bf16.mxu0 0
  %2022 = vmatpush1.bf16.msra.mxu0 0
  %2023 = vmatprep.subr.bf16.mxu0 0
  %2024 = vmatpush1.bf16.msra.mxu0 0
  %2025 = vmatprep.subr.bf16.mxu0 0
  %2026 = vmatpush1.bf16.msra.mxu0 0
  %2027 = vmatprep.subr.bf16.mxu0 0
  %2028 = vmatpush1.bf16.msra.mxu0 0
  %2029 = vmatprep.subr.bf16.mxu0 0
  %2030 = vmatpush1.bf16.msra.mxu0 0
  %2031 = vmatprep.subr.bf16.mxu0 0
  %2032 = vmatpush1.bf16.msra.mxu0 0
  %2033 = vmatprep.subr.bf16.mxu0 0
  %2034 = vmatpush1.bf16.msra.mxu0 0
  %2035 = vmatprep.subr.bf16.mxu0 0
  %2036 = vmatpush1.bf16.msra.mxu0 0
  %2037 = vmatprep.subr.bf16.mxu0 0
  %2038 = vmatpush1.bf16.msra.mxu0 0
  %2039 = vmatprep.subr.bf16.mxu0 0
  %2040 = vmatpush1.bf16.msra.mxu0 0
  %2041 = vmatprep.mubr.bf16.mxu0 0
  %2042 = vmatmul.mubr.bf16.gmra.mrb[0].mxu0 %v2007
  %v2043 = vpop.f32.mrb[0].mxu0
  %v2044 = vadd.f32 0.0, %v2043
  %v2045 = vpop.f32.mrb[0].mxu0
  %v2046 = vpop.f32.mrb[0].mxu0
  %v2047 = vpop.f32.mrb[0].mxu0
  %2048 = vdwg.mxu0
  %v2053 = vunpack.c.l.b16 %v339
  %v2054 = vunpack.c.l.b16 %v340
  %v2055 = vunpack.c.l.b16 %v341
  %v2056 = vunpack.c.l.b16 %v342
  %v2057 = vpack.c.b16 %v2054, %v2053
  %v2058 = vpack.c.b16 %v2056, %v2055
  %v2062 = vsel %vm355, %v182, 0
  %2064 = vmatprep.subr.bf16.mxu0 0
  %2065 = vmatpush1.bf16.msra.mxu0 %v2057
  %2066 = vmatprep.subr.bf16.mxu0 0
  %2067 = vmatpush1.bf16.msra.mxu0 %v2058
  %2068 = vmatprep.subr.bf16.mxu0 0
  %2069 = vmatpush1.bf16.msra.mxu0 0
  %2070 = vmatprep.subr.bf16.mxu0 0
  %2071 = vmatpush1.bf16.msra.mxu0 0
  %2072 = vmatprep.subr.bf16.mxu0 0
  %2073 = vmatpush1.bf16.msra.mxu0 0
  %2074 = vmatprep.subr.bf16.mxu0 0
  %2075 = vmatpush1.bf16.msra.mxu0 0
  %2076 = vmatprep.subr.bf16.mxu0 0
  %2077 = vmatpush1.bf16.msra.mxu0 0
  %2078 = vmatprep.subr.bf16.mxu0 0
  %2079 = vmatpush1.bf16.msra.mxu0 0
  %2080 = vmatprep.subr.bf16.mxu0 0
  %2081 = vmatpush1.bf16.msra.mxu0 0
  %2082 = vmatprep.subr.bf16.mxu0 0
  %2083 = vmatpush1.bf16.msra.mxu0 0
  %2084 = vmatprep.subr.bf16.mxu0 0
  %2085 = vmatpush1.bf16.msra.mxu0 0
  %2086 = vmatprep.subr.bf16.mxu0 0
  %2087 = vmatpush1.bf16.msra.mxu0 0
  %2088 = vmatprep.subr.bf16.mxu0 0
  %2089 = vmatpush1.bf16.msra.mxu0 0
  %2090 = vmatprep.subr.bf16.mxu0 0
  %2091 = vmatpush1.bf16.msra.mxu0 0
  %2092 = vmatprep.subr.bf16.mxu0 0
  %2093 = vmatpush1.bf16.msra.mxu0 0
  %2094 = vmatprep.subr.bf16.mxu0 0
  %2095 = vmatpush1.bf16.msra.mxu0 0
  %2096 = vmatprep.mubr.bf16.mxu0 0
  %2097 = vmatmul.mubr.bf16.gmra.mrb[0].mxu0 %v2062
  %v2098 = vpop.f32.mrb[0].mxu0
  %v2099 = vadd.f32 0.0, %v2098
  %v2100 = vpop.f32.mrb[0].mxu0
  %v2101 = vpop.f32.mrb[0].mxu0
  %v2102 = vpop.f32.mrb[0].mxu0
  %2103 = vdwg.mxu0
  %v2104 = vld [vmem:[%s3] sm:$0xf]
  %v2105 = vld [vmem:[%s3 + $0x4] sm:$0xf]
  %v2106 = vld [vmem:[%s3 + $0x8] sm:$0xf]
  %v2107 = vld [vmem:[%s3 + $0xc] sm:$0xf]
  %v2108 = vld [vmem:[%s3 + $0x10] sm:$0xf]
  %v2109 = vld [vmem:[%s3 + $0x14] sm:$0xf]
  %v2110 = vld [vmem:[%s3 + $0x18] sm:$0xf]
  %v2111 = vld [vmem:[%s3 + $0x1c] sm:$0xf]
  %v2112 = vld [vmem:[%s3 + $0x20] sm:$0xf]
  %v2113 = vld [vmem:[%s3 + $0x24] sm:$0xf]
  %v2114 = vld [vmem:[%s3 + $0x28] sm:$0xf]
  %v2115 = vld [vmem:[%s3 + $0x2c] sm:$0xf]
  %v2116 = vld [vmem:[%s3 + $0x30] sm:$0xf]
  %v2117 = vld [vmem:[%s3 + $0x34] sm:$0xf]
  %v2118 = vld [vmem:[%s3 + $0x38] sm:$0xf]
  %v2119 = vld [vmem:[%s3 + $0x3c] sm:$0xf]
  %v2120 = vld [vmem:[%s3 + $0x40] sm:$0xf]
  %v2121 = vld [vmem:[%s3 + $0x44] sm:$0xf]
  %v2122 = vld [vmem:[%s3 + $0x48] sm:$0xf]
  %v2123 = vld [vmem:[%s3 + $0x4c] sm:$0xf]
  %v2124 = vld [vmem:[%s3 + $0x50] sm:$0xf]
  %v2125 = vld [vmem:[%s3 + $0x54] sm:$0xf]
  %v2126 = vld [vmem:[%s3 + $0x58] sm:$0xf]
  %v2127 = vld [vmem:[%s3 + $0x5c] sm:$0xf]
  %v2128 = vld [vmem:[%s3 + $0x60] sm:$0xf]
  %v2129 = vld [vmem:[%s3 + $0x64] sm:$0xf]
  %v2130 = vld [vmem:[%s3 + $0x68] sm:$0xf]
  %v2131 = vld [vmem:[%s3 + $0x6c] sm:$0xf]
  %v2132 = vld [vmem:[%s3 + $0x70] sm:$0xf]
  %v2133 = vld [vmem:[%s3 + $0x74] sm:$0xf]
  %v2134 = vld [vmem:[%s3 + $0x78] sm:$0xf]
  %v2135 = vld [vmem:[%s3 + $0x7c] sm:$0xf]
  %v2136 = vld [vmem:[%s3 + $0x80] sm:$0xf]
  %v2137 = vld [vmem:[%s3 + $0x84] sm:$0xf]
  %v2138 = vld [vmem:[%s3 + $0x88] sm:$0xf]
  %v2139 = vld [vmem:[%s3 + $0x8c] sm:$0xf]
  %v2140 = vld [vmem:[%s3 + $0x90] sm:$0xf]
  %v2141 = vld [vmem:[%s3 + $0x94] sm:$0xf]
  %v2142 = vld [vmem:[%s3 + $0x98] sm:$0xf]
  %v2143 = vld [vmem:[%s3 + $0x9c] sm:$0xf]
  %v2144 = vld [vmem:[%s3 + $0xa0] sm:$0xf]
  %v2145 = vld [vmem:[%s3 + $0xa4] sm:$0xf]
  %v2146 = vld [vmem:[%s3 + $0xa8] sm:$0xf]
  %v2147 = vld [vmem:[%s3 + $0xac] sm:$0xf]
  %v2148 = vld [vmem:[%s3 + $0xb0] sm:$0xf]
  %v2149 = vld [vmem:[%s3 + $0xb4] sm:$0xf]
  %v2150 = vld [vmem:[%s3 + $0xb8] sm:$0xf]
  %v2151 = vld [vmem:[%s3 + $0xbc] sm:$0xf]
  %v2152 = vld [vmem:[%s3 + $0xc0] sm:$0xf]
  %v2153 = vld [vmem:[%s3 + $0xc4] sm:$0xf]
  %v2154 = vld [vmem:[%s3 + $0xc8] sm:$0xf]
  %v2155 = vld [vmem:[%s3 + $0xcc] sm:$0xf]
  %v2156 = vld [vmem:[%s3 + $0xd0] sm:$0xf]
  %v2157 = vld [vmem:[%s3 + $0xd4] sm:$0xf]
  %v2158 = vld [vmem:[%s3 + $0xd8] sm:$0xf]
  %v2159 = vld [vmem:[%s3 + $0xdc] sm:$0xf]
  %v2160 = vld [vmem:[%s3 + $0xe0] sm:$0xf]
  %v2161 = vld [vmem:[%s3 + $0xe4] sm:$0xf]
  %v2162 = vld [vmem:[%s3 + $0xe8] sm:$0xf]
  %v2163 = vld [vmem:[%s3 + $0xec] sm:$0xf]
  %v2164 = vld [vmem:[%s3 + $0xf0] sm:$0xf]
  %v2165 = vld [vmem:[%s3 + $0xf4] sm:$0xf]
  %v2166 = vld [vmem:[%s3 + $0xf8] sm:$0xf]
  %v2167 = vld [vmem:[%s3 + $0xfc] sm:$0xf]
  %v2168 = vld [vmem:[%s3 + $0x100] sm:$0xf]
  %v2169 = vld [vmem:[%s3 + $0x104] sm:$0xf]
  %v2170 = vld [vmem:[%s3 + $0x108] sm:$0xf]
  %v2171 = vld [vmem:[%s3 + $0x10c] sm:$0xf]
  %v2172 = vld [vmem:[%s3 + $0x110] sm:$0xf]
  %v2173 = vld [vmem:[%s3 + $0x114] sm:$0xf]
  %v2174 = vld [vmem:[%s3 + $0x118] sm:$0xf]
  %v2175 = vld [vmem:[%s3 + $0x11c] sm:$0xf]
  %v2176 = vld [vmem:[%s3 + $0x120] sm:$0xf]
  %v2177 = vld [vmem:[%s3 + $0x124] sm:$0xf]
  %v2178 = vld [vmem:[%s3 + $0x128] sm:$0xf]
  %v2179 = vld [vmem:[%s3 + $0x12c] sm:$0xf]
  %v2180 = vld [vmem:[%s3 + $0x130] sm:$0xf]
  %v2181 = vld [vmem:[%s3 + $0x134] sm:$0xf]
  %v2182 = vld [vmem:[%s3 + $0x138] sm:$0xf]
  %v2183 = vld [vmem:[%s3 + $0x13c] sm:$0xf]
  %v2184 = vld [vmem:[%s3 + $0x140] sm:$0xf]
  %v2185 = vld [vmem:[%s3 + $0x144] sm:$0xf]
  %v2186 = vld [vmem:[%s3 + $0x148] sm:$0xf]
  %v2187 = vld [vmem:[%s3 + $0x14c] sm:$0xf]
  %v2188 = vld [vmem:[%s3 + $0x150] sm:$0xf]
  %v2189 = vld [vmem:[%s3 + $0x154] sm:$0xf]
  %v2190 = vld [vmem:[%s3 + $0x158] sm:$0xf]
  %v2191 = vld [vmem:[%s3 + $0x15c] sm:$0xf]
  %v2192 = vld [vmem:[%s3 + $0x160] sm:$0xf]
  %v2193 = vld [vmem:[%s3 + $0x164] sm:$0xf]
  %v2194 = vld [vmem:[%s3 + $0x168] sm:$0xf]
  %v2195 = vld [vmem:[%s3 + $0x16c] sm:$0xf]
  %v2196 = vld [vmem:[%s3 + $0x170] sm:$0xf]
  %v2197 = vld [vmem:[%s3 + $0x174] sm:$0xf]
  %v2198 = vld [vmem:[%s3 + $0x178] sm:$0xf]
  %v2199 = vld [vmem:[%s3 + $0x17c] sm:$0xf]
  %v2200 = vld [vmem:[%s3 + $0x180] sm:$0xf]
  %v2201 = vld [vmem:[%s3 + $0x184] sm:$0xf]
  %v2202 = vld [vmem:[%s3 + $0x188] sm:$0xf]
  %v2203 = vld [vmem:[%s3 + $0x18c] sm:$0xf]
  %v2204 = vld [vmem:[%s3 + $0x190] sm:$0xf]
  %v2205 = vld [vmem:[%s3 + $0x194] sm:$0xf]
  %v2206 = vld [vmem:[%s3 + $0x198] sm:$0xf]
  %v2207 = vld [vmem:[%s3 + $0x19c] sm:$0xf]
  %v2208 = vld [vmem:[%s3 + $0x1a0] sm:$0xf]
  %v2209 = vld [vmem:[%s3 + $0x1a4] sm:$0xf]
  %v2210 = vld [vmem:[%s3 + $0x1a8] sm:$0xf]
  %v2211 = vld [vmem:[%s3 + $0x1ac] sm:$0xf]
  %v2212 = vld [vmem:[%s3 + $0x1b0] sm:$0xf]
  %v2213 = vld [vmem:[%s3 + $0x1b4] sm:$0xf]
  %v2214 = vld [vmem:[%s3 + $0x1b8] sm:$0xf]
  %v2215 = vld [vmem:[%s3 + $0x1bc] sm:$0xf]
  %v2216 = vld [vmem:[%s3 + $0x1c0] sm:$0xf]
  %v2217 = vld [vmem:[%s3 + $0x1c4] sm:$0xf]
  %v2218 = vld [vmem:[%s3 + $0x1c8] sm:$0xf]
  %v2219 = vld [vmem:[%s3 + $0x1cc] sm:$0xf]
  %v2220 = vld [vmem:[%s3 + $0x1d0] sm:$0xf]
  %v2221 = vld [vmem:[%s3 + $0x1d4] sm:$0xf]
  %v2222 = vld [vmem:[%s3 + $0x1d8] sm:$0xf]
  %v2223 = vld [vmem:[%s3 + $0x1dc] sm:$0xf]
  %v2224 = vld [vmem:[%s3 + $0x1e0] sm:$0xf]
  %v2225 = vld [vmem:[%s3 + $0x1e4] sm:$0xf]
  %v2226 = vld [vmem:[%s3 + $0x1e8] sm:$0xf]
  %v2227 = vld [vmem:[%s3 + $0x1ec] sm:$0xf]
  %v2228 = vld [vmem:[%s3 + $0x1f0] sm:$0xf]
  %v2229 = vld [vmem:[%s3 + $0x1f4] sm:$0xf]
  %v2230 = vld [vmem:[%s3 + $0x1f8] sm:$0xf]
  %v2231 = vld [vmem:[%s3 + $0x1fc] sm:$0xf]
  %v2236 = vunpack.c.l.b16 %v2104
  %v2237 = vunpack.c.l.b16 %v2105
  %v2238 = vunpack.c.l.b16 %v2106
  %v2239 = vunpack.c.l.b16 %v2107
  %v2240 = vpack.c.b16 %v2237, %v2236
  %v2241 = vpack.c.b16 %v2239, %v2238
  %v2245 = vsel %vm355, %v183, 0
  %2247 = vmatprep.subr.bf16.mxu0 0
  %2248 = vmatpush1.bf16.msra.mxu0 %v2240
  %2249 = vmatprep.subr.bf16.mxu0 0
  %2250 = vmatpush1.bf16.msra.mxu0 %v2241
  %2251 = vmatprep.subr.bf16.mxu0 0
  %2252 = vmatpush1.bf16.msra.mxu0 0
  %2253 = vmatprep.subr.bf16.mxu0 0
  %2254 = vmatpush1.bf16.msra.mxu0 0
  %2255 = vmatprep.subr.bf16.mxu0 0
  %2256 = vmatpush1.bf16.msra.mxu0 0
  %2257 = vmatprep.subr.bf16.mxu0 0
  %2258 = vmatpush1.bf16.msra.mxu0 0
  %2259 = vmatprep.subr.bf16.mxu0 0
  %2260 = vmatpush1.bf16.msra.mxu0 0
  %2261 = vmatprep.subr.bf16.mxu0 0
  %2262 = vmatpush1.bf16.msra.mxu0 0
  %2263 = vmatprep.subr.bf16.mxu0 0
  %2264 = vmatpush1.bf16.msra.mxu0 0
  %2265 = vmatprep.subr.bf16.mxu0 0
  %2266 = vmatpush1.bf16.msra.mxu0 0
  %2267 = vmatprep.subr.bf16.mxu0 0
  %2268 = vmatpush1.bf16.msra.mxu0 0
  %2269 = vmatprep.subr.bf16.mxu0 0
  %2270 = vmatpush1.bf16.msra.mxu0 0
  %2271 = vmatprep.subr.bf16.mxu0 0
  %2272 = vmatpush1.bf16.msra.mxu0 0
  %2273 = vmatprep.subr.bf16.mxu0 0
  %2274 = vmatpush1.bf16.msra.mxu0 0
  %2275 = vmatprep.subr.bf16.mxu0 0
  %2276 = vmatpush1.bf16.msra.mxu0 0
  %2277 = vmatprep.subr.bf16.mxu0 0
  %2278 = vmatpush1.bf16.msra.mxu0 0
  %2279 = vmatprep.mubr.bf16.mxu0 0
  %2280 = vmatmul.mubr.bf16.gmra.mrb[0].mxu0 %v2245
  %v2281 = vpop.f32.mrb[0].mxu0
  %v2282 = vadd.f32 0.0, %v2281
  %v2283 = vpop.f32.mrb[0].mxu0
  %v2284 = vpop.f32.mrb[0].mxu0
  %v2285 = vpop.f32.mrb[0].mxu0
  %2286 = vdwg.mxu0
  %v2291 = vunpack.c.l.b16 %v2108
  %v2292 = vunpack.c.l.b16 %v2109
  %v2293 = vunpack.c.l.b16 %v2110
  %v2294 = vunpack.c.l.b16 %v2111
  %v2295 = vpack.c.b16 %v2292, %v2291
  %v2296 = vpack.c.b16 %v2294, %v2293
  %v2300 = vsel %vm355, %v184, 0
  %2302 = vmatprep.subr.bf16.mxu0 0
  %2303 = vmatpush1.bf16.msra.mxu0 %v2295
  %2304 = vmatprep.subr.bf16.mxu0 0
  %2305 = vmatpush1.bf16.msra.mxu0 %v2296
  %2306 = vmatprep.subr.bf16.mxu0 0
  %2307 = vmatpush1.bf16.msra.mxu0 0
  %2308 = vmatprep.subr.bf16.mxu0 0
  %2309 = vmatpush1.bf16.msra.mxu0 0
  %2310 = vmatprep.subr.bf16.mxu0 0
  %2311 = vmatpush1.bf16.msra.mxu0 0
  %2312 = vmatprep.subr.bf16.mxu0 0
  %2313 = vmatpush1.bf16.msra.mxu0 0
  %2314 = vmatprep.subr.bf16.mxu0 0
  %2315 = vmatpush1.bf16.msra.mxu0 0
  %2316 = vmatprep.subr.bf16.mxu0 0
  %2317 = vmatpush1.bf16.msra.mxu0 0
  %2318 = vmatprep.subr.bf16.mxu0 0
  %2319 = vmatpush1.bf16.msra.mxu0 0
  %2320 = vmatprep.subr.bf16.mxu0 0
  %2321 = vmatpush1.bf16.msra.mxu0 0
  %2322 = vmatprep.subr.bf16.mxu0 0
  %2323 = vmatpush1.bf16.msra.mxu0 0
  %2324 = vmatprep.subr.bf16.mxu0 0
  %2325 = vmatpush1.bf16.msra.mxu0 0
  %2326 = vmatprep.subr.bf16.mxu0 0
  %2327 = vmatpush1.bf16.msra.mxu0 0
  %2328 = vmatprep.subr.bf16.mxu0 0
  %2329 = vmatpush1.bf16.msra.mxu0 0
  %2330 = vmatprep.subr.bf16.mxu0 0
  %2331 = vmatpush1.bf16.msra.mxu0 0
  %2332 = vmatprep.subr.bf16.mxu0 0
  %2333 = vmatpush1.bf16.msra.mxu0 0
  %2334 = vmatprep.mubr.bf16.mxu0 0
  %2335 = vmatmul.mubr.bf16.gmra.mrb[0].mxu0 %v2300
  %v2336 = vpop.f32.mrb[0].mxu0
  %v2337 = vadd.f32 0.0, %v2336
  %v2338 = vpop.f32.mrb[0].mxu0
  %v2339 = vpop.f32.mrb[0].mxu0
  %v2340 = vpop.f32.mrb[0].mxu0
  %2341 = vdwg.mxu0
  %v2346 = vunpack.c.l.b16 %v2112
  %v2347 = vunpack.c.l.b16 %v2113
  %v2348 = vunpack.c.l.b16 %v2114
  %v2349 = vunpack.c.l.b16 %v2115
  %v2350 = vpack.c.b16 %v2347, %v2346
  %v2351 = vpack.c.b16 %v2349, %v2348
  %v2355 = vsel %vm355, %v185, 0
  %2357 = vmatprep.subr.bf16.mxu0 0
  %2358 = vmatpush1.bf16.msra.mxu0 %v2350
  %2359 = vmatprep.subr.bf16.mxu0 0
  %2360 = vmatpush1.bf16.msra.mxu0 %v2351
  %2361 = vmatprep.subr.bf16.mxu0 0
  %2362 = vmatpush1.bf16.msra.mxu0 0
  %2363 = vmatprep.subr.bf16.mxu0 0
  %2364 = vmatpush1.bf16.msra.mxu0 0
  %2365 = vmatprep.subr.bf16.mxu0 0
  %2366 = vmatpush1.bf16.msra.mxu0 0
  %2367 = vmatprep.subr.bf16.mxu0 0
  %2368 = vmatpush1.bf16.msra.mxu0 0
  %2369 = vmatprep.subr.bf16.mxu0 0
  %2370 = vmatpush1.bf16.msra.mxu0 0
  %2371 = vmatprep.subr.bf16.mxu0 0
  %2372 = vmatpush1.bf16.msra.mxu0 0
  %2373 = vmatprep.subr.bf16.mxu0 0
  %2374 = vmatpush1.bf16.msra.mxu0 0
  %2375 = vmatprep.subr.bf16.mxu0 0
  %2376 = vmatpush1.bf16.msra.mxu0 0
  %2377 = vmatprep.subr.bf16.mxu0 0
  %2378 = vmatpush1.bf16.msra.mxu0 0
  %2379 = vmatprep.subr.bf16.mxu0 0
  %2380 = vmatpush1.bf16.msra.mxu0 0
  %2381 = vmatprep.subr.bf16.mxu0 0
  %2382 = vmatpush1.bf16.msra.mxu0 0
  %2383 = vmatprep.subr.bf16.mxu0 0
  %2384 = vmatpush1.bf16.msra.mxu0 0
  %2385 = vmatprep.subr.bf16.mxu0 0
  %2386 = vmatpush1.bf16.msra.mxu0 0
  %2387 = vmatprep.subr.bf16.mxu0 0
  %2388 = vmatpush1.bf16.msra.mxu0 0
  %2389 = vmatprep.mubr.bf16.mxu0 0
  %2390 = vmatmul.mubr.bf16.gmra.mrb[0].mxu0 %v2355
  %v2391 = vpop.f32.mrb[0].mxu0
  %v2392 = vadd.f32 0.0, %v2391
  %v2393 = vpop.f32.mrb[0].mxu0
  %v2394 = vpop.f32.mrb[0].mxu0
  %v2395 = vpop.f32.mrb[0].mxu0
  %2396 = vdwg.mxu0
  %v2401 = vunpack.c.l.b16 %v2116
  %v2402 = vunpack.c.l.b16 %v2117
  %v2403 = vunpack.c.l.b16 %v2118
  %v2404 = vunpack.c.l.b16 %v2119
  %v2405 = vpack.c.b16 %v2402, %v2401
  %v2406 = vpack.c.b16 %v2404, %v2403
  %v2410 = vsel %vm355, %v186, 0
  %2412 = vmatprep.subr.bf16.mxu0 0
  %2413 = vmatpush1.bf16.msra.mxu0 %v2405
  %2414 = vmatprep.subr.bf16.mxu0 0
  %2415 = vmatpush1.bf16.msra.mxu0 %v2406
  %2416 = vmatprep.subr.bf16.mxu0 0
  %2417 = vmatpush1.bf16.msra.mxu0 0
  %2418 = vmatprep.subr.bf16.mxu0 0
  %2419 = vmatpush1.bf16.msra.mxu0 0
  %2420 = vmatprep.subr.bf16.mxu0 0
  %2421 = vmatpush1.bf16.msra.mxu0 0
  %2422 = vmatprep.subr.bf16.mxu0 0
  %2423 = vmatpush1.bf16.msra.mxu0 0
  %2424 = vmatprep.subr.bf16.mxu0 0
  %2425 = vmatpush1.bf16.msra.mxu0 0
  %2426 = vmatprep.subr.bf16.mxu0 0
  %2427 = vmatpush1.bf16.msra.mxu0 0
  %2428 = vmatprep.subr.bf16.mxu0 0
  %2429 = vmatpush1.bf16.msra.mxu0 0
  %2430 = vmatprep.subr.bf16.mxu0 0
  %2431 = vmatpush1.bf16.msra.mxu0 0
  %2432 = vmatprep.subr.bf16.mxu0 0
  %2433 = vmatpush1.bf16.msra.mxu0 0
  %2434 = vmatprep.subr.bf16.mxu0 0
  %2435 = vmatpush1.bf16.msra.mxu0 0
  %2436 = vmatprep.subr.bf16.mxu0 0
  %2437 = vmatpush1.bf16.msra.mxu0 0
  %2438 = vmatprep.subr.bf16.mxu0 0
  %2439 = vmatpush1.bf16.msra.mxu0 0
  %2440 = vmatprep.subr.bf16.mxu0 0
  %2441 = vmatpush1.bf16.msra.mxu0 0
  %2442 = vmatprep.subr.bf16.mxu0 0
  %2443 = vmatpush1.bf16.msra.mxu0 0
  %2444 = vmatprep.mubr.bf16.mxu0 0
  %2445 = vmatmul.mubr.bf16.gmra.mrb[0].mxu0 %v2410
  %v2446 = vpop.f32.mrb[0].mxu0
  %v2447 = vadd.f32 0.0, %v2446
  %v2448 = vpop.f32.mrb[0].mxu0
  %v2449 = vpop.f32.mrb[0].mxu0
  %v2450 = vpop.f32.mrb[0].mxu0
  %2451 = vdwg.mxu0
  %v2456 = vunpack.c.l.b16 %v2120
  %v2457 = vunpack.c.l.b16 %v2121
  %v2458 = vunpack.c.l.b16 %v2122
  %v2459 = vunpack.c.l.b16 %v2123
  %v2460 = vpack.c.b16 %v2457, %v2456
  %v2461 = vpack.c.b16 %v2459, %v2458
  %v2465 = vsel %vm355, %v187, 0
  %2467 = vmatprep.subr.bf16.mxu0 0
  %2468 = vmatpush1.bf16.msra.mxu0 %v2460
  %2469 = vmatprep.subr.bf16.mxu0 0
  %2470 = vmatpush1.bf16.msra.mxu0 %v2461
  %2471 = vmatprep.subr.bf16.mxu0 0
  %2472 = vmatpush1.bf16.msra.mxu0 0
  %2473 = vmatprep.subr.bf16.mxu0 0
  %2474 = vmatpush1.bf16.msra.mxu0 0
  %2475 = vmatprep.subr.bf16.mxu0 0
  %2476 = vmatpush1.bf16.msra.mxu0 0
  %2477 = vmatprep.subr.bf16.mxu0 0
  %2478 = vmatpush1.bf16.msra.mxu0 0
  %2479 = vmatprep.subr.bf16.mxu0 0
  %2480 = vmatpush1.bf16.msra.mxu0 0
  %2481 = vmatprep.subr.bf16.mxu0 0
  %2482 = vmatpush1.bf16.msra.mxu0 0
  %2483 = vmatprep.subr.bf16.mxu0 0
  %2484 = vmatpush1.bf16.msra.mxu0 0
  %2485 = vmatprep.subr.bf16.mxu0 0
  %2486 = vmatpush1.bf16.msra.mxu0 0
  %2487 = vmatprep.subr.bf16.mxu0 0
  %2488 = vmatpush1.bf16.msra.mxu0 0
  %2489 = vmatprep.subr.bf16.mxu0 0
  %2490 = vmatpush1.bf16.msra.mxu0 0
  %2491 = vmatprep.subr.bf16.mxu0 0
  %2492 = vmatpush1.bf16.msra.mxu0 0
  %2493 = vmatprep.subr.bf16.mxu0 0
  %2494 = vmatpush1.bf16.msra.mxu0 0
  %2495 = vmatprep.subr.bf16.mxu0 0
  %2496 = vmatpush1.bf16.msra.mxu0 0
  %2497 = vmatprep.subr.bf16.mxu0 0
  %2498 = vmatpush1.bf16.msra.mxu0 0
  %2499 = vmatprep.mubr.bf16.mxu0 0
  %2500 = vmatmul.mubr.bf16.gmra.mrb[0].mxu0 %v2465
  %v2501 = vpop.f32.mrb[0].mxu0
  %v2502 = vadd.f32 0.0, %v2501
  %v2503 = vpop.f32.mrb[0].mxu0
  %v2504 = vpop.f32.mrb[0].mxu0
  %v2505 = vpop.f32.mrb[0].mxu0
  %2506 = vdwg.mxu0
  %v2511 = vunpack.c.l.b16 %v2124
  %v2512 = vunpack.c.l.b16 %v2125
  %v2513 = vunpack.c.l.b16 %v2126
  %v2514 = vunpack.c.l.b16 %v2127
  %v2515 = vpack.c.b16 %v2512, %v2511
  %v2516 = vpack.c.b16 %v2514, %v2513
  %v2520 = vsel %vm355, %v188, 0
  %2522 = vmatprep.subr.bf16.mxu0 0
  %2523 = vmatpush1.bf16.msra.mxu0 %v2515
  %2524 = vmatprep.subr.bf16.mxu0 0
  %2525 = vmatpush1.bf16.msra.mxu0 %v2516
  %2526 = vmatprep.subr.bf16.mxu0 0
  %2527 = vmatpush1.bf16.msra.mxu0 0
  %2528 = vmatprep.subr.bf16.mxu0 0
  %2529 = vmatpush1.bf16.msra.mxu0 0
  %2530 = vmatprep.subr.bf16.mxu0 0
  %2531 = vmatpush1.bf16.msra.mxu0 0
  %2532 = vmatprep.subr.bf16.mxu0 0
  %2533 = vmatpush1.bf16.msra.mxu0 0
  %2534 = vmatprep.subr.bf16.mxu0 0
  %2535 = vmatpush1.bf16.msra.mxu0 0
  %2536 = vmatprep.subr.bf16.mxu0 0
  %2537 = vmatpush1.bf16.msra.mxu0 0
  %2538 = vmatprep.subr.bf16.mxu0 0
  %2539 = vmatpush1.bf16.msra.mxu0 0
  %2540 = vmatprep.subr.bf16.mxu0 0
  %2541 = vmatpush1.bf16.msra.mxu0 0
  %2542 = vmatprep.subr.bf16.mxu0 0
  %2543 = vmatpush1.bf16.msra.mxu0 0
  %2544 = vmatprep.subr.bf16.mxu0 0
  %2545 = vmatpush1.bf16.msra.mxu0 0
  %2546 = vmatprep.subr.bf16.mxu0 0
  %2547 = vmatpush1.bf16.msra.mxu0 0
  %2548 = vmatprep.subr.bf16.mxu0 0
  %2549 = vmatpush1.bf16.msra.mxu0 0
  %2550 = vmatprep.subr.bf16.mxu0 0
  %2551 = vmatpush1.bf16.msra.mxu0 0
  %2552 = vmatprep.subr.bf16.mxu0 0
  %2553 = vmatpush1.bf16.msra.mxu0 0
  %2554 = vmatprep.mubr.bf16.mxu0 0
  %2555 = vmatmul.mubr.bf16.gmra.mrb[0].mxu0 %v2520
  %v2556 = vpop.f32.mrb[0].mxu0
  %v2557 = vadd.f32 0.0, %v2556
  %v2558 = vpop.f32.mrb[0].mxu0
  %v2559 = vpop.f32.mrb[0].mxu0
  %v2560 = vpop.f32.mrb[0].mxu0
  %2561 = vdwg.mxu0
  %v2566 = vunpack.c.l.b16 %v2128
  %v2567 = vunpack.c.l.b16 %v2129
  %v2568 = vunpack.c.l.b16 %v2130
  %v2569 = vunpack.c.l.b16 %v2131
  %v2570 = vpack.c.b16 %v2567, %v2566
  %v2571 = vpack.c.b16 %v2569, %v2568
  %v2575 = vsel %vm355, %v189, 0
  %2577 = vmatprep.subr.bf16.mxu0 0
  %2578 = vmatpush1.bf16.msra.mxu0 %v2570
  %2579 = vmatprep.subr.bf16.mxu0 0
  %2580 = vmatpush1.bf16.msra.mxu0 %v2571
  %2581 = vmatprep.subr.bf16.mxu0 0
  %2582 = vmatpush1.bf16.msra.mxu0 0
  %2583 = vmatprep.subr.bf16.mxu0 0
  %2584 = vmatpush1.bf16.msra.mxu0 0
  %2585 = vmatprep.subr.bf16.mxu0 0
  %2586 = vmatpush1.bf16.msra.mxu0 0
  %2587 = vmatprep.subr.bf16.mxu0 0
  %2588 = vmatpush1.bf16.msra.mxu0 0
  %2589 = vmatprep.subr.bf16.mxu0 0
  %2590 = vmatpush1.bf16.msra.mxu0 0
  %2591 = vmatprep.subr.bf16.mxu0 0
  %2592 = vmatpush1.bf16.msra.mxu0 0
  %2593 = vmatprep.subr.bf16.mxu0 0
  %2594 = vmatpush1.bf16.msra.mxu0 0
  %2595 = vmatprep.subr.bf16.mxu0 0
  %2596 = vmatpush1.bf16.msra.mxu0 0
  %2597 = vmatprep.subr.bf16.mxu0 0
  %2598 = vmatpush1.bf16.msra.mxu0 0
  %2599 = vmatprep.subr.bf16.mxu0 0
  %2600 = vmatpush1.bf16.msra.mxu0 0
  %2601 = vmatprep.subr.bf16.mxu0 0
  %2602 = vmatpush1.bf16.msra.mxu0 0
  %2603 = vmatprep.subr.bf16.mxu0 0
  %2604 = vmatpush1.bf16.msra.mxu0 0
  %2605 = vmatprep.subr.bf16.mxu0 0
  %2606 = vmatpush1.bf16.msra.mxu0 0
  %2607 = vmatprep.subr.bf16.mxu0 0
  %2608 = vmatpush1.bf16.msra.mxu0 0
  %2609 = vmatprep.mubr.bf16.mxu0 0
  %2610 = vmatmul.mubr.bf16.gmra.mrb[0].mxu0 %v2575
  %v2611 = vpop.f32.mrb[0].mxu0
  %v2612 = vadd.f32 0.0, %v2611
  %v2613 = vpop.f32.mrb[0].mxu0
  %v2614 = vpop.f32.mrb[0].mxu0
  %v2615 = vpop.f32.mrb[0].mxu0
  %2616 = vdwg.mxu0
  %v2621 = vunpack.c.l.b16 %v2132
  %v2622 = vunpack.c.l.b16 %v2133
  %v2623 = vunpack.c.l.b16 %v2134
  %v2624 = vunpack.c.l.b16 %v2135
  %v2625 = vpack.c.b16 %v2622, %v2621
  %v2626 = vpack.c.b16 %v2624, %v2623
  %v2630 = vsel %vm355, %v190, 0
  %2632 = vmatprep.subr.bf16.mxu0 0
  %2633 = vmatpush1.bf16.msra.mxu0 %v2625
  %2634 = vmatprep.subr.bf16.mxu0 0
  %2635 = vmatpush1.bf16.msra.mxu0 %v2626
  %2636 = vmatprep.subr.bf16.mxu0 0
  %2637 = vmatpush1.bf16.msra.mxu0 0
  %2638 = vmatprep.subr.bf16.mxu0 0
  %2639 = vmatpush1.bf16.msra.mxu0 0
  %2640 = vmatprep.subr.bf16.mxu0 0
  %2641 = vmatpush1.bf16.msra.mxu0 0
  %2642 = vmatprep.subr.bf16.mxu0 0
  %2643 = vmatpush1.bf16.msra.mxu0 0
  %2644 = vmatprep.subr.bf16.mxu0 0
  %2645 = vmatpush1.bf16.msra.mxu0 0
  %2646 = vmatprep.subr.bf16.mxu0 0
  %2647 = vmatpush1.bf16.msra.mxu0 0
  %2648 = vmatprep.subr.bf16.mxu0 0
  %2649 = vmatpush1.bf16.msra.mxu0 0
  %2650 = vmatprep.subr.bf16.mxu0 0
  %2651 = vmatpush1.bf16.msra.mxu0 0
  %2652 = vmatprep.subr.bf16.mxu0 0
  %2653 = vmatpush1.bf16.msra.mxu0 0
  %2654 = vmatprep.subr.bf16.mxu0 0
  %2655 = vmatpush1.bf16.msra.mxu0 0
  %2656 = vmatprep.subr.bf16.mxu0 0
  %2657 = vmatpush1.bf16.msra.mxu0 0
  %2658 = vmatprep.subr.bf16.mxu0 0
  %2659 = vmatpush1.bf16.msra.mxu0 0
  %2660 = vmatprep.subr.bf16.mxu0 0
  %2661 = vmatpush1.bf16.msra.mxu0 0
  %2662 = vmatprep.subr.bf16.mxu0 0
  %2663 = vmatpush1.bf16.msra.mxu0 0
  %2664 = vmatprep.mubr.bf16.mxu0 0
  %2665 = vmatmul.mubr.bf16.gmra.mrb[0].mxu0 %v2630
  %v2666 = vpop.f32.mrb[0].mxu0
  %v2667 = vadd.f32 0.0, %v2666
  %v2668 = vpop.f32.mrb[0].mxu0
  %v2669 = vpop.f32.mrb[0].mxu0
  %v2670 = vpop.f32.mrb[0].mxu0
  %2671 = vdwg.mxu0
  %v2676 = vunpack.c.l.b16 %v2136
  %v2677 = vunpack.c.l.b16 %v2137
  %v2678 = vunpack.c.l.b16 %v2138
  %v2679 = vunpack.c.l.b16 %v2139
  %v2680 = vpack.c.b16 %v2677, %v2676
  %v2681 = vpack.c.b16 %v2679, %v2678
  %v2685 = vsel %vm355, %v191, 0
  %2687 = vmatprep.subr.bf16.mxu0 0
  %2688 = vmatpush1.bf16.msra.mxu0 %v2680
  %2689 = vmatprep.subr.bf16.mxu0 0
  %2690 = vmatpush1.bf16.msra.mxu0 %v2681
  %2691 = vmatprep.subr.bf16.mxu0 0
  %2692 = vmatpush1.bf16.msra.mxu0 0
  %2693 = vmatprep.subr.bf16.mxu0 0
  %2694 = vmatpush1.bf16.msra.mxu0 0
  %2695 = vmatprep.subr.bf16.mxu0 0
  %2696 = vmatpush1.bf16.msra.mxu0 0
  %2697 = vmatprep.subr.bf16.mxu0 0
  %2698 = vmatpush1.bf16.msra.mxu0 0
  %2699 = vmatprep.subr.bf16.mxu0 0
  %2700 = vmatpush1.bf16.msra.mxu0 0
  %2701 = vmatprep.subr.bf16.mxu0 0
  %2702 = vmatpush1.bf16.msra.mxu0 0
  %2703 = vmatprep.subr.bf16.mxu0 0
  %2704 = vmatpush1.bf16.msra.mxu0 0
  %2705 = vmatprep.subr.bf16.mxu0 0
  %2706 = vmatpush1.bf16.msra.mxu0 0
  %2707 = vmatprep.subr.bf16.mxu0 0
  %2708 = vmatpush1.bf16.msra.mxu0 0
  %2709 = vmatprep.subr.bf16.mxu0 0
  %2710 = vmatpush1.bf16.msra.mxu0 0
  %2711 = vmatprep.subr.bf16.mxu0 0
  %2712 = vmatpush1.bf16.msra.mxu0 0
  %2713 = vmatprep.subr.bf16.mxu0 0
  %2714 = vmatpush1.bf16.msra.mxu0 0
  %2715 = vmatprep.subr.bf16.mxu0 0
  %2716 = vmatpush1.bf16.msra.mxu0 0
  %2717 = vmatprep.subr.bf16.mxu0 0
  %2718 = vmatpush1.bf16.msra.mxu0 0
  %2719 = vmatprep.mubr.bf16.mxu0 0
  %2720 = vmatmul.mubr.bf16.gmra.mrb[0].mxu0 %v2685
  %v2721 = vpop.f32.mrb[0].mxu0
  %v2722 = vadd.f32 0.0, %v2721
  %v2723 = vpop.f32.mrb[0].mxu0
  %v2724 = vpop.f32.mrb[0].mxu0
  %v2725 = vpop.f32.mrb[0].mxu0
  %2726 = vdwg.mxu0
  %v2731 = vunpack.c.l.b16 %v2140
  %v2732 = vunpack.c.l.b16 %v2141
  %v2733 = vunpack.c.l.b16 %v2142
  %v2734 = vunpack.c.l.b16 %v2143
  %v2735 = vpack.c.b16 %v2732, %v2731
  %v2736 = vpack.c.b16 %v2734, %v2733
  %v2740 = vsel %vm355, %v192, 0
  %2742 = vmatprep.subr.bf16.mxu0 0
  %2743 = vmatpush1.bf16.msra.mxu0 %v2735
  %2744 = vmatprep.subr.bf16.mxu0 0
  %2745 = vmatpush1.bf16.msra.mxu0 %v2736
  %2746 = vmatprep.subr.bf16.mxu0 0
  %2747 = vmatpush1.bf16.msra.mxu0 0
  %2748 = vmatprep.subr.bf16.mxu0 0
  %2749 = vmatpush1.bf16.msra.mxu0 0
  %2750 = vmatprep.subr.bf16.mxu0 0
  %2751 = vmatpush1.bf16.msra.mxu0 0
  %2752 = vmatprep.subr.bf16.mxu0 0
  %2753 = vmatpush1.bf16.msra.mxu0 0
  %2754 = vmatprep.subr.bf16.mxu0 0
  %2755 = vmatpush1.bf16.msra.mxu0 0
  %2756 = vmatprep.subr.bf16.mxu0 0
  %2757 = vmatpush1.bf16.msra.mxu0 0
  %2758 = vmatprep.subr.bf16.mxu0 0
  %2759 = vmatpush1.bf16.msra.mxu0 0
  %2760 = vmatprep.subr.bf16.mxu0 0
  %2761 = vmatpush1.bf16.msra.mxu0 0
  %2762 = vmatprep.subr.bf16.mxu0 0
  %2763 = vmatpush1.bf16.msra.mxu0 0
  %2764 = vmatprep.subr.bf16.mxu0 0
  %2765 = vmatpush1.bf16.msra.mxu0 0
  %2766 = vmatprep.subr.bf16.mxu0 0
  %2767 = vmatpush1.bf16.msra.mxu0 0
  %2768 = vmatprep.subr.bf16.mxu0 0
  %2769 = vmatpush1.bf16.msra.mxu0 0
  %2770 = vmatprep.subr.bf16.mxu0 0
  %2771 = vmatpush1.bf16.msra.mxu0 0
  %2772 = vmatprep.subr.bf16.mxu0 0
  %2773 = vmatpush1.bf16.msra.mxu0 0
  %2774 = vmatprep.mubr.bf16.mxu0 0
  %2775 = vmatmul.mubr.bf16.gmra.mrb[0].mxu0 %v2740
  %v2776 = vpop.f32.mrb[0].mxu0
  %v2777 = vadd.f32 0.0, %v2776
  %v2778 = vpop.f32.mrb[0].mxu0
  %v2779 = vpop.f32.mrb[0].mxu0
  %v2780 = vpop.f32.mrb[0].mxu0
  %2781 = vdwg.mxu0
  %v2786 = vunpack.c.l.b16 %v2144
  %v2787 = vunpack.c.l.b16 %v2145
  %v2788 = vunpack.c.l.b16 %v2146
  %v2789 = vunpack.c.l.b16 %v2147
  %v2790 = vpack.c.b16 %v2787, %v2786
  %v2791 = vpack.c.b16 %v2789, %v2788
  %v2795 = vsel %vm355, %v193, 0
  %2797 = vmatprep.subr.bf16.mxu0 0
  %2798 = vmatpush1.bf16.msra.mxu0 %v2790
  %2799 = vmatprep.subr.bf16.mxu0 0
  %2800 = vmatpush1.bf16.msra.mxu0 %v2791
  %2801 = vmatprep.subr.bf16.mxu0 0
  %2802 = vmatpush1.bf16.msra.mxu0 0
  %2803 = vmatprep.subr.bf16.mxu0 0
  %2804 = vmatpush1.bf16.msra.mxu0 0
  %2805 = vmatprep.subr.bf16.mxu0 0
  %2806 = vmatpush1.bf16.msra.mxu0 0
  %2807 = vmatprep.subr.bf16.mxu0 0
  %2808 = vmatpush1.bf16.msra.mxu0 0
  %2809 = vmatprep.subr.bf16.mxu0 0
  %2810 = vmatpush1.bf16.msra.mxu0 0
  %2811 = vmatprep.subr.bf16.mxu0 0
  %2812 = vmatpush1.bf16.msra.mxu0 0
  %2813 = vmatprep.subr.bf16.mxu0 0
  %2814 = vmatpush1.bf16.msra.mxu0 0
  %2815 = vmatprep.subr.bf16.mxu0 0
  %2816 = vmatpush1.bf16.msra.mxu0 0
  %2817 = vmatprep.subr.bf16.mxu0 0
  %2818 = vmatpush1.bf16.msra.mxu0 0
  %2819 = vmatprep.subr.bf16.mxu0 0
  %2820 = vmatpush1.bf16.msra.mxu0 0
  %2821 = vmatprep.subr.bf16.mxu0 0
  %2822 = vmatpush1.bf16.msra.mxu0 0
  %2823 = vmatprep.subr.bf16.mxu0 0
  %2824 = vmatpush1.bf16.msra.mxu0 0
  %2825 = vmatprep.subr.bf16.mxu0 0
  %2826 = vmatpush1.bf16.msra.mxu0 0
  %2827 = vmatprep.subr.bf16.mxu0 0
  %2828 = vmatpush1.bf16.msra.mxu0 0
  %2829 = vmatprep.mubr.bf16.mxu0 0
  %2830 = vmatmul.mubr.bf16.gmra.mrb[0].mxu0 %v2795
  %v2831 = vpop.f32.mrb[0].mxu0
  %v2832 = vadd.f32 0.0, %v2831
  %v2833 = vpop.f32.mrb[0].mxu0
  %v2834 = vpop.f32.mrb[0].mxu0
  %v2835 = vpop.f32.mrb[0].mxu0
  %2836 = vdwg.mxu0
  %v2841 = vunpack.c.l.b16 %v2148
  %v2842 = vunpack.c.l.b16 %v2149
  %v2843 = vunpack.c.l.b16 %v2150
  %v2844 = vunpack.c.l.b16 %v2151
  %v2845 = vpack.c.b16 %v2842, %v2841
  %v2846 = vpack.c.b16 %v2844, %v2843
  %v2850 = vsel %vm355, %v194, 0
  %2852 = vmatprep.subr.bf16.mxu0 0
  %2853 = vmatpush1.bf16.msra.mxu0 %v2845
  %2854 = vmatprep.subr.bf16.mxu0 0
  %2855 = vmatpush1.bf16.msra.mxu0 %v2846
  %2856 = vmatprep.subr.bf16.mxu0 0
  %2857 = vmatpush1.bf16.msra.mxu0 0
  %2858 = vmatprep.subr.bf16.mxu0 0
  %2859 = vmatpush1.bf16.msra.mxu0 0
  %2860 = vmatprep.subr.bf16.mxu0 0
  %2861 = vmatpush1.bf16.msra.mxu0 0
  %2862 = vmatprep.subr.bf16.mxu0 0
  %2863 = vmatpush1.bf16.msra.mxu0 0
  %2864 = vmatprep.subr.bf16.mxu0 0
  %2865 = vmatpush1.bf16.msra.mxu0 0
  %2866 = vmatprep.subr.bf16.mxu0 0
  %2867 = vmatpush1.bf16.msra.mxu0 0
  %2868 = vmatprep.subr.bf16.mxu0 0
  %2869 = vmatpush1.bf16.msra.mxu0 0
  %2870 = vmatprep.subr.bf16.mxu0 0
  %2871 = vmatpush1.bf16.msra.mxu0 0
  %2872 = vmatprep.subr.bf16.mxu0 0
  %2873 = vmatpush1.bf16.msra.mxu0 0
  %2874 = vmatprep.subr.bf16.mxu0 0
  %2875 = vmatpush1.bf16.msra.mxu0 0
  %2876 = vmatprep.subr.bf16.mxu0 0
  %2877 = vmatpush1.bf16.msra.mxu0 0
  %2878 = vmatprep.subr.bf16.mxu0 0
  %2879 = vmatpush1.bf16.msra.mxu0 0
  %2880 = vmatprep.subr.bf16.mxu0 0
  %2881 = vmatpush1.bf16.msra.mxu0 0
  %2882 = vmatprep.subr.bf16.mxu0 0
  %2883 = vmatpush1.bf16.msra.mxu0 0
  %2884 = vmatprep.mubr.bf16.mxu0 0
  %2885 = vmatmul.mubr.bf16.gmra.mrb[0].mxu0 %v2850
  %v2886 = vpop.f32.mrb[0].mxu0
  %v2887 = vadd.f32 0.0, %v2886
  %v2888 = vpop.f32.mrb[0].mxu0
  %v2889 = vpop.f32.mrb[0].mxu0
  %v2890 = vpop.f32.mrb[0].mxu0
  %2891 = vdwg.mxu0
  %v2896 = vunpack.c.l.b16 %v2152
  %v2897 = vunpack.c.l.b16 %v2153
  %v2898 = vunpack.c.l.b16 %v2154
  %v2899 = vunpack.c.l.b16 %v2155
  %v2900 = vpack.c.b16 %v2897, %v2896
  %v2901 = vpack.c.b16 %v2899, %v2898
  %v2905 = vsel %vm355, %v195, 0
  %2907 = vmatprep.subr.bf16.mxu0 0
  %2908 = vmatpush1.bf16.msra.mxu0 %v2900
  %2909 = vmatprep.subr.bf16.mxu0 0
  %2910 = vmatpush1.bf16.msra.mxu0 %v2901
  %2911 = vmatprep.subr.bf16.mxu0 0
  %2912 = vmatpush1.bf16.msra.mxu0 0
  %2913 = vmatprep.subr.bf16.mxu0 0
  %2914 = vmatpush1.bf16.msra.mxu0 0
  %2915 = vmatprep.subr.bf16.mxu0 0
  %2916 = vmatpush1.bf16.msra.mxu0 0
  %2917 = vmatprep.subr.bf16.mxu0 0
  %2918 = vmatpush1.bf16.msra.mxu0 0
  %2919 = vmatprep.subr.bf16.mxu0 0
  %2920 = vmatpush1.bf16.msra.mxu0 0
  %2921 = vmatprep.subr.bf16.mxu0 0
  %2922 = vmatpush1.bf16.msra.mxu0 0
  %2923 = vmatprep.subr.bf16.mxu0 0
  %2924 = vmatpush1.bf16.msra.mxu0 0
  %2925 = vmatprep.subr.bf16.mxu0 0
  %2926 = vmatpush1.bf16.msra.mxu0 0
  %2927 = vmatprep.subr.bf16.mxu0 0
  %2928 = vmatpush1.bf16.msra.mxu0 0
  %2929 = vmatprep.subr.bf16.mxu0 0
  %2930 = vmatpush1.bf16.msra.mxu0 0
  %2931 = vmatprep.subr.bf16.mxu0 0
  %2932 = vmatpush1.bf16.msra.mxu0 0
  %2933 = vmatprep.subr.bf16.mxu0 0
  %2934 = vmatpush1.bf16.msra.mxu0 0
  %2935 = vmatprep.subr.bf16.mxu0 0
  %2936 = vmatpush1.bf16.msra.mxu0 0
  %2937 = vmatprep.subr.bf16.mxu0 0
  %2938 = vmatpush1.bf16.msra.mxu0 0
  %2939 = vmatprep.mubr.bf16.mxu0 0
  %2940 = vmatmul.mubr.bf16.gmra.mrb[0].mxu0 %v2905
  %v2941 = vpop.f32.mrb[0].mxu0
  %v2942 = vadd.f32 0.0, %v2941
  %v2943 = vpop.f32.mrb[0].mxu0
  %v2944 = vpop.f32.mrb[0].mxu0
  %v2945 = vpop.f32.mrb[0].mxu0
  %2946 = vdwg.mxu0
  %v2951 = vunpack.c.l.b16 %v2156
  %v2952 = vunpack.c.l.b16 %v2157
  %v2953 = vunpack.c.l.b16 %v2158
  %v2954 = vunpack.c.l.b16 %v2159
  %v2955 = vpack.c.b16 %v2952, %v2951
  %v2956 = vpack.c.b16 %v2954, %v2953
  %v2960 = vsel %vm355, %v196, 0
  %2962 = vmatprep.subr.bf16.mxu0 0
  %2963 = vmatpush1.bf16.msra.mxu0 %v2955
  %2964 = vmatprep.subr.bf16.mxu0 0
  %2965 = vmatpush1.bf16.msra.mxu0 %v2956
  %2966 = vmatprep.subr.bf16.mxu0 0
  %2967 = vmatpush1.bf16.msra.mxu0 0
  %2968 = vmatprep.subr.bf16.mxu0 0
  %2969 = vmatpush1.bf16.msra.mxu0 0
  %2970 = vmatprep.subr.bf16.mxu0 0
  %2971 = vmatpush1.bf16.msra.mxu0 0
  %2972 = vmatprep.subr.bf16.mxu0 0
  %2973 = vmatpush1.bf16.msra.mxu0 0
  %2974 = vmatprep.subr.bf16.mxu0 0
  %2975 = vmatpush1.bf16.msra.mxu0 0
  %2976 = vmatprep.subr.bf16.mxu0 0
  %2977 = vmatpush1.bf16.msra.mxu0 0
  %2978 = vmatprep.subr.bf16.mxu0 0
  %2979 = vmatpush1.bf16.msra.mxu0 0
  %2980 = vmatprep.subr.bf16.mxu0 0
  %2981 = vmatpush1.bf16.msra.mxu0 0
  %2982 = vmatprep.subr.bf16.mxu0 0
  %2983 = vmatpush1.bf16.msra.mxu0 0
  %2984 = vmatprep.subr.bf16.mxu0 0
  %2985 = vmatpush1.bf16.msra.mxu0 0
  %2986 = vmatprep.subr.bf16.mxu0 0
  %2987 = vmatpush1.bf16.msra.mxu0 0
  %2988 = vmatprep.subr.bf16.mxu0 0
  %2989 = vmatpush1.bf16.msra.mxu0 0
  %2990 = vmatprep.subr.bf16.mxu0 0
  %2991 = vmatpush1.bf16.msra.mxu0 0
  %2992 = vmatprep.subr.bf16.mxu0 0
  %2993 = vmatpush1.bf16.msra.mxu0 0
  %2994 = vmatprep.mubr.bf16.mxu0 0
  %2995 = vmatmul.mubr.bf16.gmra.mrb[0].mxu0 %v2960
  %v2996 = vpop.f32.mrb[0].mxu0
  %v2997 = vadd.f32 0.0, %v2996
  %v2998 = vpop.f32.mrb[0].mxu0
  %v2999 = vpop.f32.mrb[0].mxu0
  %v3000 = vpop.f32.mrb[0].mxu0
  %3001 = vdwg.mxu0
  %v3006 = vunpack.c.l.b16 %v2160
  %v3007 = vunpack.c.l.b16 %v2161
  %v3008 = vunpack.c.l.b16 %v2162
  %v3009 = vunpack.c.l.b16 %v2163
  %v3010 = vpack.c.b16 %v3007, %v3006
  %v3011 = vpack.c.b16 %v3009, %v3008
  %v3015 = vsel %vm355, %v197, 0
  %3017 = vmatprep.subr.bf16.mxu0 0
  %3018 = vmatpush1.bf16.msra.mxu0 %v3010
  %3019 = vmatprep.subr.bf16.mxu0 0
  %3020 = vmatpush1.bf16.msra.mxu0 %v3011
  %3021 = vmatprep.subr.bf16.mxu0 0
  %3022 = vmatpush1.bf16.msra.mxu0 0
  %3023 = vmatprep.subr.bf16.mxu0 0
  %3024 = vmatpush1.bf16.msra.mxu0 0
  %3025 = vmatprep.subr.bf16.mxu0 0
  %3026 = vmatpush1.bf16.msra.mxu0 0
  %3027 = vmatprep.subr.bf16.mxu0 0
  %3028 = vmatpush1.bf16.msra.mxu0 0
  %3029 = vmatprep.subr.bf16.mxu0 0
  %3030 = vmatpush1.bf16.msra.mxu0 0
  %3031 = vmatprep.subr.bf16.mxu0 0
  %3032 = vmatpush1.bf16.msra.mxu0 0
  %3033 = vmatprep.subr.bf16.mxu0 0
  %3034 = vmatpush1.bf16.msra.mxu0 0
  %3035 = vmatprep.subr.bf16.mxu0 0
  %3036 = vmatpush1.bf16.msra.mxu0 0
  %3037 = vmatprep.subr.bf16.mxu0 0
  %3038 = vmatpush1.bf16.msra.mxu0 0
  %3039 = vmatprep.subr.bf16.mxu0 0
  %3040 = vmatpush1.bf16.msra.mxu0 0
  %3041 = vmatprep.subr.bf16.mxu0 0
  %3042 = vmatpush1.bf16.msra.mxu0 0
  %3043 = vmatprep.subr.bf16.mxu0 0
  %3044 = vmatpush1.bf16.msra.mxu0 0
  %3045 = vmatprep.subr.bf16.mxu0 0
  %3046 = vmatpush1.bf16.msra.mxu0 0
  %3047 = vmatprep.subr.bf16.mxu0 0
  %3048 = vmatpush1.bf16.msra.mxu0 0
  %3049 = vmatprep.mubr.bf16.mxu0 0
  %3050 = vmatmul.mubr.bf16.gmra.mrb[0].mxu0 %v3015
  %v3051 = vpop.f32.mrb[0].mxu0
  %v3052 = vadd.f32 0.0, %v3051
  %v3053 = vpop.f32.mrb[0].mxu0
  %v3054 = vpop.f32.mrb[0].mxu0
  %v3055 = vpop.f32.mrb[0].mxu0
  %3056 = vdwg.mxu0
  %v3061 = vunpack.c.l.b16 %v2164
  %v3062 = vunpack.c.l.b16 %v2165
  %v3063 = vunpack.c.l.b16 %v2166
  %v3064 = vunpack.c.l.b16 %v2167
  %v3065 = vpack.c.b16 %v3062, %v3061
  %v3066 = vpack.c.b16 %v3064, %v3063
  %v3070 = vsel %vm355, %v198, 0
  %3072 = vmatprep.subr.bf16.mxu0 0
  %3073 = vmatpush1.bf16.msra.mxu0 %v3065
  %3074 = vmatprep.subr.bf16.mxu0 0
  %3075 = vmatpush1.bf16.msra.mxu0 %v3066
  %3076 = vmatprep.subr.bf16.mxu0 0
  %3077 = vmatpush1.bf16.msra.mxu0 0
  %3078 = vmatprep.subr.bf16.mxu0 0
  %3079 = vmatpush1.bf16.msra.mxu0 0
  %3080 = vmatprep.subr.bf16.mxu0 0
  %3081 = vmatpush1.bf16.msra.mxu0 0
  %3082 = vmatprep.subr.bf16.mxu0 0
  %3083 = vmatpush1.bf16.msra.mxu0 0
  %3084 = vmatprep.subr.bf16.mxu0 0
  %3085 = vmatpush1.bf16.msra.mxu0 0
  %3086 = vmatprep.subr.bf16.mxu0 0
  %3087 = vmatpush1.bf16.msra.mxu0 0
  %3088 = vmatprep.subr.bf16.mxu0 0
  %3089 = vmatpush1.bf16.msra.mxu0 0
  %3090 = vmatprep.subr.bf16.mxu0 0
  %3091 = vmatpush1.bf16.msra.mxu0 0
  %3092 = vmatprep.subr.bf16.mxu0 0
  %3093 = vmatpush1.bf16.msra.mxu0 0
  %3094 = vmatprep.subr.bf16.mxu0 0
  %3095 = vmatpush1.bf16.msra.mxu0 0
  %3096 = vmatprep.subr.bf16.mxu0 0
  %3097 = vmatpush1.bf16.msra.mxu0 0
  %3098 = vmatprep.subr.bf16.mxu0 0
  %3099 = vmatpush1.bf16.msra.mxu0 0
  %3100 = vmatprep.subr.bf16.mxu0 0
  %3101 = vmatpush1.bf16.msra.mxu0 0
  %3102 = vmatprep.subr.bf16.mxu0 0
  %3103 = vmatpush1.bf16.msra.mxu0 0
  %3104 = vmatprep.mubr.bf16.mxu0 0
  %3105 = vmatmul.mubr.bf16.gmra.mrb[0].mxu0 %v3070
  %v3106 = vpop.f32.mrb[0].mxu0
  %v3107 = vadd.f32 0.0, %v3106
  %v3108 = vpop.f32.mrb[0].mxu0
  %v3109 = vpop.f32.mrb[0].mxu0
  %v3110 = vpop.f32.mrb[0].mxu0
  %3111 = vdwg.mxu0
  %v3116 = vunpack.c.l.b16 %v2168
  %v3117 = vunpack.c.l.b16 %v2169
  %v3118 = vunpack.c.l.b16 %v2170
  %v3119 = vunpack.c.l.b16 %v2171
  %v3120 = vpack.c.b16 %v3117, %v3116
  %v3121 = vpack.c.b16 %v3119, %v3118
  %v3125 = vsel %vm355, %v199, 0
  %3127 = vmatprep.subr.bf16.mxu0 0
  %3128 = vmatpush1.bf16.msra.mxu0 %v3120
  %3129 = vmatprep.subr.bf16.mxu0 0
  %3130 = vmatpush1.bf16.msra.mxu0 %v3121
  %3131 = vmatprep.subr.bf16.mxu0 0
  %3132 = vmatpush1.bf16.msra.mxu0 0
  %3133 = vmatprep.subr.bf16.mxu0 0
  %3134 = vmatpush1.bf16.msra.mxu0 0
  %3135 = vmatprep.subr.bf16.mxu0 0
  %3136 = vmatpush1.bf16.msra.mxu0 0
  %3137 = vmatprep.subr.bf16.mxu0 0
  %3138 = vmatpush1.bf16.msra.mxu0 0
  %3139 = vmatprep.subr.bf16.mxu0 0
  %3140 = vmatpush1.bf16.msra.mxu0 0
  %3141 = vmatprep.subr.bf16.mxu0 0
  %3142 = vmatpush1.bf16.msra.mxu0 0
  %3143 = vmatprep.subr.bf16.mxu0 0
  %3144 = vmatpush1.bf16.msra.mxu0 0
  %3145 = vmatprep.subr.bf16.mxu0 0
  %3146 = vmatpush1.bf16.msra.mxu0 0
  %3147 = vmatprep.subr.bf16.mxu0 0
  %3148 = vmatpush1.bf16.msra.mxu0 0
  %3149 = vmatprep.subr.bf16.mxu0 0
  %3150 = vmatpush1.bf16.msra.mxu0 0
  %3151 = vmatprep.subr.bf16.mxu0 0
  %3152 = vmatpush1.bf16.msra.mxu0 0
  %3153 = vmatprep.subr.bf16.mxu0 0
  %3154 = vmatpush1.bf16.msra.mxu0 0
  %3155 = vmatprep.subr.bf16.mxu0 0
  %3156 = vmatpush1.bf16.msra.mxu0 0
  %3157 = vmatprep.subr.bf16.mxu0 0
  %3158 = vmatpush1.bf16.msra.mxu0 0
  %3159 = vmatprep.mubr.bf16.mxu0 0
  %3160 = vmatmul.mubr.bf16.gmra.mrb[0].mxu0 %v3125
  %v3161 = vpop.f32.mrb[0].mxu0
  %v3162 = vadd.f32 0.0, %v3161
  %v3163 = vpop.f32.mrb[0].mxu0
  %v3164 = vpop.f32.mrb[0].mxu0
  %v3165 = vpop.f32.mrb[0].mxu0
  %3166 = vdwg.mxu0
  %v3171 = vunpack.c.l.b16 %v2172
  %v3172 = vunpack.c.l.b16 %v2173
  %v3173 = vunpack.c.l.b16 %v2174
  %v3174 = vunpack.c.l.b16 %v2175
  %v3175 = vpack.c.b16 %v3172, %v3171
  %v3176 = vpack.c.b16 %v3174, %v3173
  %v3180 = vsel %vm355, %v200, 0
  %3182 = vmatprep.subr.bf16.mxu0 0
  %3183 = vmatpush1.bf16.msra.mxu0 %v3175
  %3184 = vmatprep.subr.bf16.mxu0 0
  %3185 = vmatpush1.bf16.msra.mxu0 %v3176
  %3186 = vmatprep.subr.bf16.mxu0 0
  %3187 = vmatpush1.bf16.msra.mxu0 0
  %3188 = vmatprep.subr.bf16.mxu0 0
  %3189 = vmatpush1.bf16.msra.mxu0 0
  %3190 = vmatprep.subr.bf16.mxu0 0
  %3191 = vmatpush1.bf16.msra.mxu0 0
  %3192 = vmatprep.subr.bf16.mxu0 0
  %3193 = vmatpush1.bf16.msra.mxu0 0
  %3194 = vmatprep.subr.bf16.mxu0 0
  %3195 = vmatpush1.bf16.msra.mxu0 0
  %3196 = vmatprep.subr.bf16.mxu0 0
  %3197 = vmatpush1.bf16.msra.mxu0 0
  %3198 = vmatprep.subr.bf16.mxu0 0
  %3199 = vmatpush1.bf16.msra.mxu0 0
  %3200 = vmatprep.subr.bf16.mxu0 0
  %3201 = vmatpush1.bf16.msra.mxu0 0
  %3202 = vmatprep.subr.bf16.mxu0 0
  %3203 = vmatpush1.bf16.msra.mxu0 0
  %3204 = vmatprep.subr.bf16.mxu0 0
  %3205 = vmatpush1.bf16.msra.mxu0 0
  %3206 = vmatprep.subr.bf16.mxu0 0
  %3207 = vmatpush1.bf16.msra.mxu0 0
  %3208 = vmatprep.subr.bf16.mxu0 0
  %3209 = vmatpush1.bf16.msra.mxu0 0
  %3210 = vmatprep.subr.bf16.mxu0 0
  %3211 = vmatpush1.bf16.msra.mxu0 0
  %3212 = vmatprep.subr.bf16.mxu0 0
  %3213 = vmatpush1.bf16.msra.mxu0 0
  %3214 = vmatprep.mubr.bf16.mxu0 0
  %3215 = vmatmul.mubr.bf16.gmra.mrb[0].mxu0 %v3180
  %v3216 = vpop.f32.mrb[0].mxu0
  %v3217 = vadd.f32 0.0, %v3216
  %v3218 = vpop.f32.mrb[0].mxu0
  %v3219 = vpop.f32.mrb[0].mxu0
  %v3220 = vpop.f32.mrb[0].mxu0
  %3221 = vdwg.mxu0
  %v3226 = vunpack.c.l.b16 %v2176
  %v3227 = vunpack.c.l.b16 %v2177
  %v3228 = vunpack.c.l.b16 %v2178
  %v3229 = vunpack.c.l.b16 %v2179
  %v3230 = vpack.c.b16 %v3227, %v3226
  %v3231 = vpack.c.b16 %v3229, %v3228
  %v3235 = vsel %vm355, %v201, 0
  %3237 = vmatprep.subr.bf16.mxu0 0
  %3238 = vmatpush1.bf16.msra.mxu0 %v3230
  %3239 = vmatprep.subr.bf16.mxu0 0
  %3240 = vmatpush1.bf16.msra.mxu0 %v3231
  %3241 = vmatprep.subr.bf16.mxu0 0
  %3242 = vmatpush1.bf16.msra.mxu0 0
  %3243 = vmatprep.subr.bf16.mxu0 0
  %3244 = vmatpush1.bf16.msra.mxu0 0
  %3245 = vmatprep.subr.bf16.mxu0 0
  %3246 = vmatpush1.bf16.msra.mxu0 0
  %3247 = vmatprep.subr.bf16.mxu0 0
  %3248 = vmatpush1.bf16.msra.mxu0 0
  %3249 = vmatprep.subr.bf16.mxu0 0
  %3250 = vmatpush1.bf16.msra.mxu0 0
  %3251 = vmatprep.subr.bf16.mxu0 0
  %3252 = vmatpush1.bf16.msra.mxu0 0
  %3253 = vmatprep.subr.bf16.mxu0 0
  %3254 = vmatpush1.bf16.msra.mxu0 0
  %3255 = vmatprep.subr.bf16.mxu0 0
  %3256 = vmatpush1.bf16.msra.mxu0 0
  %3257 = vmatprep.subr.bf16.mxu0 0
  %3258 = vmatpush1.bf16.msra.mxu0 0
  %3259 = vmatprep.subr.bf16.mxu0 0
  %3260 = vmatpush1.bf16.msra.mxu0 0
  %3261 = vmatprep.subr.bf16.mxu0 0
  %3262 = vmatpush1.bf16.msra.mxu0 0
  %3263 = vmatprep.subr.bf16.mxu0 0
  %3264 = vmatpush1.bf16.msra.mxu0 0
  %3265 = vmatprep.subr.bf16.mxu0 0
  %3266 = vmatpush1.bf16.msra.mxu0 0
  %3267 = vmatprep.subr.bf16.mxu0 0
  %3268 = vmatpush1.bf16.msra.mxu0 0
  %3269 = vmatprep.mubr.bf16.mxu0 0
  %3270 = vmatmul.mubr.bf16.gmra.mrb[0].mxu0 %v3235
  %v3271 = vpop.f32.mrb[0].mxu0
  %v3272 = vadd.f32 0.0, %v3271
  %v3273 = vpop.f32.mrb[0].mxu0
  %v3274 = vpop.f32.mrb[0].mxu0
  %v3275 = vpop.f32.mrb[0].mxu0
  %3276 = vdwg.mxu0
  %v3281 = vunpack.c.l.b16 %v2180
  %v3282 = vunpack.c.l.b16 %v2181
  %v3283 = vunpack.c.l.b16 %v2182
  %v3284 = vunpack.c.l.b16 %v2183
  %v3285 = vpack.c.b16 %v3282, %v3281
  %v3286 = vpack.c.b16 %v3284, %v3283
  %v3290 = vsel %vm355, %v202, 0
  %3292 = vmatprep.subr.bf16.mxu0 0
  %3293 = vmatpush1.bf16.msra.mxu0 %v3285
  %3294 = vmatprep.subr.bf16.mxu0 0
  %3295 = vmatpush1.bf16.msra.mxu0 %v3286
  %3296 = vmatprep.subr.bf16.mxu0 0
  %3297 = vmatpush1.bf16.msra.mxu0 0
  %3298 = vmatprep.subr.bf16.mxu0 0
  %3299 = vmatpush1.bf16.msra.mxu0 0
  %3300 = vmatprep.subr.bf16.mxu0 0
  %3301 = vmatpush1.bf16.msra.mxu0 0
  %3302 = vmatprep.subr.bf16.mxu0 0
  %3303 = vmatpush1.bf16.msra.mxu0 0
  %3304 = vmatprep.subr.bf16.mxu0 0
  %3305 = vmatpush1.bf16.msra.mxu0 0
  %3306 = vmatprep.subr.bf16.mxu0 0
  %3307 = vmatpush1.bf16.msra.mxu0 0
  %3308 = vmatprep.subr.bf16.mxu0 0
  %3309 = vmatpush1.bf16.msra.mxu0 0
  %3310 = vmatprep.subr.bf16.mxu0 0
  %3311 = vmatpush1.bf16.msra.mxu0 0
  %3312 = vmatprep.subr.bf16.mxu0 0
  %3313 = vmatpush1.bf16.msra.mxu0 0
  %3314 = vmatprep.subr.bf16.mxu0 0
  %3315 = vmatpush1.bf16.msra.mxu0 0
  %3316 = vmatprep.subr.bf16.mxu0 0
  %3317 = vmatpush1.bf16.msra.mxu0 0
  %3318 = vmatprep.subr.bf16.mxu0 0
  %3319 = vmatpush1.bf16.msra.mxu0 0
  %3320 = vmatprep.subr.bf16.mxu0 0
  %3321 = vmatpush1.bf16.msra.mxu0 0
  %3322 = vmatprep.subr.bf16.mxu0 0
  %3323 = vmatpush1.bf16.msra.mxu0 0
  %3324 = vmatprep.mubr.bf16.mxu0 0
  %3325 = vmatmul.mubr.bf16.gmra.mrb[0].mxu0 %v3290
  %v3326 = vpop.f32.mrb[0].mxu0
  %v3327 = vadd.f32 0.0, %v3326
  %v3328 = vpop.f32.mrb[0].mxu0
  %v3329 = vpop.f32.mrb[0].mxu0
  %v3330 = vpop.f32.mrb[0].mxu0
  %3331 = vdwg.mxu0
  %v3336 = vunpack.c.l.b16 %v2184
  %v3337 = vunpack.c.l.b16 %v2185
  %v3338 = vunpack.c.l.b16 %v2186
  %v3339 = vunpack.c.l.b16 %v2187
  %v3340 = vpack.c.b16 %v3337, %v3336
  %v3341 = vpack.c.b16 %v3339, %v3338
  %v3345 = vsel %vm355, %v203, 0
  %3347 = vmatprep.subr.bf16.mxu0 0
  %3348 = vmatpush1.bf16.msra.mxu0 %v3340
  %3349 = vmatprep.subr.bf16.mxu0 0
  %3350 = vmatpush1.bf16.msra.mxu0 %v3341
  %3351 = vmatprep.subr.bf16.mxu0 0
  %3352 = vmatpush1.bf16.msra.mxu0 0
  %3353 = vmatprep.subr.bf16.mxu0 0
  %3354 = vmatpush1.bf16.msra.mxu0 0
  %3355 = vmatprep.subr.bf16.mxu0 0
  %3356 = vmatpush1.bf16.msra.mxu0 0
  %3357 = vmatprep.subr.bf16.mxu0 0
  %3358 = vmatpush1.bf16.msra.mxu0 0
  %3359 = vmatprep.subr.bf16.mxu0 0
  %3360 = vmatpush1.bf16.msra.mxu0 0
  %3361 = vmatprep.subr.bf16.mxu0 0
  %3362 = vmatpush1.bf16.msra.mxu0 0
  %3363 = vmatprep.subr.bf16.mxu0 0
  %3364 = vmatpush1.bf16.msra.mxu0 0
  %3365 = vmatprep.subr.bf16.mxu0 0
  %3366 = vmatpush1.bf16.msra.mxu0 0
  %3367 = vmatprep.subr.bf16.mxu0 0
  %3368 = vmatpush1.bf16.msra.mxu0 0
  %3369 = vmatprep.subr.bf16.mxu0 0
  %3370 = vmatpush1.bf16.msra.mxu0 0
  %3371 = vmatprep.subr.bf16.mxu0 0
  %3372 = vmatpush1.bf16.msra.mxu0 0
  %3373 = vmatprep.subr.bf16.mxu0 0
  %3374 = vmatpush1.bf16.msra.mxu0 0
  %3375 = vmatprep.subr.bf16.mxu0 0
  %3376 = vmatpush1.bf16.msra.mxu0 0
  %3377 = vmatprep.subr.bf16.mxu0 0
  %3378 = vmatpush1.bf16.msra.mxu0 0
  %3379 = vmatprep.mubr.bf16.mxu0 0
  %3380 = vmatmul.mubr.bf16.gmra.mrb[0].mxu0 %v3345
  %v3381 = vpop.f32.mrb[0].mxu0
  %v3382 = vadd.f32 0.0, %v3381
  %v3383 = vpop.f32.mrb[0].mxu0
  %v3384 = vpop.f32.mrb[0].mxu0
  %v3385 = vpop.f32.mrb[0].mxu0
  %3386 = vdwg.mxu0
  %v3391 = vunpack.c.l.b16 %v2188
  %v3392 = vunpack.c.l.b16 %v2189
  %v3393 = vunpack.c.l.b16 %v2190
  %v3394 = vunpack.c.l.b16 %v2191
  %v3395 = vpack.c.b16 %v3392, %v3391
  %v3396 = vpack.c.b16 %v3394, %v3393
  %v3400 = vsel %vm355, %v204, 0
  %3402 = vmatprep.subr.bf16.mxu0 0
  %3403 = vmatpush1.bf16.msra.mxu0 %v3395
  %3404 = vmatprep.subr.bf16.mxu0 0
  %3405 = vmatpush1.bf16.msra.mxu0 %v3396
  %3406 = vmatprep.subr.bf16.mxu0 0
  %3407 = vmatpush1.bf16.msra.mxu0 0
  %3408 = vmatprep.subr.bf16.mxu0 0
  %3409 = vmatpush1.bf16.msra.mxu0 0
  %3410 = vmatprep.subr.bf16.mxu0 0
  %3411 = vmatpush1.bf16.msra.mxu0 0
  %3412 = vmatprep.subr.bf16.mxu0 0
  %3413 = vmatpush1.bf16.msra.mxu0 0
  %3414 = vmatprep.subr.bf16.mxu0 0
  %3415 = vmatpush1.bf16.msra.mxu0 0
  %3416 = vmatprep.subr.bf16.mxu0 0
  %3417 = vmatpush1.bf16.msra.mxu0 0
  %3418 = vmatprep.subr.bf16.mxu0 0
  %3419 = vmatpush1.bf16.msra.mxu0 0
  %3420 = vmatprep.subr.bf16.mxu0 0
  %3421 = vmatpush1.bf16.msra.mxu0 0
  %3422 = vmatprep.subr.bf16.mxu0 0
  %3423 = vmatpush1.bf16.msra.mxu0 0
  %3424 = vmatprep.subr.bf16.mxu0 0
  %3425 = vmatpush1.bf16.msra.mxu0 0
  %3426 = vmatprep.subr.bf16.mxu0 0
  %3427 = vmatpush1.bf16.msra.mxu0 0
  %3428 = vmatprep.subr.bf16.mxu0 0
  %3429 = vmatpush1.bf16.msra.mxu0 0
  %3430 = vmatprep.subr.bf16.mxu0 0
  %3431 = vmatpush1.bf16.msra.mxu0 0
  %3432 = vmatprep.subr.bf16.mxu0 0
  %3433 = vmatpush1.bf16.msra.mxu0 0
  %3434 = vmatprep.mubr.bf16.mxu0 0
  %3435 = vmatmul.mubr.bf16.gmra.mrb[0].mxu0 %v3400
  %v3436 = vpop.f32.mrb[0].mxu0
  %v3437 = vadd.f32 0.0, %v3436
  %v3438 = vpop.f32.mrb[0].mxu0
  %v3439 = vpop.f32.mrb[0].mxu0
  %v3440 = vpop.f32.mrb[0].mxu0
  %3441 = vdwg.mxu0
  %v3446 = vunpack.c.l.b16 %v2192
  %v3447 = vunpack.c.l.b16 %v2193
  %v3448 = vunpack.c.l.b16 %v2194
  %v3449 = vunpack.c.l.b16 %v2195
  %v3450 = vpack.c.b16 %v3447, %v3446
  %v3451 = vpack.c.b16 %v3449, %v3448
  %v3455 = vsel %vm355, %v205, 0
  %3457 = vmatprep.subr.bf16.mxu0 0
  %3458 = vmatpush1.bf16.msra.mxu0 %v3450
  %3459 = vmatprep.subr.bf16.mxu0 0
  %3460 = vmatpush1.bf16.msra.mxu0 %v3451
  %3461 = vmatprep.subr.bf16.mxu0 0
  %3462 = vmatpush1.bf16.msra.mxu0 0
  %3463 = vmatprep.subr.bf16.mxu0 0
  %3464 = vmatpush1.bf16.msra.mxu0 0
  %3465 = vmatprep.subr.bf16.mxu0 0
  %3466 = vmatpush1.bf16.msra.mxu0 0
  %3467 = vmatprep.subr.bf16.mxu0 0
  %3468 = vmatpush1.bf16.msra.mxu0 0
  %3469 = vmatprep.subr.bf16.mxu0 0
  %3470 = vmatpush1.bf16.msra.mxu0 0
  %3471 = vmatprep.subr.bf16.mxu0 0
  %3472 = vmatpush1.bf16.msra.mxu0 0
  %3473 = vmatprep.subr.bf16.mxu0 0
  %3474 = vmatpush1.bf16.msra.mxu0 0
  %3475 = vmatprep.subr.bf16.mxu0 0
  %3476 = vmatpush1.bf16.msra.mxu0 0
  %3477 = vmatprep.subr.bf16.mxu0 0
  %3478 = vmatpush1.bf16.msra.mxu0 0
  %3479 = vmatprep.subr.bf16.mxu0 0
  %3480 = vmatpush1.bf16.msra.mxu0 0
  %3481 = vmatprep.subr.bf16.mxu0 0
  %3482 = vmatpush1.bf16.msra.mxu0 0
  %3483 = vmatprep.subr.bf16.mxu0 0
  %3484 = vmatpush1.bf16.msra.mxu0 0
  %3485 = vmatprep.subr.bf16.mxu0 0
  %3486 = vmatpush1.bf16.msra.mxu0 0
  %3487 = vmatprep.subr.bf16.mxu0 0
  %3488 = vmatpush1.bf16.msra.mxu0 0
  %3489 = vmatprep.mubr.bf16.mxu0 0
  %3490 = vmatmul.mubr.bf16.gmra.mrb[0].mxu0 %v3455
  %v3491 = vpop.f32.mrb[0].mxu0
  %v3492 = vadd.f32 0.0, %v3491
  %v3493 = vpop.f32.mrb[0].mxu0
  %v3494 = vpop.f32.mrb[0].mxu0
  %v3495 = vpop.f32.mrb[0].mxu0
  %3496 = vdwg.mxu0
  %v3501 = vunpack.c.l.b16 %v2196
  %v3502 = vunpack.c.l.b16 %v2197
  %v3503 = vunpack.c.l.b16 %v2198
  %v3504 = vunpack.c.l.b16 %v2199
  %v3505 = vpack.c.b16 %v3502, %v3501
  %v3506 = vpack.c.b16 %v3504, %v3503
  %v3510 = vsel %vm355, %v206, 0
  %3512 = vmatprep.subr.bf16.mxu0 0
  %3513 = vmatpush1.bf16.msra.mxu0 %v3505
  %3514 = vmatprep.subr.bf16.mxu0 0
  %3515 = vmatpush1.bf16.msra.mxu0 %v3506
  %3516 = vmatprep.subr.bf16.mxu0 0
  %3517 = vmatpush1.bf16.msra.mxu0 0
  %3518 = vmatprep.subr.bf16.mxu0 0
  %3519 = vmatpush1.bf16.msra.mxu0 0
  %3520 = vmatprep.subr.bf16.mxu0 0
  %3521 = vmatpush1.bf16.msra.mxu0 0
  %3522 = vmatprep.subr.bf16.mxu0 0
  %3523 = vmatpush1.bf16.msra.mxu0 0
  %3524 = vmatprep.subr.bf16.mxu0 0
  %3525 = vmatpush1.bf16.msra.mxu0 0
  %3526 = vmatprep.subr.bf16.mxu0 0
  %3527 = vmatpush1.bf16.msra.mxu0 0
  %3528 = vmatprep.subr.bf16.mxu0 0
  %3529 = vmatpush1.bf16.msra.mxu0 0
  %3530 = vmatprep.subr.bf16.mxu0 0
  %3531 = vmatpush1.bf16.msra.mxu0 0
  %3532 = vmatprep.subr.bf16.mxu0 0
  %3533 = vmatpush1.bf16.msra.mxu0 0
  %3534 = vmatprep.subr.bf16.mxu0 0
  %3535 = vmatpush1.bf16.msra.mxu0 0
  %3536 = vmatprep.subr.bf16.mxu0 0
  %3537 = vmatpush1.bf16.msra.mxu0 0
  %3538 = vmatprep.subr.bf16.mxu0 0
  %3539 = vmatpush1.bf16.msra.mxu0 0
  %3540 = vmatprep.subr.bf16.mxu0 0
  %3541 = vmatpush1.bf16.msra.mxu0 0
  %3542 = vmatprep.subr.bf16.mxu0 0
  %3543 = vmatpush1.bf16.msra.mxu0 0
  %3544 = vmatprep.mubr.bf16.mxu0 0
  %3545 = vmatmul.mubr.bf16.gmra.mrb[0].mxu0 %v3510
  %v3546 = vpop.f32.mrb[0].mxu0
  %v3547 = vadd.f32 0.0, %v3546
  %v3548 = vpop.f32.mrb[0].mxu0
  %v3549 = vpop.f32.mrb[0].mxu0
  %v3550 = vpop.f32.mrb[0].mxu0
  %3551 = vdwg.mxu0
  %v3556 = vunpack.c.l.b16 %v2200
  %v3557 = vunpack.c.l.b16 %v2201
  %v3558 = vunpack.c.l.b16 %v2202
  %v3559 = vunpack.c.l.b16 %v2203
  %v3560 = vpack.c.b16 %v3557, %v3556
  %v3561 = vpack.c.b16 %v3559, %v3558
  %v3565 = vsel %vm355, %v207, 0
  %3567 = vmatprep.subr.bf16.mxu0 0
  %3568 = vmatpush1.bf16.msra.mxu0 %v3560
  %3569 = vmatprep.subr.bf16.mxu0 0
  %3570 = vmatpush1.bf16.msra.mxu0 %v3561
  %3571 = vmatprep.subr.bf16.mxu0 0
  %3572 = vmatpush1.bf16.msra.mxu0 0
  %3573 = vmatprep.subr.bf16.mxu0 0
  %3574 = vmatpush1.bf16.msra.mxu0 0
  %3575 = vmatprep.subr.bf16.mxu0 0
  %3576 = vmatpush1.bf16.msra.mxu0 0
  %3577 = vmatprep.subr.bf16.mxu0 0
  %3578 = vmatpush1.bf16.msra.mxu0 0
  %3579 = vmatprep.subr.bf16.mxu0 0
  %3580 = vmatpush1.bf16.msra.mxu0 0
  %3581 = vmatprep.subr.bf16.mxu0 0
  %3582 = vmatpush1.bf16.msra.mxu0 0
  %3583 = vmatprep.subr.bf16.mxu0 0
  %3584 = vmatpush1.bf16.msra.mxu0 0
  %3585 = vmatprep.subr.bf16.mxu0 0
  %3586 = vmatpush1.bf16.msra.mxu0 0
  %3587 = vmatprep.subr.bf16.mxu0 0
  %3588 = vmatpush1.bf16.msra.mxu0 0
  %3589 = vmatprep.subr.bf16.mxu0 0
  %3590 = vmatpush1.bf16.msra.mxu0 0
  %3591 = vmatprep.subr.bf16.mxu0 0
  %3592 = vmatpush1.bf16.msra.mxu0 0
  %3593 = vmatprep.subr.bf16.mxu0 0
  %3594 = vmatpush1.bf16.msra.mxu0 0
  %3595 = vmatprep.subr.bf16.mxu0 0
  %3596 = vmatpush1.bf16.msra.mxu0 0
  %3597 = vmatprep.subr.bf16.mxu0 0
  %3598 = vmatpush1.bf16.msra.mxu0 0
  %3599 = vmatprep.mubr.bf16.mxu0 0
  %3600 = vmatmul.mubr.bf16.gmra.mrb[0].mxu0 %v3565
  %v3601 = vpop.f32.mrb[0].mxu0
  %v3602 = vadd.f32 0.0, %v3601
  %v3603 = vpop.f32.mrb[0].mxu0
  %v3604 = vpop.f32.mrb[0].mxu0
  %v3605 = vpop.f32.mrb[0].mxu0
  %3606 = vdwg.mxu0
  %v3611 = vunpack.c.l.b16 %v2204
  %v3612 = vunpack.c.l.b16 %v2205
  %v3613 = vunpack.c.l.b16 %v2206
  %v3614 = vunpack.c.l.b16 %v2207
  %v3615 = vpack.c.b16 %v3612, %v3611
  %v3616 = vpack.c.b16 %v3614, %v3613
  %v3620 = vsel %vm355, %v208, 0
  %3622 = vmatprep.subr.bf16.mxu0 0
  %3623 = vmatpush1.bf16.msra.mxu0 %v3615
  %3624 = vmatprep.subr.bf16.mxu0 0
  %3625 = vmatpush1.bf16.msra.mxu0 %v3616
  %3626 = vmatprep.subr.bf16.mxu0 0
  %3627 = vmatpush1.bf16.msra.mxu0 0
  %3628 = vmatprep.subr.bf16.mxu0 0
  %3629 = vmatpush1.bf16.msra.mxu0 0
  %3630 = vmatprep.subr.bf16.mxu0 0
  %3631 = vmatpush1.bf16.msra.mxu0 0
  %3632 = vmatprep.subr.bf16.mxu0 0
  %3633 = vmatpush1.bf16.msra.mxu0 0
  %3634 = vmatprep.subr.bf16.mxu0 0
  %3635 = vmatpush1.bf16.msra.mxu0 0
  %3636 = vmatprep.subr.bf16.mxu0 0
  %3637 = vmatpush1.bf16.msra.mxu0 0
  %3638 = vmatprep.subr.bf16.mxu0 0
  %3639 = vmatpush1.bf16.msra.mxu0 0
  %3640 = vmatprep.subr.bf16.mxu0 0
  %3641 = vmatpush1.bf16.msra.mxu0 0
  %3642 = vmatprep.subr.bf16.mxu0 0
  %3643 = vmatpush1.bf16.msra.mxu0 0
  %3644 = vmatprep.subr.bf16.mxu0 0
  %3645 = vmatpush1.bf16.msra.mxu0 0
  %3646 = vmatprep.subr.bf16.mxu0 0
  %3647 = vmatpush1.bf16.msra.mxu0 0
  %3648 = vmatprep.subr.bf16.mxu0 0
  %3649 = vmatpush1.bf16.msra.mxu0 0
  %3650 = vmatprep.subr.bf16.mxu0 0
  %3651 = vmatpush1.bf16.msra.mxu0 0
  %3652 = vmatprep.subr.bf16.mxu0 0
  %3653 = vmatpush1.bf16.msra.mxu0 0
  %3654 = vmatprep.mubr.bf16.mxu0 0
  %3655 = vmatmul.mubr.bf16.gmra.mrb[0].mxu0 %v3620
  %v3656 = vpop.f32.mrb[0].mxu0
  %v3657 = vadd.f32 0.0, %v3656
  %v3658 = vpop.f32.mrb[0].mxu0
  %v3659 = vpop.f32.mrb[0].mxu0
  %v3660 = vpop.f32.mrb[0].mxu0
  %3661 = vdwg.mxu0
  %v3666 = vunpack.c.l.b16 %v2208
  %v3667 = vunpack.c.l.b16 %v2209
  %v3668 = vunpack.c.l.b16 %v2210
  %v3669 = vunpack.c.l.b16 %v2211
  %v3670 = vpack.c.b16 %v3667, %v3666
  %v3671 = vpack.c.b16 %v3669, %v3668
  %v3675 = vsel %vm355, %v209, 0
  %3677 = vmatprep.subr.bf16.mxu0 0
  %3678 = vmatpush1.bf16.msra.mxu0 %v3670
  %3679 = vmatprep.subr.bf16.mxu0 0
  %3680 = vmatpush1.bf16.msra.mxu0 %v3671
  %3681 = vmatprep.subr.bf16.mxu0 0
  %3682 = vmatpush1.bf16.msra.mxu0 0
  %3683 = vmatprep.subr.bf16.mxu0 0
  %3684 = vmatpush1.bf16.msra.mxu0 0
  %3685 = vmatprep.subr.bf16.mxu0 0
  %3686 = vmatpush1.bf16.msra.mxu0 0
  %3687 = vmatprep.subr.bf16.mxu0 0
  %3688 = vmatpush1.bf16.msra.mxu0 0
  %3689 = vmatprep.subr.bf16.mxu0 0
  %3690 = vmatpush1.bf16.msra.mxu0 0
  %3691 = vmatprep.subr.bf16.mxu0 0
  %3692 = vmatpush1.bf16.msra.mxu0 0
  %3693 = vmatprep.subr.bf16.mxu0 0
  %3694 = vmatpush1.bf16.msra.mxu0 0
  %3695 = vmatprep.subr.bf16.mxu0 0
  %3696 = vmatpush1.bf16.msra.mxu0 0
  %3697 = vmatprep.subr.bf16.mxu0 0
  %3698 = vmatpush1.bf16.msra.mxu0 0
  %3699 = vmatprep.subr.bf16.mxu0 0
  %3700 = vmatpush1.bf16.msra.mxu0 0
  %3701 = vmatprep.subr.bf16.mxu0 0
  %3702 = vmatpush1.bf16.msra.mxu0 0
  %3703 = vmatprep.subr.bf16.mxu0 0
  %3704 = vmatpush1.bf16.msra.mxu0 0
  %3705 = vmatprep.subr.bf16.mxu0 0
  %3706 = vmatpush1.bf16.msra.mxu0 0
  %3707 = vmatprep.subr.bf16.mxu0 0
  %3708 = vmatpush1.bf16.msra.mxu0 0
  %3709 = vmatprep.mubr.bf16.mxu0 0
  %3710 = vmatmul.mubr.bf16.gmra.mrb[0].mxu0 %v3675
  %v3711 = vpop.f32.mrb[0].mxu0
  %v3712 = vadd.f32 0.0, %v3711
  %v3713 = vpop.f32.mrb[0].mxu0
  %v3714 = vpop.f32.mrb[0].mxu0
  %v3715 = vpop.f32.mrb[0].mxu0
  %3716 = vdwg.mxu0
  %v3721 = vunpack.c.l.b16 %v2212
  %v3722 = vunpack.c.l.b16 %v2213
  %v3723 = vunpack.c.l.b16 %v2214
  %v3724 = vunpack.c.l.b16 %v2215
  %v3725 = vpack.c.b16 %v3722, %v3721
  %v3726 = vpack.c.b16 %v3724, %v3723
  %v3730 = vsel %vm355, %v210, 0
  %3732 = vmatprep.subr.bf16.mxu0 0
  %3733 = vmatpush1.bf16.msra.mxu0 %v3725
  %3734 = vmatprep.subr.bf16.mxu0 0
  %3735 = vmatpush1.bf16.msra.mxu0 %v3726
  %3736 = vmatprep.subr.bf16.mxu0 0
  %3737 = vmatpush1.bf16.msra.mxu0 0
  %3738 = vmatprep.subr.bf16.mxu0 0
  %3739 = vmatpush1.bf16.msra.mxu0 0
  %3740 = vmatprep.subr.bf16.mxu0 0
  %3741 = vmatpush1.bf16.msra.mxu0 0
  %3742 = vmatprep.subr.bf16.mxu0 0
  %3743 = vmatpush1.bf16.msra.mxu0 0
  %3744 = vmatprep.subr.bf16.mxu0 0
  %3745 = vmatpush1.bf16.msra.mxu0 0
  %3746 = vmatprep.subr.bf16.mxu0 0
  %3747 = vmatpush1.bf16.msra.mxu0 0
  %3748 = vmatprep.subr.bf16.mxu0 0
  %3749 = vmatpush1.bf16.msra.mxu0 0
  %3750 = vmatprep.subr.bf16.mxu0 0
  %3751 = vmatpush1.bf16.msra.mxu0 0
  %3752 = vmatprep.subr.bf16.mxu0 0
  %3753 = vmatpush1.bf16.msra.mxu0 0
  %3754 = vmatprep.subr.bf16.mxu0 0
  %3755 = vmatpush1.bf16.msra.mxu0 0
  %3756 = vmatprep.subr.bf16.mxu0 0
  %3757 = vmatpush1.bf16.msra.mxu0 0
  %3758 = vmatprep.subr.bf16.mxu0 0
  %3759 = vmatpush1.bf16.msra.mxu0 0
  %3760 = vmatprep.subr.bf16.mxu0 0
  %3761 = vmatpush1.bf16.msra.mxu0 0
  %3762 = vmatprep.subr.bf16.mxu0 0
  %3763 = vmatpush1.bf16.msra.mxu0 0
  %3764 = vmatprep.mubr.bf16.mxu0 0
  %3765 = vmatmul.mubr.bf16.gmra.mrb[0].mxu0 %v3730
  %v3766 = vpop.f32.mrb[0].mxu0
  %v3767 = vadd.f32 0.0, %v3766
  %v3768 = vpop.f32.mrb[0].mxu0
  %v3769 = vpop.f32.mrb[0].mxu0
  %v3770 = vpop.f32.mrb[0].mxu0
  %3771 = vdwg.mxu0
  %v3776 = vunpack.c.l.b16 %v2216
  %v3777 = vunpack.c.l.b16 %v2217
  %v3778 = vunpack.c.l.b16 %v2218
  %v3779 = vunpack.c.l.b16 %v2219
  %v3780 = vpack.c.b16 %v3777, %v3776
  %v3781 = vpack.c.b16 %v3779, %v3778
  %v3785 = vsel %vm355, %v211, 0
  %3787 = vmatprep.subr.bf16.mxu0 0
  %3788 = vmatpush1.bf16.msra.mxu0 %v3780
  %3789 = vmatprep.subr.bf16.mxu0 0
  %3790 = vmatpush1.bf16.msra.mxu0 %v3781
  %3791 = vmatprep.subr.bf16.mxu0 0
  %3792 = vmatpush1.bf16.msra.mxu0 0
  %3793 = vmatprep.subr.bf16.mxu0 0
  %3794 = vmatpush1.bf16.msra.mxu0 0
  %3795 = vmatprep.subr.bf16.mxu0 0
  %3796 = vmatpush1.bf16.msra.mxu0 0
  %3797 = vmatprep.subr.bf16.mxu0 0
  %3798 = vmatpush1.bf16.msra.mxu0 0
  %3799 = vmatprep.subr.bf16.mxu0 0
  %3800 = vmatpush1.bf16.msra.mxu0 0
  %3801 = vmatprep.subr.bf16.mxu0 0
  %3802 = vmatpush1.bf16.msra.mxu0 0
  %3803 = vmatprep.subr.bf16.mxu0 0
  %3804 = vmatpush1.bf16.msra.mxu0 0
  %3805 = vmatprep.subr.bf16.mxu0 0
  %3806 = vmatpush1.bf16.msra.mxu0 0
  %3807 = vmatprep.subr.bf16.mxu0 0
  %3808 = vmatpush1.bf16.msra.mxu0 0
  %3809 = vmatprep.subr.bf16.mxu0 0
  %3810 = vmatpush1.bf16.msra.mxu0 0
  %3811 = vmatprep.subr.bf16.mxu0 0
  %3812 = vmatpush1.bf16.msra.mxu0 0
  %3813 = vmatprep.subr.bf16.mxu0 0
  %3814 = vmatpush1.bf16.msra.mxu0 0
  %3815 = vmatprep.subr.bf16.mxu0 0
  %3816 = vmatpush1.bf16.msra.mxu0 0
  %3817 = vmatprep.subr.bf16.mxu0 0
  %3818 = vmatpush1.bf16.msra.mxu0 0
  %3819 = vmatprep.mubr.bf16.mxu0 0
  %3820 = vmatmul.mubr.bf16.gmra.mrb[0].mxu0 %v3785
  %v3821 = vpop.f32.mrb[0].mxu0
  %v3822 = vadd.f32 0.0, %v3821
  %v3823 = vpop.f32.mrb[0].mxu0
  %v3824 = vpop.f32.mrb[0].mxu0
  %v3825 = vpop.f32.mrb[0].mxu0
  %3826 = vdwg.mxu0
  %v3831 = vunpack.c.l.b16 %v2220
  %v3832 = vunpack.c.l.b16 %v2221
  %v3833 = vunpack.c.l.b16 %v2222
  %v3834 = vunpack.c.l.b16 %v2223
  %v3835 = vpack.c.b16 %v3832, %v3831
  %v3836 = vpack.c.b16 %v3834, %v3833
  %v3840 = vsel %vm355, %v212, 0
  %3842 = vmatprep.subr.bf16.mxu0 0
  %3843 = vmatpush1.bf16.msra.mxu0 %v3835
  %3844 = vmatprep.subr.bf16.mxu0 0
  %3845 = vmatpush1.bf16.msra.mxu0 %v3836
  %3846 = vmatprep.subr.bf16.mxu0 0
  %3847 = vmatpush1.bf16.msra.mxu0 0
  %3848 = vmatprep.subr.bf16.mxu0 0
  %3849 = vmatpush1.bf16.msra.mxu0 0
  %3850 = vmatprep.subr.bf16.mxu0 0
  %3851 = vmatpush1.bf16.msra.mxu0 0
  %3852 = vmatprep.subr.bf16.mxu0 0
  %3853 = vmatpush1.bf16.msra.mxu0 0
  %3854 = vmatprep.subr.bf16.mxu0 0
  %3855 = vmatpush1.bf16.msra.mxu0 0
  %3856 = vmatprep.subr.bf16.mxu0 0
  %3857 = vmatpush1.bf16.msra.mxu0 0
  %3858 = vmatprep.subr.bf16.mxu0 0
  %3859 = vmatpush1.bf16.msra.mxu0 0
  %3860 = vmatprep.subr.bf16.mxu0 0
  %3861 = vmatpush1.bf16.msra.mxu0 0
  %3862 = vmatprep.subr.bf16.mxu0 0
  %3863 = vmatpush1.bf16.msra.mxu0 0
  %3864 = vmatprep.subr.bf16.mxu0 0
  %3865 = vmatpush1.bf16.msra.mxu0 0
  %3866 = vmatprep.subr.bf16.mxu0 0
  %3867 = vmatpush1.bf16.msra.mxu0 0
  %3868 = vmatprep.subr.bf16.mxu0 0
  %3869 = vmatpush1.bf16.msra.mxu0 0
  %3870 = vmatprep.subr.bf16.mxu0 0
  %3871 = vmatpush1.bf16.msra.mxu0 0
  %3872 = vmatprep.subr.bf16.mxu0 0
  %3873 = vmatpush1.bf16.msra.mxu0 0
  %3874 = vmatprep.mubr.bf16.mxu0 0
  %3875 = vmatmul.mubr.bf16.gmra.mrb[0].mxu0 %v3840
  %v3876 = vpop.f32.mrb[0].mxu0
  %v3877 = vadd.f32 0.0, %v3876
  %v3878 = vpop.f32.mrb[0].mxu0
  %v3879 = vpop.f32.mrb[0].mxu0
  %v3880 = vpop.f32.mrb[0].mxu0
  %3881 = vdwg.mxu0
  %v3886 = vunpack.c.l.b16 %v2224
  %v3887 = vunpack.c.l.b16 %v2225
  %v3888 = vunpack.c.l.b16 %v2226
  %v3889 = vunpack.c.l.b16 %v2227
  %v3890 = vpack.c.b16 %v3887, %v3886
  %v3891 = vpack.c.b16 %v3889, %v3888
  %v3895 = vsel %vm355, %v213, 0
  %3897 = vmatprep.subr.bf16.mxu0 0
  %3898 = vmatpush1.bf16.msra.mxu0 %v3890
  %3899 = vmatprep.subr.bf16.mxu0 0
  %3900 = vmatpush1.bf16.msra.mxu0 %v3891
  %3901 = vmatprep.subr.bf16.mxu0 0
  %3902 = vmatpush1.bf16.msra.mxu0 0
  %3903 = vmatprep.subr.bf16.mxu0 0
  %3904 = vmatpush1.bf16.msra.mxu0 0
  %3905 = vmatprep.subr.bf16.mxu0 0
  %3906 = vmatpush1.bf16.msra.mxu0 0
  %3907 = vmatprep.subr.bf16.mxu0 0
  %3908 = vmatpush1.bf16.msra.mxu0 0
  %3909 = vmatprep.subr.bf16.mxu0 0
  %3910 = vmatpush1.bf16.msra.mxu0 0
  %3911 = vmatprep.subr.bf16.mxu0 0
  %3912 = vmatpush1.bf16.msra.mxu0 0
  %3913 = vmatprep.subr.bf16.mxu0 0
  %3914 = vmatpush1.bf16.msra.mxu0 0
  %3915 = vmatprep.subr.bf16.mxu0 0
  %3916 = vmatpush1.bf16.msra.mxu0 0
  %3917 = vmatprep.subr.bf16.mxu0 0
  %3918 = vmatpush1.bf16.msra.mxu0 0
  %3919 = vmatprep.subr.bf16.mxu0 0
  %3920 = vmatpush1.bf16.msra.mxu0 0
  %3921 = vmatprep.subr.bf16.mxu0 0
  %3922 = vmatpush1.bf16.msra.mxu0 0
  %3923 = vmatprep.subr.bf16.mxu0 0
  %3924 = vmatpush1.bf16.msra.mxu0 0
  %3925 = vmatprep.subr.bf16.mxu0 0
  %3926 = vmatpush1.bf16.msra.mxu0 0
  %3927 = vmatprep.subr.bf16.mxu0 0
  %3928 = vmatpush1.bf16.msra.mxu0 0
  %3929 = vmatprep.mubr.bf16.mxu0 0
  %3930 = vmatmul.mubr.bf16.gmra.mrb[0].mxu0 %v3895
  %v3931 = vpop.f32.mrb[0].mxu0
  %v3932 = vadd.f32 0.0, %v3931
  %v3933 = vpop.f32.mrb[0].mxu0
  %v3934 = vpop.f32.mrb[0].mxu0
  %v3935 = vpop.f32.mrb[0].mxu0
  %3936 = vdwg.mxu0
  %v3941 = vunpack.c.l.b16 %v2228
  %v3942 = vunpack.c.l.b16 %v2229
  %v3943 = vunpack.c.l.b16 %v2230
  %v3944 = vunpack.c.l.b16 %v2231
  %v3945 = vpack.c.b16 %v3942, %v3941
  %v3946 = vpack.c.b16 %v3944, %v3943
  %v3950 = vsel %vm355, %v214, 0
  %3952 = vmatprep.subr.bf16.mxu0 0
  %3953 = vmatpush1.bf16.msra.mxu0 %v3945
  %3954 = vmatprep.subr.bf16.mxu0 0
  %3955 = vmatpush1.bf16.msra.mxu0 %v3946
  %3956 = vmatprep.subr.bf16.mxu0 0
  %3957 = vmatpush1.bf16.msra.mxu0 0
  %3958 = vmatprep.subr.bf16.mxu0 0
  %3959 = vmatpush1.bf16.msra.mxu0 0
  %3960 = vmatprep.subr.bf16.mxu0 0
  %3961 = vmatpush1.bf16.msra.mxu0 0
  %3962 = vmatprep.subr.bf16.mxu0 0
  %3963 = vmatpush1.bf16.msra.mxu0 0
  %3964 = vmatprep.subr.bf16.mxu0 0
  %3965 = vmatpush1.bf16.msra.mxu0 0
  %3966 = vmatprep.subr.bf16.mxu0 0
  %3967 = vmatpush1.bf16.msra.mxu0 0
  %3968 = vmatprep.subr.bf16.mxu0 0
  %3969 = vmatpush1.bf16.msra.mxu0 0
  %3970 = vmatprep.subr.bf16.mxu0 0
  %3971 = vmatpush1.bf16.msra.mxu0 0
  %3972 = vmatprep.subr.bf16.mxu0 0
  %3973 = vmatpush1.bf16.msra.mxu0 0
  %3974 = vmatprep.subr.bf16.mxu0 0
  %3975 = vmatpush1.bf16.msra.mxu0 0
  %3976 = vmatprep.subr.bf16.mxu0 0
  %3977 = vmatpush1.bf16.msra.mxu0 0
  %3978 = vmatprep.subr.bf16.mxu0 0
  %3979 = vmatpush1.bf16.msra.mxu0 0
  %3980 = vmatprep.subr.bf16.mxu0 0
  %3981 = vmatpush1.bf16.msra.mxu0 0
  %3982 = vmatprep.subr.bf16.mxu0 0
  %3983 = vmatpush1.bf16.msra.mxu0 0
  %3984 = vmatprep.mubr.bf16.mxu0 0
  %3985 = vmatmul.mubr.bf16.gmra.mrb[0].mxu0 %v3950
  %v3986 = vpop.f32.mrb[0].mxu0
  %v3987 = vadd.f32 0.0, %v3986
  %v3988 = vpop.f32.mrb[0].mxu0
  %v3989 = vpop.f32.mrb[0].mxu0
  %v3990 = vpop.f32.mrb[0].mxu0
  %3991 = vdwg.mxu0
  %v3992 = vld [vmem:[%s4] sm:$0xf]
  %v3993 = vld [vmem:[%s4 + $0x4] sm:$0xf]
  %v3994 = vld [vmem:[%s4 + $0x8] sm:$0xf]
  %v3995 = vld [vmem:[%s4 + $0xc] sm:$0xf]
  %v3996 = vld [vmem:[%s4 + $0x10] sm:$0xf]
  %v3997 = vld [vmem:[%s4 + $0x14] sm:$0xf]
  %v3998 = vld [vmem:[%s4 + $0x18] sm:$0xf]
  %v3999 = vld [vmem:[%s4 + $0x1c] sm:$0xf]
  %v4000 = vld [vmem:[%s4 + $0x20] sm:$0xf]
  %v4001 = vld [vmem:[%s4 + $0x24] sm:$0xf]
  %v4002 = vld [vmem:[%s4 + $0x28] sm:$0xf]
  %v4003 = vld [vmem:[%s4 + $0x2c] sm:$0xf]
  %v4004 = vld [vmem:[%s4 + $0x30] sm:$0xf]
  %v4005 = vld [vmem:[%s4 + $0x34] sm:$0xf]
  %v4006 = vld [vmem:[%s4 + $0x38] sm:$0xf]
  %v4007 = vld [vmem:[%s4 + $0x3c] sm:$0xf]
  %v4008 = vld [vmem:[%s4 + $0x40] sm:$0xf]
  %v4009 = vld [vmem:[%s4 + $0x44] sm:$0xf]
  %v4010 = vld [vmem:[%s4 + $0x48] sm:$0xf]
  %v4011 = vld [vmem:[%s4 + $0x4c] sm:$0xf]
  %v4012 = vld [vmem:[%s4 + $0x50] sm:$0xf]
  %v4013 = vld [vmem:[%s4 + $0x54] sm:$0xf]
  %v4014 = vld [vmem:[%s4 + $0x58] sm:$0xf]
  %v4015 = vld [vmem:[%s4 + $0x5c] sm:$0xf]
  %v4016 = vld [vmem:[%s4 + $0x60] sm:$0xf]
  %v4017 = vld [vmem:[%s4 + $0x64] sm:$0xf]
  %v4018 = vld [vmem:[%s4 + $0x68] sm:$0xf]
  %v4019 = vld [vmem:[%s4 + $0x6c] sm:$0xf]
  %v4020 = vld [vmem:[%s4 + $0x70] sm:$0xf]
  %v4021 = vld [vmem:[%s4 + $0x74] sm:$0xf]
  %v4022 = vld [vmem:[%s4 + $0x78] sm:$0xf]
  %v4023 = vld [vmem:[%s4 + $0x7c] sm:$0xf]
  %v4024 = vld [vmem:[%s4 + $0x80] sm:$0xf]
  %v4025 = vld [vmem:[%s4 + $0x84] sm:$0xf]
  %v4026 = vld [vmem:[%s4 + $0x88] sm:$0xf]
  %v4027 = vld [vmem:[%s4 + $0x8c] sm:$0xf]
  %v4028 = vld [vmem:[%s4 + $0x90] sm:$0xf]
  %v4029 = vld [vmem:[%s4 + $0x94] sm:$0xf]
  %v4030 = vld [vmem:[%s4 + $0x98] sm:$0xf]
  %v4031 = vld [vmem:[%s4 + $0x9c] sm:$0xf]
  %v4032 = vld [vmem:[%s4 + $0xa0] sm:$0xf]
  %v4033 = vld [vmem:[%s4 + $0xa4] sm:$0xf]
  %v4034 = vld [vmem:[%s4 + $0xa8] sm:$0xf]
  %v4035 = vld [vmem:[%s4 + $0xac] sm:$0xf]
  %v4036 = vld [vmem:[%s4 + $0xb0] sm:$0xf]
  %v4037 = vld [vmem:[%s4 + $0xb4] sm:$0xf]
  %v4038 = vld [vmem:[%s4 + $0xb8] sm:$0xf]
  %v4039 = vld [vmem:[%s4 + $0xbc] sm:$0xf]
  %v4040 = vld [vmem:[%s4 + $0xc0] sm:$0xf]
  %v4041 = vld [vmem:[%s4 + $0xc4] sm:$0xf]
  %v4042 = vld [vmem:[%s4 + $0xc8] sm:$0xf]
  %v4043 = vld [vmem:[%s4 + $0xcc] sm:$0xf]
  %v4044 = vld [vmem:[%s4 + $0xd0] sm:$0xf]
  %v4045 = vld [vmem:[%s4 + $0xd4] sm:$0xf]
  %v4046 = vld [vmem:[%s4 + $0xd8] sm:$0xf]
  %v4047 = vld [vmem:[%s4 + $0xdc] sm:$0xf]
  %v4048 = vld [vmem:[%s4 + $0xe0] sm:$0xf]
  %v4049 = vld [vmem:[%s4 + $0xe4] sm:$0xf]
  %v4050 = vld [vmem:[%s4 + $0xe8] sm:$0xf]
  %v4051 = vld [vmem:[%s4 + $0xec] sm:$0xf]
  %v4052 = vld [vmem:[%s4 + $0xf0] sm:$0xf]
  %v4053 = vld [vmem:[%s4 + $0xf4] sm:$0xf]
  %v4054 = vld [vmem:[%s4 + $0xf8] sm:$0xf]
  %v4055 = vld [vmem:[%s4 + $0xfc] sm:$0xf]
  %v4056 = vld [vmem:[%s4 + $0x100] sm:$0xf]
  %v4057 = vld [vmem:[%s4 + $0x104] sm:$0xf]
  %v4058 = vld [vmem:[%s4 + $0x108] sm:$0xf]
  %v4059 = vld [vmem:[%s4 + $0x10c] sm:$0xf]
  %v4060 = vld [vmem:[%s4 + $0x110] sm:$0xf]
  %v4061 = vld [vmem:[%s4 + $0x114] sm:$0xf]
  %v4062 = vld [vmem:[%s4 + $0x118] sm:$0xf]
  %v4063 = vld [vmem:[%s4 + $0x11c] sm:$0xf]
  %v4064 = vld [vmem:[%s4 + $0x120] sm:$0xf]
  %v4065 = vld [vmem:[%s4 + $0x124] sm:$0xf]
  %v4066 = vld [vmem:[%s4 + $0x128] sm:$0xf]
  %v4067 = vld [vmem:[%s4 + $0x12c] sm:$0xf]
  %v4068 = vld [vmem:[%s4 + $0x130] sm:$0xf]
  %v4069 = vld [vmem:[%s4 + $0x134] sm:$0xf]
  %v4070 = vld [vmem:[%s4 + $0x138] sm:$0xf]
  %v4071 = vld [vmem:[%s4 + $0x13c] sm:$0xf]
  %v4072 = vld [vmem:[%s4 + $0x140] sm:$0xf]
  %v4073 = vld [vmem:[%s4 + $0x144] sm:$0xf]
  %v4074 = vld [vmem:[%s4 + $0x148] sm:$0xf]
  %v4075 = vld [vmem:[%s4 + $0x14c] sm:$0xf]
  %v4076 = vld [vmem:[%s4 + $0x150] sm:$0xf]
  %v4077 = vld [vmem:[%s4 + $0x154] sm:$0xf]
  %v4078 = vld [vmem:[%s4 + $0x158] sm:$0xf]
  %v4079 = vld [vmem:[%s4 + $0x15c] sm:$0xf]
  %v4080 = vld [vmem:[%s4 + $0x160] sm:$0xf]
  %v4081 = vld [vmem:[%s4 + $0x164] sm:$0xf]
  %v4082 = vld [vmem:[%s4 + $0x168] sm:$0xf]
  %v4083 = vld [vmem:[%s4 + $0x16c] sm:$0xf]
  %v4084 = vld [vmem:[%s4 + $0x170] sm:$0xf]
  %v4085 = vld [vmem:[%s4 + $0x174] sm:$0xf]
  %v4086 = vld [vmem:[%s4 + $0x178] sm:$0xf]
  %v4087 = vld [vmem:[%s4 + $0x17c] sm:$0xf]
  %v4088 = vld [vmem:[%s4 + $0x180] sm:$0xf]
  %v4089 = vld [vmem:[%s4 + $0x184] sm:$0xf]
  %v4090 = vld [vmem:[%s4 + $0x188] sm:$0xf]
  %v4091 = vld [vmem:[%s4 + $0x18c] sm:$0xf]
  %v4092 = vld [vmem:[%s4 + $0x190] sm:$0xf]
  %v4093 = vld [vmem:[%s4 + $0x194] sm:$0xf]
  %v4094 = vld [vmem:[%s4 + $0x198] sm:$0xf]
  %v4095 = vld [vmem:[%s4 + $0x19c] sm:$0xf]
  %v4096 = vld [vmem:[%s4 + $0x1a0] sm:$0xf]
  %v4097 = vld [vmem:[%s4 + $0x1a4] sm:$0xf]
  %v4098 = vld [vmem:[%s4 + $0x1a8] sm:$0xf]
  %v4099 = vld [vmem:[%s4 + $0x1ac] sm:$0xf]
  %v4100 = vld [vmem:[%s4 + $0x1b0] sm:$0xf]
  %v4101 = vld [vmem:[%s4 + $0x1b4] sm:$0xf]
  %v4102 = vld [vmem:[%s4 + $0x1b8] sm:$0xf]
  %v4103 = vld [vmem:[%s4 + $0x1bc] sm:$0xf]
  %v4104 = vld [vmem:[%s4 + $0x1c0] sm:$0xf]
  %v4105 = vld [vmem:[%s4 + $0x1c4] sm:$0xf]
  %v4106 = vld [vmem:[%s4 + $0x1c8] sm:$0xf]
  %v4107 = vld [vmem:[%s4 + $0x1cc] sm:$0xf]
  %v4108 = vld [vmem:[%s4 + $0x1d0] sm:$0xf]
  %v4109 = vld [vmem:[%s4 + $0x1d4] sm:$0xf]
  %v4110 = vld [vmem:[%s4 + $0x1d8] sm:$0xf]
  %v4111 = vld [vmem:[%s4 + $0x1dc] sm:$0xf]
  %v4112 = vld [vmem:[%s4 + $0x1e0] sm:$0xf]
  %v4113 = vld [vmem:[%s4 + $0x1e4] sm:$0xf]
  %v4114 = vld [vmem:[%s4 + $0x1e8] sm:$0xf]
  %v4115 = vld [vmem:[%s4 + $0x1ec] sm:$0xf]
  %v4116 = vld [vmem:[%s4 + $0x1f0] sm:$0xf]
  %v4117 = vld [vmem:[%s4 + $0x1f4] sm:$0xf]
  %v4118 = vld [vmem:[%s4 + $0x1f8] sm:$0xf]
  %v4119 = vld [vmem:[%s4 + $0x1fc] sm:$0xf]
  %v4124 = vunpack.c.l.b16 %v3992
  %v4125 = vunpack.c.l.b16 %v3993
  %v4126 = vunpack.c.l.b16 %v3994
  %v4127 = vunpack.c.l.b16 %v3995
  %v4128 = vpack.c.b16 %v4125, %v4124
  %v4129 = vpack.c.b16 %v4127, %v4126
  %v4133 = vsel %vm355, %v119, 0
  %4135 = vmatprep.subr.bf16.mxu0 0
  %4136 = vmatpush1.bf16.msra.mxu0 %v4128
  %4137 = vmatprep.subr.bf16.mxu0 0
  %4138 = vmatpush1.bf16.msra.mxu0 %v4129
  %4139 = vmatprep.subr.bf16.mxu0 0
  %4140 = vmatpush1.bf16.msra.mxu0 0
  %4141 = vmatprep.subr.bf16.mxu0 0
  %4142 = vmatpush1.bf16.msra.mxu0 0
  %4143 = vmatprep.subr.bf16.mxu0 0
  %4144 = vmatpush1.bf16.msra.mxu0 0
  %4145 = vmatprep.subr.bf16.mxu0 0
  %4146 = vmatpush1.bf16.msra.mxu0 0
  %4147 = vmatprep.subr.bf16.mxu0 0
  %4148 = vmatpush1.bf16.msra.mxu0 0
  %4149 = vmatprep.subr.bf16.mxu0 0
  %4150 = vmatpush1.bf16.msra.mxu0 0
  %4151 = vmatprep.subr.bf16.mxu0 0
  %4152 = vmatpush1.bf16.msra.mxu0 0
  %4153 = vmatprep.subr.bf16.mxu0 0
  %4154 = vmatpush1.bf16.msra.mxu0 0
  %4155 = vmatprep.subr.bf16.mxu0 0
  %4156 = vmatpush1.bf16.msra.mxu0 0
  %4157 = vmatprep.subr.bf16.mxu0 0
  %4158 = vmatpush1.bf16.msra.mxu0 0
  %4159 = vmatprep.subr.bf16.mxu0 0
  %4160 = vmatpush1.bf16.msra.mxu0 0
  %4161 = vmatprep.subr.bf16.mxu0 0
  %4162 = vmatpush1.bf16.msra.mxu0 0
  %4163 = vmatprep.subr.bf16.mxu0 0
  %4164 = vmatpush1.bf16.msra.mxu0 0
  %4165 = vmatprep.subr.bf16.mxu0 0
  %4166 = vmatpush1.bf16.msra.mxu0 0
  %4167 = vmatprep.mubr.bf16.mxu0 0
  %4168 = vmatmul.mubr.bf16.gmra.mrb[0].mxu0 %v4133
  %v4169 = vpop.f32.mrb[0].mxu0
  %v4170 = vadd.f32 0.0, %v4169
  %v4171 = vpop.f32.mrb[0].mxu0
  %v4172 = vpop.f32.mrb[0].mxu0
  %v4173 = vpop.f32.mrb[0].mxu0
  %4174 = vdwg.mxu0
  %v4179 = vunpack.c.l.b16 %v3996
  %v4180 = vunpack.c.l.b16 %v3997
  %v4181 = vunpack.c.l.b16 %v3998
  %v4182 = vunpack.c.l.b16 %v3999
  %v4183 = vpack.c.b16 %v4180, %v4179
  %v4184 = vpack.c.b16 %v4182, %v4181
  %v4188 = vsel %vm355, %v120, 0
  %4190 = vmatprep.subr.bf16.mxu0 0
  %4191 = vmatpush1.bf16.msra.mxu0 %v4183
  %4192 = vmatprep.subr.bf16.mxu0 0
  %4193 = vmatpush1.bf16.msra.mxu0 %v4184
  %4194 = vmatprep.subr.bf16.mxu0 0
  %4195 = vmatpush1.bf16.msra.mxu0 0
  %4196 = vmatprep.subr.bf16.mxu0 0
  %4197 = vmatpush1.bf16.msra.mxu0 0
  %4198 = vmatprep.subr.bf16.mxu0 0
  %4199 = vmatpush1.bf16.msra.mxu0 0
  %4200 = vmatprep.subr.bf16.mxu0 0
  %4201 = vmatpush1.bf16.msra.mxu0 0
  %4202 = vmatprep.subr.bf16.mxu0 0
  %4203 = vmatpush1.bf16.msra.mxu0 0
  %4204 = vmatprep.subr.bf16.mxu0 0
  %4205 = vmatpush1.bf16.msra.mxu0 0
  %4206 = vmatprep.subr.bf16.mxu0 0
  %4207 = vmatpush1.bf16.msra.mxu0 0
  %4208 = vmatprep.subr.bf16.mxu0 0
  %4209 = vmatpush1.bf16.msra.mxu0 0
  %4210 = vmatprep.subr.bf16.mxu0 0
  %4211 = vmatpush1.bf16.msra.mxu0 0
  %4212 = vmatprep.subr.bf16.mxu0 0
  %4213 = vmatpush1.bf16.msra.mxu0 0
  %4214 = vmatprep.subr.bf16.mxu0 0
  %4215 = vmatpush1.bf16.msra.mxu0 0
  %4216 = vmatprep.subr.bf16.mxu0 0
  %4217 = vmatpush1.bf16.msra.mxu0 0
  %4218 = vmatprep.subr.bf16.mxu0 0
  %4219 = vmatpush1.bf16.msra.mxu0 0
  %4220 = vmatprep.subr.bf16.mxu0 0
  %4221 = vmatpush1.bf16.msra.mxu0 0
  %4222 = vmatprep.mubr.bf16.mxu0 0
  %4223 = vmatmul.mubr.bf16.gmra.mrb[0].mxu0 %v4188
  %v4224 = vpop.f32.mrb[0].mxu0
  %v4225 = vadd.f32 0.0, %v4224
  %v4226 = vpop.f32.mrb[0].mxu0
  %v4227 = vpop.f32.mrb[0].mxu0
  %v4228 = vpop.f32.mrb[0].mxu0
  %4229 = vdwg.mxu0
  %v4234 = vunpack.c.l.b16 %v4000
  %v4235 = vunpack.c.l.b16 %v4001
  %v4236 = vunpack.c.l.b16 %v4002
  %v4237 = vunpack.c.l.b16 %v4003
  %v4238 = vpack.c.b16 %v4235, %v4234
  %v4239 = vpack.c.b16 %v4237, %v4236
  %v4243 = vsel %vm355, %v121, 0
  %4245 = vmatprep.subr.bf16.mxu0 0
  %4246 = vmatpush1.bf16.msra.mxu0 %v4238
  %4247 = vmatprep.subr.bf16.mxu0 0
  %4248 = vmatpush1.bf16.msra.mxu0 %v4239
  %4249 = vmatprep.subr.bf16.mxu0 0
  %4250 = vmatpush1.bf16.msra.mxu0 0
  %4251 = vmatprep.subr.bf16.mxu0 0
  %4252 = vmatpush1.bf16.msra.mxu0 0
  %4253 = vmatprep.subr.bf16.mxu0 0
  %4254 = vmatpush1.bf16.msra.mxu0 0
  %4255 = vmatprep.subr.bf16.mxu0 0
  %4256 = vmatpush1.bf16.msra.mxu0 0
  %4257 = vmatprep.subr.bf16.mxu0 0
  %4258 = vmatpush1.bf16.msra.mxu0 0
  %4259 = vmatprep.subr.bf16.mxu0 0
  %4260 = vmatpush1.bf16.msra.mxu0 0
  %4261 = vmatprep.subr.bf16.mxu0 0
  %4262 = vmatpush1.bf16.msra.mxu0 0
  %4263 = vmatprep.subr.bf16.mxu0 0
  %4264 = vmatpush1.bf16.msra.mxu0 0
  %4265 = vmatprep.subr.bf16.mxu0 0
  %4266 = vmatpush1.bf16.msra.mxu0 0
  %4267 = vmatprep.subr.bf16.mxu0 0
  %4268 = vmatpush1.bf16.msra.mxu0 0
  %4269 = vmatprep.subr.bf16.mxu0 0
  %4270 = vmatpush1.bf16.msra.mxu0 0
  %4271 = vmatprep.subr.bf16.mxu0 0
  %4272 = vmatpush1.bf16.msra.mxu0 0
  %4273 = vmatprep.subr.bf16.mxu0 0
  %4274 = vmatpush1.bf16.msra.mxu0 0
  %4275 = vmatprep.subr.bf16.mxu0 0
  %4276 = vmatpush1.bf16.msra.mxu0 0
  %4277 = vmatprep.mubr.bf16.mxu0 0
  %4278 = vmatmul.mubr.bf16.gmra.mrb[0].mxu0 %v4243
  %v4279 = vpop.f32.mrb[0].mxu0
  %v4280 = vadd.f32 0.0, %v4279
  %v4281 = vpop.f32.mrb[0].mxu0
  %v4282 = vpop.f32.mrb[0].mxu0
  %v4283 = vpop.f32.mrb[0].mxu0
  %4284 = vdwg.mxu0
  %v4289 = vunpack.c.l.b16 %v4004
  %v4290 = vunpack.c.l.b16 %v4005
  %v4291 = vunpack.c.l.b16 %v4006
  %v4292 = vunpack.c.l.b16 %v4007
  %v4293 = vpack.c.b16 %v4290, %v4289
  %v4294 = vpack.c.b16 %v4292, %v4291
  %v4298 = vsel %vm355, %v122, 0
  %4300 = vmatprep.subr.bf16.mxu0 0
  %4301 = vmatpush1.bf16.msra.mxu0 %v4293
  %4302 = vmatprep.subr.bf16.mxu0 0
  %4303 = vmatpush1.bf16.msra.mxu0 %v4294
  %4304 = vmatprep.subr.bf16.mxu0 0
  %4305 = vmatpush1.bf16.msra.mxu0 0
  %4306 = vmatprep.subr.bf16.mxu0 0
  %4307 = vmatpush1.bf16.msra.mxu0 0
  %4308 = vmatprep.subr.bf16.mxu0 0
  %4309 = vmatpush1.bf16.msra.mxu0 0
  %4310 = vmatprep.subr.bf16.mxu0 0
  %4311 = vmatpush1.bf16.msra.mxu0 0
  %4312 = vmatprep.subr.bf16.mxu0 0
  %4313 = vmatpush1.bf16.msra.mxu0 0
  %4314 = vmatprep.subr.bf16.mxu0 0
  %4315 = vmatpush1.bf16.msra.mxu0 0
  %4316 = vmatprep.subr.bf16.mxu0 0
  %4317 = vmatpush1.bf16.msra.mxu0 0
  %4318 = vmatprep.subr.bf16.mxu0 0
  %4319 = vmatpush1.bf16.msra.mxu0 0
  %4320 = vmatprep.subr.bf16.mxu0 0
  %4321 = vmatpush1.bf16.msra.mxu0 0
  %4322 = vmatprep.subr.bf16.mxu0 0
  %4323 = vmatpush1.bf16.msra.mxu0 0
  %4324 = vmatprep.subr.bf16.mxu0 0
  %4325 = vmatpush1.bf16.msra.mxu0 0
  %4326 = vmatprep.subr.bf16.mxu0 0
  %4327 = vmatpush1.bf16.msra.mxu0 0
  %4328 = vmatprep.subr.bf16.mxu0 0
  %4329 = vmatpush1.bf16.msra.mxu0 0
  %4330 = vmatprep.subr.bf16.mxu0 0
  %4331 = vmatpush1.bf16.msra.mxu0 0
  %4332 = vmatprep.mubr.bf16.mxu0 0
  %4333 = vmatmul.mubr.bf16.gmra.mrb[0].mxu0 %v4298
  %v4334 = vpop.f32.mrb[0].mxu0
  %v4335 = vadd.f32 0.0, %v4334
  %v4336 = vpop.f32.mrb[0].mxu0
  %v4337 = vpop.f32.mrb[0].mxu0
  %v4338 = vpop.f32.mrb[0].mxu0
  %4339 = vdwg.mxu0
  %v4344 = vunpack.c.l.b16 %v4008
  %v4345 = vunpack.c.l.b16 %v4009
  %v4346 = vunpack.c.l.b16 %v4010
  %v4347 = vunpack.c.l.b16 %v4011
  %v4348 = vpack.c.b16 %v4345, %v4344
  %v4349 = vpack.c.b16 %v4347, %v4346
  %v4353 = vsel %vm355, %v123, 0
  %4355 = vmatprep.subr.bf16.mxu0 0
  %4356 = vmatpush1.bf16.msra.mxu0 %v4348
  %4357 = vmatprep.subr.bf16.mxu0 0
  %4358 = vmatpush1.bf16.msra.mxu0 %v4349
  %4359 = vmatprep.subr.bf16.mxu0 0
  %4360 = vmatpush1.bf16.msra.mxu0 0
  %4361 = vmatprep.subr.bf16.mxu0 0
  %4362 = vmatpush1.bf16.msra.mxu0 0
  %4363 = vmatprep.subr.bf16.mxu0 0
  %4364 = vmatpush1.bf16.msra.mxu0 0
  %4365 = vmatprep.subr.bf16.mxu0 0
  %4366 = vmatpush1.bf16.msra.mxu0 0
  %4367 = vmatprep.subr.bf16.mxu0 0
  %4368 = vmatpush1.bf16.msra.mxu0 0
  %4369 = vmatprep.subr.bf16.mxu0 0
  %4370 = vmatpush1.bf16.msra.mxu0 0
  %4371 = vmatprep.subr.bf16.mxu0 0
  %4372 = vmatpush1.bf16.msra.mxu0 0
  %4373 = vmatprep.subr.bf16.mxu0 0
  %4374 = vmatpush1.bf16.msra.mxu0 0
  %4375 = vmatprep.subr.bf16.mxu0 0
  %4376 = vmatpush1.bf16.msra.mxu0 0
  %4377 = vmatprep.subr.bf16.mxu0 0
  %4378 = vmatpush1.bf16.msra.mxu0 0
  %4379 = vmatprep.subr.bf16.mxu0 0
  %4380 = vmatpush1.bf16.msra.mxu0 0
  %4381 = vmatprep.subr.bf16.mxu0 0
  %4382 = vmatpush1.bf16.msra.mxu0 0
  %4383 = vmatprep.subr.bf16.mxu0 0
  %4384 = vmatpush1.bf16.msra.mxu0 0
  %4385 = vmatprep.subr.bf16.mxu0 0
  %4386 = vmatpush1.bf16.msra.mxu0 0
  %4387 = vmatprep.mubr.bf16.mxu0 0
  %4388 = vmatmul.mubr.bf16.gmra.mrb[0].mxu0 %v4353
  %v4389 = vpop.f32.mrb[0].mxu0
  %v4390 = vadd.f32 0.0, %v4389
  %v4391 = vpop.f32.mrb[0].mxu0
  %v4392 = vpop.f32.mrb[0].mxu0
  %v4393 = vpop.f32.mrb[0].mxu0
  %4394 = vdwg.mxu0
  %v4399 = vunpack.c.l.b16 %v4012
  %v4400 = vunpack.c.l.b16 %v4013
  %v4401 = vunpack.c.l.b16 %v4014
  %v4402 = vunpack.c.l.b16 %v4015
  %v4403 = vpack.c.b16 %v4400, %v4399
  %v4404 = vpack.c.b16 %v4402, %v4401
  %v4408 = vsel %vm355, %v124, 0
  %4410 = vmatprep.subr.bf16.mxu0 0
  %4411 = vmatpush1.bf16.msra.mxu0 %v4403
  %4412 = vmatprep.subr.bf16.mxu0 0
  %4413 = vmatpush1.bf16.msra.mxu0 %v4404
  %4414 = vmatprep.subr.bf16.mxu0 0
  %4415 = vmatpush1.bf16.msra.mxu0 0
  %4416 = vmatprep.subr.bf16.mxu0 0
  %4417 = vmatpush1.bf16.msra.mxu0 0
  %4418 = vmatprep.subr.bf16.mxu0 0
  %4419 = vmatpush1.bf16.msra.mxu0 0
  %4420 = vmatprep.subr.bf16.mxu0 0
  %4421 = vmatpush1.bf16.msra.mxu0 0
  %4422 = vmatprep.subr.bf16.mxu0 0
  %4423 = vmatpush1.bf16.msra.mxu0 0
  %4424 = vmatprep.subr.bf16.mxu0 0
  %4425 = vmatpush1.bf16.msra.mxu0 0
  %4426 = vmatprep.subr.bf16.mxu0 0
  %4427 = vmatpush1.bf16.msra.mxu0 0
  %4428 = vmatprep.subr.bf16.mxu0 0
  %4429 = vmatpush1.bf16.msra.mxu0 0
  %4430 = vmatprep.subr.bf16.mxu0 0
  %4431 = vmatpush1.bf16.msra.mxu0 0
  %4432 = vmatprep.subr.bf16.mxu0 0
  %4433 = vmatpush1.bf16.msra.mxu0 0
  %4434 = vmatprep.subr.bf16.mxu0 0
  %4435 = vmatpush1.bf16.msra.mxu0 0
  %4436 = vmatprep.subr.bf16.mxu0 0
  %4437 = vmatpush1.bf16.msra.mxu0 0
  %4438 = vmatprep.subr.bf16.mxu0 0
  %4439 = vmatpush1.bf16.msra.mxu0 0
  %4440 = vmatprep.subr.bf16.mxu0 0
  %4441 = vmatpush1.bf16.msra.mxu0 0
  %4442 = vmatprep.mubr.bf16.mxu0 0
  %4443 = vmatmul.mubr.bf16.gmra.mrb[0].mxu0 %v4408
  %v4444 = vpop.f32.mrb[0].mxu0
  %v4445 = vadd.f32 0.0, %v4444
  %v4446 = vpop.f32.mrb[0].mxu0
  %v4447 = vpop.f32.mrb[0].mxu0
  %v4448 = vpop.f32.mrb[0].mxu0
  %4449 = vdwg.mxu0
  %v4454 = vunpack.c.l.b16 %v4016
  %v4455 = vunpack.c.l.b16 %v4017
  %v4456 = vunpack.c.l.b16 %v4018
  %v4457 = vunpack.c.l.b16 %v4019
  %v4458 = vpack.c.b16 %v4455, %v4454
  %v4459 = vpack.c.b16 %v4457, %v4456
  %v4463 = vsel %vm355, %v125, 0
  %4465 = vmatprep.subr.bf16.mxu0 0
  %4466 = vmatpush1.bf16.msra.mxu0 %v4458
  %4467 = vmatprep.subr.bf16.mxu0 0
  %4468 = vmatpush1.bf16.msra.mxu0 %v4459
  %4469 = vmatprep.subr.bf16.mxu0 0
  %4470 = vmatpush1.bf16.msra.mxu0 0
  %4471 = vmatprep.subr.bf16.mxu0 0
  %4472 = vmatpush1.bf16.msra.mxu0 0
  %4473 = vmatprep.subr.bf16.mxu0 0
  %4474 = vmatpush1.bf16.msra.mxu0 0
  %4475 = vmatprep.subr.bf16.mxu0 0
  %4476 = vmatpush1.bf16.msra.mxu0 0
  %4477 = vmatprep.subr.bf16.mxu0 0
  %4478 = vmatpush1.bf16.msra.mxu0 0
  %4479 = vmatprep.subr.bf16.mxu0 0
  %4480 = vmatpush1.bf16.msra.mxu0 0
  %4481 = vmatprep.subr.bf16.mxu0 0
  %4482 = vmatpush1.bf16.msra.mxu0 0
  %4483 = vmatprep.subr.bf16.mxu0 0
  %4484 = vmatpush1.bf16.msra.mxu0 0
  %4485 = vmatprep.subr.bf16.mxu0 0
  %4486 = vmatpush1.bf16.msra.mxu0 0
  %4487 = vmatprep.subr.bf16.mxu0 0
  %4488 = vmatpush1.bf16.msra.mxu0 0
  %4489 = vmatprep.subr.bf16.mxu0 0
  %4490 = vmatpush1.bf16.msra.mxu0 0
  %4491 = vmatprep.subr.bf16.mxu0 0
  %4492 = vmatpush1.bf16.msra.mxu0 0
  %4493 = vmatprep.subr.bf16.mxu0 0
  %4494 = vmatpush1.bf16.msra.mxu0 0
  %4495 = vmatprep.subr.bf16.mxu0 0
  %4496 = vmatpush1.bf16.msra.mxu0 0
  %4497 = vmatprep.mubr.bf16.mxu0 0
  %4498 = vmatmul.mubr.bf16.gmra.mrb[0].mxu0 %v4463
  %v4499 = vpop.f32.mrb[0].mxu0
  %v4500 = vadd.f32 0.0, %v4499
  %v4501 = vpop.f32.mrb[0].mxu0
  %v4502 = vpop.f32.mrb[0].mxu0
  %v4503 = vpop.f32.mrb[0].mxu0
  %4504 = vdwg.mxu0
  %v4509 = vunpack.c.l.b16 %v4020
  %v4510 = vunpack.c.l.b16 %v4021
  %v4511 = vunpack.c.l.b16 %v4022
  %v4512 = vunpack.c.l.b16 %v4023
  %v4513 = vpack.c.b16 %v4510, %v4509
  %v4514 = vpack.c.b16 %v4512, %v4511
  %v4518 = vsel %vm355, %v126, 0
  %4520 = vmatprep.subr.bf16.mxu0 0
  %4521 = vmatpush1.bf16.msra.mxu0 %v4513
  %4522 = vmatprep.subr.bf16.mxu0 0
  %4523 = vmatpush1.bf16.msra.mxu0 %v4514
  %4524 = vmatprep.subr.bf16.mxu0 0
  %4525 = vmatpush1.bf16.msra.mxu0 0
  %4526 = vmatprep.subr.bf16.mxu0 0
  %4527 = vmatpush1.bf16.msra.mxu0 0
  %4528 = vmatprep.subr.bf16.mxu0 0
  %4529 = vmatpush1.bf16.msra.mxu0 0
  %4530 = vmatprep.subr.bf16.mxu0 0
  %4531 = vmatpush1.bf16.msra.mxu0 0
  %4532 = vmatprep.subr.bf16.mxu0 0
  %4533 = vmatpush1.bf16.msra.mxu0 0
  %4534 = vmatprep.subr.bf16.mxu0 0
  %4535 = vmatpush1.bf16.msra.mxu0 0
  %4536 = vmatprep.subr.bf16.mxu0 0
  %4537 = vmatpush1.bf16.msra.mxu0 0
  %4538 = vmatprep.subr.bf16.mxu0 0
  %4539 = vmatpush1.bf16.msra.mxu0 0
  %4540 = vmatprep.subr.bf16.mxu0 0
  %4541 = vmatpush1.bf16.msra.mxu0 0
  %4542 = vmatprep.subr.bf16.mxu0 0
  %4543 = vmatpush1.bf16.msra.mxu0 0
  %4544 = vmatprep.subr.bf16.mxu0 0
  %4545 = vmatpush1.bf16.msra.mxu0 0
  %4546 = vmatprep.subr.bf16.mxu0 0
  %4547 = vmatpush1.bf16.msra.mxu0 0
  %4548 = vmatprep.subr.bf16.mxu0 0
  %4549 = vmatpush1.bf16.msra.mxu0 0
  %4550 = vmatprep.subr.bf16.mxu0 0
  %4551 = vmatpush1.bf16.msra.mxu0 0
  %4552 = vmatprep.mubr.bf16.mxu0 0
  %4553 = vmatmul.mubr.bf16.gmra.mrb[0].mxu0 %v4518
  %v4554 = vpop.f32.mrb[0].mxu0
  %v4555 = vadd.f32 0.0, %v4554
  %v4556 = vpop.f32.mrb[0].mxu0
  %v4557 = vpop.f32.mrb[0].mxu0
  %v4558 = vpop.f32.mrb[0].mxu0
  %4559 = vdwg.mxu0
  %v4564 = vunpack.c.l.b16 %v4024
  %v4565 = vunpack.c.l.b16 %v4025
  %v4566 = vunpack.c.l.b16 %v4026
  %v4567 = vunpack.c.l.b16 %v4027
  %v4568 = vpack.c.b16 %v4565, %v4564
  %v4569 = vpack.c.b16 %v4567, %v4566
  %v4573 = vsel %vm355, %v127, 0
  %4575 = vmatprep.subr.bf16.mxu0 0
  %4576 = vmatpush1.bf16.msra.mxu0 %v4568
  %4577 = vmatprep.subr.bf16.mxu0 0
  %4578 = vmatpush1.bf16.msra.mxu0 %v4569
  %4579 = vmatprep.subr.bf16.mxu0 0
  %4580 = vmatpush1.bf16.msra.mxu0 0
  %4581 = vmatprep.subr.bf16.mxu0 0
  %4582 = vmatpush1.bf16.msra.mxu0 0
  %4583 = vmatprep.subr.bf16.mxu0 0
  %4584 = vmatpush1.bf16.msra.mxu0 0
  %4585 = vmatprep.subr.bf16.mxu0 0
  %4586 = vmatpush1.bf16.msra.mxu0 0
  %4587 = vmatprep.subr.bf16.mxu0 0
  %4588 = vmatpush1.bf16.msra.mxu0 0
  %4589 = vmatprep.subr.bf16.mxu0 0
  %4590 = vmatpush1.bf16.msra.mxu0 0
  %4591 = vmatprep.subr.bf16.mxu0 0
  %4592 = vmatpush1.bf16.msra.mxu0 0
  %4593 = vmatprep.subr.bf16.mxu0 0
  %4594 = vmatpush1.bf16.msra.mxu0 0
  %4595 = vmatprep.subr.bf16.mxu0 0
  %4596 = vmatpush1.bf16.msra.mxu0 0
  %4597 = vmatprep.subr.bf16.mxu0 0
  %4598 = vmatpush1.bf16.msra.mxu0 0
  %4599 = vmatprep.subr.bf16.mxu0 0
  %4600 = vmatpush1.bf16.msra.mxu0 0
  %4601 = vmatprep.subr.bf16.mxu0 0
  %4602 = vmatpush1.bf16.msra.mxu0 0
  %4603 = vmatprep.subr.bf16.mxu0 0
  %4604 = vmatpush1.bf16.msra.mxu0 0
  %4605 = vmatprep.subr.bf16.mxu0 0
  %4606 = vmatpush1.bf16.msra.mxu0 0
  %4607 = vmatprep.mubr.bf16.mxu0 0
  %4608 = vmatmul.mubr.bf16.gmra.mrb[0].mxu0 %v4573
  %v4609 = vpop.f32.mrb[0].mxu0
  %v4610 = vadd.f32 0.0, %v4609
  %v4611 = vpop.f32.mrb[0].mxu0
  %v4612 = vpop.f32.mrb[0].mxu0
  %v4613 = vpop.f32.mrb[0].mxu0
  %4614 = vdwg.mxu0
  %v4619 = vunpack.c.l.b16 %v4028
  %v4620 = vunpack.c.l.b16 %v4029
  %v4621 = vunpack.c.l.b16 %v4030
  %v4622 = vunpack.c.l.b16 %v4031
  %v4623 = vpack.c.b16 %v4620, %v4619
  %v4624 = vpack.c.b16 %v4622, %v4621
  %v4628 = vsel %vm355, %v128, 0
  %4630 = vmatprep.subr.bf16.mxu0 0
  %4631 = vmatpush1.bf16.msra.mxu0 %v4623
  %4632 = vmatprep.subr.bf16.mxu0 0
  %4633 = vmatpush1.bf16.msra.mxu0 %v4624
  %4634 = vmatprep.subr.bf16.mxu0 0
  %4635 = vmatpush1.bf16.msra.mxu0 0
  %4636 = vmatprep.subr.bf16.mxu0 0
  %4637 = vmatpush1.bf16.msra.mxu0 0
  %4638 = vmatprep.subr.bf16.mxu0 0
  %4639 = vmatpush1.bf16.msra.mxu0 0
  %4640 = vmatprep.subr.bf16.mxu0 0
  %4641 = vmatpush1.bf16.msra.mxu0 0
  %4642 = vmatprep.subr.bf16.mxu0 0
  %4643 = vmatpush1.bf16.msra.mxu0 0
  %4644 = vmatprep.subr.bf16.mxu0 0
  %4645 = vmatpush1.bf16.msra.mxu0 0
  %4646 = vmatprep.subr.bf16.mxu0 0
  %4647 = vmatpush1.bf16.msra.mxu0 0
  %4648 = vmatprep.subr.bf16.mxu0 0
  %4649 = vmatpush1.bf16.msra.mxu0 0
  %4650 = vmatprep.subr.bf16.mxu0 0
  %4651 = vmatpush1.bf16.msra.mxu0 0
  %4652 = vmatprep.subr.bf16.mxu0 0
  %4653 = vmatpush1.bf16.msra.mxu0 0
  %4654 = vmatprep.subr.bf16.mxu0 0
  %4655 = vmatpush1.bf16.msra.mxu0 0
  %4656 = vmatprep.subr.bf16.mxu0 0
  %4657 = vmatpush1.bf16.msra.mxu0 0
  %4658 = vmatprep.subr.bf16.mxu0 0
  %4659 = vmatpush1.bf16.msra.mxu0 0
  %4660 = vmatprep.subr.bf16.mxu0 0
  %4661 = vmatpush1.bf16.msra.mxu0 0
  %4662 = vmatprep.mubr.bf16.mxu0 0
  %4663 = vmatmul.mubr.bf16.gmra.mrb[0].mxu0 %v4628
  %v4664 = vpop.f32.mrb[0].mxu0
  %v4665 = vadd.f32 0.0, %v4664
  %v4666 = vpop.f32.mrb[0].mxu0
  %v4667 = vpop.f32.mrb[0].mxu0
  %v4668 = vpop.f32.mrb[0].mxu0
  %4669 = vdwg.mxu0
  %v4674 = vunpack.c.l.b16 %v4032
  %v4675 = vunpack.c.l.b16 %v4033
  %v4676 = vunpack.c.l.b16 %v4034
  %v4677 = vunpack.c.l.b16 %v4035
  %v4678 = vpack.c.b16 %v4675, %v4674
  %v4679 = vpack.c.b16 %v4677, %v4676
  %v4683 = vsel %vm355, %v129, 0
  %4685 = vmatprep.subr.bf16.mxu0 0
  %4686 = vmatpush1.bf16.msra.mxu0 %v4678
  %4687 = vmatprep.subr.bf16.mxu0 0
  %4688 = vmatpush1.bf16.msra.mxu0 %v4679
  %4689 = vmatprep.subr.bf16.mxu0 0
  %4690 = vmatpush1.bf16.msra.mxu0 0
  %4691 = vmatprep.subr.bf16.mxu0 0
  %4692 = vmatpush1.bf16.msra.mxu0 0
  %4693 = vmatprep.subr.bf16.mxu0 0
  %4694 = vmatpush1.bf16.msra.mxu0 0
  %4695 = vmatprep.subr.bf16.mxu0 0
  %4696 = vmatpush1.bf16.msra.mxu0 0
  %4697 = vmatprep.subr.bf16.mxu0 0
  %4698 = vmatpush1.bf16.msra.mxu0 0
  %4699 = vmatprep.subr.bf16.mxu0 0
  %4700 = vmatpush1.bf16.msra.mxu0 0
  %4701 = vmatprep.subr.bf16.mxu0 0
  %4702 = vmatpush1.bf16.msra.mxu0 0
  %4703 = vmatprep.subr.bf16.mxu0 0
  %4704 = vmatpush1.bf16.msra.mxu0 0
  %4705 = vmatprep.subr.bf16.mxu0 0
  %4706 = vmatpush1.bf16.msra.mxu0 0
  %4707 = vmatprep.subr.bf16.mxu0 0
  %4708 = vmatpush1.bf16.msra.mxu0 0
  %4709 = vmatprep.subr.bf16.mxu0 0
  %4710 = vmatpush1.bf16.msra.mxu0 0
  %4711 = vmatprep.subr.bf16.mxu0 0
  %4712 = vmatpush1.bf16.msra.mxu0 0
  %4713 = vmatprep.subr.bf16.mxu0 0
  %4714 = vmatpush1.bf16.msra.mxu0 0
  %4715 = vmatprep.subr.bf16.mxu0 0
  %4716 = vmatpush1.bf16.msra.mxu0 0
  %4717 = vmatprep.mubr.bf16.mxu0 0
  %4718 = vmatmul.mubr.bf16.gmra.mrb[0].mxu0 %v4683
  %v4719 = vpop.f32.mrb[0].mxu0
  %v4720 = vadd.f32 0.0, %v4719
  %v4721 = vpop.f32.mrb[0].mxu0
  %v4722 = vpop.f32.mrb[0].mxu0
  %v4723 = vpop.f32.mrb[0].mxu0
  %4724 = vdwg.mxu0
  %v4729 = vunpack.c.l.b16 %v4036
  %v4730 = vunpack.c.l.b16 %v4037
  %v4731 = vunpack.c.l.b16 %v4038
  %v4732 = vunpack.c.l.b16 %v4039
  %v4733 = vpack.c.b16 %v4730, %v4729
  %v4734 = vpack.c.b16 %v4732, %v4731
  %v4738 = vsel %vm355, %v130, 0
  %4740 = vmatprep.subr.bf16.mxu0 0
  %4741 = vmatpush1.bf16.msra.mxu0 %v4733
  %4742 = vmatprep.subr.bf16.mxu0 0
  %4743 = vmatpush1.bf16.msra.mxu0 %v4734
  %4744 = vmatprep.subr.bf16.mxu0 0
  %4745 = vmatpush1.bf16.msra.mxu0 0
  %4746 = vmatprep.subr.bf16.mxu0 0
  %4747 = vmatpush1.bf16.msra.mxu0 0
  %4748 = vmatprep.subr.bf16.mxu0 0
  %4749 = vmatpush1.bf16.msra.mxu0 0
  %4750 = vmatprep.subr.bf16.mxu0 0
  %4751 = vmatpush1.bf16.msra.mxu0 0
  %4752 = vmatprep.subr.bf16.mxu0 0
  %4753 = vmatpush1.bf16.msra.mxu0 0
  %4754 = vmatprep.subr.bf16.mxu0 0
  %4755 = vmatpush1.bf16.msra.mxu0 0
  %4756 = vmatprep.subr.bf16.mxu0 0
  %4757 = vmatpush1.bf16.msra.mxu0 0
  %4758 = vmatprep.subr.bf16.mxu0 0
  %4759 = vmatpush1.bf16.msra.mxu0 0
  %4760 = vmatprep.subr.bf16.mxu0 0
  %4761 = vmatpush1.bf16.msra.mxu0 0
  %4762 = vmatprep.subr.bf16.mxu0 0
  %4763 = vmatpush1.bf16.msra.mxu0 0
  %4764 = vmatprep.subr.bf16.mxu0 0
  %4765 = vmatpush1.bf16.msra.mxu0 0
  %4766 = vmatprep.subr.bf16.mxu0 0
  %4767 = vmatpush1.bf16.msra.mxu0 0
  %4768 = vmatprep.subr.bf16.mxu0 0
  %4769 = vmatpush1.bf16.msra.mxu0 0
  %4770 = vmatprep.subr.bf16.mxu0 0
  %4771 = vmatpush1.bf16.msra.mxu0 0
  %4772 = vmatprep.mubr.bf16.mxu0 0
  %4773 = vmatmul.mubr.bf16.gmra.mrb[0].mxu0 %v4738
  %v4774 = vpop.f32.mrb[0].mxu0
  %v4775 = vadd.f32 0.0, %v4774
  %v4776 = vpop.f32.mrb[0].mxu0
  %v4777 = vpop.f32.mrb[0].mxu0
  %v4778 = vpop.f32.mrb[0].mxu0
  %4779 = vdwg.mxu0
  %v4784 = vunpack.c.l.b16 %v4040
  %v4785 = vunpack.c.l.b16 %v4041
  %v4786 = vunpack.c.l.b16 %v4042
  %v4787 = vunpack.c.l.b16 %v4043
  %v4788 = vpack.c.b16 %v4785, %v4784
  %v4789 = vpack.c.b16 %v4787, %v4786
  %v4793 = vsel %vm355, %v131, 0
  %4795 = vmatprep.subr.bf16.mxu0 0
  %4796 = vmatpush1.bf16.msra.mxu0 %v4788
  %4797 = vmatprep.subr.bf16.mxu0 0
  %4798 = vmatpush1.bf16.msra.mxu0 %v4789
  %4799 = vmatprep.subr.bf16.mxu0 0
  %4800 = vmatpush1.bf16.msra.mxu0 0
  %4801 = vmatprep.subr.bf16.mxu0 0
  %4802 = vmatpush1.bf16.msra.mxu0 0
  %4803 = vmatprep.subr.bf16.mxu0 0
  %4804 = vmatpush1.bf16.msra.mxu0 0
  %4805 = vmatprep.subr.bf16.mxu0 0
  %4806 = vmatpush1.bf16.msra.mxu0 0
  %4807 = vmatprep.subr.bf16.mxu0 0
  %4808 = vmatpush1.bf16.msra.mxu0 0
  %4809 = vmatprep.subr.bf16.mxu0 0
  %4810 = vmatpush1.bf16.msra.mxu0 0
  %4811 = vmatprep.subr.bf16.mxu0 0
  %4812 = vmatpush1.bf16.msra.mxu0 0
  %4813 = vmatprep.subr.bf16.mxu0 0
  %4814 = vmatpush1.bf16.msra.mxu0 0
  %4815 = vmatprep.subr.bf16.mxu0 0
  %4816 = vmatpush1.bf16.msra.mxu0 0
  %4817 = vmatprep.subr.bf16.mxu0 0
  %4818 = vmatpush1.bf16.msra.mxu0 0
  %4819 = vmatprep.subr.bf16.mxu0 0
  %4820 = vmatpush1.bf16.msra.mxu0 0
  %4821 = vmatprep.subr.bf16.mxu0 0
  %4822 = vmatpush1.bf16.msra.mxu0 0
  %4823 = vmatprep.subr.bf16.mxu0 0
  %4824 = vmatpush1.bf16.msra.mxu0 0
  %4825 = vmatprep.subr.bf16.mxu0 0
  %4826 = vmatpush1.bf16.msra.mxu0 0
  %4827 = vmatprep.mubr.bf16.mxu0 0
  %4828 = vmatmul.mubr.bf16.gmra.mrb[0].mxu0 %v4793
  %v4829 = vpop.f32.mrb[0].mxu0
  %v4830 = vadd.f32 0.0, %v4829
  %v4831 = vpop.f32.mrb[0].mxu0
  %v4832 = vpop.f32.mrb[0].mxu0
  %v4833 = vpop.f32.mrb[0].mxu0
  %4834 = vdwg.mxu0
  %v4839 = vunpack.c.l.b16 %v4044
  %v4840 = vunpack.c.l.b16 %v4045
  %v4841 = vunpack.c.l.b16 %v4046
  %v4842 = vunpack.c.l.b16 %v4047
  %v4843 = vpack.c.b16 %v4840, %v4839
  %v4844 = vpack.c.b16 %v4842, %v4841
  %v4848 = vsel %vm355, %v132, 0
  %4850 = vmatprep.subr.bf16.mxu0 0
  %4851 = vmatpush1.bf16.msra.mxu0 %v4843
  %4852 = vmatprep.subr.bf16.mxu0 0
  %4853 = vmatpush1.bf16.msra.mxu0 %v4844
  %4854 = vmatprep.subr.bf16.mxu0 0
  %4855 = vmatpush1.bf16.msra.mxu0 0
  %4856 = vmatprep.subr.bf16.mxu0 0
  %4857 = vmatpush1.bf16.msra.mxu0 0
  %4858 = vmatprep.subr.bf16.mxu0 0
  %4859 = vmatpush1.bf16.msra.mxu0 0
  %4860 = vmatprep.subr.bf16.mxu0 0
  %4861 = vmatpush1.bf16.msra.mxu0 0
  %4862 = vmatprep.subr.bf16.mxu0 0
  %4863 = vmatpush1.bf16.msra.mxu0 0
  %4864 = vmatprep.subr.bf16.mxu0 0
  %4865 = vmatpush1.bf16.msra.mxu0 0
  %4866 = vmatprep.subr.bf16.mxu0 0
  %4867 = vmatpush1.bf16.msra.mxu0 0
  %4868 = vmatprep.subr.bf16.mxu0 0
  %4869 = vmatpush1.bf16.msra.mxu0 0
  %4870 = vmatprep.subr.bf16.mxu0 0
  %4871 = vmatpush1.bf16.msra.mxu0 0
  %4872 = vmatprep.subr.bf16.mxu0 0
  %4873 = vmatpush1.bf16.msra.mxu0 0
  %4874 = vmatprep.subr.bf16.mxu0 0
  %4875 = vmatpush1.bf16.msra.mxu0 0
  %4876 = vmatprep.subr.bf16.mxu0 0
  %4877 = vmatpush1.bf16.msra.mxu0 0
  %4878 = vmatprep.subr.bf16.mxu0 0
  %4879 = vmatpush1.bf16.msra.mxu0 0
  %4880 = vmatprep.subr.bf16.mxu0 0
  %4881 = vmatpush1.bf16.msra.mxu0 0
  %4882 = vmatprep.mubr.bf16.mxu0 0
  %4883 = vmatmul.mubr.bf16.gmra.mrb[0].mxu0 %v4848
  %v4884 = vpop.f32.mrb[0].mxu0
  %v4885 = vadd.f32 0.0, %v4884
  %v4886 = vpop.f32.mrb[0].mxu0
  %v4887 = vpop.f32.mrb[0].mxu0
  %v4888 = vpop.f32.mrb[0].mxu0
  %4889 = vdwg.mxu0
  %v4894 = vunpack.c.l.b16 %v4048
  %v4895 = vunpack.c.l.b16 %v4049
  %v4896 = vunpack.c.l.b16 %v4050
  %v4897 = vunpack.c.l.b16 %v4051
  %v4898 = vpack.c.b16 %v4895, %v4894
  %v4899 = vpack.c.b16 %v4897, %v4896
  %v4903 = vsel %vm355, %v133, 0
  %4905 = vmatprep.subr.bf16.mxu0 0
  %4906 = vmatpush1.bf16.msra.mxu0 %v4898
  %4907 = vmatprep.subr.bf16.mxu0 0
  %4908 = vmatpush1.bf16.msra.mxu0 %v4899
  %4909 = vmatprep.subr.bf16.mxu0 0
  %4910 = vmatpush1.bf16.msra.mxu0 0
  %4911 = vmatprep.subr.bf16.mxu0 0
  %4912 = vmatpush1.bf16.msra.mxu0 0
  %4913 = vmatprep.subr.bf16.mxu0 0
  %4914 = vmatpush1.bf16.msra.mxu0 0
  %4915 = vmatprep.subr.bf16.mxu0 0
  %4916 = vmatpush1.bf16.msra.mxu0 0
  %4917 = vmatprep.subr.bf16.mxu0 0
  %4918 = vmatpush1.bf16.msra.mxu0 0
  %4919 = vmatprep.subr.bf16.mxu0 0
  %4920 = vmatpush1.bf16.msra.mxu0 0
  %4921 = vmatprep.subr.bf16.mxu0 0
  %4922 = vmatpush1.bf16.msra.mxu0 0
  %4923 = vmatprep.subr.bf16.mxu0 0
  %4924 = vmatpush1.bf16.msra.mxu0 0
  %4925 = vmatprep.subr.bf16.mxu0 0
  %4926 = vmatpush1.bf16.msra.mxu0 0
  %4927 = vmatprep.subr.bf16.mxu0 0
  %4928 = vmatpush1.bf16.msra.mxu0 0
  %4929 = vmatprep.subr.bf16.mxu0 0
  %4930 = vmatpush1.bf16.msra.mxu0 0
  %4931 = vmatprep.subr.bf16.mxu0 0
  %4932 = vmatpush1.bf16.msra.mxu0 0
  %4933 = vmatprep.subr.bf16.mxu0 0
  %4934 = vmatpush1.bf16.msra.mxu0 0
  %4935 = vmatprep.subr.bf16.mxu0 0
  %4936 = vmatpush1.bf16.msra.mxu0 0
  %4937 = vmatprep.mubr.bf16.mxu0 0
  %4938 = vmatmul.mubr.bf16.gmra.mrb[0].mxu0 %v4903
  %v4939 = vpop.f32.mrb[0].mxu0
  %v4940 = vadd.f32 0.0, %v4939
  %v4941 = vpop.f32.mrb[0].mxu0
  %v4942 = vpop.f32.mrb[0].mxu0
  %v4943 = vpop.f32.mrb[0].mxu0
  %4944 = vdwg.mxu0
  %v4949 = vunpack.c.l.b16 %v4052
  %v4950 = vunpack.c.l.b16 %v4053
  %v4951 = vunpack.c.l.b16 %v4054
  %v4952 = vunpack.c.l.b16 %v4055
  %v4953 = vpack.c.b16 %v4950, %v4949
  %v4954 = vpack.c.b16 %v4952, %v4951
  %v4958 = vsel %vm355, %v134, 0
  %4960 = vmatprep.subr.bf16.mxu0 0
  %4961 = vmatpush1.bf16.msra.mxu0 %v4953
  %4962 = vmatprep.subr.bf16.mxu0 0
  %4963 = vmatpush1.bf16.msra.mxu0 %v4954
  %4964 = vmatprep.subr.bf16.mxu0 0
  %4965 = vmatpush1.bf16.msra.mxu0 0
  %4966 = vmatprep.subr.bf16.mxu0 0
  %4967 = vmatpush1.bf16.msra.mxu0 0
  %4968 = vmatprep.subr.bf16.mxu0 0
  %4969 = vmatpush1.bf16.msra.mxu0 0
  %4970 = vmatprep.subr.bf16.mxu0 0
  %4971 = vmatpush1.bf16.msra.mxu0 0
  %4972 = vmatprep.subr.bf16.mxu0 0
  %4973 = vmatpush1.bf16.msra.mxu0 0
  %4974 = vmatprep.subr.bf16.mxu0 0
  %4975 = vmatpush1.bf16.msra.mxu0 0
  %4976 = vmatprep.subr.bf16.mxu0 0
  %4977 = vmatpush1.bf16.msra.mxu0 0
  %4978 = vmatprep.subr.bf16.mxu0 0
  %4979 = vmatpush1.bf16.msra.mxu0 0
  %4980 = vmatprep.subr.bf16.mxu0 0
  %4981 = vmatpush1.bf16.msra.mxu0 0
  %4982 = vmatprep.subr.bf16.mxu0 0
  %4983 = vmatpush1.bf16.msra.mxu0 0
  %4984 = vmatprep.subr.bf16.mxu0 0
  %4985 = vmatpush1.bf16.msra.mxu0 0
  %4986 = vmatprep.subr.bf16.mxu0 0
  %4987 = vmatpush1.bf16.msra.mxu0 0
  %4988 = vmatprep.subr.bf16.mxu0 0
  %4989 = vmatpush1.bf16.msra.mxu0 0
  %4990 = vmatprep.subr.bf16.mxu0 0
  %4991 = vmatpush1.bf16.msra.mxu0 0
  %4992 = vmatprep.mubr.bf16.mxu0 0
  %4993 = vmatmul.mubr.bf16.gmra.mrb[0].mxu0 %v4958
  %v4994 = vpop.f32.mrb[0].mxu0
  %v4995 = vadd.f32 0.0, %v4994
  %v4996 = vpop.f32.mrb[0].mxu0
  %v4997 = vpop.f32.mrb[0].mxu0
  %v4998 = vpop.f32.mrb[0].mxu0
  %4999 = vdwg.mxu0
  %v5004 = vunpack.c.l.b16 %v4056
  %v5005 = vunpack.c.l.b16 %v4057
  %v5006 = vunpack.c.l.b16 %v4058
  %v5007 = vunpack.c.l.b16 %v4059
  %v5008 = vpack.c.b16 %v5005, %v5004
  %v5009 = vpack.c.b16 %v5007, %v5006
  %v5013 = vsel %vm355, %v135, 0
  %5015 = vmatprep.subr.bf16.mxu0 0
  %5016 = vmatpush1.bf16.msra.mxu0 %v5008
  %5017 = vmatprep.subr.bf16.mxu0 0
  %5018 = vmatpush1.bf16.msra.mxu0 %v5009
  %5019 = vmatprep.subr.bf16.mxu0 0
  %5020 = vmatpush1.bf16.msra.mxu0 0
  %5021 = vmatprep.subr.bf16.mxu0 0
  %5022 = vmatpush1.bf16.msra.mxu0 0
  %5023 = vmatprep.subr.bf16.mxu0 0
  %5024 = vmatpush1.bf16.msra.mxu0 0
  %5025 = vmatprep.subr.bf16.mxu0 0
  %5026 = vmatpush1.bf16.msra.mxu0 0
  %5027 = vmatprep.subr.bf16.mxu0 0
  %5028 = vmatpush1.bf16.msra.mxu0 0
  %5029 = vmatprep.subr.bf16.mxu0 0
  %5030 = vmatpush1.bf16.msra.mxu0 0
  %5031 = vmatprep.subr.bf16.mxu0 0
  %5032 = vmatpush1.bf16.msra.mxu0 0
  %5033 = vmatprep.subr.bf16.mxu0 0
  %5034 = vmatpush1.bf16.msra.mxu0 0
  %5035 = vmatprep.subr.bf16.mxu0 0
  %5036 = vmatpush1.bf16.msra.mxu0 0
  %5037 = vmatprep.subr.bf16.mxu0 0
  %5038 = vmatpush1.bf16.msra.mxu0 0
  %5039 = vmatprep.subr.bf16.mxu0 0
  %5040 = vmatpush1.bf16.msra.mxu0 0
  %5041 = vmatprep.subr.bf16.mxu0 0
  %5042 = vmatpush1.bf16.msra.mxu0 0
  %5043 = vmatprep.subr.bf16.mxu0 0
  %5044 = vmatpush1.bf16.msra.mxu0 0
  %5045 = vmatprep.subr.bf16.mxu0 0
  %5046 = vmatpush1.bf16.msra.mxu0 0
  %5047 = vmatprep.mubr.bf16.mxu0 0
  %5048 = vmatmul.mubr.bf16.gmra.mrb[0].mxu0 %v5013
  %v5049 = vpop.f32.mrb[0].mxu0
  %v5050 = vadd.f32 0.0, %v5049
  %v5051 = vpop.f32.mrb[0].mxu0
  %v5052 = vpop.f32.mrb[0].mxu0
  %v5053 = vpop.f32.mrb[0].mxu0
  %5054 = vdwg.mxu0
  %v5059 = vunpack.c.l.b16 %v4060
  %v5060 = vunpack.c.l.b16 %v4061
  %v5061 = vunpack.c.l.b16 %v4062
  %v5062 = vunpack.c.l.b16 %v4063
  %v5063 = vpack.c.b16 %v5060, %v5059
  %v5064 = vpack.c.b16 %v5062, %v5061
  %v5068 = vsel %vm355, %v136, 0
  %5070 = vmatprep.subr.bf16.mxu0 0
  %5071 = vmatpush1.bf16.msra.mxu0 %v5063
  %5072 = vmatprep.subr.bf16.mxu0 0
  %5073 = vmatpush1.bf16.msra.mxu0 %v5064
  %5074 = vmatprep.subr.bf16.mxu0 0
  %5075 = vmatpush1.bf16.msra.mxu0 0
  %5076 = vmatprep.subr.bf16.mxu0 0
  %5077 = vmatpush1.bf16.msra.mxu0 0
  %5078 = vmatprep.subr.bf16.mxu0 0
  %5079 = vmatpush1.bf16.msra.mxu0 0
  %5080 = vmatprep.subr.bf16.mxu0 0
  %5081 = vmatpush1.bf16.msra.mxu0 0
  %5082 = vmatprep.subr.bf16.mxu0 0
  %5083 = vmatpush1.bf16.msra.mxu0 0
  %5084 = vmatprep.subr.bf16.mxu0 0
  %5085 = vmatpush1.bf16.msra.mxu0 0
  %5086 = vmatprep.subr.bf16.mxu0 0
  %5087 = vmatpush1.bf16.msra.mxu0 0
  %5088 = vmatprep.subr.bf16.mxu0 0
  %5089 = vmatpush1.bf16.msra.mxu0 0
  %5090 = vmatprep.subr.bf16.mxu0 0
  %5091 = vmatpush1.bf16.msra.mxu0 0
  %5092 = vmatprep.subr.bf16.mxu0 0
  %5093 = vmatpush1.bf16.msra.mxu0 0
  %5094 = vmatprep.subr.bf16.mxu0 0
  %5095 = vmatpush1.bf16.msra.mxu0 0
  %5096 = vmatprep.subr.bf16.mxu0 0
  %5097 = vmatpush1.bf16.msra.mxu0 0
  %5098 = vmatprep.subr.bf16.mxu0 0
  %5099 = vmatpush1.bf16.msra.mxu0 0
  %5100 = vmatprep.subr.bf16.mxu0 0
  %5101 = vmatpush1.bf16.msra.mxu0 0
  %5102 = vmatprep.mubr.bf16.mxu0 0
  %5103 = vmatmul.mubr.bf16.gmra.mrb[0].mxu0 %v5068
  %v5104 = vpop.f32.mrb[0].mxu0
  %v5105 = vadd.f32 0.0, %v5104
  %v5106 = vpop.f32.mrb[0].mxu0
  %v5107 = vpop.f32.mrb[0].mxu0
  %v5108 = vpop.f32.mrb[0].mxu0
  %5109 = vdwg.mxu0
  %v5114 = vunpack.c.l.b16 %v4064
  %v5115 = vunpack.c.l.b16 %v4065
  %v5116 = vunpack.c.l.b16 %v4066
  %v5117 = vunpack.c.l.b16 %v4067
  %v5118 = vpack.c.b16 %v5115, %v5114
  %v5119 = vpack.c.b16 %v5117, %v5116
  %v5123 = vsel %vm355, %v137, 0
  %5125 = vmatprep.subr.bf16.mxu0 0
  %5126 = vmatpush1.bf16.msra.mxu0 %v5118
  %5127 = vmatprep.subr.bf16.mxu0 0
  %5128 = vmatpush1.bf16.msra.mxu0 %v5119
  %5129 = vmatprep.subr.bf16.mxu0 0
  %5130 = vmatpush1.bf16.msra.mxu0 0
  %5131 = vmatprep.subr.bf16.mxu0 0
  %5132 = vmatpush1.bf16.msra.mxu0 0
  %5133 = vmatprep.subr.bf16.mxu0 0
  %5134 = vmatpush1.bf16.msra.mxu0 0
  %5135 = vmatprep.subr.bf16.mxu0 0
  %5136 = vmatpush1.bf16.msra.mxu0 0
  %5137 = vmatprep.subr.bf16.mxu0 0
  %5138 = vmatpush1.bf16.msra.mxu0 0
  %5139 = vmatprep.subr.bf16.mxu0 0
  %5140 = vmatpush1.bf16.msra.mxu0 0
  %5141 = vmatprep.subr.bf16.mxu0 0
  %5142 = vmatpush1.bf16.msra.mxu0 0
  %5143 = vmatprep.subr.bf16.mxu0 0
  %5144 = vmatpush1.bf16.msra.mxu0 0
  %5145 = vmatprep.subr.bf16.mxu0 0
  %5146 = vmatpush1.bf16.msra.mxu0 0
  %5147 = vmatprep.subr.bf16.mxu0 0
  %5148 = vmatpush1.bf16.msra.mxu0 0
  %5149 = vmatprep.subr.bf16.mxu0 0
  %5150 = vmatpush1.bf16.msra.mxu0 0
  %5151 = vmatprep.subr.bf16.mxu0 0
  %5152 = vmatpush1.bf16.msra.mxu0 0
  %5153 = vmatprep.subr.bf16.mxu0 0
  %5154 = vmatpush1.bf16.msra.mxu0 0
  %5155 = vmatprep.subr.bf16.mxu0 0
  %5156 = vmatpush1.bf16.msra.mxu0 0
  %5157 = vmatprep.mubr.bf16.mxu0 0
  %5158 = vmatmul.mubr.bf16.gmra.mrb[0].mxu0 %v5123
  %v5159 = vpop.f32.mrb[0].mxu0
  %v5160 = vadd.f32 0.0, %v5159
  %v5161 = vpop.f32.mrb[0].mxu0
  %v5162 = vpop.f32.mrb[0].mxu0
  %v5163 = vpop.f32.mrb[0].mxu0
  %5164 = vdwg.mxu0
  %v5169 = vunpack.c.l.b16 %v4068
  %v5170 = vunpack.c.l.b16 %v4069
  %v5171 = vunpack.c.l.b16 %v4070
  %v5172 = vunpack.c.l.b16 %v4071
  %v5173 = vpack.c.b16 %v5170, %v5169
  %v5174 = vpack.c.b16 %v5172, %v5171
  %v5178 = vsel %vm355, %v138, 0
  %5180 = vmatprep.subr.bf16.mxu0 0
  %5181 = vmatpush1.bf16.msra.mxu0 %v5173
  %5182 = vmatprep.subr.bf16.mxu0 0
  %5183 = vmatpush1.bf16.msra.mxu0 %v5174
  %5184 = vmatprep.subr.bf16.mxu0 0
  %5185 = vmatpush1.bf16.msra.mxu0 0
  %5186 = vmatprep.subr.bf16.mxu0 0
  %5187 = vmatpush1.bf16.msra.mxu0 0
  %5188 = vmatprep.subr.bf16.mxu0 0
  %5189 = vmatpush1.bf16.msra.mxu0 0
  %5190 = vmatprep.subr.bf16.mxu0 0
  %5191 = vmatpush1.bf16.msra.mxu0 0
  %5192 = vmatprep.subr.bf16.mxu0 0
  %5193 = vmatpush1.bf16.msra.mxu0 0
  %5194 = vmatprep.subr.bf16.mxu0 0
  %5195 = vmatpush1.bf16.msra.mxu0 0
  %5196 = vmatprep.subr.bf16.mxu0 0
  %5197 = vmatpush1.bf16.msra.mxu0 0
  %5198 = vmatprep.subr.bf16.mxu0 0
  %5199 = vmatpush1.bf16.msra.mxu0 0
  %5200 = vmatprep.subr.bf16.mxu0 0
  %5201 = vmatpush1.bf16.msra.mxu0 0
  %5202 = vmatprep.subr.bf16.mxu0 0
  %5203 = vmatpush1.bf16.msra.mxu0 0
  %5204 = vmatprep.subr.bf16.mxu0 0
  %5205 = vmatpush1.bf16.msra.mxu0 0
  %5206 = vmatprep.subr.bf16.mxu0 0
  %5207 = vmatpush1.bf16.msra.mxu0 0
  %5208 = vmatprep.subr.bf16.mxu0 0
  %5209 = vmatpush1.bf16.msra.mxu0 0
  %5210 = vmatprep.subr.bf16.mxu0 0
  %5211 = vmatpush1.bf16.msra.mxu0 0
  %5212 = vmatprep.mubr.bf16.mxu0 0
  %5213 = vmatmul.mubr.bf16.gmra.mrb[0].mxu0 %v5178
  %v5214 = vpop.f32.mrb[0].mxu0
  %v5215 = vadd.f32 0.0, %v5214
  %v5216 = vpop.f32.mrb[0].mxu0
  %v5217 = vpop.f32.mrb[0].mxu0
  %v5218 = vpop.f32.mrb[0].mxu0
  %5219 = vdwg.mxu0
  %v5224 = vunpack.c.l.b16 %v4072
  %v5225 = vunpack.c.l.b16 %v4073
  %v5226 = vunpack.c.l.b16 %v4074
  %v5227 = vunpack.c.l.b16 %v4075
  %v5228 = vpack.c.b16 %v5225, %v5224
  %v5229 = vpack.c.b16 %v5227, %v5226
  %v5233 = vsel %vm355, %v139, 0
  %5235 = vmatprep.subr.bf16.mxu0 0
  %5236 = vmatpush1.bf16.msra.mxu0 %v5228
  %5237 = vmatprep.subr.bf16.mxu0 0
  %5238 = vmatpush1.bf16.msra.mxu0 %v5229
  %5239 = vmatprep.subr.bf16.mxu0 0
  %5240 = vmatpush1.bf16.msra.mxu0 0
  %5241 = vmatprep.subr.bf16.mxu0 0
  %5242 = vmatpush1.bf16.msra.mxu0 0
  %5243 = vmatprep.subr.bf16.mxu0 0
  %5244 = vmatpush1.bf16.msra.mxu0 0
  %5245 = vmatprep.subr.bf16.mxu0 0
  %5246 = vmatpush1.bf16.msra.mxu0 0
  %5247 = vmatprep.subr.bf16.mxu0 0
  %5248 = vmatpush1.bf16.msra.mxu0 0
  %5249 = vmatprep.subr.bf16.mxu0 0
  %5250 = vmatpush1.bf16.msra.mxu0 0
  %5251 = vmatprep.subr.bf16.mxu0 0
  %5252 = vmatpush1.bf16.msra.mxu0 0
  %5253 = vmatprep.subr.bf16.mxu0 0
  %5254 = vmatpush1.bf16.msra.mxu0 0
  %5255 = vmatprep.subr.bf16.mxu0 0
  %5256 = vmatpush1.bf16.msra.mxu0 0
  %5257 = vmatprep.subr.bf16.mxu0 0
  %5258 = vmatpush1.bf16.msra.mxu0 0
  %5259 = vmatprep.subr.bf16.mxu0 0
  %5260 = vmatpush1.bf16.msra.mxu0 0
  %5261 = vmatprep.subr.bf16.mxu0 0
  %5262 = vmatpush1.bf16.msra.mxu0 0
  %5263 = vmatprep.subr.bf16.mxu0 0
  %5264 = vmatpush1.bf16.msra.mxu0 0
  %5265 = vmatprep.subr.bf16.mxu0 0
  %5266 = vmatpush1.bf16.msra.mxu0 0
  %5267 = vmatprep.mubr.bf16.mxu0 0
  %5268 = vmatmul.mubr.bf16.gmra.mrb[0].mxu0 %v5233
  %v5269 = vpop.f32.mrb[0].mxu0
  %v5270 = vadd.f32 0.0, %v5269
  %v5271 = vpop.f32.mrb[0].mxu0
  %v5272 = vpop.f32.mrb[0].mxu0
  %v5273 = vpop.f32.mrb[0].mxu0
  %5274 = vdwg.mxu0
  %v5279 = vunpack.c.l.b16 %v4076
  %v5280 = vunpack.c.l.b16 %v4077
  %v5281 = vunpack.c.l.b16 %v4078
  %v5282 = vunpack.c.l.b16 %v4079
  %v5283 = vpack.c.b16 %v5280, %v5279
  %v5284 = vpack.c.b16 %v5282, %v5281
  %v5288 = vsel %vm355, %v140, 0
  %5290 = vmatprep.subr.bf16.mxu0 0
  %5291 = vmatpush1.bf16.msra.mxu0 %v5283
  %5292 = vmatprep.subr.bf16.mxu0 0
  %5293 = vmatpush1.bf16.msra.mxu0 %v5284
  %5294 = vmatprep.subr.bf16.mxu0 0
  %5295 = vmatpush1.bf16.msra.mxu0 0
  %5296 = vmatprep.subr.bf16.mxu0 0
  %5297 = vmatpush1.bf16.msra.mxu0 0
  %5298 = vmatprep.subr.bf16.mxu0 0
  %5299 = vmatpush1.bf16.msra.mxu0 0
  %5300 = vmatprep.subr.bf16.mxu0 0
  %5301 = vmatpush1.bf16.msra.mxu0 0
  %5302 = vmatprep.subr.bf16.mxu0 0
  %5303 = vmatpush1.bf16.msra.mxu0 0
  %5304 = vmatprep.subr.bf16.mxu0 0
  %5305 = vmatpush1.bf16.msra.mxu0 0
  %5306 = vmatprep.subr.bf16.mxu0 0
  %5307 = vmatpush1.bf16.msra.mxu0 0
  %5308 = vmatprep.subr.bf16.mxu0 0
  %5309 = vmatpush1.bf16.msra.mxu0 0
  %5310 = vmatprep.subr.bf16.mxu0 0
  %5311 = vmatpush1.bf16.msra.mxu0 0
  %5312 = vmatprep.subr.bf16.mxu0 0
  %5313 = vmatpush1.bf16.msra.mxu0 0
  %5314 = vmatprep.subr.bf16.mxu0 0
  %5315 = vmatpush1.bf16.msra.mxu0 0
  %5316 = vmatprep.subr.bf16.mxu0 0
  %5317 = vmatpush1.bf16.msra.mxu0 0
  %5318 = vmatprep.subr.bf16.mxu0 0
  %5319 = vmatpush1.bf16.msra.mxu0 0
  %5320 = vmatprep.subr.bf16.mxu0 0
  %5321 = vmatpush1.bf16.msra.mxu0 0
  %5322 = vmatprep.mubr.bf16.mxu0 0
  %5323 = vmatmul.mubr.bf16.gmra.mrb[0].mxu0 %v5288
  %v5324 = vpop.f32.mrb[0].mxu0
  %v5325 = vadd.f32 0.0, %v5324
  %v5326 = vpop.f32.mrb[0].mxu0
  %v5327 = vpop.f32.mrb[0].mxu0
  %v5328 = vpop.f32.mrb[0].mxu0
  %5329 = vdwg.mxu0
  %v5334 = vunpack.c.l.b16 %v4080
  %v5335 = vunpack.c.l.b16 %v4081
  %v5336 = vunpack.c.l.b16 %v4082
  %v5337 = vunpack.c.l.b16 %v4083
  %v5338 = vpack.c.b16 %v5335, %v5334
  %v5339 = vpack.c.b16 %v5337, %v5336
  %v5343 = vsel %vm355, %v141, 0
  %5345 = vmatprep.subr.bf16.mxu0 0
  %5346 = vmatpush1.bf16.msra.mxu0 %v5338
  %5347 = vmatprep.subr.bf16.mxu0 0
  %5348 = vmatpush1.bf16.msra.mxu0 %v5339
  %5349 = vmatprep.subr.bf16.mxu0 0
  %5350 = vmatpush1.bf16.msra.mxu0 0
  %5351 = vmatprep.subr.bf16.mxu0 0
  %5352 = vmatpush1.bf16.msra.mxu0 0
  %5353 = vmatprep.subr.bf16.mxu0 0
  %5354 = vmatpush1.bf16.msra.mxu0 0
  %5355 = vmatprep.subr.bf16.mxu0 0
  %5356 = vmatpush1.bf16.msra.mxu0 0
  %5357 = vmatprep.subr.bf16.mxu0 0
  %5358 = vmatpush1.bf16.msra.mxu0 0
  %5359 = vmatprep.subr.bf16.mxu0 0
  %5360 = vmatpush1.bf16.msra.mxu0 0
  %5361 = vmatprep.subr.bf16.mxu0 0
  %5362 = vmatpush1.bf16.msra.mxu0 0
  %5363 = vmatprep.subr.bf16.mxu0 0
  %5364 = vmatpush1.bf16.msra.mxu0 0
  %5365 = vmatprep.subr.bf16.mxu0 0
  %5366 = vmatpush1.bf16.msra.mxu0 0
  %5367 = vmatprep.subr.bf16.mxu0 0
  %5368 = vmatpush1.bf16.msra.mxu0 0
  %5369 = vmatprep.subr.bf16.mxu0 0
  %5370 = vmatpush1.bf16.msra.mxu0 0
  %5371 = vmatprep.subr.bf16.mxu0 0
  %5372 = vmatpush1.bf16.msra.mxu0 0
  %5373 = vmatprep.subr.bf16.mxu0 0
  %5374 = vmatpush1.bf16.msra.mxu0 0
  %5375 = vmatprep.subr.bf16.mxu0 0
  %5376 = vmatpush1.bf16.msra.mxu0 0
  %5377 = vmatprep.mubr.bf16.mxu0 0
  %5378 = vmatmul.mubr.bf16.gmra.mrb[0].mxu0 %v5343
  %v5379 = vpop.f32.mrb[0].mxu0
  %v5380 = vadd.f32 0.0, %v5379
  %v5381 = vpop.f32.mrb[0].mxu0
  %v5382 = vpop.f32.mrb[0].mxu0
  %v5383 = vpop.f32.mrb[0].mxu0
  %5384 = vdwg.mxu0
  %v5389 = vunpack.c.l.b16 %v4084
  %v5390 = vunpack.c.l.b16 %v4085
  %v5391 = vunpack.c.l.b16 %v4086
  %v5392 = vunpack.c.l.b16 %v4087
  %v5393 = vpack.c.b16 %v5390, %v5389
  %v5394 = vpack.c.b16 %v5392, %v5391
  %v5398 = vsel %vm355, %v142, 0
  %5400 = vmatprep.subr.bf16.mxu0 0
  %5401 = vmatpush1.bf16.msra.mxu0 %v5393
  %5402 = vmatprep.subr.bf16.mxu0 0
  %5403 = vmatpush1.bf16.msra.mxu0 %v5394
  %5404 = vmatprep.subr.bf16.mxu0 0
  %5405 = vmatpush1.bf16.msra.mxu0 0
  %5406 = vmatprep.subr.bf16.mxu0 0
  %5407 = vmatpush1.bf16.msra.mxu0 0
  %5408 = vmatprep.subr.bf16.mxu0 0
  %5409 = vmatpush1.bf16.msra.mxu0 0
  %5410 = vmatprep.subr.bf16.mxu0 0
  %5411 = vmatpush1.bf16.msra.mxu0 0
  %5412 = vmatprep.subr.bf16.mxu0 0
  %5413 = vmatpush1.bf16.msra.mxu0 0
  %5414 = vmatprep.subr.bf16.mxu0 0
  %5415 = vmatpush1.bf16.msra.mxu0 0
  %5416 = vmatprep.subr.bf16.mxu0 0
  %5417 = vmatpush1.bf16.msra.mxu0 0
  %5418 = vmatprep.subr.bf16.mxu0 0
  %5419 = vmatpush1.bf16.msra.mxu0 0
  %5420 = vmatprep.subr.bf16.mxu0 0
  %5421 = vmatpush1.bf16.msra.mxu0 0
  %5422 = vmatprep.subr.bf16.mxu0 0
  %5423 = vmatpush1.bf16.msra.mxu0 0
  %5424 = vmatprep.subr.bf16.mxu0 0
  %5425 = vmatpush1.bf16.msra.mxu0 0
  %5426 = vmatprep.subr.bf16.mxu0 0
  %5427 = vmatpush1.bf16.msra.mxu0 0
  %5428 = vmatprep.subr.bf16.mxu0 0
  %5429 = vmatpush1.bf16.msra.mxu0 0
  %5430 = vmatprep.subr.bf16.mxu0 0
  %5431 = vmatpush1.bf16.msra.mxu0 0
  %5432 = vmatprep.mubr.bf16.mxu0 0
  %5433 = vmatmul.mubr.bf16.gmra.mrb[0].mxu0 %v5398
  %v5434 = vpop.f32.mrb[0].mxu0
  %v5435 = vadd.f32 0.0, %v5434
  %v5436 = vpop.f32.mrb[0].mxu0
  %v5437 = vpop.f32.mrb[0].mxu0
  %v5438 = vpop.f32.mrb[0].mxu0
  %5439 = vdwg.mxu0
  %v5444 = vunpack.c.l.b16 %v4088
  %v5445 = vunpack.c.l.b16 %v4089
  %v5446 = vunpack.c.l.b16 %v4090
  %v5447 = vunpack.c.l.b16 %v4091
  %v5448 = vpack.c.b16 %v5445, %v5444
  %v5449 = vpack.c.b16 %v5447, %v5446
  %v5453 = vsel %vm355, %v143, 0
  %5455 = vmatprep.subr.bf16.mxu0 0
  %5456 = vmatpush1.bf16.msra.mxu0 %v5448
  %5457 = vmatprep.subr.bf16.mxu0 0
  %5458 = vmatpush1.bf16.msra.mxu0 %v5449
  %5459 = vmatprep.subr.bf16.mxu0 0
  %5460 = vmatpush1.bf16.msra.mxu0 0
  %5461 = vmatprep.subr.bf16.mxu0 0
  %5462 = vmatpush1.bf16.msra.mxu0 0
  %5463 = vmatprep.subr.bf16.mxu0 0
  %5464 = vmatpush1.bf16.msra.mxu0 0
  %5465 = vmatprep.subr.bf16.mxu0 0
  %5466 = vmatpush1.bf16.msra.mxu0 0
  %5467 = vmatprep.subr.bf16.mxu0 0
  %5468 = vmatpush1.bf16.msra.mxu0 0
  %5469 = vmatprep.subr.bf16.mxu0 0
  %5470 = vmatpush1.bf16.msra.mxu0 0
  %5471 = vmatprep.subr.bf16.mxu0 0
  %5472 = vmatpush1.bf16.msra.mxu0 0
  %5473 = vmatprep.subr.bf16.mxu0 0
  %5474 = vmatpush1.bf16.msra.mxu0 0
  %5475 = vmatprep.subr.bf16.mxu0 0
  %5476 = vmatpush1.bf16.msra.mxu0 0
  %5477 = vmatprep.subr.bf16.mxu0 0
  %5478 = vmatpush1.bf16.msra.mxu0 0
  %5479 = vmatprep.subr.bf16.mxu0 0
  %5480 = vmatpush1.bf16.msra.mxu0 0
  %5481 = vmatprep.subr.bf16.mxu0 0
  %5482 = vmatpush1.bf16.msra.mxu0 0
  %5483 = vmatprep.subr.bf16.mxu0 0
  %5484 = vmatpush1.bf16.msra.mxu0 0
  %5485 = vmatprep.subr.bf16.mxu0 0
  %5486 = vmatpush1.bf16.msra.mxu0 0
  %5487 = vmatprep.mubr.bf16.mxu0 0
  %5488 = vmatmul.mubr.bf16.gmra.mrb[0].mxu0 %v5453
  %v5489 = vpop.f32.mrb[0].mxu0
  %v5490 = vadd.f32 0.0, %v5489
  %v5491 = vpop.f32.mrb[0].mxu0
  %v5492 = vpop.f32.mrb[0].mxu0
  %v5493 = vpop.f32.mrb[0].mxu0
  %5494 = vdwg.mxu0
  %v5499 = vunpack.c.l.b16 %v4092
  %v5500 = vunpack.c.l.b16 %v4093
  %v5501 = vunpack.c.l.b16 %v4094
  %v5502 = vunpack.c.l.b16 %v4095
  %v5503 = vpack.c.b16 %v5500, %v5499
  %v5504 = vpack.c.b16 %v5502, %v5501
  %v5508 = vsel %vm355, %v144, 0
  %5510 = vmatprep.subr.bf16.mxu0 0
  %5511 = vmatpush1.bf16.msra.mxu0 %v5503
  %5512 = vmatprep.subr.bf16.mxu0 0
  %5513 = vmatpush1.bf16.msra.mxu0 %v5504
  %5514 = vmatprep.subr.bf16.mxu0 0
  %5515 = vmatpush1.bf16.msra.mxu0 0
  %5516 = vmatprep.subr.bf16.mxu0 0
  %5517 = vmatpush1.bf16.msra.mxu0 0
  %5518 = vmatprep.subr.bf16.mxu0 0
  %5519 = vmatpush1.bf16.msra.mxu0 0
  %5520 = vmatprep.subr.bf16.mxu0 0
  %5521 = vmatpush1.bf16.msra.mxu0 0
  %5522 = vmatprep.subr.bf16.mxu0 0
  %5523 = vmatpush1.bf16.msra.mxu0 0
  %5524 = vmatprep.subr.bf16.mxu0 0
  %5525 = vmatpush1.bf16.msra.mxu0 0
  %5526 = vmatprep.subr.bf16.mxu0 0
  %5527 = vmatpush1.bf16.msra.mxu0 0
  %5528 = vmatprep.subr.bf16.mxu0 0
  %5529 = vmatpush1.bf16.msra.mxu0 0
  %5530 = vmatprep.subr.bf16.mxu0 0
  %5531 = vmatpush1.bf16.msra.mxu0 0
  %5532 = vmatprep.subr.bf16.mxu0 0
  %5533 = vmatpush1.bf16.msra.mxu0 0
  %5534 = vmatprep.subr.bf16.mxu0 0
  %5535 = vmatpush1.bf16.msra.mxu0 0
  %5536 = vmatprep.subr.bf16.mxu0 0
  %5537 = vmatpush1.bf16.msra.mxu0 0
  %5538 = vmatprep.subr.bf16.mxu0 0
  %5539 = vmatpush1.bf16.msra.mxu0 0
  %5540 = vmatprep.subr.bf16.mxu0 0
  %5541 = vmatpush1.bf16.msra.mxu0 0
  %5542 = vmatprep.mubr.bf16.mxu0 0
  %5543 = vmatmul.mubr.bf16.gmra.mrb[0].mxu0 %v5508
  %v5544 = vpop.f32.mrb[0].mxu0
  %v5545 = vadd.f32 0.0, %v5544
  %v5546 = vpop.f32.mrb[0].mxu0
  %v5547 = vpop.f32.mrb[0].mxu0
  %v5548 = vpop.f32.mrb[0].mxu0
  %5549 = vdwg.mxu0
  %v5554 = vunpack.c.l.b16 %v4096
  %v5555 = vunpack.c.l.b16 %v4097
  %v5556 = vunpack.c.l.b16 %v4098
  %v5557 = vunpack.c.l.b16 %v4099
  %v5558 = vpack.c.b16 %v5555, %v5554
  %v5559 = vpack.c.b16 %v5557, %v5556
  %v5563 = vsel %vm355, %v145, 0
  %5565 = vmatprep.subr.bf16.mxu0 0
  %5566 = vmatpush1.bf16.msra.mxu0 %v5558
  %5567 = vmatprep.subr.bf16.mxu0 0
  %5568 = vmatpush1.bf16.msra.mxu0 %v5559
  %5569 = vmatprep.subr.bf16.mxu0 0
  %5570 = vmatpush1.bf16.msra.mxu0 0
  %5571 = vmatprep.subr.bf16.mxu0 0
  %5572 = vmatpush1.bf16.msra.mxu0 0
  %5573 = vmatprep.subr.bf16.mxu0 0
  %5574 = vmatpush1.bf16.msra.mxu0 0
  %5575 = vmatprep.subr.bf16.mxu0 0
  %5576 = vmatpush1.bf16.msra.mxu0 0
  %5577 = vmatprep.subr.bf16.mxu0 0
  %5578 = vmatpush1.bf16.msra.mxu0 0
  %5579 = vmatprep.subr.bf16.mxu0 0
  %5580 = vmatpush1.bf16.msra.mxu0 0
  %5581 = vmatprep.subr.bf16.mxu0 0
  %5582 = vmatpush1.bf16.msra.mxu0 0
  %5583 = vmatprep.subr.bf16.mxu0 0
  %5584 = vmatpush1.bf16.msra.mxu0 0
  %5585 = vmatprep.subr.bf16.mxu0 0
  %5586 = vmatpush1.bf16.msra.mxu0 0
  %5587 = vmatprep.subr.bf16.mxu0 0
  %5588 = vmatpush1.bf16.msra.mxu0 0
  %5589 = vmatprep.subr.bf16.mxu0 0
  %5590 = vmatpush1.bf16.msra.mxu0 0
  %5591 = vmatprep.subr.bf16.mxu0 0
  %5592 = vmatpush1.bf16.msra.mxu0 0
  %5593 = vmatprep.subr.bf16.mxu0 0
  %5594 = vmatpush1.bf16.msra.mxu0 0
  %5595 = vmatprep.subr.bf16.mxu0 0
  %5596 = vmatpush1.bf16.msra.mxu0 0
  %5597 = vmatprep.mubr.bf16.mxu0 0
  %5598 = vmatmul.mubr.bf16.gmra.mrb[0].mxu0 %v5563
  %v5599 = vpop.f32.mrb[0].mxu0
  %v5600 = vadd.f32 0.0, %v5599
  %v5601 = vpop.f32.mrb[0].mxu0
  %v5602 = vpop.f32.mrb[0].mxu0
  %v5603 = vpop.f32.mrb[0].mxu0
  %5604 = vdwg.mxu0
  %v5609 = vunpack.c.l.b16 %v4100
  %v5610 = vunpack.c.l.b16 %v4101
  %v5611 = vunpack.c.l.b16 %v4102
  %v5612 = vunpack.c.l.b16 %v4103
  %v5613 = vpack.c.b16 %v5610, %v5609
  %v5614 = vpack.c.b16 %v5612, %v5611
  %v5618 = vsel %vm355, %v146, 0
  %5620 = vmatprep.subr.bf16.mxu0 0
  %5621 = vmatpush1.bf16.msra.mxu0 %v5613
  %5622 = vmatprep.subr.bf16.mxu0 0
  %5623 = vmatpush1.bf16.msra.mxu0 %v5614
  %5624 = vmatprep.subr.bf16.mxu0 0
  %5625 = vmatpush1.bf16.msra.mxu0 0
  %5626 = vmatprep.subr.bf16.mxu0 0
  %5627 = vmatpush1.bf16.msra.mxu0 0
  %5628 = vmatprep.subr.bf16.mxu0 0
  %5629 = vmatpush1.bf16.msra.mxu0 0
  %5630 = vmatprep.subr.bf16.mxu0 0
  %5631 = vmatpush1.bf16.msra.mxu0 0
  %5632 = vmatprep.subr.bf16.mxu0 0
  %5633 = vmatpush1.bf16.msra.mxu0 0
  %5634 = vmatprep.subr.bf16.mxu0 0
  %5635 = vmatpush1.bf16.msra.mxu0 0
  %5636 = vmatprep.subr.bf16.mxu0 0
  %5637 = vmatpush1.bf16.msra.mxu0 0
  %5638 = vmatprep.subr.bf16.mxu0 0
  %5639 = vmatpush1.bf16.msra.mxu0 0
  %5640 = vmatprep.subr.bf16.mxu0 0
  %5641 = vmatpush1.bf16.msra.mxu0 0
  %5642 = vmatprep.subr.bf16.mxu0 0
  %5643 = vmatpush1.bf16.msra.mxu0 0
  %5644 = vmatprep.subr.bf16.mxu0 0
  %5645 = vmatpush1.bf16.msra.mxu0 0
  %5646 = vmatprep.subr.bf16.mxu0 0
  %5647 = vmatpush1.bf16.msra.mxu0 0
  %5648 = vmatprep.subr.bf16.mxu0 0
  %5649 = vmatpush1.bf16.msra.mxu0 0
  %5650 = vmatprep.subr.bf16.mxu0 0
  %5651 = vmatpush1.bf16.msra.mxu0 0
  %5652 = vmatprep.mubr.bf16.mxu0 0
  %5653 = vmatmul.mubr.bf16.gmra.mrb[0].mxu0 %v5618
  %v5654 = vpop.f32.mrb[0].mxu0
  %v5655 = vadd.f32 0.0, %v5654
  %v5656 = vpop.f32.mrb[0].mxu0
  %v5657 = vpop.f32.mrb[0].mxu0
  %v5658 = vpop.f32.mrb[0].mxu0
  %5659 = vdwg.mxu0
  %v5664 = vunpack.c.l.b16 %v4104
  %v5665 = vunpack.c.l.b16 %v4105
  %v5666 = vunpack.c.l.b16 %v4106
  %v5667 = vunpack.c.l.b16 %v4107
  %v5668 = vpack.c.b16 %v5665, %v5664
  %v5669 = vpack.c.b16 %v5667, %v5666
  %v5673 = vsel %vm355, %v147, 0
  %5675 = vmatprep.subr.bf16.mxu0 0
  %5676 = vmatpush1.bf16.msra.mxu0 %v5668
  %5677 = vmatprep.subr.bf16.mxu0 0
  %5678 = vmatpush1.bf16.msra.mxu0 %v5669
  %5679 = vmatprep.subr.bf16.mxu0 0
  %5680 = vmatpush1.bf16.msra.mxu0 0
  %5681 = vmatprep.subr.bf16.mxu0 0
  %5682 = vmatpush1.bf16.msra.mxu0 0
  %5683 = vmatprep.subr.bf16.mxu0 0
  %5684 = vmatpush1.bf16.msra.mxu0 0
  %5685 = vmatprep.subr.bf16.mxu0 0
  %5686 = vmatpush1.bf16.msra.mxu0 0
  %5687 = vmatprep.subr.bf16.mxu0 0
  %5688 = vmatpush1.bf16.msra.mxu0 0
  %5689 = vmatprep.subr.bf16.mxu0 0
  %5690 = vmatpush1.bf16.msra.mxu0 0
  %5691 = vmatprep.subr.bf16.mxu0 0
  %5692 = vmatpush1.bf16.msra.mxu0 0
  %5693 = vmatprep.subr.bf16.mxu0 0
  %5694 = vmatpush1.bf16.msra.mxu0 0
  %5695 = vmatprep.subr.bf16.mxu0 0
  %5696 = vmatpush1.bf16.msra.mxu0 0
  %5697 = vmatprep.subr.bf16.mxu0 0
  %5698 = vmatpush1.bf16.msra.mxu0 0
  %5699 = vmatprep.subr.bf16.mxu0 0
  %5700 = vmatpush1.bf16.msra.mxu0 0
  %5701 = vmatprep.subr.bf16.mxu0 0
  %5702 = vmatpush1.bf16.msra.mxu0 0
  %5703 = vmatprep.subr.bf16.mxu0 0
  %5704 = vmatpush1.bf16.msra.mxu0 0
  %5705 = vmatprep.subr.bf16.mxu0 0
  %5706 = vmatpush1.bf16.msra.mxu0 0
  %5707 = vmatprep.mubr.bf16.mxu0 0
  %5708 = vmatmul.mubr.bf16.gmra.mrb[0].mxu0 %v5673
  %v5709 = vpop.f32.mrb[0].mxu0
  %v5710 = vadd.f32 0.0, %v5709
  %v5711 = vpop.f32.mrb[0].mxu0
  %v5712 = vpop.f32.mrb[0].mxu0
  %v5713 = vpop.f32.mrb[0].mxu0
  %5714 = vdwg.mxu0
  %v5719 = vunpack.c.l.b16 %v4108
  %v5720 = vunpack.c.l.b16 %v4109
  %v5721 = vunpack.c.l.b16 %v4110
  %v5722 = vunpack.c.l.b16 %v4111
  %v5723 = vpack.c.b16 %v5720, %v5719
  %v5724 = vpack.c.b16 %v5722, %v5721
  %v5728 = vsel %vm355, %v148, 0
  %5730 = vmatprep.subr.bf16.mxu0 0
  %5731 = vmatpush1.bf16.msra.mxu0 %v5723
  %5732 = vmatprep.subr.bf16.mxu0 0
  %5733 = vmatpush1.bf16.msra.mxu0 %v5724
  %5734 = vmatprep.subr.bf16.mxu0 0
  %5735 = vmatpush1.bf16.msra.mxu0 0
  %5736 = vmatprep.subr.bf16.mxu0 0
  %5737 = vmatpush1.bf16.msra.mxu0 0
  %5738 = vmatprep.subr.bf16.mxu0 0
  %5739 = vmatpush1.bf16.msra.mxu0 0
  %5740 = vmatprep.subr.bf16.mxu0 0
  %5741 = vmatpush1.bf16.msra.mxu0 0
  %5742 = vmatprep.subr.bf16.mxu0 0
  %5743 = vmatpush1.bf16.msra.mxu0 0
  %5744 = vmatprep.subr.bf16.mxu0 0
  %5745 = vmatpush1.bf16.msra.mxu0 0
  %5746 = vmatprep.subr.bf16.mxu0 0
  %5747 = vmatpush1.bf16.msra.mxu0 0
  %5748 = vmatprep.subr.bf16.mxu0 0
  %5749 = vmatpush1.bf16.msra.mxu0 0
  %5750 = vmatprep.subr.bf16.mxu0 0
  %5751 = vmatpush1.bf16.msra.mxu0 0
  %5752 = vmatprep.subr.bf16.mxu0 0
  %5753 = vmatpush1.bf16.msra.mxu0 0
  %5754 = vmatprep.subr.bf16.mxu0 0
  %5755 = vmatpush1.bf16.msra.mxu0 0
  %5756 = vmatprep.subr.bf16.mxu0 0
  %5757 = vmatpush1.bf16.msra.mxu0 0
  %5758 = vmatprep.subr.bf16.mxu0 0
  %5759 = vmatpush1.bf16.msra.mxu0 0
  %5760 = vmatprep.subr.bf16.mxu0 0
  %5761 = vmatpush1.bf16.msra.mxu0 0
  %5762 = vmatprep.mubr.bf16.mxu0 0
  %5763 = vmatmul.mubr.bf16.gmra.mrb[0].mxu0 %v5728
  %v5764 = vpop.f32.mrb[0].mxu0
  %v5765 = vadd.f32 0.0, %v5764
  %v5766 = vpop.f32.mrb[0].mxu0
  %v5767 = vpop.f32.mrb[0].mxu0
  %v5768 = vpop.f32.mrb[0].mxu0
  %5769 = vdwg.mxu0
  %v5774 = vunpack.c.l.b16 %v4112
  %v5775 = vunpack.c.l.b16 %v4113
  %v5776 = vunpack.c.l.b16 %v4114
  %v5777 = vunpack.c.l.b16 %v4115
  %v5778 = vpack.c.b16 %v5775, %v5774
  %v5779 = vpack.c.b16 %v5777, %v5776
  %v5783 = vsel %vm355, %v149, 0
  %5785 = vmatprep.subr.bf16.mxu0 0
  %5786 = vmatpush1.bf16.msra.mxu0 %v5778
  %5787 = vmatprep.subr.bf16.mxu0 0
  %5788 = vmatpush1.bf16.msra.mxu0 %v5779
  %5789 = vmatprep.subr.bf16.mxu0 0
  %5790 = vmatpush1.bf16.msra.mxu0 0
  %5791 = vmatprep.subr.bf16.mxu0 0
  %5792 = vmatpush1.bf16.msra.mxu0 0
  %5793 = vmatprep.subr.bf16.mxu0 0
  %5794 = vmatpush1.bf16.msra.mxu0 0
  %5795 = vmatprep.subr.bf16.mxu0 0
  %5796 = vmatpush1.bf16.msra.mxu0 0
  %5797 = vmatprep.subr.bf16.mxu0 0
  %5798 = vmatpush1.bf16.msra.mxu0 0
  %5799 = vmatprep.subr.bf16.mxu0 0
  %5800 = vmatpush1.bf16.msra.mxu0 0
  %5801 = vmatprep.subr.bf16.mxu0 0
  %5802 = vmatpush1.bf16.msra.mxu0 0
  %5803 = vmatprep.subr.bf16.mxu0 0
  %5804 = vmatpush1.bf16.msra.mxu0 0
  %5805 = vmatprep.subr.bf16.mxu0 0
  %5806 = vmatpush1.bf16.msra.mxu0 0
  %5807 = vmatprep.subr.bf16.mxu0 0
  %5808 = vmatpush1.bf16.msra.mxu0 0
  %5809 = vmatprep.subr.bf16.mxu0 0
  %5810 = vmatpush1.bf16.msra.mxu0 0
  %5811 = vmatprep.subr.bf16.mxu0 0
  %5812 = vmatpush1.bf16.msra.mxu0 0
  %5813 = vmatprep.subr.bf16.mxu0 0
  %5814 = vmatpush1.bf16.msra.mxu0 0
  %5815 = vmatprep.subr.bf16.mxu0 0
  %5816 = vmatpush1.bf16.msra.mxu0 0
  %5817 = vmatprep.mubr.bf16.mxu0 0
  %5818 = vmatmul.mubr.bf16.gmra.mrb[0].mxu0 %v5783
  %v5819 = vpop.f32.mrb[0].mxu0
  %v5820 = vadd.f32 0.0, %v5819
  %v5821 = vpop.f32.mrb[0].mxu0
  %v5822 = vpop.f32.mrb[0].mxu0
  %v5823 = vpop.f32.mrb[0].mxu0
  %5824 = vdwg.mxu0
  %v5829 = vunpack.c.l.b16 %v4116
  %v5830 = vunpack.c.l.b16 %v4117
  %v5831 = vunpack.c.l.b16 %v4118
  %v5832 = vunpack.c.l.b16 %v4119
  %v5833 = vpack.c.b16 %v5830, %v5829
  %v5834 = vpack.c.b16 %v5832, %v5831
  %v5838 = vsel %vm355, %v150, 0
  %5840 = vmatprep.subr.bf16.mxu0 0
  %5841 = vmatpush1.bf16.msra.mxu0 %v5833
  %5842 = vmatprep.subr.bf16.mxu0 0
  %5843 = vmatpush1.bf16.msra.mxu0 %v5834
  %5844 = vmatprep.subr.bf16.mxu0 0
  %5845 = vmatpush1.bf16.msra.mxu0 0
  %5846 = vmatprep.subr.bf16.mxu0 0
  %5847 = vmatpush1.bf16.msra.mxu0 0
  %5848 = vmatprep.subr.bf16.mxu0 0
  %5849 = vmatpush1.bf16.msra.mxu0 0
  %5850 = vmatprep.subr.bf16.mxu0 0
  %5851 = vmatpush1.bf16.msra.mxu0 0
  %5852 = vmatprep.subr.bf16.mxu0 0
  %5853 = vmatpush1.bf16.msra.mxu0 0
  %5854 = vmatprep.subr.bf16.mxu0 0
  %5855 = vmatpush1.bf16.msra.mxu0 0
  %5856 = vmatprep.subr.bf16.mxu0 0
  %5857 = vmatpush1.bf16.msra.mxu0 0
  %5858 = vmatprep.subr.bf16.mxu0 0
  %5859 = vmatpush1.bf16.msra.mxu0 0
  %5860 = vmatprep.subr.bf16.mxu0 0
  %5861 = vmatpush1.bf16.msra.mxu0 0
  %5862 = vmatprep.subr.bf16.mxu0 0
  %5863 = vmatpush1.bf16.msra.mxu0 0
  %5864 = vmatprep.subr.bf16.mxu0 0
  %5865 = vmatpush1.bf16.msra.mxu0 0
  %5866 = vmatprep.subr.bf16.mxu0 0
  %5867 = vmatpush1.bf16.msra.mxu0 0
  %5868 = vmatprep.subr.bf16.mxu0 0
  %5869 = vmatpush1.bf16.msra.mxu0 0
  %5870 = vmatprep.subr.bf16.mxu0 0
  %5871 = vmatpush1.bf16.msra.mxu0 0
  %5872 = vmatprep.mubr.bf16.mxu0 0
  %5873 = vmatmul.mubr.bf16.gmra.mrb[0].mxu0 %v5838
  %v5874 = vpop.f32.mrb[0].mxu0
  %v5875 = vadd.f32 0.0, %v5874
  %v5876 = vpop.f32.mrb[0].mxu0
  %v5877 = vpop.f32.mrb[0].mxu0
  %v5878 = vpop.f32.mrb[0].mxu0
  %5879 = vdwg.mxu0
  %v5880 = vsub.f32 %v394, %v2282
  %v5881 = vsub.f32 %v449, %v2337
  %v5882 = vsub.f32 %v504, %v2392
  %v5883 = vsub.f32 %v559, %v2447
  %v5884 = vsub.f32 %v614, %v2502
  %v5885 = vsub.f32 %v669, %v2557
  %v5886 = vsub.f32 %v724, %v2612
  %v5887 = vsub.f32 %v779, %v2667
  %v5888 = vsub.f32 %v834, %v2722
  %v5889 = vsub.f32 %v889, %v2777
  %v5890 = vsub.f32 %v944, %v2832
  %v5891 = vsub.f32 %v999, %v2887
  %v5892 = vsub.f32 %v1054, %v2942
  %v5893 = vsub.f32 %v1109, %v2997
  %v5894 = vsub.f32 %v1164, %v3052
  %v5895 = vsub.f32 %v1219, %v3107
  %v5896 = vsub.f32 %v1274, %v3162
  %v5897 = vsub.f32 %v1329, %v3217
  %v5898 = vsub.f32 %v1384, %v3272
  %v5899 = vsub.f32 %v1439, %v3327
  %v5900 = vsub.f32 %v1494, %v3382
  %v5901 = vsub.f32 %v1549, %v3437
  %v5902 = vsub.f32 %v1604, %v3492
  %v5903 = vsub.f32 %v1659, %v3547
  %v5904 = vsub.f32 %v1714, %v3602
  %v5905 = vsub.f32 %v1769, %v3657
  %v5906 = vsub.f32 %v1824, %v3712
  %v5907 = vsub.f32 %v1879, %v3767
  %v5908 = vsub.f32 %v1934, %v3822
  %v5909 = vsub.f32 %v1989, %v3877
  %v5910 = vsub.f32 %v2044, %v3932
  %v5911 = vsub.f32 %v2099, %v3987
  %5912 = vst.msk [vmem:[%s5] sm:$0xff] %vm355, %v5880
  %5913 = vst.msk [vmem:[%s5 + $0x8] sm:$0xff] %vm355, %v5881
  %5914 = vst.msk [vmem:[%s5 + $0x10] sm:$0xff] %vm355, %v5882
  %5915 = vst.msk [vmem:[%s5 + $0x18] sm:$0xff] %vm355, %v5883
  %5916 = vst.msk [vmem:[%s5 + $0x20] sm:$0xff] %vm355, %v5884
  %5917 = vst.msk [vmem:[%s5 + $0x28] sm:$0xff] %vm355, %v5885
  %5918 = vst.msk [vmem:[%s5 + $0x30] sm:$0xff] %vm355, %v5886
  %5919 = vst.msk [vmem:[%s5 + $0x38] sm:$0xff] %vm355, %v5887
  %5920 = vst.msk [vmem:[%s5 + $0x40] sm:$0xff] %vm355, %v5888
  %5921 = vst.msk [vmem:[%s5 + $0x48] sm:$0xff] %vm355, %v5889
  %5922 = vst.msk [vmem:[%s5 + $0x50] sm:$0xff] %vm355, %v5890
  %5923 = vst.msk [vmem:[%s5 + $0x58] sm:$0xff] %vm355, %v5891
  %5924 = vst.msk [vmem:[%s5 + $0x60] sm:$0xff] %vm355, %v5892
  %5925 = vst.msk [vmem:[%s5 + $0x68] sm:$0xff] %vm355, %v5893
  %5926 = vst.msk [vmem:[%s5 + $0x70] sm:$0xff] %vm355, %v5894
  %5927 = vst.msk [vmem:[%s5 + $0x78] sm:$0xff] %vm355, %v5895
  %5928 = vst.msk [vmem:[%s5 + $0x80] sm:$0xff] %vm355, %v5896
  %5929 = vst.msk [vmem:[%s5 + $0x88] sm:$0xff] %vm355, %v5897
  %5930 = vst.msk [vmem:[%s5 + $0x90] sm:$0xff] %vm355, %v5898
  %5931 = vst.msk [vmem:[%s5 + $0x98] sm:$0xff] %vm355, %v5899
  %5932 = vst.msk [vmem:[%s5 + $0xa0] sm:$0xff] %vm355, %v5900
  %5933 = vst.msk [vmem:[%s5 + $0xa8] sm:$0xff] %vm355, %v5901
  %5934 = vst.msk [vmem:[%s5 + $0xb0] sm:$0xff] %vm355, %v5902
  %5935 = vst.msk [vmem:[%s5 + $0xb8] sm:$0xff] %vm355, %v5903
  %5936 = vst.msk [vmem:[%s5 + $0xc0] sm:$0xff] %vm355, %v5904
  %5937 = vst.msk [vmem:[%s5 + $0xc8] sm:$0xff] %vm355, %v5905
  %5938 = vst.msk [vmem:[%s5 + $0xd0] sm:$0xff] %vm355, %v5906
  %5939 = vst.msk [vmem:[%s5 + $0xd8] sm:$0xff] %vm355, %v5907
  %5940 = vst.msk [vmem:[%s5 + $0xe0] sm:$0xff] %vm355, %v5908
  %5941 = vst.msk [vmem:[%s5 + $0xe8] sm:$0xff] %vm355, %v5909
  %5942 = vst.msk [vmem:[%s5 + $0xf0] sm:$0xff] %vm355, %v5910
  %5943 = vst.msk [vmem:[%s5 + $0xf8] sm:$0xff] %vm355, %v5911
  %v5944 = vsub.f32 %v4170, %v394
  %v5945 = vsub.f32 %v4225, %v449
  %v5946 = vsub.f32 %v4280, %v504
  %v5947 = vsub.f32 %v4335, %v559
  %v5948 = vsub.f32 %v4390, %v614
  %v5949 = vsub.f32 %v4445, %v669
  %v5950 = vsub.f32 %v4500, %v724
  %v5951 = vsub.f32 %v4555, %v779
  %v5952 = vsub.f32 %v4610, %v834
  %v5953 = vsub.f32 %v4665, %v889
  %v5954 = vsub.f32 %v4720, %v944
  %v5955 = vsub.f32 %v4775, %v999
  %v5956 = vsub.f32 %v4830, %v1054
  %v5957 = vsub.f32 %v4885, %v1109
  %v5958 = vsub.f32 %v4940, %v1164
  %v5959 = vsub.f32 %v4995, %v1219
  %v5960 = vsub.f32 %v5050, %v1274
  %v5961 = vsub.f32 %v5105, %v1329
  %v5962 = vsub.f32 %v5160, %v1384
  %v5963 = vsub.f32 %v5215, %v1439
  %v5964 = vsub.f32 %v5270, %v1494
  %v5965 = vsub.f32 %v5325, %v1549
  %v5966 = vsub.f32 %v5380, %v1604
  %v5967 = vsub.f32 %v5435, %v1659
  %v5968 = vsub.f32 %v5490, %v1714
  %v5969 = vsub.f32 %v5545, %v1769
  %v5970 = vsub.f32 %v5600, %v1824
  %v5971 = vsub.f32 %v5655, %v1879
  %v5972 = vsub.f32 %v5710, %v1934
  %v5973 = vsub.f32 %v5765, %v1989
  %v5974 = vsub.f32 %v5820, %v2044
  %v5975 = vsub.f32 %v5875, %v2099
  %v5976 = vsub.f32 %v5944, %v2282
  %v5977 = vsub.f32 %v5945, %v2337
  %v5978 = vsub.f32 %v5946, %v2392
  %v5979 = vsub.f32 %v5947, %v2447
  %v5980 = vsub.f32 %v5948, %v2502
  %v5981 = vsub.f32 %v5949, %v2557
  %v5982 = vsub.f32 %v5950, %v2612
  %v5983 = vsub.f32 %v5951, %v2667
  %v5984 = vsub.f32 %v5952, %v2722
  %v5985 = vsub.f32 %v5953, %v2777
  %v5986 = vsub.f32 %v5954, %v2832
  %v5987 = vsub.f32 %v5955, %v2887
  %v5988 = vsub.f32 %v5956, %v2942
  %v5989 = vsub.f32 %v5957, %v2997
  %v5990 = vsub.f32 %v5958, %v3052
  %v5991 = vsub.f32 %v5959, %v3107
  %v5992 = vsub.f32 %v5960, %v3162
  %v5993 = vsub.f32 %v5961, %v3217
  %v5994 = vsub.f32 %v5962, %v3272
  %v5995 = vsub.f32 %v5963, %v3327
  %v5996 = vsub.f32 %v5964, %v3382
  %v5997 = vsub.f32 %v5965, %v3437
  %v5998 = vsub.f32 %v5966, %v3492
  %v5999 = vsub.f32 %v5967, %v3547
  %v6000 = vsub.f32 %v5968, %v3602
  %v6001 = vsub.f32 %v5969, %v3657
  %v6002 = vsub.f32 %v5970, %v3712
  %v6003 = vsub.f32 %v5971, %v3767
  %v6004 = vsub.f32 %v5972, %v3822
  %v6005 = vsub.f32 %v5973, %v3877
  %v6006 = vsub.f32 %v5974, %v3932
  %v6007 = vsub.f32 %v5975, %v3987
  %6008 = vst.msk [vmem:[%s6] sm:$0xff] %vm355, %v5976
  %6009 = vst.msk [vmem:[%s6 + $0x8] sm:$0xff] %vm355, %v5977
  %6010 = vst.msk [vmem:[%s6 + $0x10] sm:$0xff] %vm355, %v5978
  %6011 = vst.msk [vmem:[%s6 + $0x18] sm:$0xff] %vm355, %v5979
  %6012 = vst.msk [vmem:[%s6 + $0x20] sm:$0xff] %vm355, %v5980
  %6013 = vst.msk [vmem:[%s6 + $0x28] sm:$0xff] %vm355, %v5981
  %6014 = vst.msk [vmem:[%s6 + $0x30] sm:$0xff] %vm355, %v5982
  %6015 = vst.msk [vmem:[%s6 + $0x38] sm:$0xff] %vm355, %v5983
  %6016 = vst.msk [vmem:[%s6 + $0x40] sm:$0xff] %vm355, %v5984
  %6017 = vst.msk [vmem:[%s6 + $0x48] sm:$0xff] %vm355, %v5985
  %6018 = vst.msk [vmem:[%s6 + $0x50] sm:$0xff] %vm355, %v5986
  %6019 = vst.msk [vmem:[%s6 + $0x58] sm:$0xff] %vm355, %v5987
  %6020 = vst.msk [vmem:[%s6 + $0x60] sm:$0xff] %vm355, %v5988
  %6021 = vst.msk [vmem:[%s6 + $0x68] sm:$0xff] %vm355, %v5989
  %6022 = vst.msk [vmem:[%s6 + $0x70] sm:$0xff] %vm355, %v5990
  %6023 = vst.msk [vmem:[%s6 + $0x78] sm:$0xff] %vm355, %v5991
  %6024 = vst.msk [vmem:[%s6 + $0x80] sm:$0xff] %vm355, %v5992
  %6025 = vst.msk [vmem:[%s6 + $0x88] sm:$0xff] %vm355, %v5993
  %6026 = vst.msk [vmem:[%s6 + $0x90] sm:$0xff] %vm355, %v5994
  %6027 = vst.msk [vmem:[%s6 + $0x98] sm:$0xff] %vm355, %v5995
  %6028 = vst.msk [vmem:[%s6 + $0xa0] sm:$0xff] %vm355, %v5996
  %6029 = vst.msk [vmem:[%s6 + $0xa8] sm:$0xff] %vm355, %v5997
  %6030 = vst.msk [vmem:[%s6 + $0xb0] sm:$0xff] %vm355, %v5998
  %6031 = vst.msk [vmem:[%s6 + $0xb8] sm:$0xff] %vm355, %v5999
  %6032 = vst.msk [vmem:[%s6 + $0xc0] sm:$0xff] %vm355, %v6000
  %6033 = vst.msk [vmem:[%s6 + $0xc8] sm:$0xff] %vm355, %v6001
  %6034 = vst.msk [vmem:[%s6 + $0xd0] sm:$0xff] %vm355, %v6002
  %6035 = vst.msk [vmem:[%s6 + $0xd8] sm:$0xff] %vm355, %v6003
  %6036 = vst.msk [vmem:[%s6 + $0xe0] sm:$0xff] %vm355, %v6004
  %6037 = vst.msk [vmem:[%s6 + $0xe8] sm:$0xff] %vm355, %v6005
  %6038 = vst.msk [vmem:[%s6 + $0xf0] sm:$0xff] %vm355, %v6006
  %6039 = vst.msk [vmem:[%s6 + $0xf8] sm:$0xff] %vm355, %v6007
  // Predicated region
  $region22: #{fno2d_forward.10} parent=0 // pred_check
    _
  $region23: #{fno2d_forward.10} parent=0 // pred_check_branch
    %6041 = sbr.rel (0) target = $region25
  $region24: #{fno2d_forward.10} parent=0 // pred_region
    _
  $region25: #{fno2d_forward.10} parent=0 // pred_fallthru
    _
  // Predicated region
  $region26: #{fno2d_forward.10} parent=0 // pred_check
    _
  $region27: #{fno2d_forward.10} parent=0 // pred_check_branch
    %6043 = sbr.rel (0) target = $region29
  $region28: #{fno2d_forward.10} parent=0 // pred_region
    _
  $region29: #{fno2d_forward.10} parent=0 // pred_fallthru
    _
  // Predicated region
  $region30: #{fno2d_forward.10} parent=0 // pred_check
    _
  $region31: #{fno2d_forward.10} parent=0 // pred_check_branch
    %6045 = sbr.rel (0) target = $region33
  $region32: #{fno2d_forward.10} parent=0 // pred_region
    _
  $region33: #{fno2d_forward.10} parent=0 // pred_fallthru
    _
  // Predicated region
  $region34: #{fno2d_forward.10} parent=0 // pred_check
    _
  $region35: #{fno2d_forward.10} parent=0 // pred_check_branch
    %6047 = sbr.rel (0) target = $region37
  $region36: #{fno2d_forward.10} parent=0 // pred_region
    _
  $region37: #{fno2d_forward.10} parent=0 // pred_fallthru
    _

</llo_original>
